<compile_context>
chip_gen: v7x
topology: tpu7x:2x2x1
jax: 0.10.0
libtpu: 0.0.40
codegen_flags: <defaults>
</compile_context>

<pallas_src>
import jax
import jax.numpy as jnp
import numpy as np
from jax.experimental import pallas as pl
from jax.experimental.pallas import tpu as pltpu

_NPAD = 8  # batch padded to one full sublane tile


# ---------------------------------------------------------------------------
# Parameter preparation helpers (host-side, run once)
# ---------------------------------------------------------------------------
def _banded_weight(w_oihw, mel_in):
    """Fold the mel-direction taps, stride-2 subsampling and channel mixing of a
    3x3/stride2/pad1 conv into 3 dense matrices (one per time tap kh) that act on
    the flattened (mel, channel) lane axis."""
    c_out, c_in, _, _ = w_oihw.shape
    mel_out = (mel_in - 1) // 2 + 1
    wk = np.zeros((3, mel_in * c_in, mel_out * c_out), np.float32)
    for kh in range(3):
        for j in range(mel_out):
            for kw in range(3):
                wi = 2 * j + kw - 1                       # padded mel index - 1
                if 0 <= wi < mel_in:
                    wk[kh,
                       wi * c_in:(wi + 1) * c_in,
                       j * c_out:(j + 1) * c_out] = w_oihw[:, :, kh, kw].T
    return jnp.asarray(wk)


def calculate_size(dim_size, kernel_size, stride, pad, n_convs):
    for _ in range(n_convs):
        dim_size = (dim_size - kernel_size + 2 * pad) // stride + 1
    return dim_size


def make_params(key, ref_enc_filters, n_mel_channels, encoder_embedding_dim):
    eps = 1e-5
    k_layers = len(ref_enc_filters)
    filters = [1] + list(ref_enc_filters)
    keys = jax.random.split(key, 6 * k_layers + 4)

    convs = []
    mel = n_mel_channels
    for i in range(k_layers):
        c_in, c_out = filters[i], filters[i + 1]
        kw_, kb_, kg_, kbe_, km_, kv_ = keys[6 * i:6 * i + 6]
        w = jax.random.normal(kw_, (c_out, c_in, 3, 3), jnp.float32) * 0.1   # OIHW
        b = jax.random.normal(kb_, (c_out,), jnp.float32) * 0.1
        gamma = jax.random.uniform(kg_, (c_out,), jnp.float32, 0.5, 1.5)
        beta = jax.random.normal(kbe_, (c_out,), jnp.float32) * 0.1
        mean = jax.random.normal(km_, (c_out,), jnp.float32) * 0.1
        var = jax.random.uniform(kv_, (c_out,), jnp.float32, 0.5, 1.5)

        # Fold eval-mode BatchNorm (+ conv bias) into a per-channel scale/bias.
        inv_std = 1.0 / jnp.sqrt(var + eps)
        scale = gamma * inv_std
        bias = (b - mean) * scale + beta

        mel_out = (mel - 1) // 2 + 1
        wk = _banded_weight(np.asarray(w), mel)          # [3, mel*Cin, mel_out*Cout]
        # Lane layout of a layer output is (mel-major, channel-minor).
        scale_t = jnp.tile(scale, mel_out).reshape(1, mel_out * c_out)
        bias_t = jnp.tile(bias, mel_out).reshape(1, mel_out * c_out)

        convs.append(dict(
            w=w, b=b, gamma=gamma, beta=beta, mean=mean, var=var,
            wk=wk, scale_t=scale_t, bias_t=bias_t,
            wc_in=mel * c_in, wc_out=mel_out * c_out))
        mel = mel_out

    d_in = ref_enc_filters[-1] * mel
    hidden = encoder_embedding_dim // 2
    kih, khh, kbi, kbh = keys[6 * k_layers:6 * k_layers + 4]
    s = 0.2
    w_ih = jax.random.normal(kih, (3 * hidden, d_in), jnp.float32) * s       # PyTorch layout
    w_hh = jax.random.normal(khh, (3 * hidden, hidden), jnp.float32) * s
    b_ih = jax.random.normal(kbi, (3 * hidden,), jnp.float32) * s
    b_hh = jax.random.normal(kbh, (3 * hidden,), jnp.float32) * s
    gru = dict(w_ih=w_ih, w_hh=w_hh, b_ih_v=b_ih, b_hh_v=b_hh,
               w_ih_t=w_ih.T, w_hh_t=w_hh.T,
               b_ih=b_ih.reshape(1, -1), b_hh=b_hh.reshape(1, -1))
    return dict(convs=convs, gru=gru, n_mels=n_mel_channels,
                hidden=hidden, eps=eps)


# ---------------------------------------------------------------------------
# The fused kernel
# ---------------------------------------------------------------------------
def _make_fused_kernel(layer_dims, n_real, hidden):
    """layer_dims: tuple of (time_in, time_out, lane_in, lane_out) per conv layer."""
    n_layers = len(layer_dims)

    def kernel(*refs):
        x_ref = refs[0]
        conv_refs = refs[1:1 + 3 * n_layers]
        wih_ref, whh_ref, bih_ref, bhh_ref = refs[1 + 3 * n_layers:5 + 3 * n_layers]
        o_ref = refs[5 + 3 * n_layers]
        pad_refs = refs[6 + 3 * n_layers:]

        cur = x_ref[...]                                   # [T0, 8, mel*1]
        # ---------------- conv + BN + ReLU stack (all in VMEM) ----------------
        for l, (h_in, h_out, wc_in, wc_out) in enumerate(layer_dims):
            wk_ref = conv_refs[3 * l + 0]                  # [3, wc_in, wc_out]
            sc_ref = conv_refs[3 * l + 1]                  # [1, wc_out]
            bi_ref = conv_refs[3 * l + 2]                  # [1, wc_out]
            s = pad_refs[l]                                # [h_in + 2, 8, wc_in]

            # Time-direction zero halo (pad=1) via VMEM scratch.
            zero_row = jnp.zeros((1, _NPAD, wc_in), jnp.float32)
            s[pl.ds(0, 1), :, :] = zero_row
            s[pl.ds(h_in + 1, 1), :, :] = zero_row
            s[pl.ds(1, h_in), :, :] = cur

            xp = s[...]                                    # [h_in+2, 8, wc_in]
            # Even/odd time rows via a leading-dim-only reshape (no relayout).
            r2 = xp.reshape((h_in + 2) // 2, 2, _NPAD, wc_in)
            even = r2[:, 0]                                # padded rows 0,2,...,h_in
            odd = r2[:, 1]                                 # padded rows 1,3,...,h_in+1
            taps = (even[0:h_out],                         # kh = 0 -> rows 2i
                    odd[0:h_out],                          # kh = 1 -> rows 2i+1
                    even[1:h_out + 1])                     # kh = 2 -> rows 2i+2

            acc = jnp.zeros((h_out * _NPAD, wc_out), jnp.float32)
            for kh in range(3):                            # 3 fat MXU matmuls / layer
                xt = taps[kh].reshape(h_out * _NPAD, wc_in)
                acc = acc + jnp.dot(xt, wk_ref[kh],
                                    preferred_element_type=jnp.float32)
            y = jnp.maximum(acc * sc_ref[...] + bi_ref[...], 0.0)
            cur = y.reshape(h_out, _NPAD, wc_out)

        # -------- GRU (batch_first, 1 layer); final hidden state only --------
        t_steps, _, d_in = cur.shape
        gx = jnp.dot(cur.reshape(t_steps * _NPAD, d_in), wih_ref[...],
                     preferred_element_type=jnp.float32) + bih_ref[...]
        gx = gx.reshape(t_steps, _NPAD, 3 * hidden)        # tile-aligned per-step blocks
        h = jnp.zeros((_NPAD, hidden), jnp.float32)
        # TODO(synk): for long sequences switch this static unroll to
        # lax.fori_loop(..., unroll=True); here T is tiny.
        for t in range(t_steps):
            gxt = gx[t]                                    # [8, 3H]
            gh = jnp.dot(h, whh_ref[...],
                         preferred_element_type=jnp.float32) + bhh_ref[...]
            r = jax.nn.sigmoid(gxt[:, 0:hidden] + gh[:, 0:hidden])
            z = jax.nn.sigmoid(gxt[:, hidden:2 * hidden] + gh[:, hidden:2 * hidden])
            c = jnp.tanh(gxt[:, 2 * hidden:] + r * gh[:, 2 * hidden:])
            h = (1.0 - z) * c + z * h
        o_ref[...] = h[0:n_real, :]                        # drop padded batch rows

    return kernel


# ---------------------------------------------------------------------------
# Forward pass wrapper (one pallas_call)
# ---------------------------------------------------------------------------
def reference_encoder_forward(inputs, params):
    """inputs: [N, Ty, n_mels] f32 -> [N, encoder_embedding_dim // 2]."""
    n, ty, n_mels = inputs.shape
    assert n_mels == params["n_mels"]
    assert n <= _NPAD, "TODO(synk): batches > 8 need a batch grid axis"
    hidden = params["hidden"]

    # Static per-layer dims: (time_in, time_out, lane_in, lane_out).
    layer_dims = []
    h = ty
    for layer in params["convs"]:
        assert h % 2 == 0, "TODO(synk): odd time dims need one extra halo row"
        layer_dims.append((h, h // 2, layer["wc_in"], layer["wc_out"]))
        h //= 2

    # Wrapper-side layout plumbing only: time-major, batch padded to a full
    # sublane tile.  This is the only HBM-resident activation.
    x = jnp.transpose(inputs, (1, 0, 2))
    x = jnp.pad(x, ((0, 0), (0, _NPAD - n), (0, 0)))

    vmem = pl.BlockSpec(memory_space=pltpu.MemorySpace.VMEM)
    args = [x]
    in_specs = [vmem]
    for layer in params["convs"]:
        args += [layer["wk"], layer["scale_t"], layer["bias_t"]]
        in_specs += [vmem, vmem, vmem]
    gru = params["gru"]
    args += [gru["w_ih_t"], gru["w_hh_t"], gru["b_ih"], gru["b_hh"]]
    in_specs += [vmem] * 4

    kernel = _make_fused_kernel(tuple(layer_dims), n, hidden)
    return pl.pallas_call(
        kernel,
        out_shape=jax.ShapeDtypeStruct((n, hidden), jnp.float32),
        in_specs=in_specs,
        out_specs=pl.BlockSpec(memory_space=pltpu.MemorySpace.VMEM),
        scratch_shapes=[pltpu.VMEM((hi + 2, _NPAD, wc), jnp.float32)
                        for (hi, _, wc, _) in layer_dims],
    )(*args)


# ---------------------------------------------------------------------------
# Pure-JAX reference mirroring the PyTorch forward (eval-mode BN)
# ---------------------------------------------------------------------------
def _reference_forward(inputs, params):
    eps = params["eps"]
    n = inputs.shape[0]
    hp = jax.lax.Precision.HIGHEST
    out = inputs.reshape(n, 1, -1, params["n_mels"])                 # NCHW
    for layer in params["convs"]:
        out = jax.lax.conv_general_dilated(
            out, layer["w"], window_strides=(2, 2),
            padding=((1, 1), (1, 1)),
            dimension_numbers=("NCHW", "OIHW", "NCHW"),
            precision=hp)
        out = out + layer["b"][None, :, None, None]
        out = ((out - layer["mean"][None, :, None, None])
               / jnp.sqrt(layer["var"][None, :, None, None] + eps)
               * layer["gamma"][None, :, None, None]
               + layer["beta"][None, :, None, None])
        out = jnp.maximum(out, 0.0)
    out = jnp.transpose(out, (0, 2, 1, 3))                           # [N,T,C,W]
    t = out.shape[1]
    seq = out.reshape(n, t, -1)

    hid = params["hidden"]
    w_ih, w_hh = params["gru"]["w_ih"], params["gru"]["w_hh"]
    b_ih, b_hh = params["gru"]["b_ih_v"], params["gru"]["b_hh_v"]
    h = jnp.zeros((n, hid), jnp.float32)
    for ti in range(t):
        xt = seq[:, ti, :]
        gx = jnp.dot(xt, w_ih.T, precision=hp) + b_ih
        gh = jnp.dot(h, w_hh.T, precision=hp) + b_hh
        r = jax.nn.sigmoid(gx[:, :hid] + gh[:, :hid])
        z = jax.nn.sigmoid(gx[:, hid:2 * hid] + gh[:, hid:2 * hid])
        cand = jnp.tanh(gx[:, 2 * hid:] + r * gh[:, 2 * hid:])
        h = (1.0 - z) * cand + z * h
    return h


if __name__ == "__main__":
    # Small shapes consistent with the module's forward.
    N = 2
    Ty = 128                      # mel frames
    n_mel_channels = 32
    ref_enc_filters = [8, 8, 16, 16, 32, 32]
    encoder_embedding_dim = 64    # GRU hidden = 32

    root = jax.random.PRNGKey(0)
    k_in, k_par = jax.random.split(root)
    inputs = jax.random.normal(k_in, (N, Ty, n_mel_channels), jnp.float32)
    params = make_params(k_par, ref_enc_filters, n_mel_channels,
                         encoder_embedding_dim)

    fwd = jax.jit(lambda x: reference_encoder_forward(x, params))
    out = jax.block_until_ready(fwd(inputs))

    ref = jax.block_until_ready(_reference_forward(inputs, params))

    assert out.shape == (N, encoder_embedding_dim // 2)
    assert bool(jnp.all(jnp.isfinite(out)))
    # Tightened from 2e-2; kept at 5e-3 to absorb MXU f32 rounding differences
    # across 7 fused matmul stages vs. the XLA conv/dot reference.
    max_diff = float(jnp.max(jnp.abs(out - ref)))
    assert jnp.allclose(out, ref, atol=5e-3, rtol=5e-3), max_diff

    print("KERNEL_OK")
</pallas_src>

<mosaic_0001>
module attributes {stable_mosaic.version = 11 : i64} {
  func.func @kernel(%arg0: memref<128x8x32xf32, #tpu.memory_space<vmem>>, %arg1: memref<3x32x128xf32, #tpu.memory_space<vmem>>, %arg2: memref<1x128xf32, #tpu.memory_space<vmem>>, %arg3: memref<1x128xf32, #tpu.memory_space<vmem>>, %arg4: memref<3x128x64xf32, #tpu.memory_space<vmem>>, %arg5: memref<1x64xf32, #tpu.memory_space<vmem>>, %arg6: memref<1x64xf32, #tpu.memory_space<vmem>>, %arg7: memref<3x64x64xf32, #tpu.memory_space<vmem>>, %arg8: memref<1x64xf32, #tpu.memory_space<vmem>>, %arg9: memref<1x64xf32, #tpu.memory_space<vmem>>, %arg10: memref<3x64x32xf32, #tpu.memory_space<vmem>>, %arg11: memref<1x32xf32, #tpu.memory_space<vmem>>, %arg12: memref<1x32xf32, #tpu.memory_space<vmem>>, %arg13: memref<3x32x32xf32, #tpu.memory_space<vmem>>, %arg14: memref<1x32xf32, #tpu.memory_space<vmem>>, %arg15: memref<1x32xf32, #tpu.memory_space<vmem>>, %arg16: memref<3x32x32xf32, #tpu.memory_space<vmem>>, %arg17: memref<1x32xf32, #tpu.memory_space<vmem>>, %arg18: memref<1x32xf32, #tpu.memory_space<vmem>>, %arg19: memref<32x96xf32, #tpu.memory_space<vmem>>, %arg20: memref<32x96xf32, #tpu.memory_space<vmem>>, %arg21: memref<1x96xf32, #tpu.memory_space<vmem>>, %arg22: memref<1x96xf32, #tpu.memory_space<vmem>>, %arg23: memref<2x32xf32, #tpu.memory_space<vmem>>, %arg24: memref<130x8x32xf32, #tpu.memory_space<vmem>>, %arg25: memref<66x8x128xf32, #tpu.memory_space<vmem>>, %arg26: memref<34x8x64xf32, #tpu.memory_space<vmem>>, %arg27: memref<18x8x64xf32, #tpu.memory_space<vmem>>, %arg28: memref<10x8x32xf32, #tpu.memory_space<vmem>>, %arg29: memref<6x8x32xf32, #tpu.memory_space<vmem>>) attributes {dimension_semantics = [], scalar_prefetch = 0 : i64, scratch_operands = 6 : i64, tpu.core_type = #tpu.core_type<tc>} {
    %c0 = arith.constant 0 : index
    %c0_0 = arith.constant 0 : index
    %c0_1 = arith.constant 0 : index
    %0 = vector.load %arg0[%c0, %c0_0, %c0_1] : memref<128x8x32xf32, #tpu.memory_space<vmem>>, vector<128x8x32xf32>
    %cst = arith.constant 0.000000e+00 : f32
    %1 = vector.broadcast %cst : f32 to vector<1x8x32xf32>
    %c0_2 = arith.constant 0 : index
    %c0_3 = arith.constant 0 : index
    %c0_4 = arith.constant 0 : index
    %2 = vector.load %arg24[%c0_2, %c0_3, %c0_4] : memref<130x8x32xf32, #tpu.memory_space<vmem>>, vector<1x8x32xf32>
    tpu.vector_store %arg24[%c0_2, %c0_3, %c0_4], %1 {strides = array<i32>} : memref<130x8x32xf32, #tpu.memory_space<vmem>>, vector<1x8x32xf32>,
    %c129 = arith.constant 129 : index
    %c0_5 = arith.constant 0 : index
    %c0_6 = arith.constant 0 : index
    %3 = vector.load %arg24[%c129, %c0_5, %c0_6] : memref<130x8x32xf32, #tpu.memory_space<vmem>>, vector<1x8x32xf32>
    tpu.vector_store %arg24[%c129, %c0_5, %c0_6], %1 {strides = array<i32>} : memref<130x8x32xf32, #tpu.memory_space<vmem>>, vector<1x8x32xf32>,
    %c1 = arith.constant 1 : index
    %c0_7 = arith.constant 0 : index
    %c0_8 = arith.constant 0 : index
    %4 = vector.load %arg24[%c1, %c0_7, %c0_8] : memref<130x8x32xf32, #tpu.memory_space<vmem>>, vector<128x8x32xf32>
    tpu.vector_store %arg24[%c1, %c0_7, %c0_8], %0 {strides = array<i32>} : memref<130x8x32xf32, #tpu.memory_space<vmem>>, vector<128x8x32xf32>,
    %c0_9 = arith.constant 0 : index
    %c0_10 = arith.constant 0 : index
    %c0_11 = arith.constant 0 : index
    %5 = vector.load %arg24[%c0_9, %c0_10, %c0_11] : memref<130x8x32xf32, #tpu.memory_space<vmem>>, vector<130x8x32xf32>
    %6 = vector.shape_cast %5 : vector<130x8x32xf32> to vector<65x2x8x32xf32>
    %7 = vector.extract_strided_slice %6 {offsets = [0, 0, 0, 0], sizes = [65, 1, 8, 32], strides = [1, 1, 1, 1]} : vector<65x2x8x32xf32> to vector<65x1x8x32xf32>
    %8 = vector.shape_cast %7 : vector<65x1x8x32xf32> to vector<65x8x32xf32>
    %9 = vector.extract_strided_slice %6 {offsets = [0, 1, 0, 0], sizes = [65, 1, 8, 32], strides = [1, 1, 1, 1]} : vector<65x2x8x32xf32> to vector<65x1x8x32xf32>
    %10 = vector.shape_cast %9 : vector<65x1x8x32xf32> to vector<65x8x32xf32>
    %11 = vector.extract_strided_slice %8 {offsets = [0, 0, 0], sizes = [64, 8, 32], strides = [1, 1, 1]} : vector<65x8x32xf32> to vector<64x8x32xf32>
    %12 = vector.extract_strided_slice %10 {offsets = [0, 0, 0], sizes = [64, 8, 32], strides = [1, 1, 1]} : vector<65x8x32xf32> to vector<64x8x32xf32>
    %13 = vector.extract_strided_slice %8 {offsets = [1, 0, 0], sizes = [64, 8, 32], strides = [1, 1, 1]} : vector<65x8x32xf32> to vector<64x8x32xf32>
    %cst_12 = arith.constant 0.000000e+00 : f32
    %14 = vector.broadcast %cst_12 : f32 to vector<512x128xf32>
    %15 = vector.shape_cast %11 : vector<64x8x32xf32> to vector<512x32xf32>
    %c0_13 = arith.constant 0 : index
    %c0_14 = arith.constant 0 : index
    %c0_15 = arith.constant 0 : index
    %16 = vector.load %arg1[%c0_13, %c0_14, %c0_15] : memref<3x32x128xf32, #tpu.memory_space<vmem>>, vector<1x32x128xf32>
    %17 = vector.shape_cast %16 : vector<1x32x128xf32> to vector<32x128xf32>
    %cst_16 = arith.constant dense<0.000000e+00> : vector<512x128xf32>
    %18 = tpu.matmul %15, %17, %cst_16 {dimension_numbers = #tpu.dot_dimension_numbers<[1], [0], [0], [1], [0, 0, 1, 1], [], []>} : vector<512x32xf32>, vector<32x128xf32>, vector<512x128xf32> -> vector<512x128xf32>
    %19 = arith.addf %14, %18 : vector<512x128xf32>
    %20 = vector.shape_cast %12 : vector<64x8x32xf32> to vector<512x32xf32>
    %c1_17 = arith.constant 1 : index
    %c0_18 = arith.constant 0 : index
    %c0_19 = arith.constant 0 : index
    %21 = vector.load %arg1[%c1_17, %c0_18, %c0_19] : memref<3x32x128xf32, #tpu.memory_space<vmem>>, vector<1x32x128xf32>
    %22 = vector.shape_cast %21 : vector<1x32x128xf32> to vector<32x128xf32>
    %cst_20 = arith.constant dense<0.000000e+00> : vector<512x128xf32>
    %23 = tpu.matmul %20, %22, %cst_20 {dimension_numbers = #tpu.dot_dimension_numbers<[1], [0], [0], [1], [0, 0, 1, 1], [], []>} : vector<512x32xf32>, vector<32x128xf32>, vector<512x128xf32> -> vector<512x128xf32>
    %24 = arith.addf %19, %23 : vector<512x128xf32>
    %25 = vector.shape_cast %13 : vector<64x8x32xf32> to vector<512x32xf32>
    %c2 = arith.constant 2 : index
    %c0_21 = arith.constant 0 : index
    %c0_22 = arith.constant 0 : index
    %26 = vector.load %arg1[%c2, %c0_21, %c0_22] : memref<3x32x128xf32, #tpu.memory_space<vmem>>, vector<1x32x128xf32>
    %27 = vector.shape_cast %26 : vector<1x32x128xf32> to vector<32x128xf32>
    %cst_23 = arith.constant dense<0.000000e+00> : vector<512x128xf32>
    %28 = tpu.matmul %25, %27, %cst_23 {dimension_numbers = #tpu.dot_dimension_numbers<[1], [0], [0], [1], [0, 0, 1, 1], [], []>} : vector<512x32xf32>, vector<32x128xf32>, vector<512x128xf32> -> vector<512x128xf32>
    %29 = arith.addf %24, %28 : vector<512x128xf32>
    %c0_24 = arith.constant 0 : index
    %c0_25 = arith.constant 0 : index
    %30 = vector.load %arg2[%c0_24, %c0_25] : memref<1x128xf32, #tpu.memory_space<vmem>>, vector<1x128xf32>
    %31 = vector.broadcast %30 : vector<1x128xf32> to vector<512x128xf32>
    %32 = arith.mulf %29, %31 : vector<512x128xf32>
    %c0_26 = arith.constant 0 : index
    %c0_27 = arith.constant 0 : index
    %33 = vector.load %arg3[%c0_26, %c0_27] : memref<1x128xf32, #tpu.memory_space<vmem>>, vector<1x128xf32>
    %34 = vector.broadcast %33 : vector<1x128xf32> to vector<512x128xf32>
    %35 = arith.addf %32, %34 : vector<512x128xf32>
    %cst_28 = arith.constant 0.000000e+00 : f32
    %36 = vector.broadcast %cst_28 : f32 to vector<512x128xf32>
    %37 = arith.maximumf %35, %36 : vector<512x128xf32>
    %38 = vector.shape_cast %37 : vector<512x128xf32> to vector<64x8x128xf32>
    %cst_29 = arith.constant 0.000000e+00 : f32
    %39 = vector.broadcast %cst_29 : f32 to vector<1x8x128xf32>
    %c0_30 = arith.constant 0 : index
    %c0_31 = arith.constant 0 : index
    %c0_32 = arith.constant 0 : index
    %40 = vector.load %arg25[%c0_30, %c0_31, %c0_32] : memref<66x8x128xf32, #tpu.memory_space<vmem>>, vector<1x8x128xf32>
    tpu.vector_store %arg25[%c0_30, %c0_31, %c0_32], %39 {strides = array<i32>} : memref<66x8x128xf32, #tpu.memory_space<vmem>>, vector<1x8x128xf32>,
    %c65 = arith.constant 65 : index
    %c0_33 = arith.constant 0 : index
    %c0_34 = arith.constant 0 : index
    %41 = vector.load %arg25[%c65, %c0_33, %c0_34] : memref<66x8x128xf32, #tpu.memory_space<vmem>>, vector<1x8x128xf32>
    tpu.vector_store %arg25[%c65, %c0_33, %c0_34], %39 {strides = array<i32>} : memref<66x8x128xf32, #tpu.memory_space<vmem>>, vector<1x8x128xf32>,
    %c1_35 = arith.constant 1 : index
    %c0_36 = arith.constant 0 : index
    %c0_37 = arith.constant 0 : index
    %42 = vector.load %arg25[%c1_35, %c0_36, %c0_37] : memref<66x8x128xf32, #tpu.memory_space<vmem>>, vector<64x8x128xf32>
    tpu.vector_store %arg25[%c1_35, %c0_36, %c0_37], %38 {strides = array<i32>} : memref<66x8x128xf32, #tpu.memory_space<vmem>>, vector<64x8x128xf32>,
    %c0_38 = arith.constant 0 : index
    %c0_39 = arith.constant 0 : index
    %c0_40 = arith.constant 0 : index
    %43 = vector.load %arg25[%c0_38, %c0_39, %c0_40] : memref<66x8x128xf32, #tpu.memory_space<vmem>>, vector<66x8x128xf32>
    %44 = vector.shape_cast %43 : vector<66x8x128xf32> to vector<33x2x8x128xf32>
    %45 = vector.extract_strided_slice %44 {offsets = [0, 0, 0, 0], sizes = [33, 1, 8, 128], strides = [1, 1, 1, 1]} : vector<33x2x8x128xf32> to vector<33x1x8x128xf32>
    %46 = vector.shape_cast %45 : vector<33x1x8x128xf32> to vector<33x8x128xf32>
    %47 = vector.extract_strided_slice %44 {offsets = [0, 1, 0, 0], sizes = [33, 1, 8, 128], strides = [1, 1, 1, 1]} : vector<33x2x8x128xf32> to vector<33x1x8x128xf32>
    %48 = vector.shape_cast %47 : vector<33x1x8x128xf32> to vector<33x8x128xf32>
    %49 = vector.extract_strided_slice %46 {offsets = [0, 0, 0], sizes = [32, 8, 128], strides = [1, 1, 1]} : vector<33x8x128xf32> to vector<32x8x128xf32>
    %50 = vector.extract_strided_slice %48 {offsets = [0, 0, 0], sizes = [32, 8, 128], strides = [1, 1, 1]} : vector<33x8x128xf32> to vector<32x8x128xf32>
    %51 = vector.extract_strided_slice %46 {offsets = [1, 0, 0], sizes = [32, 8, 128], strides = [1, 1, 1]} : vector<33x8x128xf32> to vector<32x8x128xf32>
    %cst_41 = arith.constant 0.000000e+00 : f32
    %52 = vector.broadcast %cst_41 : f32 to vector<256x64xf32>
    %53 = vector.shape_cast %49 : vector<32x8x128xf32> to vector<256x128xf32>
    %c0_42 = arith.constant 0 : index
    %c0_43 = arith.constant 0 : index
    %c0_44 = arith.constant 0 : index
    %54 = vector.load %arg4[%c0_42, %c0_43, %c0_44] : memref<3x128x64xf32, #tpu.memory_space<vmem>>, vector<1x128x64xf32>
    %55 = vector.shape_cast %54 : vector<1x128x64xf32> to vector<128x64xf32>
    %cst_45 = arith.constant dense<0.000000e+00> : vector<256x64xf32>
    %56 = tpu.matmul %53, %55, %cst_45 {dimension_numbers = #tpu.dot_dimension_numbers<[1], [0], [0], [1], [0, 0, 1, 1], [], []>} : vector<256x128xf32>, vector<128x64xf32>, vector<256x64xf32> -> vector<256x64xf32>
    %57 = arith.addf %52, %56 : vector<256x64xf32>
    %58 = vector.shape_cast %50 : vector<32x8x128xf32> to vector<256x128xf32>
    %c1_46 = arith.constant 1 : index
    %c0_47 = arith.constant 0 : index
    %c0_48 = arith.constant 0 : index
    %59 = vector.load %arg4[%c1_46, %c0_47, %c0_48] : memref<3x128x64xf32, #tpu.memory_space<vmem>>, vector<1x128x64xf32>
    %60 = vector.shape_cast %59 : vector<1x128x64xf32> to vector<128x64xf32>
    %cst_49 = arith.constant dense<0.000000e+00> : vector<256x64xf32>
    %61 = tpu.matmul %58, %60, %cst_49 {dimension_numbers = #tpu.dot_dimension_numbers<[1], [0], [0], [1], [0, 0, 1, 1], [], []>} : vector<256x128xf32>, vector<128x64xf32>, vector<256x64xf32> -> vector<256x64xf32>
    %62 = arith.addf %57, %61 : vector<256x64xf32>
    %63 = vector.shape_cast %51 : vector<32x8x128xf32> to vector<256x128xf32>
    %c2_50 = arith.constant 2 : index
    %c0_51 = arith.constant 0 : index
    %c0_52 = arith.constant 0 : index
    %64 = vector.load %arg4[%c2_50, %c0_51, %c0_52] : memref<3x128x64xf32, #tpu.memory_space<vmem>>, vector<1x128x64xf32>
    %65 = vector.shape_cast %64 : vector<1x128x64xf32> to vector<128x64xf32>
    %cst_53 = arith.constant dense<0.000000e+00> : vector<256x64xf32>
    %66 = tpu.matmul %63, %65, %cst_53 {dimension_numbers = #tpu.dot_dimension_numbers<[1], [0], [0], [1], [0, 0, 1, 1], [], []>} : vector<256x128xf32>, vector<128x64xf32>, vector<256x64xf32> -> vector<256x64xf32>
    %67 = arith.addf %62, %66 : vector<256x64xf32>
    %c0_54 = arith.constant 0 : index
    %c0_55 = arith.constant 0 : index
    %68 = vector.load %arg5[%c0_54, %c0_55] : memref<1x64xf32, #tpu.memory_space<vmem>>, vector<1x64xf32>
    %69 = vector.broadcast %68 : vector<1x64xf32> to vector<256x64xf32>
    %70 = arith.mulf %67, %69 : vector<256x64xf32>
    %c0_56 = arith.constant 0 : index
    %c0_57 = arith.constant 0 : index
    %71 = vector.load %arg6[%c0_56, %c0_57] : memref<1x64xf32, #tpu.memory_space<vmem>>, vector<1x64xf32>
    %72 = vector.broadcast %71 : vector<1x64xf32> to vector<256x64xf32>
    %73 = arith.addf %70, %72 : vector<256x64xf32>
    %cst_58 = arith.constant 0.000000e+00 : f32
    %74 = vector.broadcast %cst_58 : f32 to vector<256x64xf32>
    %75 = arith.maximumf %73, %74 : vector<256x64xf32>
    %76 = vector.shape_cast %75 : vector<256x64xf32> to vector<32x8x64xf32>
    %cst_59 = arith.constant 0.000000e+00 : f32
    %77 = vector.broadcast %cst_59 : f32 to vector<1x8x64xf32>
    %c0_60 = arith.constant 0 : index
    %c0_61 = arith.constant 0 : index
    %c0_62 = arith.constant 0 : index
    %78 = vector.load %arg26[%c0_60, %c0_61, %c0_62] : memref<34x8x64xf32, #tpu.memory_space<vmem>>, vector<1x8x64xf32>
    tpu.vector_store %arg26[%c0_60, %c0_61, %c0_62], %77 {strides = array<i32>} : memref<34x8x64xf32, #tpu.memory_space<vmem>>, vector<1x8x64xf32>,
    %c33 = arith.constant 33 : index
    %c0_63 = arith.constant 0 : index
    %c0_64 = arith.constant 0 : index
    %79 = vector.load %arg26[%c33, %c0_63, %c0_64] : memref<34x8x64xf32, #tpu.memory_space<vmem>>, vector<1x8x64xf32>
    tpu.vector_store %arg26[%c33, %c0_63, %c0_64], %77 {strides = array<i32>} : memref<34x8x64xf32, #tpu.memory_space<vmem>>, vector<1x8x64xf32>,
    %c1_65 = arith.constant 1 : index
    %c0_66 = arith.constant 0 : index
    %c0_67 = arith.constant 0 : index
    %80 = vector.load %arg26[%c1_65, %c0_66, %c0_67] : memref<34x8x64xf32, #tpu.memory_space<vmem>>, vector<32x8x64xf32>
    tpu.vector_store %arg26[%c1_65, %c0_66, %c0_67], %76 {strides = array<i32>} : memref<34x8x64xf32, #tpu.memory_space<vmem>>, vector<32x8x64xf32>,
    %c0_68 = arith.constant 0 : index
    %c0_69 = arith.constant 0 : index
    %c0_70 = arith.constant 0 : index
    %81 = vector.load %arg26[%c0_68, %c0_69, %c0_70] : memref<34x8x64xf32, #tpu.memory_space<vmem>>, vector<34x8x64xf32>
    %82 = vector.shape_cast %81 : vector<34x8x64xf32> to vector<17x2x8x64xf32>
    %83 = vector.extract_strided_slice %82 {offsets = [0, 0, 0, 0], sizes = [17, 1, 8, 64], strides = [1, 1, 1, 1]} : vector<17x2x8x64xf32> to vector<17x1x8x64xf32>
    %84 = vector.shape_cast %83 : vector<17x1x8x64xf32> to vector<17x8x64xf32>
    %85 = vector.extract_strided_slice %82 {offsets = [0, 1, 0, 0], sizes = [17, 1, 8, 64], strides = [1, 1, 1, 1]} : vector<17x2x8x64xf32> to vector<17x1x8x64xf32>
    %86 = vector.shape_cast %85 : vector<17x1x8x64xf32> to vector<17x8x64xf32>
    %87 = vector.extract_strided_slice %84 {offsets = [0, 0, 0], sizes = [16, 8, 64], strides = [1, 1, 1]} : vector<17x8x64xf32> to vector<16x8x64xf32>
    %88 = vector.extract_strided_slice %86 {offsets = [0, 0, 0], sizes = [16, 8, 64], strides = [1, 1, 1]} : vector<17x8x64xf32> to vector<16x8x64xf32>
    %89 = vector.extract_strided_slice %84 {offsets = [1, 0, 0], sizes = [16, 8, 64], strides = [1, 1, 1]} : vector<17x8x64xf32> to vector<16x8x64xf32>
    %cst_71 = arith.constant 0.000000e+00 : f32
    %90 = vector.broadcast %cst_71 : f32 to vector<128x64xf32>
    %91 = vector.shape_cast %87 : vector<16x8x64xf32> to vector<128x64xf32>
    %c0_72 = arith.constant 0 : index
    %c0_73 = arith.constant 0 : index
    %c0_74 = arith.constant 0 : index
    %92 = vector.load %arg7[%c0_72, %c0_73, %c0_74] : memref<3x64x64xf32, #tpu.memory_space<vmem>>, vector<1x64x64xf32>
    %93 = vector.shape_cast %92 : vector<1x64x64xf32> to vector<64x64xf32>
    %cst_75 = arith.constant dense<0.000000e+00> : vector<128x64xf32>
    %94 = tpu.matmul %91, %93, %cst_75 {dimension_numbers = #tpu.dot_dimension_numbers<[1], [0], [0], [1], [0, 0, 1, 1], [], []>} : vector<128x64xf32>, vector<64x64xf32>, vector<128x64xf32> -> vector<128x64xf32>
    %95 = arith.addf %90, %94 : vector<128x64xf32>
    %96 = vector.shape_cast %88 : vector<16x8x64xf32> to vector<128x64xf32>
    %c1_76 = arith.constant 1 : index
    %c0_77 = arith.constant 0 : index
    %c0_78 = arith.constant 0 : index
    %97 = vector.load %arg7[%c1_76, %c0_77, %c0_78] : memref<3x64x64xf32, #tpu.memory_space<vmem>>, vector<1x64x64xf32>
    %98 = vector.shape_cast %97 : vector<1x64x64xf32> to vector<64x64xf32>
    %cst_79 = arith.constant dense<0.000000e+00> : vector<128x64xf32>
    %99 = tpu.matmul %96, %98, %cst_79 {dimension_numbers = #tpu.dot_dimension_numbers<[1], [0], [0], [1], [0, 0, 1, 1], [], []>} : vector<128x64xf32>, vector<64x64xf32>, vector<128x64xf32> -> vector<128x64xf32>
    %100 = arith.addf %95, %99 : vector<128x64xf32>
    %101 = vector.shape_cast %89 : vector<16x8x64xf32> to vector<128x64xf32>
    %c2_80 = arith.constant 2 : index
    %c0_81 = arith.constant 0 : index
    %c0_82 = arith.constant 0 : index
    %102 = vector.load %arg7[%c2_80, %c0_81, %c0_82] : memref<3x64x64xf32, #tpu.memory_space<vmem>>, vector<1x64x64xf32>
    %103 = vector.shape_cast %102 : vector<1x64x64xf32> to vector<64x64xf32>
    %cst_83 = arith.constant dense<0.000000e+00> : vector<128x64xf32>
    %104 = tpu.matmul %101, %103, %cst_83 {dimension_numbers = #tpu.dot_dimension_numbers<[1], [0], [0], [1], [0, 0, 1, 1], [], []>} : vector<128x64xf32>, vector<64x64xf32>, vector<128x64xf32> -> vector<128x64xf32>
    %105 = arith.addf %100, %104 : vector<128x64xf32>
    %c0_84 = arith.constant 0 : index
    %c0_85 = arith.constant 0 : index
    %106 = vector.load %arg8[%c0_84, %c0_85] : memref<1x64xf32, #tpu.memory_space<vmem>>, vector<1x64xf32>
    %107 = vector.broadcast %106 : vector<1x64xf32> to vector<128x64xf32>
    %108 = arith.mulf %105, %107 : vector<128x64xf32>
    %c0_86 = arith.constant 0 : index
    %c0_87 = arith.constant 0 : index
    %109 = vector.load %arg9[%c0_86, %c0_87] : memref<1x64xf32, #tpu.memory_space<vmem>>, vector<1x64xf32>
    %110 = vector.broadcast %109 : vector<1x64xf32> to vector<128x64xf32>
    %111 = arith.addf %108, %110 : vector<128x64xf32>
    %cst_88 = arith.constant 0.000000e+00 : f32
    %112 = vector.broadcast %cst_88 : f32 to vector<128x64xf32>
    %113 = arith.maximumf %111, %112 : vector<128x64xf32>
    %114 = vector.shape_cast %113 : vector<128x64xf32> to vector<16x8x64xf32>
    %cst_89 = arith.constant 0.000000e+00 : f32
    %115 = vector.broadcast %cst_89 : f32 to vector<1x8x64xf32>
    %c0_90 = arith.constant 0 : index
    %c0_91 = arith.constant 0 : index
    %c0_92 = arith.constant 0 : index
    %116 = vector.load %arg27[%c0_90, %c0_91, %c0_92] : memref<18x8x64xf32, #tpu.memory_space<vmem>>, vector<1x8x64xf32>
    tpu.vector_store %arg27[%c0_90, %c0_91, %c0_92], %115 {strides = array<i32>} : memref<18x8x64xf32, #tpu.memory_space<vmem>>, vector<1x8x64xf32>,
    %c17 = arith.constant 17 : index
    %c0_93 = arith.constant 0 : index
    %c0_94 = arith.constant 0 : index
    %117 = vector.load %arg27[%c17, %c0_93, %c0_94] : memref<18x8x64xf32, #tpu.memory_space<vmem>>, vector<1x8x64xf32>
    tpu.vector_store %arg27[%c17, %c0_93, %c0_94], %115 {strides = array<i32>} : memref<18x8x64xf32, #tpu.memory_space<vmem>>, vector<1x8x64xf32>,
    %c1_95 = arith.constant 1 : index
    %c0_96 = arith.constant 0 : index
    %c0_97 = arith.constant 0 : index
    %118 = vector.load %arg27[%c1_95, %c0_96, %c0_97] : memref<18x8x64xf32, #tpu.memory_space<vmem>>, vector<16x8x64xf32>
    tpu.vector_store %arg27[%c1_95, %c0_96, %c0_97], %114 {strides = array<i32>} : memref<18x8x64xf32, #tpu.memory_space<vmem>>, vector<16x8x64xf32>,
    %c0_98 = arith.constant 0 : index
    %c0_99 = arith.constant 0 : index
    %c0_100 = arith.constant 0 : index
    %119 = vector.load %arg27[%c0_98, %c0_99, %c0_100] : memref<18x8x64xf32, #tpu.memory_space<vmem>>, vector<18x8x64xf32>
    %120 = vector.shape_cast %119 : vector<18x8x64xf32> to vector<9x2x8x64xf32>
    %121 = vector.extract_strided_slice %120 {offsets = [0, 0, 0, 0], sizes = [9, 1, 8, 64], strides = [1, 1, 1, 1]} : vector<9x2x8x64xf32> to vector<9x1x8x64xf32>
    %122 = vector.shape_cast %121 : vector<9x1x8x64xf32> to vector<9x8x64xf32>
    %123 = vector.extract_strided_slice %120 {offsets = [0, 1, 0, 0], sizes = [9, 1, 8, 64], strides = [1, 1, 1, 1]} : vector<9x2x8x64xf32> to vector<9x1x8x64xf32>
    %124 = vector.shape_cast %123 : vector<9x1x8x64xf32> to vector<9x8x64xf32>
    %125 = vector.extract_strided_slice %122 {offsets = [0, 0, 0], sizes = [8, 8, 64], strides = [1, 1, 1]} : vector<9x8x64xf32> to vector<8x8x64xf32>
    %126 = vector.extract_strided_slice %124 {offsets = [0, 0, 0], sizes = [8, 8, 64], strides = [1, 1, 1]} : vector<9x8x64xf32> to vector<8x8x64xf32>
    %127 = vector.extract_strided_slice %122 {offsets = [1, 0, 0], sizes = [8, 8, 64], strides = [1, 1, 1]} : vector<9x8x64xf32> to vector<8x8x64xf32>
    %cst_101 = arith.constant 0.000000e+00 : f32
    %128 = vector.broadcast %cst_101 : f32 to vector<64x32xf32>
    %129 = vector.shape_cast %125 : vector<8x8x64xf32> to vector<64x64xf32>
    %c0_102 = arith.constant 0 : index
    %c0_103 = arith.constant 0 : index
    %c0_104 = arith.constant 0 : index
    %130 = vector.load %arg10[%c0_102, %c0_103, %c0_104] : memref<3x64x32xf32, #tpu.memory_space<vmem>>, vector<1x64x32xf32>
    %131 = vector.shape_cast %130 : vector<1x64x32xf32> to vector<64x32xf32>
    %cst_105 = arith.constant dense<0.000000e+00> : vector<64x32xf32>
    %132 = tpu.matmul %129, %131, %cst_105 {dimension_numbers = #tpu.dot_dimension_numbers<[1], [0], [0], [1], [0, 0, 1, 1], [], []>} : vector<64x64xf32>, vector<64x32xf32>, vector<64x32xf32> -> vector<64x32xf32>
    %133 = arith.addf %128, %132 : vector<64x32xf32>
    %134 = vector.shape_cast %126 : vector<8x8x64xf32> to vector<64x64xf32>
    %c1_106 = arith.constant 1 : index
    %c0_107 = arith.constant 0 : index
    %c0_108 = arith.constant 0 : index
    %135 = vector.load %arg10[%c1_106, %c0_107, %c0_108] : memref<3x64x32xf32, #tpu.memory_space<vmem>>, vector<1x64x32xf32>
    %136 = vector.shape_cast %135 : vector<1x64x32xf32> to vector<64x32xf32>
    %cst_109 = arith.constant dense<0.000000e+00> : vector<64x32xf32>
    %137 = tpu.matmul %134, %136, %cst_109 {dimension_numbers = #tpu.dot_dimension_numbers<[1], [0], [0], [1], [0, 0, 1, 1], [], []>} : vector<64x64xf32>, vector<64x32xf32>, vector<64x32xf32> -> vector<64x32xf32>
    %138 = arith.addf %133, %137 : vector<64x32xf32>
    %139 = vector.shape_cast %127 : vector<8x8x64xf32> to vector<64x64xf32>
    %c2_110 = arith.constant 2 : index
    %c0_111 = arith.constant 0 : index
    %c0_112 = arith.constant 0 : index
    %140 = vector.load %arg10[%c2_110, %c0_111, %c0_112] : memref<3x64x32xf32, #tpu.memory_space<vmem>>, vector<1x64x32xf32>
    %141 = vector.shape_cast %140 : vector<1x64x32xf32> to vector<64x32xf32>
    %cst_113 = arith.constant dense<0.000000e+00> : vector<64x32xf32>
    %142 = tpu.matmul %139, %141, %cst_113 {dimension_numbers = #tpu.dot_dimension_numbers<[1], [0], [0], [1], [0, 0, 1, 1], [], []>} : vector<64x64xf32>, vector<64x32xf32>, vector<64x32xf32> -> vector<64x32xf32>
    %143 = arith.addf %138, %142 : vector<64x32xf32>
    %c0_114 = arith.constant 0 : index
    %c0_115 = arith.constant 0 : index
    %144 = vector.load %arg11[%c0_114, %c0_115] : memref<1x32xf32, #tpu.memory_space<vmem>>, vector<1x32xf32>
    %145 = vector.broadcast %144 : vector<1x32xf32> to vector<64x32xf32>
    %146 = arith.mulf %143, %145 : vector<64x32xf32>
    %c0_116 = arith.constant 0 : index
    %c0_117 = arith.constant 0 : index
    %147 = vector.load %arg12[%c0_116, %c0_117] : memref<1x32xf32, #tpu.memory_space<vmem>>, vector<1x32xf32>
    %148 = vector.broadcast %147 : vector<1x32xf32> to vector<64x32xf32>
    %149 = arith.addf %146, %148 : vector<64x32xf32>
    %cst_118 = arith.constant 0.000000e+00 : f32
    %150 = vector.broadcast %cst_118 : f32 to vector<64x32xf32>
    %151 = arith.maximumf %149, %150 : vector<64x32xf32>
    %152 = vector.shape_cast %151 : vector<64x32xf32> to vector<8x8x32xf32>
    %cst_119 = arith.constant 0.000000e+00 : f32
    %153 = vector.broadcast %cst_119 : f32 to vector<1x8x32xf32>
    %c0_120 = arith.constant 0 : index
    %c0_121 = arith.constant 0 : index
    %c0_122 = arith.constant 0 : index
    %154 = vector.load %arg28[%c0_120, %c0_121, %c0_122] : memref<10x8x32xf32, #tpu.memory_space<vmem>>, vector<1x8x32xf32>
    tpu.vector_store %arg28[%c0_120, %c0_121, %c0_122], %153 {strides = array<i32>} : memref<10x8x32xf32, #tpu.memory_space<vmem>>, vector<1x8x32xf32>,
    %c9 = arith.constant 9 : index
    %c0_123 = arith.constant 0 : index
    %c0_124 = arith.constant 0 : index
    %155 = vector.load %arg28[%c9, %c0_123, %c0_124] : memref<10x8x32xf32, #tpu.memory_space<vmem>>, vector<1x8x32xf32>
    tpu.vector_store %arg28[%c9, %c0_123, %c0_124], %153 {strides = array<i32>} : memref<10x8x32xf32, #tpu.memory_space<vmem>>, vector<1x8x32xf32>,
    %c1_125 = arith.constant 1 : index
    %c0_126 = arith.constant 0 : index
    %c0_127 = arith.constant 0 : index
    %156 = vector.load %arg28[%c1_125, %c0_126, %c0_127] : memref<10x8x32xf32, #tpu.memory_space<vmem>>, vector<8x8x32xf32>
    tpu.vector_store %arg28[%c1_125, %c0_126, %c0_127], %152 {strides = array<i32>} : memref<10x8x32xf32, #tpu.memory_space<vmem>>, vector<8x8x32xf32>,
    %c0_128 = arith.constant 0 : index
    %c0_129 = arith.constant 0 : index
    %c0_130 = arith.constant 0 : index
    %157 = vector.load %arg28[%c0_128, %c0_129, %c0_130] : memref<10x8x32xf32, #tpu.memory_space<vmem>>, vector<10x8x32xf32>
    %158 = vector.shape_cast %157 : vector<10x8x32xf32> to vector<5x2x8x32xf32>
    %159 = vector.extract_strided_slice %158 {offsets = [0, 0, 0, 0], sizes = [5, 1, 8, 32], strides = [1, 1, 1, 1]} : vector<5x2x8x32xf32> to vector<5x1x8x32xf32>
    %160 = vector.shape_cast %159 : vector<5x1x8x32xf32> to vector<5x8x32xf32>
    %161 = vector.extract_strided_slice %158 {offsets = [0, 1, 0, 0], sizes = [5, 1, 8, 32], strides = [1, 1, 1, 1]} : vector<5x2x8x32xf32> to vector<5x1x8x32xf32>
    %162 = vector.shape_cast %161 : vector<5x1x8x32xf32> to vector<5x8x32xf32>
    %163 = vector.extract_strided_slice %160 {offsets = [0, 0, 0], sizes = [4, 8, 32], strides = [1, 1, 1]} : vector<5x8x32xf32> to vector<4x8x32xf32>
    %164 = vector.extract_strided_slice %162 {offsets = [0, 0, 0], sizes = [4, 8, 32], strides = [1, 1, 1]} : vector<5x8x32xf32> to vector<4x8x32xf32>
    %165 = vector.extract_strided_slice %160 {offsets = [1, 0, 0], sizes = [4, 8, 32], strides = [1, 1, 1]} : vector<5x8x32xf32> to vector<4x8x32xf32>
    %cst_131 = arith.constant 0.000000e+00 : f32
    %166 = vector.broadcast %cst_131 : f32 to vector<32x32xf32>
    %167 = vector.shape_cast %163 : vector<4x8x32xf32> to vector<32x32xf32>
    %c0_132 = arith.constant 0 : index
    %c0_133 = arith.constant 0 : index
    %c0_134 = arith.constant 0 : index
    %168 = vector.load %arg13[%c0_132, %c0_133, %c0_134] : memref<3x32x32xf32, #tpu.memory_space<vmem>>, vector<1x32x32xf32>
    %169 = vector.shape_cast %168 : vector<1x32x32xf32> to vector<32x32xf32>
    %cst_135 = arith.constant dense<0.000000e+00> : vector<32x32xf32>
    %170 = tpu.matmul %167, %169, %cst_135 {dimension_numbers = #tpu.dot_dimension_numbers<[1], [0], [0], [1], [0, 0, 1, 1], [], []>} : vector<32x32xf32>, vector<32x32xf32>, vector<32x32xf32> -> vector<32x32xf32>
    %171 = arith.addf %166, %170 : vector<32x32xf32>
    %172 = vector.shape_cast %164 : vector<4x8x32xf32> to vector<32x32xf32>
    %c1_136 = arith.constant 1 : index
    %c0_137 = arith.constant 0 : index
    %c0_138 = arith.constant 0 : index
    %173 = vector.load %arg13[%c1_136, %c0_137, %c0_138] : memref<3x32x32xf32, #tpu.memory_space<vmem>>, vector<1x32x32xf32>
    %174 = vector.shape_cast %173 : vector<1x32x32xf32> to vector<32x32xf32>
    %cst_139 = arith.constant dense<0.000000e+00> : vector<32x32xf32>
    %175 = tpu.matmul %172, %174, %cst_139 {dimension_numbers = #tpu.dot_dimension_numbers<[1], [0], [0], [1], [0, 0, 1, 1], [], []>} : vector<32x32xf32>, vector<32x32xf32>, vector<32x32xf32> -> vector<32x32xf32>
    %176 = arith.addf %171, %175 : vector<32x32xf32>
    %177 = vector.shape_cast %165 : vector<4x8x32xf32> to vector<32x32xf32>
    %c2_140 = arith.constant 2 : index
    %c0_141 = arith.constant 0 : index
    %c0_142 = arith.constant 0 : index
    %178 = vector.load %arg13[%c2_140, %c0_141, %c0_142] : memref<3x32x32xf32, #tpu.memory_space<vmem>>, vector<1x32x32xf32>
    %179 = vector.shape_cast %178 : vector<1x32x32xf32> to vector<32x32xf32>
    %cst_143 = arith.constant dense<0.000000e+00> : vector<32x32xf32>
    %180 = tpu.matmul %177, %179, %cst_143 {dimension_numbers = #tpu.dot_dimension_numbers<[1], [0], [0], [1], [0, 0, 1, 1], [], []>} : vector<32x32xf32>, vector<32x32xf32>, vector<32x32xf32> -> vector<32x32xf32>
    %181 = arith.addf %176, %180 : vector<32x32xf32>
    %c0_144 = arith.constant 0 : index
    %c0_145 = arith.constant 0 : index
    %182 = vector.load %arg14[%c0_144, %c0_145] : memref<1x32xf32, #tpu.memory_space<vmem>>, vector<1x32xf32>
    %183 = vector.broadcast %182 : vector<1x32xf32> to vector<32x32xf32>
    %184 = arith.mulf %181, %183 : vector<32x32xf32>
    %c0_146 = arith.constant 0 : index
    %c0_147 = arith.constant 0 : index
    %185 = vector.load %arg15[%c0_146, %c0_147] : memref<1x32xf32, #tpu.memory_space<vmem>>, vector<1x32xf32>
    %186 = vector.broadcast %185 : vector<1x32xf32> to vector<32x32xf32>
    %187 = arith.addf %184, %186 : vector<32x32xf32>
    %cst_148 = arith.constant 0.000000e+00 : f32
    %188 = vector.broadcast %cst_148 : f32 to vector<32x32xf32>
    %189 = arith.maximumf %187, %188 : vector<32x32xf32>
    %190 = vector.shape_cast %189 : vector<32x32xf32> to vector<4x8x32xf32>
    %cst_149 = arith.constant 0.000000e+00 : f32
    %191 = vector.broadcast %cst_149 : f32 to vector<1x8x32xf32>
    %c0_150 = arith.constant 0 : index
    %c0_151 = arith.constant 0 : index
    %c0_152 = arith.constant 0 : index
    %192 = vector.load %arg29[%c0_150, %c0_151, %c0_152] : memref<6x8x32xf32, #tpu.memory_space<vmem>>, vector<1x8x32xf32>
    tpu.vector_store %arg29[%c0_150, %c0_151, %c0_152], %191 {strides = array<i32>} : memref<6x8x32xf32, #tpu.memory_space<vmem>>, vector<1x8x32xf32>,
    %c5 = arith.constant 5 : index
    %c0_153 = arith.constant 0 : index
    %c0_154 = arith.constant 0 : index
    %193 = vector.load %arg29[%c5, %c0_153, %c0_154] : memref<6x8x32xf32, #tpu.memory_space<vmem>>, vector<1x8x32xf32>
    tpu.vector_store %arg29[%c5, %c0_153, %c0_154], %191 {strides = array<i32>} : memref<6x8x32xf32, #tpu.memory_space<vmem>>, vector<1x8x32xf32>,
    %c1_155 = arith.constant 1 : index
    %c0_156 = arith.constant 0 : index
    %c0_157 = arith.constant 0 : index
    %194 = vector.load %arg29[%c1_155, %c0_156, %c0_157] : memref<6x8x32xf32, #tpu.memory_space<vmem>>, vector<4x8x32xf32>
    tpu.vector_store %arg29[%c1_155, %c0_156, %c0_157], %190 {strides = array<i32>} : memref<6x8x32xf32, #tpu.memory_space<vmem>>, vector<4x8x32xf32>,
    %c0_158 = arith.constant 0 : index
    %c0_159 = arith.constant 0 : index
    %c0_160 = arith.constant 0 : index
    %195 = vector.load %arg29[%c0_158, %c0_159, %c0_160] : memref<6x8x32xf32, #tpu.memory_space<vmem>>, vector<6x8x32xf32>
    %196 = vector.shape_cast %195 : vector<6x8x32xf32> to vector<3x2x8x32xf32>
    %197 = vector.extract_strided_slice %196 {offsets = [0, 0, 0, 0], sizes = [3, 1, 8, 32], strides = [1, 1, 1, 1]} : vector<3x2x8x32xf32> to vector<3x1x8x32xf32>
    %198 = vector.shape_cast %197 : vector<3x1x8x32xf32> to vector<3x8x32xf32>
    %199 = vector.extract_strided_slice %196 {offsets = [0, 1, 0, 0], sizes = [3, 1, 8, 32], strides = [1, 1, 1, 1]} : vector<3x2x8x32xf32> to vector<3x1x8x32xf32>
    %200 = vector.shape_cast %199 : vector<3x1x8x32xf32> to vector<3x8x32xf32>
    %201 = vector.extract_strided_slice %198 {offsets = [0, 0, 0], sizes = [2, 8, 32], strides = [1, 1, 1]} : vector<3x8x32xf32> to vector<2x8x32xf32>
    %202 = vector.extract_strided_slice %200 {offsets = [0, 0, 0], sizes = [2, 8, 32], strides = [1, 1, 1]} : vector<3x8x32xf32> to vector<2x8x32xf32>
    %203 = vector.extract_strided_slice %198 {offsets = [1, 0, 0], sizes = [2, 8, 32], strides = [1, 1, 1]} : vector<3x8x32xf32> to vector<2x8x32xf32>
    %cst_161 = arith.constant 0.000000e+00 : f32
    %204 = vector.broadcast %cst_161 : f32 to vector<16x32xf32>
    %205 = vector.shape_cast %201 : vector<2x8x32xf32> to vector<16x32xf32>
    %c0_162 = arith.constant 0 : index
    %c0_163 = arith.constant 0 : index
    %c0_164 = arith.constant 0 : index
    %206 = vector.load %arg16[%c0_162, %c0_163, %c0_164] : memref<3x32x32xf32, #tpu.memory_space<vmem>>, vector<1x32x32xf32>
    %207 = vector.shape_cast %206 : vector<1x32x32xf32> to vector<32x32xf32>
    %cst_165 = arith.constant dense<0.000000e+00> : vector<16x32xf32>
    %208 = tpu.matmul %205, %207, %cst_165 {dimension_numbers = #tpu.dot_dimension_numbers<[1], [0], [0], [1], [0, 0, 1, 1], [], []>} : vector<16x32xf32>, vector<32x32xf32>, vector<16x32xf32> -> vector<16x32xf32>
    %209 = arith.addf %204, %208 : vector<16x32xf32>
    %210 = vector.shape_cast %202 : vector<2x8x32xf32> to vector<16x32xf32>
    %c1_166 = arith.constant 1 : index
    %c0_167 = arith.constant 0 : index
    %c0_168 = arith.constant 0 : index
    %211 = vector.load %arg16[%c1_166, %c0_167, %c0_168] : memref<3x32x32xf32, #tpu.memory_space<vmem>>, vector<1x32x32xf32>
    %212 = vector.shape_cast %211 : vector<1x32x32xf32> to vector<32x32xf32>
    %cst_169 = arith.constant dense<0.000000e+00> : vector<16x32xf32>
    %213 = tpu.matmul %210, %212, %cst_169 {dimension_numbers = #tpu.dot_dimension_numbers<[1], [0], [0], [1], [0, 0, 1, 1], [], []>} : vector<16x32xf32>, vector<32x32xf32>, vector<16x32xf32> -> vector<16x32xf32>
    %214 = arith.addf %209, %213 : vector<16x32xf32>
    %215 = vector.shape_cast %203 : vector<2x8x32xf32> to vector<16x32xf32>
    %c2_170 = arith.constant 2 : index
    %c0_171 = arith.constant 0 : index
    %c0_172 = arith.constant 0 : index
    %216 = vector.load %arg16[%c2_170, %c0_171, %c0_172] : memref<3x32x32xf32, #tpu.memory_space<vmem>>, vector<1x32x32xf32>
    %217 = vector.shape_cast %216 : vector<1x32x32xf32> to vector<32x32xf32>
    %cst_173 = arith.constant dense<0.000000e+00> : vector<16x32xf32>
    %218 = tpu.matmul %215, %217, %cst_173 {dimension_numbers = #tpu.dot_dimension_numbers<[1], [0], [0], [1], [0, 0, 1, 1], [], []>} : vector<16x32xf32>, vector<32x32xf32>, vector<16x32xf32> -> vector<16x32xf32>
    %219 = arith.addf %214, %218 : vector<16x32xf32>
    %c0_174 = arith.constant 0 : index
    %c0_175 = arith.constant 0 : index
    %220 = vector.load %arg17[%c0_174, %c0_175] : memref<1x32xf32, #tpu.memory_space<vmem>>, vector<1x32xf32>
    %221 = vector.broadcast %220 : vector<1x32xf32> to vector<16x32xf32>
    %222 = arith.mulf %219, %221 : vector<16x32xf32>
    %c0_176 = arith.constant 0 : index
    %c0_177 = arith.constant 0 : index
    %223 = vector.load %arg18[%c0_176, %c0_177] : memref<1x32xf32, #tpu.memory_space<vmem>>, vector<1x32xf32>
    %224 = vector.broadcast %223 : vector<1x32xf32> to vector<16x32xf32>
    %225 = arith.addf %222, %224 : vector<16x32xf32>
    %cst_178 = arith.constant 0.000000e+00 : f32
    %226 = vector.broadcast %cst_178 : f32 to vector<16x32xf32>
    %227 = arith.maximumf %225, %226 : vector<16x32xf32>
    %228 = vector.shape_cast %227 : vector<16x32xf32> to vector<2x8x32xf32>
    %229 = vector.shape_cast %228 : vector<2x8x32xf32> to vector<16x32xf32>
    %c0_179 = arith.constant 0 : index
    %c0_180 = arith.constant 0 : index
    %230 = vector.load %arg19[%c0_179, %c0_180] : memref<32x96xf32, #tpu.memory_space<vmem>>, vector<32x96xf32>
    %cst_181 = arith.constant dense<0.000000e+00> : vector<16x96xf32>
    %231 = tpu.matmul %229, %230, %cst_181 {dimension_numbers = #tpu.dot_dimension_numbers<[1], [0], [0], [1], [0, 0, 1, 1], [], []>} : vector<16x32xf32>, vector<32x96xf32>, vector<16x96xf32> -> vector<16x96xf32>
    %c0_182 = arith.constant 0 : index
    %c0_183 = arith.constant 0 : index
    %232 = vector.load %arg21[%c0_182, %c0_183] : memref<1x96xf32, #tpu.memory_space<vmem>>, vector<1x96xf32>
    %233 = vector.broadcast %232 : vector<1x96xf32> to vector<16x96xf32>
    %234 = arith.addf %231, %233 : vector<16x96xf32>
    %235 = vector.shape_cast %234 : vector<16x96xf32> to vector<2x8x96xf32>
    %cst_184 = arith.constant 0.000000e+00 : f32
    %236 = vector.broadcast %cst_184 : f32 to vector<8x32xf32>
    %237 = vector.extract_strided_slice %235 {offsets = [0, 0, 0], sizes = [1, 8, 96], strides = [1, 1, 1]} : vector<2x8x96xf32> to vector<1x8x96xf32>
    %238 = vector.shape_cast %237 : vector<1x8x96xf32> to vector<8x96xf32>
    %c0_185 = arith.constant 0 : index
    %c0_186 = arith.constant 0 : index
    %239 = vector.load %arg20[%c0_185, %c0_186] : memref<32x96xf32, #tpu.memory_space<vmem>>, vector<32x96xf32>
    %cst_187 = arith.constant dense<0.000000e+00> : vector<8x96xf32>
    %240 = tpu.matmul %236, %239, %cst_187 {dimension_numbers = #tpu.dot_dimension_numbers<[1], [0], [0], [1], [0, 0, 1, 1], [], []>} : vector<8x32xf32>, vector<32x96xf32>, vector<8x96xf32> -> vector<8x96xf32>
    %c0_188 = arith.constant 0 : index
    %c0_189 = arith.constant 0 : index
    %241 = vector.load %arg22[%c0_188, %c0_189] : memref<1x96xf32, #tpu.memory_space<vmem>>, vector<1x96xf32>
    %242 = vector.broadcast %241 : vector<1x96xf32> to vector<8x96xf32>
    %243 = arith.addf %240, %242 : vector<8x96xf32>
    %244 = vector.extract_strided_slice %238 {offsets = [0, 0], sizes = [8, 32], strides = [1, 1]} : vector<8x96xf32> to vector<8x32xf32>
    %245 = vector.extract_strided_slice %243 {offsets = [0, 0], sizes = [8, 32], strides = [1, 1]} : vector<8x96xf32> to vector<8x32xf32>
    %246 = arith.addf %244, %245 : vector<8x32xf32>
    %247 = arith.negf %246 : vector<8x32xf32>
    %248 = math.exp %247 : vector<8x32xf32>
    %cst_190 = arith.constant 1.000000e+00 : f32
    %249 = vector.broadcast %cst_190 : f32 to vector<8x32xf32>
    %250 = arith.addf %249, %248 : vector<8x32xf32>
    %251 = arith.divf %249, %250 : vector<8x32xf32>
    %252 = vector.extract_strided_slice %238 {offsets = [0, 32], sizes = [8, 32], strides = [1, 1]} : vector<8x96xf32> to vector<8x32xf32>
    %253 = vector.extract_strided_slice %243 {offsets = [0, 32], sizes = [8, 32], strides = [1, 1]} : vector<8x96xf32> to vector<8x32xf32>
    %254 = arith.addf %252, %253 : vector<8x32xf32>
    %255 = arith.negf %254 : vector<8x32xf32>
    %256 = math.exp %255 : vector<8x32xf32>
    %cst_191 = arith.constant 1.000000e+00 : f32
    %257 = vector.broadcast %cst_191 : f32 to vector<8x32xf32>
    %258 = arith.addf %257, %256 : vector<8x32xf32>
    %259 = arith.divf %257, %258 : vector<8x32xf32>
    %260 = vector.extract_strided_slice %238 {offsets = [0, 64], sizes = [8, 32], strides = [1, 1]} : vector<8x96xf32> to vector<8x32xf32>
    %261 = vector.extract_strided_slice %243 {offsets = [0, 64], sizes = [8, 32], strides = [1, 1]} : vector<8x96xf32> to vector<8x32xf32>
    %262 = arith.mulf %251, %261 : vector<8x32xf32>
    %263 = arith.addf %260, %262 : vector<8x32xf32>
    %264 = math.tanh %263 : vector<8x32xf32>
    %cst_192 = arith.constant 1.000000e+00 : f32
    %265 = vector.broadcast %cst_192 : f32 to vector<8x32xf32>
    %266 = arith.subf %265, %259 : vector<8x32xf32>
    %267 = arith.mulf %266, %264 : vector<8x32xf32>
    %268 = arith.mulf %259, %236 : vector<8x32xf32>
    %269 = arith.addf %267, %268 : vector<8x32xf32>
    %270 = vector.extract_strided_slice %235 {offsets = [1, 0, 0], sizes = [1, 8, 96], strides = [1, 1, 1]} : vector<2x8x96xf32> to vector<1x8x96xf32>
    %271 = vector.shape_cast %270 : vector<1x8x96xf32> to vector<8x96xf32>
    %c0_193 = arith.constant 0 : index
    %c0_194 = arith.constant 0 : index
    %272 = vector.load %arg20[%c0_193, %c0_194] : memref<32x96xf32, #tpu.memory_space<vmem>>, vector<32x96xf32>
    %cst_195 = arith.constant dense<0.000000e+00> : vector<8x96xf32>
    %273 = tpu.matmul %269, %272, %cst_195 {dimension_numbers = #tpu.dot_dimension_numbers<[1], [0], [0], [1], [0, 0, 1, 1], [], []>} : vector<8x32xf32>, vector<32x96xf32>, vector<8x96xf32> -> vector<8x96xf32>
    %c0_196 = arith.constant 0 : index
    %c0_197 = arith.constant 0 : index
    %274 = vector.load %arg22[%c0_196, %c0_197] : memref<1x96xf32, #tpu.memory_space<vmem>>, vector<1x96xf32>
    %275 = vector.broadcast %274 : vector<1x96xf32> to vector<8x96xf32>
    %276 = arith.addf %273, %275 : vector<8x96xf32>
    %277 = vector.extract_strided_slice %271 {offsets = [0, 0], sizes = [8, 32], strides = [1, 1]} : vector<8x96xf32> to vector<8x32xf32>
    %278 = vector.extract_strided_slice %276 {offsets = [0, 0], sizes = [8, 32], strides = [1, 1]} : vector<8x96xf32> to vector<8x32xf32>
    %279 = arith.addf %277, %278 : vector<8x32xf32>
    %280 = arith.negf %279 : vector<8x32xf32>
    %281 = math.exp %280 : vector<8x32xf32>
    %cst_198 = arith.constant 1.000000e+00 : f32
    %282 = vector.broadcast %cst_198 : f32 to vector<8x32xf32>
    %283 = arith.addf %282, %281 : vector<8x32xf32>
    %284 = arith.divf %282, %283 : vector<8x32xf32>
    %285 = vector.extract_strided_slice %271 {offsets = [0, 32], sizes = [8, 32], strides = [1, 1]} : vector<8x96xf32> to vector<8x32xf32>
    %286 = vector.extract_strided_slice %276 {offsets = [0, 32], sizes = [8, 32], strides = [1, 1]} : vector<8x96xf32> to vector<8x32xf32>
    %287 = arith.addf %285, %286 : vector<8x32xf32>
    %288 = arith.negf %287 : vector<8x32xf32>
    %289 = math.exp %288 : vector<8x32xf32>
    %cst_199 = arith.constant 1.000000e+00 : f32
    %290 = vector.broadcast %cst_199 : f32 to vector<8x32xf32>
    %291 = arith.addf %290, %289 : vector<8x32xf32>
    %292 = arith.divf %290, %291 : vector<8x32xf32>
    %293 = vector.extract_strided_slice %271 {offsets = [0, 64], sizes = [8, 32], strides = [1, 1]} : vector<8x96xf32> to vector<8x32xf32>
    %294 = vector.extract_strided_slice %276 {offsets = [0, 64], sizes = [8, 32], strides = [1, 1]} : vector<8x96xf32> to vector<8x32xf32>
    %295 = arith.mulf %284, %294 : vector<8x32xf32>
    %296 = arith.addf %293, %295 : vector<8x32xf32>
    %297 = math.tanh %296 : vector<8x32xf32>
    %cst_200 = arith.constant 1.000000e+00 : f32
    %298 = vector.broadcast %cst_200 : f32 to vector<8x32xf32>
    %299 = arith.subf %298, %292 : vector<8x32xf32>
    %300 = arith.mulf %299, %297 : vector<8x32xf32>
    %301 = arith.mulf %292, %269 : vector<8x32xf32>
    %302 = arith.addf %300, %301 : vector<8x32xf32>
    %303 = vector.extract_strided_slice %302 {offsets = [0, 0], sizes = [2, 32], strides = [1, 1]} : vector<8x32xf32> to vector<2x32xf32>
    %c0_201 = arith.constant 0 : index
    %c0_202 = arith.constant 0 : index
    %304 = vector.load %arg23[%c0_201, %c0_202] : memref<2x32xf32, #tpu.memory_space<vmem>>, vector<2x32xf32>
    tpu.vector_store %arg23[%c0_201, %c0_202], %303 {strides = array<i32>} : memref<2x32xf32, #tpu.memory_space<vmem>>, vector<2x32xf32>,
    return
  }
}

</mosaic_0001>

<llo_original>
// kernel: _lambda_.1
$region0: #{_lambda_.1}
  #allocation0 [shape = 'u32[]', space=smem, size = 0x4, offset = 0x4, fixed_abs, tag = 'smem constant byte address 0x4 - core index']
  #allocation1 [shape = 'u32[144,128]{1,0:T(1,128)}', space=vmem, size = 0x12000, scoped, tag = 'internal scratch']
  #allocation2 [shape = 'f32[130,8,32]{2,1,0:T(8,128)}', space=vmem, size = 0x82000, scoped, tag = 'scratch operand']
  #allocation3 [shape = 'f32[66,8,128]{2,1,0:T(8,128)}', space=vmem, size = 0x42000, scoped, tag = 'scratch operand']
  #allocation4 [shape = 'f32[34,8,64]{2,1,0:T(8,128)}', space=vmem, size = 0x22000, scoped, tag = 'scratch operand']
  #allocation5 [shape = 'f32[18,8,64]{2,1,0:T(8,128)}', space=vmem, size = 0x12000, scoped, tag = 'scratch operand']
  #allocation6 [shape = 'f32[10,8,32]{2,1,0:T(8,128)}', space=vmem, size = 0xa000, scoped, tag = 'scratch operand']
  #allocation7 [shape = 'f32[6,8,32]{2,1,0:T(8,128)}', space=vmem, size = 0x6000, scoped, tag = 'scratch operand']
  %s0 = inlined_call_operand.vmem [shape: f32[128,8,32], index: 0, kind: input, shape index: {}]
  %s1 = inlined_call_operand.vmem [shape: f32[3,32,128], index: 1, kind: input, shape index: {}]
  %s2 = inlined_call_operand.vmem [shape: f32[1,128], index: 2, kind: input, shape index: {}]
  %s3 = inlined_call_operand.vmem [shape: f32[1,128], index: 3, kind: input, shape index: {}]
  %s4 = inlined_call_operand.vmem [shape: f32[3,128,64], index: 4, kind: input, shape index: {}]
  %s5 = inlined_call_operand.vmem [shape: f32[1,64], index: 5, kind: input, shape index: {}]
  %s6 = inlined_call_operand.vmem [shape: f32[1,64], index: 6, kind: input, shape index: {}]
  %s7 = inlined_call_operand.vmem [shape: f32[3,64,64], index: 7, kind: input, shape index: {}]
  %s8 = inlined_call_operand.vmem [shape: f32[1,64], index: 8, kind: input, shape index: {}]
  %s9 = inlined_call_operand.vmem [shape: f32[1,64], index: 9, kind: input, shape index: {}]
  %s10 = inlined_call_operand.vmem [shape: f32[3,64,32], index: 10, kind: input, shape index: {}]
  %s11 = inlined_call_operand.vmem [shape: f32[1,32], index: 11, kind: input, shape index: {}]
  %s12 = inlined_call_operand.vmem [shape: f32[1,32], index: 12, kind: input, shape index: {}]
  %s13 = inlined_call_operand.vmem [shape: f32[3,32,32], index: 13, kind: input, shape index: {}]
  %s14 = inlined_call_operand.vmem [shape: f32[1,32], index: 14, kind: input, shape index: {}]
  %s15 = inlined_call_operand.vmem [shape: f32[1,32], index: 15, kind: input, shape index: {}]
  %s16 = inlined_call_operand.vmem [shape: f32[3,32,32], index: 16, kind: input, shape index: {}]
  %s17 = inlined_call_operand.vmem [shape: f32[1,32], index: 17, kind: input, shape index: {}]
  %s18 = inlined_call_operand.vmem [shape: f32[1,32], index: 18, kind: input, shape index: {}]
  %s19 = inlined_call_operand.vmem [shape: f32[32,96], index: 19, kind: input, shape index: {}]
  %s20 = inlined_call_operand.vmem [shape: f32[32,96], index: 20, kind: input, shape index: {}]
  %s21 = inlined_call_operand.vmem [shape: f32[1,96], index: 21, kind: input, shape index: {}]
  %s22 = inlined_call_operand.vmem [shape: f32[1,96], index: 22, kind: input, shape index: {}]
  %s23 = inlined_call_operand.hbm [shape: f32[2,32], index: 23, kind: output, shape index: {}]
  %s24 = sld [smem:[#allocation0]]
  $region102: #{_lambda_.1} parent=0
    _
  %s26 = ssub.s32 1, %s24
  %s27 = scalar_select 0, %s26, %s24
  $region1: #{_lambda_.1} parent=0
    #allocation8 [shape = 'u8[1024]{0}', space=vmem, size = 0x400, scoped, tag = 'output window, operand 0, single buffered']
    #allocation9 [shape = 's32[1]{0}', space=sflag, size = 0x4, scoped, tag = 'scoped memory for _lambda_.1']
    %28 = vsyncpa [#allocation9], 0
    // Predicated region
    $region2: #{_lambda_.1} parent=1 // pred_check
      _
    $region3: #{_lambda_.1} parent=1 // pred_check_branch
      %30 = sbr.rel (0) target = $region5
    $region4: #{_lambda_.1} parent=1 // pred_region
      _
    $region5: #{_lambda_.1} parent=1 // pred_fallthru
      _
    // Predicated region
    $region6: #{_lambda_.1} parent=1 // pred_check
      _
    $region7: #{_lambda_.1} parent=1 // pred_check_branch
      %32 = sbr.rel (0) target = $region9
    $region8: #{_lambda_.1} parent=1 // pred_region
      _
    $region9: #{_lambda_.1} parent=1 // pred_fallthru
      _
    // Predicated region
    $region10: #{_lambda_.1} parent=1 // pred_check
      _
    $region11: #{_lambda_.1} parent=1 // pred_check_branch
      %34 = sbr.rel (0) target = $region13
    $region12: #{_lambda_.1} parent=1 // pred_region
      _
    $region13: #{_lambda_.1} parent=1 // pred_fallthru
      _
    // Predicated region
    $region14: #{_lambda_.1} parent=1 // pred_check
      _
    $region15: #{_lambda_.1} parent=1 // pred_check_branch
      %36 = sbr.rel (0) target = $region17
    $region16: #{_lambda_.1} parent=1 // pred_region
      _
    $region17: #{_lambda_.1} parent=1 // pred_fallthru
      _
    // Predicated region
    $region18: #{_lambda_.1} parent=1 // pred_check
      _
    $region19: #{_lambda_.1} parent=1 // pred_check_branch
      %38 = sbr.rel (0) target = $region21
    $region20: #{_lambda_.1} parent=1 // pred_region
      _
    $region21: #{_lambda_.1} parent=1 // pred_fallthru
      _
    // Predicated region
    $region22: #{_lambda_.1} parent=1 // pred_check
      _
    $region23: #{_lambda_.1} parent=1 // pred_check_branch
      %40 = sbr.rel (0) target = $region25
    $region24: #{_lambda_.1} parent=1 // pred_region
      _
    $region25: #{_lambda_.1} parent=1 // pred_fallthru
      _
    // Predicated region
    $region26: #{_lambda_.1} parent=1 // pred_check
      _
    $region27: #{_lambda_.1} parent=1 // pred_check_branch
      %42 = sbr.rel (0) target = $region29
    $region28: #{_lambda_.1} parent=1 // pred_region
      _
    $region29: #{_lambda_.1} parent=1 // pred_fallthru
      _
    // Predicated region
    $region30: #{_lambda_.1} parent=1 // pred_check
      _
    $region31: #{_lambda_.1} parent=1 // pred_check_branch
      %44 = sbr.rel (0) target = $region33
    $region32: #{_lambda_.1} parent=1 // pred_region
      _
    $region33: #{_lambda_.1} parent=1 // pred_fallthru
      _
    // Predicated region
    $region34: #{_lambda_.1} parent=1 // pred_check
      _
    $region35: #{_lambda_.1} parent=1 // pred_check_branch
      %46 = sbr.rel (0) target = $region37
    $region36: #{_lambda_.1} parent=1 // pred_region
      _
    $region37: #{_lambda_.1} parent=1 // pred_fallthru
      _
    // Predicated region
    $region38: #{_lambda_.1} parent=1 // pred_check
      _
    $region39: #{_lambda_.1} parent=1 // pred_check_branch
      %48 = sbr.rel (0) target = $region41
    $region40: #{_lambda_.1} parent=1 // pred_region
      _
    $region41: #{_lambda_.1} parent=1 // pred_fallthru
      _
    // Predicated region
    $region42: #{_lambda_.1} parent=1 // pred_check
      _
    $region43: #{_lambda_.1} parent=1 // pred_check_branch
      %50 = sbr.rel (0) target = $region45
    $region44: #{_lambda_.1} parent=1 // pred_region
      _
    $region45: #{_lambda_.1} parent=1 // pred_fallthru
      _
    // Predicated region
    $region46: #{_lambda_.1} parent=1 // pred_check
      _
    $region47: #{_lambda_.1} parent=1 // pred_check_branch
      %52 = sbr.rel (0) target = $region49
    $region48: #{_lambda_.1} parent=1 // pred_region
      _
    $region49: #{_lambda_.1} parent=1 // pred_fallthru
      _
    // Predicated region
    $region50: #{_lambda_.1} parent=1 // pred_check
      _
    $region51: #{_lambda_.1} parent=1 // pred_check_branch
      %54 = sbr.rel (0) target = $region53
    $region52: #{_lambda_.1} parent=1 // pred_region
      _
    $region53: #{_lambda_.1} parent=1 // pred_fallthru
      _
    // Predicated region
    $region54: #{_lambda_.1} parent=1 // pred_check
      _
    $region55: #{_lambda_.1} parent=1 // pred_check_branch
      %56 = sbr.rel (0) target = $region57
    $region56: #{_lambda_.1} parent=1 // pred_region
      _
    $region57: #{_lambda_.1} parent=1 // pred_fallthru
      _
    // Predicated region
    $region58: #{_lambda_.1} parent=1 // pred_check
      _
    $region59: #{_lambda_.1} parent=1 // pred_check_branch
      %58 = sbr.rel (0) target = $region61
    $region60: #{_lambda_.1} parent=1 // pred_region
      _
    $region61: #{_lambda_.1} parent=1 // pred_fallthru
      _
    // Predicated region
    $region62: #{_lambda_.1} parent=1 // pred_check
      _
    $region63: #{_lambda_.1} parent=1 // pred_check_branch
      %60 = sbr.rel (0) target = $region65
    $region64: #{_lambda_.1} parent=1 // pred_region
      _
    $region65: #{_lambda_.1} parent=1 // pred_fallthru
      _
    // Predicated region
    $region66: #{_lambda_.1} parent=1 // pred_check
      _
    $region67: #{_lambda_.1} parent=1 // pred_check_branch
      %62 = sbr.rel (0) target = $region69
    $region68: #{_lambda_.1} parent=1 // pred_region
      _
    $region69: #{_lambda_.1} parent=1 // pred_fallthru
      _
    // Predicated region
    $region70: #{_lambda_.1} parent=1 // pred_check
      _
    $region71: #{_lambda_.1} parent=1 // pred_check_branch
      %64 = sbr.rel (0) target = $region73
    $region72: #{_lambda_.1} parent=1 // pred_region
      _
    $region73: #{_lambda_.1} parent=1 // pred_fallthru
      _
    // Predicated region
    $region74: #{_lambda_.1} parent=1 // pred_check
      _
    $region75: #{_lambda_.1} parent=1 // pred_check_branch
      %66 = sbr.rel (0) target = $region77
    $region76: #{_lambda_.1} parent=1 // pred_region
      _
    $region77: #{_lambda_.1} parent=1 // pred_fallthru
      _
    // Predicated region
    $region78: #{_lambda_.1} parent=1 // pred_check
      _
    $region79: #{_lambda_.1} parent=1 // pred_check_branch
      %68 = sbr.rel (0) target = $region81
    $region80: #{_lambda_.1} parent=1 // pred_region
      _
    $region81: #{_lambda_.1} parent=1 // pred_fallthru
      _
    // Predicated region
    $region82: #{_lambda_.1} parent=1 // pred_check
      _
    $region83: #{_lambda_.1} parent=1 // pred_check_branch
      %70 = sbr.rel (0) target = $region85
    $region84: #{_lambda_.1} parent=1 // pred_region
      _
    $region85: #{_lambda_.1} parent=1 // pred_fallthru
      _
    // Predicated region
    $region86: #{_lambda_.1} parent=1 // pred_check
      _
    $region87: #{_lambda_.1} parent=1 // pred_check_branch
      %72 = sbr.rel (0) target = $region89
    $region88: #{_lambda_.1} parent=1 // pred_region
      _
    $region89: #{_lambda_.1} parent=1 // pred_fallthru
      _
    // Predicated region
    $region90: #{_lambda_.1} parent=1 // pred_check
      _
    $region91: #{_lambda_.1} parent=1 // pred_check_branch
      %74 = sbr.rel (0) target = $region93
    $region92: #{_lambda_.1} parent=1 // pred_region
      _
    $region93: #{_lambda_.1} parent=1 // pred_fallthru
      _
    %v75 = vld [vmem:[%s0] sm:$0xff]
    %v76 = vld [vmem:[%s0 + $0x8] sm:$0xff]
    %v77 = vld [vmem:[%s0 + $0x10] sm:$0xff]
    %v78 = vld [vmem:[%s0 + $0x18] sm:$0xff]
    %v79 = vld [vmem:[%s0 + $0x20] sm:$0xff]
    %v80 = vld [vmem:[%s0 + $0x28] sm:$0xff]
    %v81 = vld [vmem:[%s0 + $0x30] sm:$0xff]
    %v82 = vld [vmem:[%s0 + $0x38] sm:$0xff]
    %v83 = vld [vmem:[%s0 + $0x40] sm:$0xff]
    %v84 = vld [vmem:[%s0 + $0x48] sm:$0xff]
    %v85 = vld [vmem:[%s0 + $0x50] sm:$0xff]
    %v86 = vld [vmem:[%s0 + $0x58] sm:$0xff]
    %v87 = vld [vmem:[%s0 + $0x60] sm:$0xff]
    %v88 = vld [vmem:[%s0 + $0x68] sm:$0xff]
    %v89 = vld [vmem:[%s0 + $0x70] sm:$0xff]
    %v90 = vld [vmem:[%s0 + $0x78] sm:$0xff]
    %v91 = vld [vmem:[%s0 + $0x80] sm:$0xff]
    %v92 = vld [vmem:[%s0 + $0x88] sm:$0xff]
    %v93 = vld [vmem:[%s0 + $0x90] sm:$0xff]
    %v94 = vld [vmem:[%s0 + $0x98] sm:$0xff]
    %v95 = vld [vmem:[%s0 + $0xa0] sm:$0xff]
    %v96 = vld [vmem:[%s0 + $0xa8] sm:$0xff]
    %v97 = vld [vmem:[%s0 + $0xb0] sm:$0xff]
    %v98 = vld [vmem:[%s0 + $0xb8] sm:$0xff]
    %v99 = vld [vmem:[%s0 + $0xc0] sm:$0xff]
    %v100 = vld [vmem:[%s0 + $0xc8] sm:$0xff]
    %v101 = vld [vmem:[%s0 + $0xd0] sm:$0xff]
    %v102 = vld [vmem:[%s0 + $0xd8] sm:$0xff]
    %v103 = vld [vmem:[%s0 + $0xe0] sm:$0xff]
    %v104 = vld [vmem:[%s0 + $0xe8] sm:$0xff]
    %v105 = vld [vmem:[%s0 + $0xf0] sm:$0xff]
    %v106 = vld [vmem:[%s0 + $0xf8] sm:$0xff]
    %v107 = vld [vmem:[%s0 + $0x100] sm:$0xff]
    %v108 = vld [vmem:[%s0 + $0x108] sm:$0xff]
    %v109 = vld [vmem:[%s0 + $0x110] sm:$0xff]
    %v110 = vld [vmem:[%s0 + $0x118] sm:$0xff]
    %v111 = vld [vmem:[%s0 + $0x120] sm:$0xff]
    %v112 = vld [vmem:[%s0 + $0x128] sm:$0xff]
    %v113 = vld [vmem:[%s0 + $0x130] sm:$0xff]
    %v114 = vld [vmem:[%s0 + $0x138] sm:$0xff]
    %v115 = vld [vmem:[%s0 + $0x140] sm:$0xff]
    %v116 = vld [vmem:[%s0 + $0x148] sm:$0xff]
    %v117 = vld [vmem:[%s0 + $0x150] sm:$0xff]
    %v118 = vld [vmem:[%s0 + $0x158] sm:$0xff]
    %v119 = vld [vmem:[%s0 + $0x160] sm:$0xff]
    %v120 = vld [vmem:[%s0 + $0x168] sm:$0xff]
    %v121 = vld [vmem:[%s0 + $0x170] sm:$0xff]
    %v122 = vld [vmem:[%s0 + $0x178] sm:$0xff]
    %v123 = vld [vmem:[%s0 + $0x180] sm:$0xff]
    %v124 = vld [vmem:[%s0 + $0x188] sm:$0xff]
    %v125 = vld [vmem:[%s0 + $0x190] sm:$0xff]
    %v126 = vld [vmem:[%s0 + $0x198] sm:$0xff]
    %v127 = vld [vmem:[%s0 + $0x1a0] sm:$0xff]
    %v128 = vld [vmem:[%s0 + $0x1a8] sm:$0xff]
    %v129 = vld [vmem:[%s0 + $0x1b0] sm:$0xff]
    %v130 = vld [vmem:[%s0 + $0x1b8] sm:$0xff]
    %v131 = vld [vmem:[%s0 + $0x1c0] sm:$0xff]
    %v132 = vld [vmem:[%s0 + $0x1c8] sm:$0xff]
    %v133 = vld [vmem:[%s0 + $0x1d0] sm:$0xff]
    %v134 = vld [vmem:[%s0 + $0x1d8] sm:$0xff]
    %v135 = vld [vmem:[%s0 + $0x1e0] sm:$0xff]
    %v136 = vld [vmem:[%s0 + $0x1e8] sm:$0xff]
    %v137 = vld [vmem:[%s0 + $0x1f0] sm:$0xff]
    %v138 = vld [vmem:[%s0 + $0x1f8] sm:$0xff]
    %v139 = vld [vmem:[%s0 + $0x200] sm:$0xff]
    %v140 = vld [vmem:[%s0 + $0x208] sm:$0xff]
    %v141 = vld [vmem:[%s0 + $0x210] sm:$0xff]
    %v142 = vld [vmem:[%s0 + $0x218] sm:$0xff]
    %v143 = vld [vmem:[%s0 + $0x220] sm:$0xff]
    %v144 = vld [vmem:[%s0 + $0x228] sm:$0xff]
    %v145 = vld [vmem:[%s0 + $0x230] sm:$0xff]
    %v146 = vld [vmem:[%s0 + $0x238] sm:$0xff]
    %v147 = vld [vmem:[%s0 + $0x240] sm:$0xff]
    %v148 = vld [vmem:[%s0 + $0x248] sm:$0xff]
    %v149 = vld [vmem:[%s0 + $0x250] sm:$0xff]
    %v150 = vld [vmem:[%s0 + $0x258] sm:$0xff]
    %v151 = vld [vmem:[%s0 + $0x260] sm:$0xff]
    %v152 = vld [vmem:[%s0 + $0x268] sm:$0xff]
    %v153 = vld [vmem:[%s0 + $0x270] sm:$0xff]
    %v154 = vld [vmem:[%s0 + $0x278] sm:$0xff]
    %v155 = vld [vmem:[%s0 + $0x280] sm:$0xff]
    %v156 = vld [vmem:[%s0 + $0x288] sm:$0xff]
    %v157 = vld [vmem:[%s0 + $0x290] sm:$0xff]
    %v158 = vld [vmem:[%s0 + $0x298] sm:$0xff]
    %v159 = vld [vmem:[%s0 + $0x2a0] sm:$0xff]
    %v160 = vld [vmem:[%s0 + $0x2a8] sm:$0xff]
    %v161 = vld [vmem:[%s0 + $0x2b0] sm:$0xff]
    %v162 = vld [vmem:[%s0 + $0x2b8] sm:$0xff]
    %v163 = vld [vmem:[%s0 + $0x2c0] sm:$0xff]
    %v164 = vld [vmem:[%s0 + $0x2c8] sm:$0xff]
    %v165 = vld [vmem:[%s0 + $0x2d0] sm:$0xff]
    %v166 = vld [vmem:[%s0 + $0x2d8] sm:$0xff]
    %v167 = vld [vmem:[%s0 + $0x2e0] sm:$0xff]
    %v168 = vld [vmem:[%s0 + $0x2e8] sm:$0xff]
    %v169 = vld [vmem:[%s0 + $0x2f0] sm:$0xff]
    %v170 = vld [vmem:[%s0 + $0x2f8] sm:$0xff]
    %v171 = vld [vmem:[%s0 + $0x300] sm:$0xff]
    %v172 = vld [vmem:[%s0 + $0x308] sm:$0xff]
    %v173 = vld [vmem:[%s0 + $0x310] sm:$0xff]
    %v174 = vld [vmem:[%s0 + $0x318] sm:$0xff]
    %v175 = vld [vmem:[%s0 + $0x320] sm:$0xff]
    %v176 = vld [vmem:[%s0 + $0x328] sm:$0xff]
    %v177 = vld [vmem:[%s0 + $0x330] sm:$0xff]
    %v178 = vld [vmem:[%s0 + $0x338] sm:$0xff]
    %v179 = vld [vmem:[%s0 + $0x340] sm:$0xff]
    %v180 = vld [vmem:[%s0 + $0x348] sm:$0xff]
    %v181 = vld [vmem:[%s0 + $0x350] sm:$0xff]
    %v182 = vld [vmem:[%s0 + $0x358] sm:$0xff]
    %v183 = vld [vmem:[%s0 + $0x360] sm:$0xff]
    %v184 = vld [vmem:[%s0 + $0x368] sm:$0xff]
    %v185 = vld [vmem:[%s0 + $0x370] sm:$0xff]
    %v186 = vld [vmem:[%s0 + $0x378] sm:$0xff]
    %v187 = vld [vmem:[%s0 + $0x380] sm:$0xff]
    %v188 = vld [vmem:[%s0 + $0x388] sm:$0xff]
    %v189 = vld [vmem:[%s0 + $0x390] sm:$0xff]
    %v190 = vld [vmem:[%s0 + $0x398] sm:$0xff]
    %v191 = vld [vmem:[%s0 + $0x3a0] sm:$0xff]
    %v192 = vld [vmem:[%s0 + $0x3a8] sm:$0xff]
    %v193 = vld [vmem:[%s0 + $0x3b0] sm:$0xff]
    %v194 = vld [vmem:[%s0 + $0x3b8] sm:$0xff]
    %v195 = vld [vmem:[%s0 + $0x3c0] sm:$0xff]
    %v196 = vld [vmem:[%s0 + $0x3c8] sm:$0xff]
    %v197 = vld [vmem:[%s0 + $0x3d0] sm:$0xff]
    %v198 = vld [vmem:[%s0 + $0x3d8] sm:$0xff]
    %v199 = vld [vmem:[%s0 + $0x3e0] sm:$0xff]
    %v200 = vld [vmem:[%s0 + $0x3e8] sm:$0xff]
    %v201 = vld [vmem:[%s0 + $0x3f0] sm:$0xff]
    %v202 = vld [vmem:[%s0 + $0x3f8] sm:$0xff]
    %vm203 = vcmask 261120
    %204 = vst.msk [vmem:[#allocation2] sm:$0xff] %vm203, 0.0
    %s205 = scalar_lea.vmem [#allocation2], 1032
    %206 = vst.msk [vmem:[%s205] sm:$0xff] %vm203, 0.0
    %s207 = scalar_lea.vmem [#allocation2], 8
    %208 = vst.msk [vmem:[%s207] sm:$0xff] %vm203, %v75
    %209 = vst.msk [vmem:[%s207 + $0x8] sm:$0xff] %vm203, %v76
    %210 = vst.msk [vmem:[%s207 + $0x10] sm:$0xff] %vm203, %v77
    %211 = vst.msk [vmem:[%s207 + $0x18] sm:$0xff] %vm203, %v78
    %212 = vst.msk [vmem:[%s207 + $0x20] sm:$0xff] %vm203, %v79
    %213 = vst.msk [vmem:[%s207 + $0x28] sm:$0xff] %vm203, %v80
    %214 = vst.msk [vmem:[%s207 + $0x30] sm:$0xff] %vm203, %v81
    %215 = vst.msk [vmem:[%s207 + $0x38] sm:$0xff] %vm203, %v82
    %216 = vst.msk [vmem:[%s207 + $0x40] sm:$0xff] %vm203, %v83
    %217 = vst.msk [vmem:[%s207 + $0x48] sm:$0xff] %vm203, %v84
    %218 = vst.msk [vmem:[%s207 + $0x50] sm:$0xff] %vm203, %v85
    %219 = vst.msk [vmem:[%s207 + $0x58] sm:$0xff] %vm203, %v86
    %220 = vst.msk [vmem:[%s207 + $0x60] sm:$0xff] %vm203, %v87
    %221 = vst.msk [vmem:[%s207 + $0x68] sm:$0xff] %vm203, %v88
    %222 = vst.msk [vmem:[%s207 + $0x70] sm:$0xff] %vm203, %v89
    %223 = vst.msk [vmem:[%s207 + $0x78] sm:$0xff] %vm203, %v90
    %224 = vst.msk [vmem:[%s207 + $0x80] sm:$0xff] %vm203, %v91
    %225 = vst.msk [vmem:[%s207 + $0x88] sm:$0xff] %vm203, %v92
    %226 = vst.msk [vmem:[%s207 + $0x90] sm:$0xff] %vm203, %v93
    %227 = vst.msk [vmem:[%s207 + $0x98] sm:$0xff] %vm203, %v94
    %228 = vst.msk [vmem:[%s207 + $0xa0] sm:$0xff] %vm203, %v95
    %229 = vst.msk [vmem:[%s207 + $0xa8] sm:$0xff] %vm203, %v96
    %230 = vst.msk [vmem:[%s207 + $0xb0] sm:$0xff] %vm203, %v97
    %231 = vst.msk [vmem:[%s207 + $0xb8] sm:$0xff] %vm203, %v98
    %232 = vst.msk [vmem:[%s207 + $0xc0] sm:$0xff] %vm203, %v99
    %233 = vst.msk [vmem:[%s207 + $0xc8] sm:$0xff] %vm203, %v100
    %234 = vst.msk [vmem:[%s207 + $0xd0] sm:$0xff] %vm203, %v101
    %235 = vst.msk [vmem:[%s207 + $0xd8] sm:$0xff] %vm203, %v102
    %236 = vst.msk [vmem:[%s207 + $0xe0] sm:$0xff] %vm203, %v103
    %237 = vst.msk [vmem:[%s207 + $0xe8] sm:$0xff] %vm203, %v104
    %238 = vst.msk [vmem:[%s207 + $0xf0] sm:$0xff] %vm203, %v105
    %239 = vst.msk [vmem:[%s207 + $0xf8] sm:$0xff] %vm203, %v106
    %240 = vst.msk [vmem:[%s207 + $0x100] sm:$0xff] %vm203, %v107
    %241 = vst.msk [vmem:[%s207 + $0x108] sm:$0xff] %vm203, %v108
    %242 = vst.msk [vmem:[%s207 + $0x110] sm:$0xff] %vm203, %v109
    %243 = vst.msk [vmem:[%s207 + $0x118] sm:$0xff] %vm203, %v110
    %244 = vst.msk [vmem:[%s207 + $0x120] sm:$0xff] %vm203, %v111
    %245 = vst.msk [vmem:[%s207 + $0x128] sm:$0xff] %vm203, %v112
    %246 = vst.msk [vmem:[%s207 + $0x130] sm:$0xff] %vm203, %v113
    %247 = vst.msk [vmem:[%s207 + $0x138] sm:$0xff] %vm203, %v114
    %248 = vst.msk [vmem:[%s207 + $0x140] sm:$0xff] %vm203, %v115
    %249 = vst.msk [vmem:[%s207 + $0x148] sm:$0xff] %vm203, %v116
    %250 = vst.msk [vmem:[%s207 + $0x150] sm:$0xff] %vm203, %v117
    %251 = vst.msk [vmem:[%s207 + $0x158] sm:$0xff] %vm203, %v118
    %252 = vst.msk [vmem:[%s207 + $0x160] sm:$0xff] %vm203, %v119
    %253 = vst.msk [vmem:[%s207 + $0x168] sm:$0xff] %vm203, %v120
    %254 = vst.msk [vmem:[%s207 + $0x170] sm:$0xff] %vm203, %v121
    %255 = vst.msk [vmem:[%s207 + $0x178] sm:$0xff] %vm203, %v122
    %256 = vst.msk [vmem:[%s207 + $0x180] sm:$0xff] %vm203, %v123
    %257 = vst.msk [vmem:[%s207 + $0x188] sm:$0xff] %vm203, %v124
    %258 = vst.msk [vmem:[%s207 + $0x190] sm:$0xff] %vm203, %v125
    %259 = vst.msk [vmem:[%s207 + $0x198] sm:$0xff] %vm203, %v126
    %260 = vst.msk [vmem:[%s207 + $0x1a0] sm:$0xff] %vm203, %v127
    %261 = vst.msk [vmem:[%s207 + $0x1a8] sm:$0xff] %vm203, %v128
    %262 = vst.msk [vmem:[%s207 + $0x1b0] sm:$0xff] %vm203, %v129
    %263 = vst.msk [vmem:[%s207 + $0x1b8] sm:$0xff] %vm203, %v130
    %264 = vst.msk [vmem:[%s207 + $0x1c0] sm:$0xff] %vm203, %v131
    %265 = vst.msk [vmem:[%s207 + $0x1c8] sm:$0xff] %vm203, %v132
    %266 = vst.msk [vmem:[%s207 + $0x1d0] sm:$0xff] %vm203, %v133
    %267 = vst.msk [vmem:[%s207 + $0x1d8] sm:$0xff] %vm203, %v134
    %268 = vst.msk [vmem:[%s207 + $0x1e0] sm:$0xff] %vm203, %v135
    %269 = vst.msk [vmem:[%s207 + $0x1e8] sm:$0xff] %vm203, %v136
    %270 = vst.msk [vmem:[%s207 + $0x1f0] sm:$0xff] %vm203, %v137
    %271 = vst.msk [vmem:[%s207 + $0x1f8] sm:$0xff] %vm203, %v138
    %272 = vst.msk [vmem:[%s207 + $0x200] sm:$0xff] %vm203, %v139
    %273 = vst.msk [vmem:[%s207 + $0x208] sm:$0xff] %vm203, %v140
    %274 = vst.msk [vmem:[%s207 + $0x210] sm:$0xff] %vm203, %v141
    %275 = vst.msk [vmem:[%s207 + $0x218] sm:$0xff] %vm203, %v142
    %276 = vst.msk [vmem:[%s207 + $0x220] sm:$0xff] %vm203, %v143
    %277 = vst.msk [vmem:[%s207 + $0x228] sm:$0xff] %vm203, %v144
    %278 = vst.msk [vmem:[%s207 + $0x230] sm:$0xff] %vm203, %v145
    %279 = vst.msk [vmem:[%s207 + $0x238] sm:$0xff] %vm203, %v146
    %280 = vst.msk [vmem:[%s207 + $0x240] sm:$0xff] %vm203, %v147
    %281 = vst.msk [vmem:[%s207 + $0x248] sm:$0xff] %vm203, %v148
    %282 = vst.msk [vmem:[%s207 + $0x250] sm:$0xff] %vm203, %v149
    %283 = vst.msk [vmem:[%s207 + $0x258] sm:$0xff] %vm203, %v150
    %284 = vst.msk [vmem:[%s207 + $0x260] sm:$0xff] %vm203, %v151
    %285 = vst.msk [vmem:[%s207 + $0x268] sm:$0xff] %vm203, %v152
    %286 = vst.msk [vmem:[%s207 + $0x270] sm:$0xff] %vm203, %v153
    %287 = vst.msk [vmem:[%s207 + $0x278] sm:$0xff] %vm203, %v154
    %288 = vst.msk [vmem:[%s207 + $0x280] sm:$0xff] %vm203, %v155
    %289 = vst.msk [vmem:[%s207 + $0x288] sm:$0xff] %vm203, %v156
    %290 = vst.msk [vmem:[%s207 + $0x290] sm:$0xff] %vm203, %v157
    %291 = vst.msk [vmem:[%s207 + $0x298] sm:$0xff] %vm203, %v158
    %292 = vst.msk [vmem:[%s207 + $0x2a0] sm:$0xff] %vm203, %v159
    %293 = vst.msk [vmem:[%s207 + $0x2a8] sm:$0xff] %vm203, %v160
    %294 = vst.msk [vmem:[%s207 + $0x2b0] sm:$0xff] %vm203, %v161
    %295 = vst.msk [vmem:[%s207 + $0x2b8] sm:$0xff] %vm203, %v162
    %296 = vst.msk [vmem:[%s207 + $0x2c0] sm:$0xff] %vm203, %v163
    %297 = vst.msk [vmem:[%s207 + $0x2c8] sm:$0xff] %vm203, %v164
    %298 = vst.msk [vmem:[%s207 + $0x2d0] sm:$0xff] %vm203, %v165
    %299 = vst.msk [vmem:[%s207 + $0x2d8] sm:$0xff] %vm203, %v166
    %300 = vst.msk [vmem:[%s207 + $0x2e0] sm:$0xff] %vm203, %v167
    %301 = vst.msk [vmem:[%s207 + $0x2e8] sm:$0xff] %vm203, %v168
    %302 = vst.msk [vmem:[%s207 + $0x2f0] sm:$0xff] %vm203, %v169
    %303 = vst.msk [vmem:[%s207 + $0x2f8] sm:$0xff] %vm203, %v170
    %304 = vst.msk [vmem:[%s207 + $0x300] sm:$0xff] %vm203, %v171
    %305 = vst.msk [vmem:[%s207 + $0x308] sm:$0xff] %vm203, %v172
    %306 = vst.msk [vmem:[%s207 + $0x310] sm:$0xff] %vm203, %v173
    %307 = vst.msk [vmem:[%s207 + $0x318] sm:$0xff] %vm203, %v174
    %308 = vst.msk [vmem:[%s207 + $0x320] sm:$0xff] %vm203, %v175
    %309 = vst.msk [vmem:[%s207 + $0x328] sm:$0xff] %vm203, %v176
    %310 = vst.msk [vmem:[%s207 + $0x330] sm:$0xff] %vm203, %v177
    %311 = vst.msk [vmem:[%s207 + $0x338] sm:$0xff] %vm203, %v178
    %312 = vst.msk [vmem:[%s207 + $0x340] sm:$0xff] %vm203, %v179
    %313 = vst.msk [vmem:[%s207 + $0x348] sm:$0xff] %vm203, %v180
    %314 = vst.msk [vmem:[%s207 + $0x350] sm:$0xff] %vm203, %v181
    %315 = vst.msk [vmem:[%s207 + $0x358] sm:$0xff] %vm203, %v182
    %316 = vst.msk [vmem:[%s207 + $0x360] sm:$0xff] %vm203, %v183
    %317 = vst.msk [vmem:[%s207 + $0x368] sm:$0xff] %vm203, %v184
    %318 = vst.msk [vmem:[%s207 + $0x370] sm:$0xff] %vm203, %v185
    %319 = vst.msk [vmem:[%s207 + $0x378] sm:$0xff] %vm203, %v186
    %320 = vst.msk [vmem:[%s207 + $0x380] sm:$0xff] %vm203, %v187
    %321 = vst.msk [vmem:[%s207 + $0x388] sm:$0xff] %vm203, %v188
    %322 = vst.msk [vmem:[%s207 + $0x390] sm:$0xff] %vm203, %v189
    %323 = vst.msk [vmem:[%s207 + $0x398] sm:$0xff] %vm203, %v190
    %324 = vst.msk [vmem:[%s207 + $0x3a0] sm:$0xff] %vm203, %v191
    %325 = vst.msk [vmem:[%s207 + $0x3a8] sm:$0xff] %vm203, %v192
    %326 = vst.msk [vmem:[%s207 + $0x3b0] sm:$0xff] %vm203, %v193
    %327 = vst.msk [vmem:[%s207 + $0x3b8] sm:$0xff] %vm203, %v194
    %328 = vst.msk [vmem:[%s207 + $0x3c0] sm:$0xff] %vm203, %v195
    %329 = vst.msk [vmem:[%s207 + $0x3c8] sm:$0xff] %vm203, %v196
    %330 = vst.msk [vmem:[%s207 + $0x3d0] sm:$0xff] %vm203, %v197
    %331 = vst.msk [vmem:[%s207 + $0x3d8] sm:$0xff] %vm203, %v198
    %332 = vst.msk [vmem:[%s207 + $0x3e0] sm:$0xff] %vm203, %v199
    %333 = vst.msk [vmem:[%s207 + $0x3e8] sm:$0xff] %vm203, %v200
    %334 = vst.msk [vmem:[%s207 + $0x3f0] sm:$0xff] %vm203, %v201
    %335 = vst.msk [vmem:[%s207 + $0x3f8] sm:$0xff] %vm203, %v202
    %v336 = vld [vmem:[#allocation2] sm:$0xff]
    %v337 = vld [vmem:[#allocation2 + $0x8] sm:$0xff]
    %v338 = vld [vmem:[#allocation2 + $0x10] sm:$0xff]
    %v339 = vld [vmem:[#allocation2 + $0x18] sm:$0xff]
    %v340 = vld [vmem:[#allocation2 + $0x20] sm:$0xff]
    %v341 = vld [vmem:[#allocation2 + $0x28] sm:$0xff]
    %v342 = vld [vmem:[#allocation2 + $0x30] sm:$0xff]
    %v343 = vld [vmem:[#allocation2 + $0x38] sm:$0xff]
    %v344 = vld [vmem:[#allocation2 + $0x40] sm:$0xff]
    %v345 = vld [vmem:[#allocation2 + $0x48] sm:$0xff]
    %v346 = vld [vmem:[#allocation2 + $0x50] sm:$0xff]
    %v347 = vld [vmem:[#allocation2 + $0x58] sm:$0xff]
    %v348 = vld [vmem:[#allocation2 + $0x60] sm:$0xff]
    %v349 = vld [vmem:[#allocation2 + $0x68] sm:$0xff]
    %v350 = vld [vmem:[#allocation2 + $0x70] sm:$0xff]
    %v351 = vld [vmem:[#allocation2 + $0x78] sm:$0xff]
    %v352 = vld [vmem:[#allocation2 + $0x80] sm:$0xff]
    %v353 = vld [vmem:[#allocation2 + $0x88] sm:$0xff]
    %v354 = vld [vmem:[#allocation2 + $0x90] sm:$0xff]
    %v355 = vld [vmem:[#allocation2 + $0x98] sm:$0xff]
    %v356 = vld [vmem:[#allocation2 + $0xa0] sm:$0xff]
    %v357 = vld [vmem:[#allocation2 + $0xa8] sm:$0xff]
    %v358 = vld [vmem:[#allocation2 + $0xb0] sm:$0xff]
    %v359 = vld [vmem:[#allocation2 + $0xb8] sm:$0xff]
    %v360 = vld [vmem:[#allocation2 + $0xc0] sm:$0xff]
    %v361 = vld [vmem:[#allocation2 + $0xc8] sm:$0xff]
    %v362 = vld [vmem:[#allocation2 + $0xd0] sm:$0xff]
    %v363 = vld [vmem:[#allocation2 + $0xd8] sm:$0xff]
    %v364 = vld [vmem:[#allocation2 + $0xe0] sm:$0xff]
    %v365 = vld [vmem:[#allocation2 + $0xe8] sm:$0xff]
    %v366 = vld [vmem:[#allocation2 + $0xf0] sm:$0xff]
    %v367 = vld [vmem:[#allocation2 + $0xf8] sm:$0xff]
    %v368 = vld [vmem:[#allocation2 + $0x100] sm:$0xff]
    %v369 = vld [vmem:[#allocation2 + $0x108] sm:$0xff]
    %v370 = vld [vmem:[#allocation2 + $0x110] sm:$0xff]
    %v371 = vld [vmem:[#allocation2 + $0x118] sm:$0xff]
    %v372 = vld [vmem:[#allocation2 + $0x120] sm:$0xff]
    %v373 = vld [vmem:[#allocation2 + $0x128] sm:$0xff]
    %v374 = vld [vmem:[#allocation2 + $0x130] sm:$0xff]
    %v375 = vld [vmem:[#allocation2 + $0x138] sm:$0xff]
    %v376 = vld [vmem:[#allocation2 + $0x140] sm:$0xff]
    %v377 = vld [vmem:[#allocation2 + $0x148] sm:$0xff]
    %v378 = vld [vmem:[#allocation2 + $0x150] sm:$0xff]
    %v379 = vld [vmem:[#allocation2 + $0x158] sm:$0xff]
    %v380 = vld [vmem:[#allocation2 + $0x160] sm:$0xff]
    %v381 = vld [vmem:[#allocation2 + $0x168] sm:$0xff]
    %v382 = vld [vmem:[#allocation2 + $0x170] sm:$0xff]
    %v383 = vld [vmem:[#allocation2 + $0x178] sm:$0xff]
    %v384 = vld [vmem:[#allocation2 + $0x180] sm:$0xff]
    %v385 = vld [vmem:[#allocation2 + $0x188] sm:$0xff]
    %v386 = vld [vmem:[#allocation2 + $0x190] sm:$0xff]
    %v387 = vld [vmem:[#allocation2 + $0x198] sm:$0xff]
    %v388 = vld [vmem:[#allocation2 + $0x1a0] sm:$0xff]
    %v389 = vld [vmem:[#allocation2 + $0x1a8] sm:$0xff]
    %v390 = vld [vmem:[#allocation2 + $0x1b0] sm:$0xff]
    %v391 = vld [vmem:[#allocation2 + $0x1b8] sm:$0xff]
    %v392 = vld [vmem:[#allocation2 + $0x1c0] sm:$0xff]
    %v393 = vld [vmem:[#allocation2 + $0x1c8] sm:$0xff]
    %v394 = vld [vmem:[#allocation2 + $0x1d0] sm:$0xff]
    %v395 = vld [vmem:[#allocation2 + $0x1d8] sm:$0xff]
    %v396 = vld [vmem:[#allocation2 + $0x1e0] sm:$0xff]
    %v397 = vld [vmem:[#allocation2 + $0x1e8] sm:$0xff]
    %v398 = vld [vmem:[#allocation2 + $0x1f0] sm:$0xff]
    %v399 = vld [vmem:[#allocation2 + $0x1f8] sm:$0xff]
    %v400 = vld [vmem:[#allocation2 + $0x200] sm:$0xff]
    %v401 = vld [vmem:[#allocation2 + $0x208] sm:$0xff]
    %v402 = vld [vmem:[#allocation2 + $0x210] sm:$0xff]
    %v403 = vld [vmem:[#allocation2 + $0x218] sm:$0xff]
    %v404 = vld [vmem:[#allocation2 + $0x220] sm:$0xff]
    %v405 = vld [vmem:[#allocation2 + $0x228] sm:$0xff]
    %v406 = vld [vmem:[#allocation2 + $0x230] sm:$0xff]
    %v407 = vld [vmem:[#allocation2 + $0x238] sm:$0xff]
    %v408 = vld [vmem:[#allocation2 + $0x240] sm:$0xff]
    %v409 = vld [vmem:[#allocation2 + $0x248] sm:$0xff]
    %v410 = vld [vmem:[#allocation2 + $0x250] sm:$0xff]
    %v411 = vld [vmem:[#allocation2 + $0x258] sm:$0xff]
    %v412 = vld [vmem:[#allocation2 + $0x260] sm:$0xff]
    %v413 = vld [vmem:[#allocation2 + $0x268] sm:$0xff]
    %v414 = vld [vmem:[#allocation2 + $0x270] sm:$0xff]
    %v415 = vld [vmem:[#allocation2 + $0x278] sm:$0xff]
    %v416 = vld [vmem:[#allocation2 + $0x280] sm:$0xff]
    %v417 = vld [vmem:[#allocation2 + $0x288] sm:$0xff]
    %v418 = vld [vmem:[#allocation2 + $0x290] sm:$0xff]
    %v419 = vld [vmem:[#allocation2 + $0x298] sm:$0xff]
    %v420 = vld [vmem:[#allocation2 + $0x2a0] sm:$0xff]
    %v421 = vld [vmem:[#allocation2 + $0x2a8] sm:$0xff]
    %v422 = vld [vmem:[#allocation2 + $0x2b0] sm:$0xff]
    %v423 = vld [vmem:[#allocation2 + $0x2b8] sm:$0xff]
    %v424 = vld [vmem:[#allocation2 + $0x2c0] sm:$0xff]
    %v425 = vld [vmem:[#allocation2 + $0x2c8] sm:$0xff]
    %v426 = vld [vmem:[#allocation2 + $0x2d0] sm:$0xff]
    %v427 = vld [vmem:[#allocation2 + $0x2d8] sm:$0xff]
    %v428 = vld [vmem:[#allocation2 + $0x2e0] sm:$0xff]
    %v429 = vld [vmem:[#allocation2 + $0x2e8] sm:$0xff]
    %v430 = vld [vmem:[#allocation2 + $0x2f0] sm:$0xff]
    %v431 = vld [vmem:[#allocation2 + $0x2f8] sm:$0xff]
    %v432 = vld [vmem:[#allocation2 + $0x300] sm:$0xff]
    %v433 = vld [vmem:[#allocation2 + $0x308] sm:$0xff]
    %v434 = vld [vmem:[#allocation2 + $0x310] sm:$0xff]
    %v435 = vld [vmem:[#allocation2 + $0x318] sm:$0xff]
    %v436 = vld [vmem:[#allocation2 + $0x320] sm:$0xff]
    %v437 = vld [vmem:[#allocation2 + $0x328] sm:$0xff]
    %v438 = vld [vmem:[#allocation2 + $0x330] sm:$0xff]
    %v439 = vld [vmem:[#allocation2 + $0x338] sm:$0xff]
    %v440 = vld [vmem:[#allocation2 + $0x340] sm:$0xff]
    %v441 = vld [vmem:[#allocation2 + $0x348] sm:$0xff]
    %v442 = vld [vmem:[#allocation2 + $0x350] sm:$0xff]
    %v443 = vld [vmem:[#allocation2 + $0x358] sm:$0xff]
    %v444 = vld [vmem:[#allocation2 + $0x360] sm:$0xff]
    %v445 = vld [vmem:[#allocation2 + $0x368] sm:$0xff]
    %v446 = vld [vmem:[#allocation2 + $0x370] sm:$0xff]
    %v447 = vld [vmem:[#allocation2 + $0x378] sm:$0xff]
    %v448 = vld [vmem:[#allocation2 + $0x380] sm:$0xff]
    %v449 = vld [vmem:[#allocation2 + $0x388] sm:$0xff]
    %v450 = vld [vmem:[#allocation2 + $0x390] sm:$0xff]
    %v451 = vld [vmem:[#allocation2 + $0x398] sm:$0xff]
    %v452 = vld [vmem:[#allocation2 + $0x3a0] sm:$0xff]
    %v453 = vld [vmem:[#allocation2 + $0x3a8] sm:$0xff]
    %v454 = vld [vmem:[#allocation2 + $0x3b0] sm:$0xff]
    %v455 = vld [vmem:[#allocation2 + $0x3b8] sm:$0xff]
    %v456 = vld [vmem:[#allocation2 + $0x3c0] sm:$0xff]
    %v457 = vld [vmem:[#allocation2 + $0x3c8] sm:$0xff]
    %v458 = vld [vmem:[#allocation2 + $0x3d0] sm:$0xff]
    %v459 = vld [vmem:[#allocation2 + $0x3d8] sm:$0xff]
    %v460 = vld [vmem:[#allocation2 + $0x3e0] sm:$0xff]
    %v461 = vld [vmem:[#allocation2 + $0x3e8] sm:$0xff]
    %v462 = vld [vmem:[#allocation2 + $0x3f0] sm:$0xff]
    %v463 = vld [vmem:[#allocation2 + $0x3f8] sm:$0xff]
    %v464 = vld [vmem:[#allocation2 + $0x400] sm:$0xff]
    %v465 = vld [vmem:[%s1] sm:$0xff]
    %v466 = vld [vmem:[%s1 + $0x8] sm:$0xff]
    %v467 = vld [vmem:[%s1 + $0x10] sm:$0xff]
    %v468 = vld [vmem:[%s1 + $0x18] sm:$0xff]
    %s469 = scalar_lea.vmem %s1, 32
    %v470 = vld [vmem:[%s469] sm:$0xff]
    %v471 = vld [vmem:[%s469 + $0x8] sm:$0xff]
    %v472 = vld [vmem:[%s469 + $0x10] sm:$0xff]
    %v473 = vld [vmem:[%s469 + $0x18] sm:$0xff]
    %v475 = vsel %vm203, %v337, 0
    %v478 = vsel %vm203, %v339, 0
    %v481 = vsel %vm203, %v341, 0
    %v484 = vsel %vm203, %v343, 0
    %v487 = vsel %vm203, %v345, 0
    %v490 = vsel %vm203, %v347, 0
    %v493 = vsel %vm203, %v349, 0
    %v496 = vsel %vm203, %v351, 0
    %v499 = vsel %vm203, %v353, 0
    %v502 = vsel %vm203, %v355, 0
    %v505 = vsel %vm203, %v357, 0
    %v508 = vsel %vm203, %v359, 0
    %v511 = vsel %vm203, %v361, 0
    %v514 = vsel %vm203, %v363, 0
    %v517 = vsel %vm203, %v365, 0
    %v520 = vsel %vm203, %v367, 0
    %v523 = vsel %vm203, %v369, 0
    %v526 = vsel %vm203, %v371, 0
    %v529 = vsel %vm203, %v373, 0
    %v532 = vsel %vm203, %v375, 0
    %v535 = vsel %vm203, %v377, 0
    %v538 = vsel %vm203, %v379, 0
    %v541 = vsel %vm203, %v381, 0
    %v544 = vsel %vm203, %v383, 0
    %v547 = vsel %vm203, %v385, 0
    %v550 = vsel %vm203, %v387, 0
    %v553 = vsel %vm203, %v389, 0
    %v556 = vsel %vm203, %v391, 0
    %v559 = vsel %vm203, %v393, 0
    %v562 = vsel %vm203, %v395, 0
    %v565 = vsel %vm203, %v397, 0
    %v568 = vsel %vm203, %v399, 0
    %v571 = vsel %vm203, %v401, 0
    %v574 = vsel %vm203, %v403, 0
    %v577 = vsel %vm203, %v405, 0
    %v580 = vsel %vm203, %v407, 0
    %v583 = vsel %vm203, %v409, 0
    %v586 = vsel %vm203, %v411, 0
    %v589 = vsel %vm203, %v413, 0
    %v592 = vsel %vm203, %v415, 0
    %v595 = vsel %vm203, %v417, 0
    %v598 = vsel %vm203, %v419, 0
    %v601 = vsel %vm203, %v421, 0
    %v604 = vsel %vm203, %v423, 0
    %v607 = vsel %vm203, %v425, 0
    %v610 = vsel %vm203, %v427, 0
    %v613 = vsel %vm203, %v429, 0
    %v616 = vsel %vm203, %v431, 0
    %v619 = vsel %vm203, %v433, 0
    %v622 = vsel %vm203, %v435, 0
    %v625 = vsel %vm203, %v437, 0
    %v628 = vsel %vm203, %v439, 0
    %v631 = vsel %vm203, %v441, 0
    %v634 = vsel %vm203, %v443, 0
    %v637 = vsel %vm203, %v445, 0
    %v640 = vsel %vm203, %v447, 0
    %v643 = vsel %vm203, %v449, 0
    %v646 = vsel %vm203, %v451, 0
    %v649 = vsel %vm203, %v453, 0
    %v652 = vsel %vm203, %v455, 0
    %v655 = vsel %vm203, %v457, 0
    %v658 = vsel %vm203, %v459, 0
    %v661 = vsel %vm203, %v461, 0
    %v664 = vsel %vm203, %v463, 0
    %666 = vmatprep.subr.mxu0 0.0
    %667 = vmatpush1.msra.mxu0 %v470
    %668 = vmatprep.subr.mxu0 0.0
    %669 = vmatpush1.msra.mxu0 %v471
    %670 = vmatprep.subr.mxu0 0.0
    %671 = vmatpush1.msra.mxu0 %v472
    %672 = vmatprep.subr.mxu0 0.0
    %673 = vmatpush1.msra.mxu0 %v473
    %674 = vmatprep.subr.mxu0 0.0
    %675 = vmatpush1.msra.mxu0 0.0
    %676 = vmatprep.subr.mxu0 0.0
    %677 = vmatpush1.msra.mxu0 0.0
    %678 = vmatprep.subr.mxu0 0.0
    %679 = vmatpush1.msra.mxu0 0.0
    %680 = vmatprep.subr.mxu0 0.0
    %681 = vmatpush1.msra.mxu0 0.0
    %682 = vmatprep.subr.mxu0 0.0
    %683 = vmatpush1.msra.mxu0 0.0
    %684 = vmatprep.subr.mxu0 0.0
    %685 = vmatpush1.msra.mxu0 0.0
    %686 = vmatprep.subr.mxu0 0.0
    %687 = vmatpush1.msra.mxu0 0.0
    %688 = vmatprep.subr.mxu0 0.0
    %689 = vmatpush1.msra.mxu0 0.0
    %690 = vmatprep.subr.mxu0 0.0
    %691 = vmatpush1.msra.mxu0 0.0
    %692 = vmatprep.subr.mxu0 0.0
    %693 = vmatpush1.msra.mxu0 0.0
    %694 = vmatprep.subr.mxu0 0.0
    %695 = vmatpush1.msra.mxu0 0.0
    %696 = vmatprep.subr.mxu0 0.0
    %697 = vmatpush1.msra.mxu0 0.0
    %698 = vmatprep.subr.mxu0 0.0
    %699 = vmatpush1.msra.mxu0 0.0
    %700 = vmatprep.subr.mxu0 0.0
    %701 = vmatpush1.msra.mxu0 0.0
    %702 = vmatprep.subr.mxu0 0.0
    %703 = vmatpush1.msra.mxu0 0.0
    %704 = vmatprep.subr.mxu0 0.0
    %705 = vmatpush1.msra.mxu0 0.0
    %706 = vmatprep.subr.mxu0 0.0
    %707 = vmatpush1.msra.mxu0 0.0
    %708 = vmatprep.subr.mxu0 0.0
    %709 = vmatpush1.msra.mxu0 0.0
    %710 = vmatprep.subr.mxu0 0.0
    %711 = vmatpush1.msra.mxu0 0.0
    %712 = vmatprep.subr.mxu0 0.0
    %713 = vmatpush1.msra.mxu0 0.0
    %714 = vmatprep.subr.mxu0 0.0
    %715 = vmatpush1.msra.mxu0 0.0
    %716 = vmatprep.subr.mxu0 0.0
    %717 = vmatpush1.msra.mxu0 0.0
    %718 = vmatprep.subr.mxu0 0.0
    %719 = vmatpush1.msra.mxu0 0.0
    %720 = vmatprep.subr.mxu0 0.0
    %721 = vmatpush1.msra.mxu0 0.0
    %722 = vmatprep.subr.mxu0 0.0
    %723 = vmatpush1.msra.mxu0 0.0
    %724 = vmatprep.subr.mxu0 0.0
    %725 = vmatpush1.msra.mxu0 0.0
    %726 = vmatprep.subr.mxu0 0.0
    %727 = vmatpush1.msra.mxu0 0.0
    %728 = vmatprep.subr.mxu0 0.0
    %729 = vmatpush1.msra.mxu0 0.0
    %730 = vmatprep.mubr.f32.mxu0 0.0
    %731 = vmatmul.mubr.f32.gmra.mrb[0].mxu0 %v475
    %v732 = vpop.f32.mrb[0].mxu0
    %v733 = vadd.f32 0.0, %v732
    %v734 = vpop.f32.mrb[0].mxu0
    %735 = vmatprep.mubr.f32.mxu0 0.0
    %736 = vmatmul.mubr.f32.gmra.mrb[0].mxu0 %v478
    %v737 = vpop.f32.mrb[0].mxu0
    %v738 = vadd.f32 0.0, %v737
    %v739 = vpop.f32.mrb[0].mxu0
    %740 = vmatprep.mubr.f32.mxu0 0.0
    %741 = vmatmul.mubr.f32.gmra.mrb[0].mxu0 %v481
    %v742 = vpop.f32.mrb[0].mxu0
    %v743 = vadd.f32 0.0, %v742
    %v744 = vpop.f32.mrb[0].mxu0
    %745 = vmatprep.mubr.f32.mxu0 0.0
    %746 = vmatmul.mubr.f32.gmra.mrb[0].mxu0 %v484
    %v747 = vpop.f32.mrb[0].mxu0
    %v748 = vadd.f32 0.0, %v747
    %v749 = vpop.f32.mrb[0].mxu0
    %750 = vmatprep.mubr.f32.mxu0 0.0
    %751 = vmatmul.mubr.f32.gmra.mrb[0].mxu0 %v487
    %v752 = vpop.f32.mrb[0].mxu0
    %v753 = vadd.f32 0.0, %v752
    %v754 = vpop.f32.mrb[0].mxu0
    %755 = vmatprep.mubr.f32.mxu0 0.0
    %756 = vmatmul.mubr.f32.gmra.mrb[0].mxu0 %v490
    %v757 = vpop.f32.mrb[0].mxu0
    %v758 = vadd.f32 0.0, %v757
    %v759 = vpop.f32.mrb[0].mxu0
    %760 = vmatprep.mubr.f32.mxu0 0.0
    %761 = vmatmul.mubr.f32.gmra.mrb[0].mxu0 %v493
    %v762 = vpop.f32.mrb[0].mxu0
    %v763 = vadd.f32 0.0, %v762
    %v764 = vpop.f32.mrb[0].mxu0
    %765 = vmatprep.mubr.f32.mxu0 0.0
    %766 = vmatmul.mubr.f32.gmra.mrb[0].mxu0 %v496
    %v767 = vpop.f32.mrb[0].mxu0
    %v768 = vadd.f32 0.0, %v767
    %v769 = vpop.f32.mrb[0].mxu0
    %770 = vmatprep.mubr.f32.mxu0 0.0
    %771 = vmatmul.mubr.f32.gmra.mrb[0].mxu0 %v499
    %v772 = vpop.f32.mrb[0].mxu0
    %v773 = vadd.f32 0.0, %v772
    %v774 = vpop.f32.mrb[0].mxu0
    %775 = vmatprep.mubr.f32.mxu0 0.0
    %776 = vmatmul.mubr.f32.gmra.mrb[0].mxu0 %v502
    %v777 = vpop.f32.mrb[0].mxu0
    %v778 = vadd.f32 0.0, %v777
    %v779 = vpop.f32.mrb[0].mxu0
    %780 = vmatprep.mubr.f32.mxu0 0.0
    %781 = vmatmul.mubr.f32.gmra.mrb[0].mxu0 %v505
    %v782 = vpop.f32.mrb[0].mxu0
    %v783 = vadd.f32 0.0, %v782
    %v784 = vpop.f32.mrb[0].mxu0
    %785 = vmatprep.mubr.f32.mxu0 0.0
    %786 = vmatmul.mubr.f32.gmra.mrb[0].mxu0 %v508
    %v787 = vpop.f32.mrb[0].mxu0
    %v788 = vadd.f32 0.0, %v787
    %v789 = vpop.f32.mrb[0].mxu0
    %790 = vmatprep.mubr.f32.mxu0 0.0
    %791 = vmatmul.mubr.f32.gmra.mrb[0].mxu0 %v511
    %v792 = vpop.f32.mrb[0].mxu0
    %v793 = vadd.f32 0.0, %v792
    %v794 = vpop.f32.mrb[0].mxu0
    %795 = vmatprep.mubr.f32.mxu0 0.0
    %796 = vmatmul.mubr.f32.gmra.mrb[0].mxu0 %v514
    %v797 = vpop.f32.mrb[0].mxu0
    %v798 = vadd.f32 0.0, %v797
    %v799 = vpop.f32.mrb[0].mxu0
    %800 = vmatprep.mubr.f32.mxu0 0.0
    %801 = vmatmul.mubr.f32.gmra.mrb[0].mxu0 %v517
    %v802 = vpop.f32.mrb[0].mxu0
    %v803 = vadd.f32 0.0, %v802
    %v804 = vpop.f32.mrb[0].mxu0
    %805 = vmatprep.mubr.f32.mxu0 0.0
    %806 = vmatmul.mubr.f32.gmra.mrb[0].mxu0 %v520
    %v807 = vpop.f32.mrb[0].mxu0
    %v808 = vadd.f32 0.0, %v807
    %v809 = vpop.f32.mrb[0].mxu0
    %810 = vmatprep.mubr.f32.mxu0 0.0
    %811 = vmatmul.mubr.f32.gmra.mrb[0].mxu0 %v523
    %v812 = vpop.f32.mrb[0].mxu0
    %v813 = vadd.f32 0.0, %v812
    %v814 = vpop.f32.mrb[0].mxu0
    %815 = vmatprep.mubr.f32.mxu0 0.0
    %816 = vmatmul.mubr.f32.gmra.mrb[0].mxu0 %v526
    %v817 = vpop.f32.mrb[0].mxu0
    %v818 = vadd.f32 0.0, %v817
    %v819 = vpop.f32.mrb[0].mxu0
    %820 = vmatprep.mubr.f32.mxu0 0.0
    %821 = vmatmul.mubr.f32.gmra.mrb[0].mxu0 %v529
    %v822 = vpop.f32.mrb[0].mxu0
    %v823 = vadd.f32 0.0, %v822
    %v824 = vpop.f32.mrb[0].mxu0
    %825 = vmatprep.mubr.f32.mxu0 0.0
    %826 = vmatmul.mubr.f32.gmra.mrb[0].mxu0 %v532
    %v827 = vpop.f32.mrb[0].mxu0
    %v828 = vadd.f32 0.0, %v827
    %v829 = vpop.f32.mrb[0].mxu0
    %830 = vmatprep.mubr.f32.mxu0 0.0
    %831 = vmatmul.mubr.f32.gmra.mrb[0].mxu0 %v535
    %v832 = vpop.f32.mrb[0].mxu0
    %v833 = vadd.f32 0.0, %v832
    %v834 = vpop.f32.mrb[0].mxu0
    %835 = vmatprep.mubr.f32.mxu0 0.0
    %836 = vmatmul.mubr.f32.gmra.mrb[0].mxu0 %v538
    %v837 = vpop.f32.mrb[0].mxu0
    %v838 = vadd.f32 0.0, %v837
    %v839 = vpop.f32.mrb[0].mxu0
    %840 = vmatprep.mubr.f32.mxu0 0.0
    %841 = vmatmul.mubr.f32.gmra.mrb[0].mxu0 %v541
    %v842 = vpop.f32.mrb[0].mxu0
    %v843 = vadd.f32 0.0, %v842
    %v844 = vpop.f32.mrb[0].mxu0
    %845 = vmatprep.mubr.f32.mxu0 0.0
    %846 = vmatmul.mubr.f32.gmra.mrb[0].mxu0 %v544
    %v847 = vpop.f32.mrb[0].mxu0
    %v848 = vadd.f32 0.0, %v847
    %v849 = vpop.f32.mrb[0].mxu0
    %850 = vmatprep.mubr.f32.mxu0 0.0
    %851 = vmatmul.mubr.f32.gmra.mrb[0].mxu0 %v547
    %v852 = vpop.f32.mrb[0].mxu0
    %v853 = vadd.f32 0.0, %v852
    %v854 = vpop.f32.mrb[0].mxu0
    %855 = vmatprep.mubr.f32.mxu0 0.0
    %856 = vmatmul.mubr.f32.gmra.mrb[0].mxu0 %v550
    %v857 = vpop.f32.mrb[0].mxu0
    %v858 = vadd.f32 0.0, %v857
    %v859 = vpop.f32.mrb[0].mxu0
    %860 = vmatprep.mubr.f32.mxu0 0.0
    %861 = vmatmul.mubr.f32.gmra.mrb[0].mxu0 %v553
    %v862 = vpop.f32.mrb[0].mxu0
    %v863 = vadd.f32 0.0, %v862
    %v864 = vpop.f32.mrb[0].mxu0
    %865 = vmatprep.mubr.f32.mxu0 0.0
    %866 = vmatmul.mubr.f32.gmra.mrb[0].mxu0 %v556
    %v867 = vpop.f32.mrb[0].mxu0
    %v868 = vadd.f32 0.0, %v867
    %v869 = vpop.f32.mrb[0].mxu0
    %870 = vmatprep.mubr.f32.mxu0 0.0
    %871 = vmatmul.mubr.f32.gmra.mrb[0].mxu0 %v559
    %v872 = vpop.f32.mrb[0].mxu0
    %v873 = vadd.f32 0.0, %v872
    %v874 = vpop.f32.mrb[0].mxu0
    %875 = vmatprep.mubr.f32.mxu0 0.0
    %876 = vmatmul.mubr.f32.gmra.mrb[0].mxu0 %v562
    %v877 = vpop.f32.mrb[0].mxu0
    %v878 = vadd.f32 0.0, %v877
    %v879 = vpop.f32.mrb[0].mxu0
    %880 = vmatprep.mubr.f32.mxu0 0.0
    %881 = vmatmul.mubr.f32.gmra.mrb[0].mxu0 %v565
    %v882 = vpop.f32.mrb[0].mxu0
    %v883 = vadd.f32 0.0, %v882
    %v884 = vpop.f32.mrb[0].mxu0
    %885 = vmatprep.mubr.f32.mxu0 0.0
    %886 = vmatmul.mubr.f32.gmra.mrb[0].mxu0 %v568
    %v887 = vpop.f32.mrb[0].mxu0
    %v888 = vadd.f32 0.0, %v887
    %v889 = vpop.f32.mrb[0].mxu0
    %890 = vmatprep.mubr.f32.mxu0 0.0
    %891 = vmatmul.mubr.f32.gmra.mrb[0].mxu0 %v571
    %v892 = vpop.f32.mrb[0].mxu0
    %v893 = vadd.f32 0.0, %v892
    %v894 = vpop.f32.mrb[0].mxu0
    %895 = vmatprep.mubr.f32.mxu0 0.0
    %896 = vmatmul.mubr.f32.gmra.mrb[0].mxu0 %v574
    %v897 = vpop.f32.mrb[0].mxu0
    %v898 = vadd.f32 0.0, %v897
    %v899 = vpop.f32.mrb[0].mxu0
    %900 = vmatprep.mubr.f32.mxu0 0.0
    %901 = vmatmul.mubr.f32.gmra.mrb[0].mxu0 %v577
    %v902 = vpop.f32.mrb[0].mxu0
    %v903 = vadd.f32 0.0, %v902
    %v904 = vpop.f32.mrb[0].mxu0
    %905 = vmatprep.mubr.f32.mxu0 0.0
    %906 = vmatmul.mubr.f32.gmra.mrb[0].mxu0 %v580
    %v907 = vpop.f32.mrb[0].mxu0
    %v908 = vadd.f32 0.0, %v907
    %v909 = vpop.f32.mrb[0].mxu0
    %910 = vmatprep.mubr.f32.mxu0 0.0
    %911 = vmatmul.mubr.f32.gmra.mrb[0].mxu0 %v583
    %v912 = vpop.f32.mrb[0].mxu0
    %v913 = vadd.f32 0.0, %v912
    %v914 = vpop.f32.mrb[0].mxu0
    %915 = vmatprep.mubr.f32.mxu0 0.0
    %916 = vmatmul.mubr.f32.gmra.mrb[0].mxu0 %v586
    %v917 = vpop.f32.mrb[0].mxu0
    %v918 = vadd.f32 0.0, %v917
    %v919 = vpop.f32.mrb[0].mxu0
    %920 = vmatprep.mubr.f32.mxu0 0.0
    %921 = vmatmul.mubr.f32.gmra.mrb[0].mxu0 %v589
    %v922 = vpop.f32.mrb[0].mxu0
    %v923 = vadd.f32 0.0, %v922
    %v924 = vpop.f32.mrb[0].mxu0
    %925 = vmatprep.mubr.f32.mxu0 0.0
    %926 = vmatmul.mubr.f32.gmra.mrb[0].mxu0 %v592
    %v927 = vpop.f32.mrb[0].mxu0
    %v928 = vadd.f32 0.0, %v927
    %v929 = vpop.f32.mrb[0].mxu0
    %930 = vmatprep.mubr.f32.mxu0 0.0
    %931 = vmatmul.mubr.f32.gmra.mrb[0].mxu0 %v595
    %v932 = vpop.f32.mrb[0].mxu0
    %v933 = vadd.f32 0.0, %v932
    %v934 = vpop.f32.mrb[0].mxu0
    %935 = vmatprep.mubr.f32.mxu0 0.0
    %936 = vmatmul.mubr.f32.gmra.mrb[0].mxu0 %v598
    %v937 = vpop.f32.mrb[0].mxu0
    %v938 = vadd.f32 0.0, %v937
    %v939 = vpop.f32.mrb[0].mxu0
    %940 = vmatprep.mubr.f32.mxu0 0.0
    %941 = vmatmul.mubr.f32.gmra.mrb[0].mxu0 %v601
    %v942 = vpop.f32.mrb[0].mxu0
    %v943 = vadd.f32 0.0, %v942
    %v944 = vpop.f32.mrb[0].mxu0
    %945 = vmatprep.mubr.f32.mxu0 0.0
    %946 = vmatmul.mubr.f32.gmra.mrb[0].mxu0 %v604
    %v947 = vpop.f32.mrb[0].mxu0
    %v948 = vadd.f32 0.0, %v947
    %v949 = vpop.f32.mrb[0].mxu0
    %950 = vmatprep.mubr.f32.mxu0 0.0
    %951 = vmatmul.mubr.f32.gmra.mrb[0].mxu0 %v607
    %v952 = vpop.f32.mrb[0].mxu0
    %v953 = vadd.f32 0.0, %v952
    %v954 = vpop.f32.mrb[0].mxu0
    %955 = vmatprep.mubr.f32.mxu0 0.0
    %956 = vmatmul.mubr.f32.gmra.mrb[0].mxu0 %v610
    %v957 = vpop.f32.mrb[0].mxu0
    %v958 = vadd.f32 0.0, %v957
    %v959 = vpop.f32.mrb[0].mxu0
    %960 = vmatprep.mubr.f32.mxu0 0.0
    %961 = vmatmul.mubr.f32.gmra.mrb[0].mxu0 %v613
    %v962 = vpop.f32.mrb[0].mxu0
    %v963 = vadd.f32 0.0, %v962
    %v964 = vpop.f32.mrb[0].mxu0
    %965 = vmatprep.mubr.f32.mxu0 0.0
    %966 = vmatmul.mubr.f32.gmra.mrb[0].mxu0 %v616
    %v967 = vpop.f32.mrb[0].mxu0
    %v968 = vadd.f32 0.0, %v967
    %v969 = vpop.f32.mrb[0].mxu0
    %970 = vmatprep.mubr.f32.mxu0 0.0
    %971 = vmatmul.mubr.f32.gmra.mrb[0].mxu0 %v619
    %v972 = vpop.f32.mrb[0].mxu0
    %v973 = vadd.f32 0.0, %v972
    %v974 = vpop.f32.mrb[0].mxu0
    %975 = vmatprep.mubr.f32.mxu0 0.0
    %976 = vmatmul.mubr.f32.gmra.mrb[0].mxu0 %v622
    %v977 = vpop.f32.mrb[0].mxu0
    %v978 = vadd.f32 0.0, %v977
    %v979 = vpop.f32.mrb[0].mxu0
    %980 = vmatprep.mubr.f32.mxu0 0.0
    %981 = vmatmul.mubr.f32.gmra.mrb[0].mxu0 %v625
    %v982 = vpop.f32.mrb[0].mxu0
    %v983 = vadd.f32 0.0, %v982
    %v984 = vpop.f32.mrb[0].mxu0
    %985 = vmatprep.mubr.f32.mxu0 0.0
    %986 = vmatmul.mubr.f32.gmra.mrb[0].mxu0 %v628
    %v987 = vpop.f32.mrb[0].mxu0
    %v988 = vadd.f32 0.0, %v987
    %v989 = vpop.f32.mrb[0].mxu0
    %990 = vmatprep.mubr.f32.mxu0 0.0
    %991 = vmatmul.mubr.f32.gmra.mrb[0].mxu0 %v631
    %v992 = vpop.f32.mrb[0].mxu0
    %v993 = vadd.f32 0.0, %v992
    %v994 = vpop.f32.mrb[0].mxu0
    %995 = vmatprep.mubr.f32.mxu0 0.0
    %996 = vmatmul.mubr.f32.gmra.mrb[0].mxu0 %v634
    %v997 = vpop.f32.mrb[0].mxu0
    %v998 = vadd.f32 0.0, %v997
    %v999 = vpop.f32.mrb[0].mxu0
    %1000 = vmatprep.mubr.f32.mxu0 0.0
    %1001 = vmatmul.mubr.f32.gmra.mrb[0].mxu0 %v637
    %v1002 = vpop.f32.mrb[0].mxu0
    %v1003 = vadd.f32 0.0, %v1002
    %v1004 = vpop.f32.mrb[0].mxu0
    %1005 = vmatprep.mubr.f32.mxu0 0.0
    %1006 = vmatmul.mubr.f32.gmra.mrb[0].mxu0 %v640
    %v1007 = vpop.f32.mrb[0].mxu0
    %v1008 = vadd.f32 0.0, %v1007
    %v1009 = vpop.f32.mrb[0].mxu0
    %1010 = vmatprep.mubr.f32.mxu0 0.0
    %1011 = vmatmul.mubr.f32.gmra.mrb[0].mxu0 %v643
    %v1012 = vpop.f32.mrb[0].mxu0
    %v1013 = vadd.f32 0.0, %v1012
    %v1014 = vpop.f32.mrb[0].mxu0
    %1015 = vmatprep.mubr.f32.mxu0 0.0
    %1016 = vmatmul.mubr.f32.gmra.mrb[0].mxu0 %v646
    %v1017 = vpop.f32.mrb[0].mxu0
    %v1018 = vadd.f32 0.0, %v1017
    %v1019 = vpop.f32.mrb[0].mxu0
    %1020 = vmatprep.mubr.f32.mxu0 0.0
    %1021 = vmatmul.mubr.f32.gmra.mrb[0].mxu0 %v649
    %v1022 = vpop.f32.mrb[0].mxu0
    %v1023 = vadd.f32 0.0, %v1022
    %v1024 = vpop.f32.mrb[0].mxu0
    %1025 = vmatprep.mubr.f32.mxu0 0.0
    %1026 = vmatmul.mubr.f32.gmra.mrb[0].mxu0 %v652
    %v1027 = vpop.f32.mrb[0].mxu0
    %v1028 = vadd.f32 0.0, %v1027
    %v1029 = vpop.f32.mrb[0].mxu0
    %1030 = vmatprep.mubr.f32.mxu0 0.0
    %1031 = vmatmul.mubr.f32.gmra.mrb[0].mxu0 %v655
    %v1032 = vpop.f32.mrb[0].mxu0
    %v1033 = vadd.f32 0.0, %v1032
    %v1034 = vpop.f32.mrb[0].mxu0
    %1035 = vmatprep.mubr.f32.mxu0 0.0
    %1036 = vmatmul.mubr.f32.gmra.mrb[0].mxu0 %v658
    %v1037 = vpop.f32.mrb[0].mxu0
    %v1038 = vadd.f32 0.0, %v1037
    %v1039 = vpop.f32.mrb[0].mxu0
    %1040 = vmatprep.mubr.f32.mxu0 0.0
    %1041 = vmatmul.mubr.f32.gmra.mrb[0].mxu0 %v661
    %v1042 = vpop.f32.mrb[0].mxu0
    %v1043 = vadd.f32 0.0, %v1042
    %v1044 = vpop.f32.mrb[0].mxu0
    %1045 = vmatprep.mubr.f32.mxu0 0.0
    %1046 = vmatmul.mubr.f32.gmra.mrb[0].mxu0 %v664
    %v1047 = vpop.f32.mrb[0].mxu0
    %v1048 = vadd.f32 0.0, %v1047
    %v1049 = vpop.f32.mrb[0].mxu0
    %1050 = vdwg.mxu0
    %v1052 = vsel %vm203, %v336, 0
    %v1055 = vsel %vm203, %v338, 0
    %v1058 = vsel %vm203, %v340, 0
    %v1061 = vsel %vm203, %v342, 0
    %v1064 = vsel %vm203, %v344, 0
    %v1067 = vsel %vm203, %v346, 0
    %v1070 = vsel %vm203, %v348, 0
    %v1073 = vsel %vm203, %v350, 0
    %v1076 = vsel %vm203, %v352, 0
    %v1079 = vsel %vm203, %v354, 0
    %v1082 = vsel %vm203, %v356, 0
    %v1085 = vsel %vm203, %v358, 0
    %v1088 = vsel %vm203, %v360, 0
    %v1091 = vsel %vm203, %v362, 0
    %v1094 = vsel %vm203, %v364, 0
    %v1097 = vsel %vm203, %v366, 0
    %v1100 = vsel %vm203, %v368, 0
    %v1103 = vsel %vm203, %v370, 0
    %v1106 = vsel %vm203, %v372, 0
    %v1109 = vsel %vm203, %v374, 0
    %v1112 = vsel %vm203, %v376, 0
    %v1115 = vsel %vm203, %v378, 0
    %v1118 = vsel %vm203, %v380, 0
    %v1121 = vsel %vm203, %v382, 0
    %v1124 = vsel %vm203, %v384, 0
    %v1127 = vsel %vm203, %v386, 0
    %v1130 = vsel %vm203, %v388, 0
    %v1133 = vsel %vm203, %v390, 0
    %v1136 = vsel %vm203, %v392, 0
    %v1139 = vsel %vm203, %v394, 0
    %v1142 = vsel %vm203, %v396, 0
    %v1145 = vsel %vm203, %v398, 0
    %v1148 = vsel %vm203, %v400, 0
    %v1151 = vsel %vm203, %v402, 0
    %v1154 = vsel %vm203, %v404, 0
    %v1157 = vsel %vm203, %v406, 0
    %v1160 = vsel %vm203, %v408, 0
    %v1163 = vsel %vm203, %v410, 0
    %v1166 = vsel %vm203, %v412, 0
    %v1169 = vsel %vm203, %v414, 0
    %v1172 = vsel %vm203, %v416, 0
    %v1175 = vsel %vm203, %v418, 0
    %v1178 = vsel %vm203, %v420, 0
    %v1181 = vsel %vm203, %v422, 0
    %v1184 = vsel %vm203, %v424, 0
    %v1187 = vsel %vm203, %v426, 0
    %v1190 = vsel %vm203, %v428, 0
    %v1193 = vsel %vm203, %v430, 0
    %v1196 = vsel %vm203, %v432, 0
    %v1199 = vsel %vm203, %v434, 0
    %v1202 = vsel %vm203, %v436, 0
    %v1205 = vsel %vm203, %v438, 0
    %v1208 = vsel %vm203, %v440, 0
    %v1211 = vsel %vm203, %v442, 0
    %v1214 = vsel %vm203, %v444, 0
    %v1217 = vsel %vm203, %v446, 0
    %v1220 = vsel %vm203, %v448, 0
    %v1223 = vsel %vm203, %v450, 0
    %v1226 = vsel %vm203, %v452, 0
    %v1229 = vsel %vm203, %v454, 0
    %v1232 = vsel %vm203, %v456, 0
    %v1235 = vsel %vm203, %v458, 0
    %v1238 = vsel %vm203, %v460, 0
    %v1241 = vsel %vm203, %v462, 0
    %1243 = vmatprep.subr.mxu0 0.0
    %1244 = vmatpush1.msra.mxu0 %v465
    %1245 = vmatprep.subr.mxu0 0.0
    %1246 = vmatpush1.msra.mxu0 %v466
    %1247 = vmatprep.subr.mxu0 0.0
    %1248 = vmatpush1.msra.mxu0 %v467
    %1249 = vmatprep.subr.mxu0 0.0
    %1250 = vmatpush1.msra.mxu0 %v468
    %1251 = vmatprep.subr.mxu0 0.0
    %1252 = vmatpush1.msra.mxu0 0.0
    %1253 = vmatprep.subr.mxu0 0.0
    %1254 = vmatpush1.msra.mxu0 0.0
    %1255 = vmatprep.subr.mxu0 0.0
    %1256 = vmatpush1.msra.mxu0 0.0
    %1257 = vmatprep.subr.mxu0 0.0
    %1258 = vmatpush1.msra.mxu0 0.0
    %1259 = vmatprep.subr.mxu0 0.0
    %1260 = vmatpush1.msra.mxu0 0.0
    %1261 = vmatprep.subr.mxu0 0.0
    %1262 = vmatpush1.msra.mxu0 0.0
    %1263 = vmatprep.subr.mxu0 0.0
    %1264 = vmatpush1.msra.mxu0 0.0
    %1265 = vmatprep.subr.mxu0 0.0
    %1266 = vmatpush1.msra.mxu0 0.0
    %1267 = vmatprep.subr.mxu0 0.0
    %1268 = vmatpush1.msra.mxu0 0.0
    %1269 = vmatprep.subr.mxu0 0.0
    %1270 = vmatpush1.msra.mxu0 0.0
    %1271 = vmatprep.subr.mxu0 0.0
    %1272 = vmatpush1.msra.mxu0 0.0
    %1273 = vmatprep.subr.mxu0 0.0
    %1274 = vmatpush1.msra.mxu0 0.0
    %1275 = vmatprep.subr.mxu0 0.0
    %1276 = vmatpush1.msra.mxu0 0.0
    %1277 = vmatprep.subr.mxu0 0.0
    %1278 = vmatpush1.msra.mxu0 0.0
    %1279 = vmatprep.subr.mxu0 0.0
    %1280 = vmatpush1.msra.mxu0 0.0
    %1281 = vmatprep.subr.mxu0 0.0
    %1282 = vmatpush1.msra.mxu0 0.0
    %1283 = vmatprep.subr.mxu0 0.0
    %1284 = vmatpush1.msra.mxu0 0.0
    %1285 = vmatprep.subr.mxu0 0.0
    %1286 = vmatpush1.msra.mxu0 0.0
    %1287 = vmatprep.subr.mxu0 0.0
    %1288 = vmatpush1.msra.mxu0 0.0
    %1289 = vmatprep.subr.mxu0 0.0
    %1290 = vmatpush1.msra.mxu0 0.0
    %1291 = vmatprep.subr.mxu0 0.0
    %1292 = vmatpush1.msra.mxu0 0.0
    %1293 = vmatprep.subr.mxu0 0.0
    %1294 = vmatpush1.msra.mxu0 0.0
    %1295 = vmatprep.subr.mxu0 0.0
    %1296 = vmatpush1.msra.mxu0 0.0
    %1297 = vmatprep.subr.mxu0 0.0
    %1298 = vmatpush1.msra.mxu0 0.0
    %1299 = vmatprep.subr.mxu0 0.0
    %1300 = vmatpush1.msra.mxu0 0.0
    %1301 = vmatprep.subr.mxu0 0.0
    %1302 = vmatpush1.msra.mxu0 0.0
    %1303 = vmatprep.subr.mxu0 0.0
    %1304 = vmatpush1.msra.mxu0 0.0
    %1305 = vmatprep.subr.mxu0 0.0
    %1306 = vmatpush1.msra.mxu0 0.0
    %1307 = vmatprep.mubr.f32.mxu0 0.0
    %1308 = vmatmul.mubr.f32.gmra.mrb[0].mxu0 %v1052
    %v1309 = vpop.f32.mrb[0].mxu0
    %v1310 = vadd.f32 %v733, %v1309
    %v1311 = vpop.f32.mrb[0].mxu0
    %1312 = vmatprep.mubr.f32.mxu0 0.0
    %1313 = vmatmul.mubr.f32.gmra.mrb[0].mxu0 %v1055
    %v1314 = vpop.f32.mrb[0].mxu0
    %v1315 = vadd.f32 %v738, %v1314
    %v1316 = vpop.f32.mrb[0].mxu0
    %1317 = vmatprep.mubr.f32.mxu0 0.0
    %1318 = vmatmul.mubr.f32.gmra.mrb[0].mxu0 %v1058
    %v1319 = vpop.f32.mrb[0].mxu0
    %v1320 = vadd.f32 %v743, %v1319
    %v1321 = vpop.f32.mrb[0].mxu0
    %1322 = vmatprep.mubr.f32.mxu0 0.0
    %1323 = vmatmul.mubr.f32.gmra.mrb[0].mxu0 %v1061
    %v1324 = vpop.f32.mrb[0].mxu0
    %v1325 = vadd.f32 %v748, %v1324
    %v1326 = vpop.f32.mrb[0].mxu0
    %1327 = vmatprep.mubr.f32.mxu0 0.0
    %1328 = vmatmul.mubr.f32.gmra.mrb[0].mxu0 %v1064
    %v1329 = vpop.f32.mrb[0].mxu0
    %v1330 = vadd.f32 %v753, %v1329
    %v1331 = vpop.f32.mrb[0].mxu0
    %1332 = vmatprep.mubr.f32.mxu0 0.0
    %1333 = vmatmul.mubr.f32.gmra.mrb[0].mxu0 %v1067
    %v1334 = vpop.f32.mrb[0].mxu0
    %v1335 = vadd.f32 %v758, %v1334
    %v1336 = vpop.f32.mrb[0].mxu0
    %1337 = vmatprep.mubr.f32.mxu0 0.0
    %1338 = vmatmul.mubr.f32.gmra.mrb[0].mxu0 %v1070
    %v1339 = vpop.f32.mrb[0].mxu0
    %v1340 = vadd.f32 %v763, %v1339
    %v1341 = vpop.f32.mrb[0].mxu0
    %1342 = vmatprep.mubr.f32.mxu0 0.0
    %1343 = vmatmul.mubr.f32.gmra.mrb[0].mxu0 %v1073
    %v1344 = vpop.f32.mrb[0].mxu0
    %v1345 = vadd.f32 %v768, %v1344
    %v1346 = vpop.f32.mrb[0].mxu0
    %1347 = vmatprep.mubr.f32.mxu0 0.0
    %1348 = vmatmul.mubr.f32.gmra.mrb[0].mxu0 %v1076
    %v1349 = vpop.f32.mrb[0].mxu0
    %v1350 = vadd.f32 %v773, %v1349
    %v1351 = vpop.f32.mrb[0].mxu0
    %1352 = vmatprep.mubr.f32.mxu0 0.0
    %1353 = vmatmul.mubr.f32.gmra.mrb[0].mxu0 %v1079
    %v1354 = vpop.f32.mrb[0].mxu0
    %v1355 = vadd.f32 %v778, %v1354
    %v1356 = vpop.f32.mrb[0].mxu0
    %1357 = vmatprep.mubr.f32.mxu0 0.0
    %1358 = vmatmul.mubr.f32.gmra.mrb[0].mxu0 %v1082
    %v1359 = vpop.f32.mrb[0].mxu0
    %v1360 = vadd.f32 %v783, %v1359
    %v1361 = vpop.f32.mrb[0].mxu0
    %1362 = vmatprep.mubr.f32.mxu0 0.0
    %1363 = vmatmul.mubr.f32.gmra.mrb[0].mxu0 %v1085
    %v1364 = vpop.f32.mrb[0].mxu0
    %v1365 = vadd.f32 %v788, %v1364
    %v1366 = vpop.f32.mrb[0].mxu0
    %1367 = vmatprep.mubr.f32.mxu0 0.0
    %1368 = vmatmul.mubr.f32.gmra.mrb[0].mxu0 %v1088
    %v1369 = vpop.f32.mrb[0].mxu0
    %v1370 = vadd.f32 %v793, %v1369
    %v1371 = vpop.f32.mrb[0].mxu0
    %1372 = vmatprep.mubr.f32.mxu0 0.0
    %1373 = vmatmul.mubr.f32.gmra.mrb[0].mxu0 %v1091
    %v1374 = vpop.f32.mrb[0].mxu0
    %v1375 = vadd.f32 %v798, %v1374
    %v1376 = vpop.f32.mrb[0].mxu0
    %1377 = vmatprep.mubr.f32.mxu0 0.0
    %1378 = vmatmul.mubr.f32.gmra.mrb[0].mxu0 %v1094
    %v1379 = vpop.f32.mrb[0].mxu0
    %v1380 = vadd.f32 %v803, %v1379
    %v1381 = vpop.f32.mrb[0].mxu0
    %1382 = vmatprep.mubr.f32.mxu0 0.0
    %1383 = vmatmul.mubr.f32.gmra.mrb[0].mxu0 %v1097
    %v1384 = vpop.f32.mrb[0].mxu0
    %v1385 = vadd.f32 %v808, %v1384
    %v1386 = vpop.f32.mrb[0].mxu0
    %1387 = vmatprep.mubr.f32.mxu0 0.0
    %1388 = vmatmul.mubr.f32.gmra.mrb[0].mxu0 %v1100
    %v1389 = vpop.f32.mrb[0].mxu0
    %v1390 = vadd.f32 %v813, %v1389
    %v1391 = vpop.f32.mrb[0].mxu0
    %1392 = vmatprep.mubr.f32.mxu0 0.0
    %1393 = vmatmul.mubr.f32.gmra.mrb[0].mxu0 %v1103
    %v1394 = vpop.f32.mrb[0].mxu0
    %v1395 = vadd.f32 %v818, %v1394
    %v1396 = vpop.f32.mrb[0].mxu0
    %1397 = vmatprep.mubr.f32.mxu0 0.0
    %1398 = vmatmul.mubr.f32.gmra.mrb[0].mxu0 %v1106
    %v1399 = vpop.f32.mrb[0].mxu0
    %v1400 = vadd.f32 %v823, %v1399
    %v1401 = vpop.f32.mrb[0].mxu0
    %1402 = vmatprep.mubr.f32.mxu0 0.0
    %1403 = vmatmul.mubr.f32.gmra.mrb[0].mxu0 %v1109
    %v1404 = vpop.f32.mrb[0].mxu0
    %v1405 = vadd.f32 %v828, %v1404
    %v1406 = vpop.f32.mrb[0].mxu0
    %1407 = vmatprep.mubr.f32.mxu0 0.0
    %1408 = vmatmul.mubr.f32.gmra.mrb[0].mxu0 %v1112
    %v1409 = vpop.f32.mrb[0].mxu0
    %v1410 = vadd.f32 %v833, %v1409
    %v1411 = vpop.f32.mrb[0].mxu0
    %1412 = vmatprep.mubr.f32.mxu0 0.0
    %1413 = vmatmul.mubr.f32.gmra.mrb[0].mxu0 %v1115
    %v1414 = vpop.f32.mrb[0].mxu0
    %v1415 = vadd.f32 %v838, %v1414
    %v1416 = vpop.f32.mrb[0].mxu0
    %1417 = vmatprep.mubr.f32.mxu0 0.0
    %1418 = vmatmul.mubr.f32.gmra.mrb[0].mxu0 %v1118
    %v1419 = vpop.f32.mrb[0].mxu0
    %v1420 = vadd.f32 %v843, %v1419
    %v1421 = vpop.f32.mrb[0].mxu0
    %1422 = vmatprep.mubr.f32.mxu0 0.0
    %1423 = vmatmul.mubr.f32.gmra.mrb[0].mxu0 %v1121
    %v1424 = vpop.f32.mrb[0].mxu0
    %v1425 = vadd.f32 %v848, %v1424
    %v1426 = vpop.f32.mrb[0].mxu0
    %1427 = vmatprep.mubr.f32.mxu0 0.0
    %1428 = vmatmul.mubr.f32.gmra.mrb[0].mxu0 %v1124
    %v1429 = vpop.f32.mrb[0].mxu0
    %v1430 = vadd.f32 %v853, %v1429
    %v1431 = vpop.f32.mrb[0].mxu0
    %1432 = vmatprep.mubr.f32.mxu0 0.0
    %1433 = vmatmul.mubr.f32.gmra.mrb[0].mxu0 %v1127
    %v1434 = vpop.f32.mrb[0].mxu0
    %v1435 = vadd.f32 %v858, %v1434
    %v1436 = vpop.f32.mrb[0].mxu0
    %1437 = vmatprep.mubr.f32.mxu0 0.0
    %1438 = vmatmul.mubr.f32.gmra.mrb[0].mxu0 %v1130
    %v1439 = vpop.f32.mrb[0].mxu0
    %v1440 = vadd.f32 %v863, %v1439
    %v1441 = vpop.f32.mrb[0].mxu0
    %1442 = vmatprep.mubr.f32.mxu0 0.0
    %1443 = vmatmul.mubr.f32.gmra.mrb[0].mxu0 %v1133
    %v1444 = vpop.f32.mrb[0].mxu0
    %v1445 = vadd.f32 %v868, %v1444
    %v1446 = vpop.f32.mrb[0].mxu0
    %1447 = vmatprep.mubr.f32.mxu0 0.0
    %1448 = vmatmul.mubr.f32.gmra.mrb[0].mxu0 %v1136
    %v1449 = vpop.f32.mrb[0].mxu0
    %v1450 = vadd.f32 %v873, %v1449
    %v1451 = vpop.f32.mrb[0].mxu0
    %1452 = vmatprep.mubr.f32.mxu0 0.0
    %1453 = vmatmul.mubr.f32.gmra.mrb[0].mxu0 %v1139
    %v1454 = vpop.f32.mrb[0].mxu0
    %v1455 = vadd.f32 %v878, %v1454
    %v1456 = vpop.f32.mrb[0].mxu0
    %1457 = vmatprep.mubr.f32.mxu0 0.0
    %1458 = vmatmul.mubr.f32.gmra.mrb[0].mxu0 %v1142
    %v1459 = vpop.f32.mrb[0].mxu0
    %v1460 = vadd.f32 %v883, %v1459
    %v1461 = vpop.f32.mrb[0].mxu0
    %1462 = vmatprep.mubr.f32.mxu0 0.0
    %1463 = vmatmul.mubr.f32.gmra.mrb[0].mxu0 %v1145
    %v1464 = vpop.f32.mrb[0].mxu0
    %v1465 = vadd.f32 %v888, %v1464
    %v1466 = vpop.f32.mrb[0].mxu0
    %1467 = vmatprep.mubr.f32.mxu0 0.0
    %1468 = vmatmul.mubr.f32.gmra.mrb[0].mxu0 %v1148
    %v1469 = vpop.f32.mrb[0].mxu0
    %v1470 = vadd.f32 %v893, %v1469
    %v1471 = vpop.f32.mrb[0].mxu0
    %1472 = vmatprep.mubr.f32.mxu0 0.0
    %1473 = vmatmul.mubr.f32.gmra.mrb[0].mxu0 %v1151
    %v1474 = vpop.f32.mrb[0].mxu0
    %v1475 = vadd.f32 %v898, %v1474
    %v1476 = vpop.f32.mrb[0].mxu0
    %1477 = vmatprep.mubr.f32.mxu0 0.0
    %1478 = vmatmul.mubr.f32.gmra.mrb[0].mxu0 %v1154
    %v1479 = vpop.f32.mrb[0].mxu0
    %v1480 = vadd.f32 %v903, %v1479
    %v1481 = vpop.f32.mrb[0].mxu0
    %1482 = vmatprep.mubr.f32.mxu0 0.0
    %1483 = vmatmul.mubr.f32.gmra.mrb[0].mxu0 %v1157
    %v1484 = vpop.f32.mrb[0].mxu0
    %v1485 = vadd.f32 %v908, %v1484
    %v1486 = vpop.f32.mrb[0].mxu0
    %1487 = vmatprep.mubr.f32.mxu0 0.0
    %1488 = vmatmul.mubr.f32.gmra.mrb[0].mxu0 %v1160
    %v1489 = vpop.f32.mrb[0].mxu0
    %v1490 = vadd.f32 %v913, %v1489
    %v1491 = vpop.f32.mrb[0].mxu0
    %1492 = vmatprep.mubr.f32.mxu0 0.0
    %1493 = vmatmul.mubr.f32.gmra.mrb[0].mxu0 %v1163
    %v1494 = vpop.f32.mrb[0].mxu0
    %v1495 = vadd.f32 %v918, %v1494
    %v1496 = vpop.f32.mrb[0].mxu0
    %1497 = vmatprep.mubr.f32.mxu0 0.0
    %1498 = vmatmul.mubr.f32.gmra.mrb[0].mxu0 %v1166
    %v1499 = vpop.f32.mrb[0].mxu0
    %v1500 = vadd.f32 %v923, %v1499
    %v1501 = vpop.f32.mrb[0].mxu0
    %1502 = vmatprep.mubr.f32.mxu0 0.0
    %1503 = vmatmul.mubr.f32.gmra.mrb[0].mxu0 %v1169
    %v1504 = vpop.f32.mrb[0].mxu0
    %v1505 = vadd.f32 %v928, %v1504
    %v1506 = vpop.f32.mrb[0].mxu0
    %1507 = vmatprep.mubr.f32.mxu0 0.0
    %1508 = vmatmul.mubr.f32.gmra.mrb[0].mxu0 %v1172
    %v1509 = vpop.f32.mrb[0].mxu0
    %v1510 = vadd.f32 %v933, %v1509
    %v1511 = vpop.f32.mrb[0].mxu0
    %1512 = vmatprep.mubr.f32.mxu0 0.0
    %1513 = vmatmul.mubr.f32.gmra.mrb[0].mxu0 %v1175
    %v1514 = vpop.f32.mrb[0].mxu0
    %v1515 = vadd.f32 %v938, %v1514
    %v1516 = vpop.f32.mrb[0].mxu0
    %1517 = vmatprep.mubr.f32.mxu0 0.0
    %1518 = vmatmul.mubr.f32.gmra.mrb[0].mxu0 %v1178
    %v1519 = vpop.f32.mrb[0].mxu0
    %v1520 = vadd.f32 %v943, %v1519
    %v1521 = vpop.f32.mrb[0].mxu0
    %1522 = vmatprep.mubr.f32.mxu0 0.0
    %1523 = vmatmul.mubr.f32.gmra.mrb[0].mxu0 %v1181
    %v1524 = vpop.f32.mrb[0].mxu0
    %v1525 = vadd.f32 %v948, %v1524
    %v1526 = vpop.f32.mrb[0].mxu0
    %1527 = vmatprep.mubr.f32.mxu0 0.0
    %1528 = vmatmul.mubr.f32.gmra.mrb[0].mxu0 %v1184
    %v1529 = vpop.f32.mrb[0].mxu0
    %v1530 = vadd.f32 %v953, %v1529
    %v1531 = vpop.f32.mrb[0].mxu0
    %1532 = vmatprep.mubr.f32.mxu0 0.0
    %1533 = vmatmul.mubr.f32.gmra.mrb[0].mxu0 %v1187
    %v1534 = vpop.f32.mrb[0].mxu0
    %v1535 = vadd.f32 %v958, %v1534
    %v1536 = vpop.f32.mrb[0].mxu0
    %1537 = vmatprep.mubr.f32.mxu0 0.0
    %1538 = vmatmul.mubr.f32.gmra.mrb[0].mxu0 %v1190
    %v1539 = vpop.f32.mrb[0].mxu0
    %v1540 = vadd.f32 %v963, %v1539
    %v1541 = vpop.f32.mrb[0].mxu0
    %1542 = vmatprep.mubr.f32.mxu0 0.0
    %1543 = vmatmul.mubr.f32.gmra.mrb[0].mxu0 %v1193
    %v1544 = vpop.f32.mrb[0].mxu0
    %v1545 = vadd.f32 %v968, %v1544
    %v1546 = vpop.f32.mrb[0].mxu0
    %1547 = vmatprep.mubr.f32.mxu0 0.0
    %1548 = vmatmul.mubr.f32.gmra.mrb[0].mxu0 %v1196
    %v1549 = vpop.f32.mrb[0].mxu0
    %v1550 = vadd.f32 %v973, %v1549
    %v1551 = vpop.f32.mrb[0].mxu0
    %1552 = vmatprep.mubr.f32.mxu0 0.0
    %1553 = vmatmul.mubr.f32.gmra.mrb[0].mxu0 %v1199
    %v1554 = vpop.f32.mrb[0].mxu0
    %v1555 = vadd.f32 %v978, %v1554
    %v1556 = vpop.f32.mrb[0].mxu0
    %1557 = vmatprep.mubr.f32.mxu0 0.0
    %1558 = vmatmul.mubr.f32.gmra.mrb[0].mxu0 %v1202
    %v1559 = vpop.f32.mrb[0].mxu0
    %v1560 = vadd.f32 %v983, %v1559
    %v1561 = vpop.f32.mrb[0].mxu0
    %1562 = vmatprep.mubr.f32.mxu0 0.0
    %1563 = vmatmul.mubr.f32.gmra.mrb[0].mxu0 %v1205
    %v1564 = vpop.f32.mrb[0].mxu0
    %v1565 = vadd.f32 %v988, %v1564
    %v1566 = vpop.f32.mrb[0].mxu0
    %1567 = vmatprep.mubr.f32.mxu0 0.0
    %1568 = vmatmul.mubr.f32.gmra.mrb[0].mxu0 %v1208
    %v1569 = vpop.f32.mrb[0].mxu0
    %v1570 = vadd.f32 %v993, %v1569
    %v1571 = vpop.f32.mrb[0].mxu0
    %1572 = vmatprep.mubr.f32.mxu0 0.0
    %1573 = vmatmul.mubr.f32.gmra.mrb[0].mxu0 %v1211
    %v1574 = vpop.f32.mrb[0].mxu0
    %v1575 = vadd.f32 %v998, %v1574
    %v1576 = vpop.f32.mrb[0].mxu0
    %1577 = vmatprep.mubr.f32.mxu0 0.0
    %1578 = vmatmul.mubr.f32.gmra.mrb[0].mxu0 %v1214
    %v1579 = vpop.f32.mrb[0].mxu0
    %v1580 = vadd.f32 %v1003, %v1579
    %v1581 = vpop.f32.mrb[0].mxu0
    %1582 = vmatprep.mubr.f32.mxu0 0.0
    %1583 = vmatmul.mubr.f32.gmra.mrb[0].mxu0 %v1217
    %v1584 = vpop.f32.mrb[0].mxu0
    %v1585 = vadd.f32 %v1008, %v1584
    %v1586 = vpop.f32.mrb[0].mxu0
    %1587 = vmatprep.mubr.f32.mxu0 0.0
    %1588 = vmatmul.mubr.f32.gmra.mrb[0].mxu0 %v1220
    %v1589 = vpop.f32.mrb[0].mxu0
    %v1590 = vadd.f32 %v1013, %v1589
    %v1591 = vpop.f32.mrb[0].mxu0
    %1592 = vmatprep.mubr.f32.mxu0 0.0
    %1593 = vmatmul.mubr.f32.gmra.mrb[0].mxu0 %v1223
    %v1594 = vpop.f32.mrb[0].mxu0
    %v1595 = vadd.f32 %v1018, %v1594
    %v1596 = vpop.f32.mrb[0].mxu0
    %1597 = vmatprep.mubr.f32.mxu0 0.0
    %1598 = vmatmul.mubr.f32.gmra.mrb[0].mxu0 %v1226
    %v1599 = vpop.f32.mrb[0].mxu0
    %v1600 = vadd.f32 %v1023, %v1599
    %v1601 = vpop.f32.mrb[0].mxu0
    %1602 = vmatprep.mubr.f32.mxu0 0.0
    %1603 = vmatmul.mubr.f32.gmra.mrb[0].mxu0 %v1229
    %v1604 = vpop.f32.mrb[0].mxu0
    %v1605 = vadd.f32 %v1028, %v1604
    %v1606 = vpop.f32.mrb[0].mxu0
    %1607 = vmatprep.mubr.f32.mxu0 0.0
    %1608 = vmatmul.mubr.f32.gmra.mrb[0].mxu0 %v1232
    %v1609 = vpop.f32.mrb[0].mxu0
    %v1610 = vadd.f32 %v1033, %v1609
    %v1611 = vpop.f32.mrb[0].mxu0
    %1612 = vmatprep.mubr.f32.mxu0 0.0
    %1613 = vmatmul.mubr.f32.gmra.mrb[0].mxu0 %v1235
    %v1614 = vpop.f32.mrb[0].mxu0
    %v1615 = vadd.f32 %v1038, %v1614
    %v1616 = vpop.f32.mrb[0].mxu0
    %1617 = vmatprep.mubr.f32.mxu0 0.0
    %1618 = vmatmul.mubr.f32.gmra.mrb[0].mxu0 %v1238
    %v1619 = vpop.f32.mrb[0].mxu0
    %v1620 = vadd.f32 %v1043, %v1619
    %v1621 = vpop.f32.mrb[0].mxu0
    %1622 = vmatprep.mubr.f32.mxu0 0.0
    %1623 = vmatmul.mubr.f32.gmra.mrb[0].mxu0 %v1241
    %v1624 = vpop.f32.mrb[0].mxu0
    %v1625 = vadd.f32 %v1048, %v1624
    %v1626 = vpop.f32.mrb[0].mxu0
    %1627 = vdwg.mxu0
    %s1628 = scalar_lea.vmem %s1, 64
    %v1629 = vld [vmem:[%s1628] sm:$0xff]
    %v1630 = vld [vmem:[%s1628 + $0x8] sm:$0xff]
    %v1631 = vld [vmem:[%s1628 + $0x10] sm:$0xff]
    %v1632 = vld [vmem:[%s1628 + $0x18] sm:$0xff]
    %v1634 = vsel %vm203, %v464, 0
    %1636 = vmatprep.subr.mxu0 0.0
    %1637 = vmatpush1.msra.mxu0 %v1629
    %1638 = vmatprep.subr.mxu0 0.0
    %1639 = vmatpush1.msra.mxu0 %v1630
    %1640 = vmatprep.subr.mxu0 0.0
    %1641 = vmatpush1.msra.mxu0 %v1631
    %1642 = vmatprep.subr.mxu0 0.0
    %1643 = vmatpush1.msra.mxu0 %v1632
    %1644 = vmatprep.subr.mxu0 0.0
    %1645 = vmatpush1.msra.mxu0 0.0
    %1646 = vmatprep.subr.mxu0 0.0
    %1647 = vmatpush1.msra.mxu0 0.0
    %1648 = vmatprep.subr.mxu0 0.0
    %1649 = vmatpush1.msra.mxu0 0.0
    %1650 = vmatprep.subr.mxu0 0.0
    %1651 = vmatpush1.msra.mxu0 0.0
    %1652 = vmatprep.subr.mxu0 0.0
    %1653 = vmatpush1.msra.mxu0 0.0
    %1654 = vmatprep.subr.mxu0 0.0
    %1655 = vmatpush1.msra.mxu0 0.0
    %1656 = vmatprep.subr.mxu0 0.0
    %1657 = vmatpush1.msra.mxu0 0.0
    %1658 = vmatprep.subr.mxu0 0.0
    %1659 = vmatpush1.msra.mxu0 0.0
    %1660 = vmatprep.subr.mxu0 0.0
    %1661 = vmatpush1.msra.mxu0 0.0
    %1662 = vmatprep.subr.mxu0 0.0
    %1663 = vmatpush1.msra.mxu0 0.0
    %1664 = vmatprep.subr.mxu0 0.0
    %1665 = vmatpush1.msra.mxu0 0.0
    %1666 = vmatprep.subr.mxu0 0.0
    %1667 = vmatpush1.msra.mxu0 0.0
    %1668 = vmatprep.subr.mxu0 0.0
    %1669 = vmatpush1.msra.mxu0 0.0
    %1670 = vmatprep.subr.mxu0 0.0
    %1671 = vmatpush1.msra.mxu0 0.0
    %1672 = vmatprep.subr.mxu0 0.0
    %1673 = vmatpush1.msra.mxu0 0.0
    %1674 = vmatprep.subr.mxu0 0.0
    %1675 = vmatpush1.msra.mxu0 0.0
    %1676 = vmatprep.subr.mxu0 0.0
    %1677 = vmatpush1.msra.mxu0 0.0
    %1678 = vmatprep.subr.mxu0 0.0
    %1679 = vmatpush1.msra.mxu0 0.0
    %1680 = vmatprep.subr.mxu0 0.0
    %1681 = vmatpush1.msra.mxu0 0.0
    %1682 = vmatprep.subr.mxu0 0.0
    %1683 = vmatpush1.msra.mxu0 0.0
    %1684 = vmatprep.subr.mxu0 0.0
    %1685 = vmatpush1.msra.mxu0 0.0
    %1686 = vmatprep.subr.mxu0 0.0
    %1687 = vmatpush1.msra.mxu0 0.0
    %1688 = vmatprep.subr.mxu0 0.0
    %1689 = vmatpush1.msra.mxu0 0.0
    %1690 = vmatprep.subr.mxu0 0.0
    %1691 = vmatpush1.msra.mxu0 0.0
    %1692 = vmatprep.subr.mxu0 0.0
    %1693 = vmatpush1.msra.mxu0 0.0
    %1694 = vmatprep.subr.mxu0 0.0
    %1695 = vmatpush1.msra.mxu0 0.0
    %1696 = vmatprep.subr.mxu0 0.0
    %1697 = vmatpush1.msra.mxu0 0.0
    %1698 = vmatprep.subr.mxu0 0.0
    %1699 = vmatpush1.msra.mxu0 0.0
    %1700 = vmatprep.mubr.f32.mxu0 0.0
    %1701 = vmatmul.mubr.f32.gmra.mrb[0].mxu0 %v1055
    %v1702 = vpop.f32.mrb[0].mxu0
    %v1703 = vadd.f32 0.0, %v1702
    %v1704 = vpop.f32.mrb[0].mxu0
    %1705 = vmatprep.mubr.f32.mxu0 0.0
    %1706 = vmatmul.mubr.f32.gmra.mrb[0].mxu0 %v1058
    %v1707 = vpop.f32.mrb[0].mxu0
    %v1708 = vadd.f32 0.0, %v1707
    %v1709 = vpop.f32.mrb[0].mxu0
    %1710 = vmatprep.mubr.f32.mxu0 0.0
    %1711 = vmatmul.mubr.f32.gmra.mrb[0].mxu0 %v1061
    %v1712 = vpop.f32.mrb[0].mxu0
    %v1713 = vadd.f32 0.0, %v1712
    %v1714 = vpop.f32.mrb[0].mxu0
    %1715 = vmatprep.mubr.f32.mxu0 0.0
    %1716 = vmatmul.mubr.f32.gmra.mrb[0].mxu0 %v1064
    %v1717 = vpop.f32.mrb[0].mxu0
    %v1718 = vadd.f32 0.0, %v1717
    %v1719 = vpop.f32.mrb[0].mxu0
    %1720 = vmatprep.mubr.f32.mxu0 0.0
    %1721 = vmatmul.mubr.f32.gmra.mrb[0].mxu0 %v1067
    %v1722 = vpop.f32.mrb[0].mxu0
    %v1723 = vadd.f32 0.0, %v1722
    %v1724 = vpop.f32.mrb[0].mxu0
    %1725 = vmatprep.mubr.f32.mxu0 0.0
    %1726 = vmatmul.mubr.f32.gmra.mrb[0].mxu0 %v1070
    %v1727 = vpop.f32.mrb[0].mxu0
    %v1728 = vadd.f32 0.0, %v1727
    %v1729 = vpop.f32.mrb[0].mxu0
    %1730 = vmatprep.mubr.f32.mxu0 0.0
    %1731 = vmatmul.mubr.f32.gmra.mrb[0].mxu0 %v1073
    %v1732 = vpop.f32.mrb[0].mxu0
    %v1733 = vadd.f32 0.0, %v1732
    %v1734 = vpop.f32.mrb[0].mxu0
    %1735 = vmatprep.mubr.f32.mxu0 0.0
    %1736 = vmatmul.mubr.f32.gmra.mrb[0].mxu0 %v1076
    %v1737 = vpop.f32.mrb[0].mxu0
    %v1738 = vadd.f32 0.0, %v1737
    %v1739 = vpop.f32.mrb[0].mxu0
    %1740 = vmatprep.mubr.f32.mxu0 0.0
    %1741 = vmatmul.mubr.f32.gmra.mrb[0].mxu0 %v1079
    %v1742 = vpop.f32.mrb[0].mxu0
    %v1743 = vadd.f32 0.0, %v1742
    %v1744 = vpop.f32.mrb[0].mxu0
    %1745 = vmatprep.mubr.f32.mxu0 0.0
    %1746 = vmatmul.mubr.f32.gmra.mrb[0].mxu0 %v1082
    %v1747 = vpop.f32.mrb[0].mxu0
    %v1748 = vadd.f32 0.0, %v1747
    %v1749 = vpop.f32.mrb[0].mxu0
    %1750 = vmatprep.mubr.f32.mxu0 0.0
    %1751 = vmatmul.mubr.f32.gmra.mrb[0].mxu0 %v1085
    %v1752 = vpop.f32.mrb[0].mxu0
    %v1753 = vadd.f32 0.0, %v1752
    %v1754 = vpop.f32.mrb[0].mxu0
    %1755 = vmatprep.mubr.f32.mxu0 0.0
    %1756 = vmatmul.mubr.f32.gmra.mrb[0].mxu0 %v1088
    %v1757 = vpop.f32.mrb[0].mxu0
    %v1758 = vadd.f32 0.0, %v1757
    %v1759 = vpop.f32.mrb[0].mxu0
    %1760 = vmatprep.mubr.f32.mxu0 0.0
    %1761 = vmatmul.mubr.f32.gmra.mrb[0].mxu0 %v1091
    %v1762 = vpop.f32.mrb[0].mxu0
    %v1763 = vadd.f32 0.0, %v1762
    %v1764 = vpop.f32.mrb[0].mxu0
    %1765 = vmatprep.mubr.f32.mxu0 0.0
    %1766 = vmatmul.mubr.f32.gmra.mrb[0].mxu0 %v1094
    %v1767 = vpop.f32.mrb[0].mxu0
    %v1768 = vadd.f32 0.0, %v1767
    %v1769 = vpop.f32.mrb[0].mxu0
    %1770 = vmatprep.mubr.f32.mxu0 0.0
    %1771 = vmatmul.mubr.f32.gmra.mrb[0].mxu0 %v1097
    %v1772 = vpop.f32.mrb[0].mxu0
    %v1773 = vadd.f32 0.0, %v1772
    %v1774 = vpop.f32.mrb[0].mxu0
    %1775 = vmatprep.mubr.f32.mxu0 0.0
    %1776 = vmatmul.mubr.f32.gmra.mrb[0].mxu0 %v1100
    %v1777 = vpop.f32.mrb[0].mxu0
    %v1778 = vadd.f32 0.0, %v1777
    %v1779 = vpop.f32.mrb[0].mxu0
    %1780 = vmatprep.mubr.f32.mxu0 0.0
    %1781 = vmatmul.mubr.f32.gmra.mrb[0].mxu0 %v1103
    %v1782 = vpop.f32.mrb[0].mxu0
    %v1783 = vadd.f32 0.0, %v1782
    %v1784 = vpop.f32.mrb[0].mxu0
    %1785 = vmatprep.mubr.f32.mxu0 0.0
    %1786 = vmatmul.mubr.f32.gmra.mrb[0].mxu0 %v1106
    %v1787 = vpop.f32.mrb[0].mxu0
    %v1788 = vadd.f32 0.0, %v1787
    %v1789 = vpop.f32.mrb[0].mxu0
    %1790 = vmatprep.mubr.f32.mxu0 0.0
    %1791 = vmatmul.mubr.f32.gmra.mrb[0].mxu0 %v1109
    %v1792 = vpop.f32.mrb[0].mxu0
    %v1793 = vadd.f32 0.0, %v1792
    %v1794 = vpop.f32.mrb[0].mxu0
    %1795 = vmatprep.mubr.f32.mxu0 0.0
    %1796 = vmatmul.mubr.f32.gmra.mrb[0].mxu0 %v1112
    %v1797 = vpop.f32.mrb[0].mxu0
    %v1798 = vadd.f32 0.0, %v1797
    %v1799 = vpop.f32.mrb[0].mxu0
    %1800 = vmatprep.mubr.f32.mxu0 0.0
    %1801 = vmatmul.mubr.f32.gmra.mrb[0].mxu0 %v1115
    %v1802 = vpop.f32.mrb[0].mxu0
    %v1803 = vadd.f32 0.0, %v1802
    %v1804 = vpop.f32.mrb[0].mxu0
    %1805 = vmatprep.mubr.f32.mxu0 0.0
    %1806 = vmatmul.mubr.f32.gmra.mrb[0].mxu0 %v1118
    %v1807 = vpop.f32.mrb[0].mxu0
    %v1808 = vadd.f32 0.0, %v1807
    %v1809 = vpop.f32.mrb[0].mxu0
    %1810 = vmatprep.mubr.f32.mxu0 0.0
    %1811 = vmatmul.mubr.f32.gmra.mrb[0].mxu0 %v1121
    %v1812 = vpop.f32.mrb[0].mxu0
    %v1813 = vadd.f32 0.0, %v1812
    %v1814 = vpop.f32.mrb[0].mxu0
    %1815 = vmatprep.mubr.f32.mxu0 0.0
    %1816 = vmatmul.mubr.f32.gmra.mrb[0].mxu0 %v1124
    %v1817 = vpop.f32.mrb[0].mxu0
    %v1818 = vadd.f32 0.0, %v1817
    %v1819 = vpop.f32.mrb[0].mxu0
    %1820 = vmatprep.mubr.f32.mxu0 0.0
    %1821 = vmatmul.mubr.f32.gmra.mrb[0].mxu0 %v1127
    %v1822 = vpop.f32.mrb[0].mxu0
    %v1823 = vadd.f32 0.0, %v1822
    %v1824 = vpop.f32.mrb[0].mxu0
    %1825 = vmatprep.mubr.f32.mxu0 0.0
    %1826 = vmatmul.mubr.f32.gmra.mrb[0].mxu0 %v1130
    %v1827 = vpop.f32.mrb[0].mxu0
    %v1828 = vadd.f32 0.0, %v1827
    %v1829 = vpop.f32.mrb[0].mxu0
    %1830 = vmatprep.mubr.f32.mxu0 0.0
    %1831 = vmatmul.mubr.f32.gmra.mrb[0].mxu0 %v1133
    %v1832 = vpop.f32.mrb[0].mxu0
    %v1833 = vadd.f32 0.0, %v1832
    %v1834 = vpop.f32.mrb[0].mxu0
    %1835 = vmatprep.mubr.f32.mxu0 0.0
    %1836 = vmatmul.mubr.f32.gmra.mrb[0].mxu0 %v1136
    %v1837 = vpop.f32.mrb[0].mxu0
    %v1838 = vadd.f32 0.0, %v1837
    %v1839 = vpop.f32.mrb[0].mxu0
    %1840 = vmatprep.mubr.f32.mxu0 0.0
    %1841 = vmatmul.mubr.f32.gmra.mrb[0].mxu0 %v1139
    %v1842 = vpop.f32.mrb[0].mxu0
    %v1843 = vadd.f32 0.0, %v1842
    %v1844 = vpop.f32.mrb[0].mxu0
    %1845 = vmatprep.mubr.f32.mxu0 0.0
    %1846 = vmatmul.mubr.f32.gmra.mrb[0].mxu0 %v1142
    %v1847 = vpop.f32.mrb[0].mxu0
    %v1848 = vadd.f32 0.0, %v1847
    %v1849 = vpop.f32.mrb[0].mxu0
    %1850 = vmatprep.mubr.f32.mxu0 0.0
    %1851 = vmatmul.mubr.f32.gmra.mrb[0].mxu0 %v1145
    %v1852 = vpop.f32.mrb[0].mxu0
    %v1853 = vadd.f32 0.0, %v1852
    %v1854 = vpop.f32.mrb[0].mxu0
    %1855 = vmatprep.mubr.f32.mxu0 0.0
    %1856 = vmatmul.mubr.f32.gmra.mrb[0].mxu0 %v1148
    %v1857 = vpop.f32.mrb[0].mxu0
    %v1858 = vadd.f32 0.0, %v1857
    %v1859 = vpop.f32.mrb[0].mxu0
    %1860 = vmatprep.mubr.f32.mxu0 0.0
    %1861 = vmatmul.mubr.f32.gmra.mrb[0].mxu0 %v1151
    %v1862 = vpop.f32.mrb[0].mxu0
    %v1863 = vadd.f32 0.0, %v1862
    %v1864 = vpop.f32.mrb[0].mxu0
    %1865 = vmatprep.mubr.f32.mxu0 0.0
    %1866 = vmatmul.mubr.f32.gmra.mrb[0].mxu0 %v1154
    %v1867 = vpop.f32.mrb[0].mxu0
    %v1868 = vadd.f32 0.0, %v1867
    %v1869 = vpop.f32.mrb[0].mxu0
    %1870 = vmatprep.mubr.f32.mxu0 0.0
    %1871 = vmatmul.mubr.f32.gmra.mrb[0].mxu0 %v1157
    %v1872 = vpop.f32.mrb[0].mxu0
    %v1873 = vadd.f32 0.0, %v1872
    %v1874 = vpop.f32.mrb[0].mxu0
    %1875 = vmatprep.mubr.f32.mxu0 0.0
    %1876 = vmatmul.mubr.f32.gmra.mrb[0].mxu0 %v1160
    %v1877 = vpop.f32.mrb[0].mxu0
    %v1878 = vadd.f32 0.0, %v1877
    %v1879 = vpop.f32.mrb[0].mxu0
    %1880 = vmatprep.mubr.f32.mxu0 0.0
    %1881 = vmatmul.mubr.f32.gmra.mrb[0].mxu0 %v1163
    %v1882 = vpop.f32.mrb[0].mxu0
    %v1883 = vadd.f32 0.0, %v1882
    %v1884 = vpop.f32.mrb[0].mxu0
    %1885 = vmatprep.mubr.f32.mxu0 0.0
    %1886 = vmatmul.mubr.f32.gmra.mrb[0].mxu0 %v1166
    %v1887 = vpop.f32.mrb[0].mxu0
    %v1888 = vadd.f32 0.0, %v1887
    %v1889 = vpop.f32.mrb[0].mxu0
    %1890 = vmatprep.mubr.f32.mxu0 0.0
    %1891 = vmatmul.mubr.f32.gmra.mrb[0].mxu0 %v1169
    %v1892 = vpop.f32.mrb[0].mxu0
    %v1893 = vadd.f32 0.0, %v1892
    %v1894 = vpop.f32.mrb[0].mxu0
    %1895 = vmatprep.mubr.f32.mxu0 0.0
    %1896 = vmatmul.mubr.f32.gmra.mrb[0].mxu0 %v1172
    %v1897 = vpop.f32.mrb[0].mxu0
    %v1898 = vadd.f32 0.0, %v1897
    %v1899 = vpop.f32.mrb[0].mxu0
    %1900 = vmatprep.mubr.f32.mxu0 0.0
    %1901 = vmatmul.mubr.f32.gmra.mrb[0].mxu0 %v1175
    %v1902 = vpop.f32.mrb[0].mxu0
    %v1903 = vadd.f32 0.0, %v1902
    %v1904 = vpop.f32.mrb[0].mxu0
    %1905 = vmatprep.mubr.f32.mxu0 0.0
    %1906 = vmatmul.mubr.f32.gmra.mrb[0].mxu0 %v1178
    %v1907 = vpop.f32.mrb[0].mxu0
    %v1908 = vadd.f32 0.0, %v1907
    %v1909 = vpop.f32.mrb[0].mxu0
    %1910 = vmatprep.mubr.f32.mxu0 0.0
    %1911 = vmatmul.mubr.f32.gmra.mrb[0].mxu0 %v1181
    %v1912 = vpop.f32.mrb[0].mxu0
    %v1913 = vadd.f32 0.0, %v1912
    %v1914 = vpop.f32.mrb[0].mxu0
    %1915 = vmatprep.mubr.f32.mxu0 0.0
    %1916 = vmatmul.mubr.f32.gmra.mrb[0].mxu0 %v1184
    %v1917 = vpop.f32.mrb[0].mxu0
    %v1918 = vadd.f32 0.0, %v1917
    %v1919 = vpop.f32.mrb[0].mxu0
    %1920 = vmatprep.mubr.f32.mxu0 0.0
    %1921 = vmatmul.mubr.f32.gmra.mrb[0].mxu0 %v1187
    %v1922 = vpop.f32.mrb[0].mxu0
    %v1923 = vadd.f32 0.0, %v1922
    %v1924 = vpop.f32.mrb[0].mxu0
    %1925 = vmatprep.mubr.f32.mxu0 0.0
    %1926 = vmatmul.mubr.f32.gmra.mrb[0].mxu0 %v1190
    %v1927 = vpop.f32.mrb[0].mxu0
    %v1928 = vadd.f32 0.0, %v1927
    %v1929 = vpop.f32.mrb[0].mxu0
    %1930 = vmatprep.mubr.f32.mxu0 0.0
    %1931 = vmatmul.mubr.f32.gmra.mrb[0].mxu0 %v1193
    %v1932 = vpop.f32.mrb[0].mxu0
    %v1933 = vadd.f32 0.0, %v1932
    %v1934 = vpop.f32.mrb[0].mxu0
    %1935 = vmatprep.mubr.f32.mxu0 0.0
    %1936 = vmatmul.mubr.f32.gmra.mrb[0].mxu0 %v1196
    %v1937 = vpop.f32.mrb[0].mxu0
    %v1938 = vadd.f32 0.0, %v1937
    %v1939 = vpop.f32.mrb[0].mxu0
    %1940 = vmatprep.mubr.f32.mxu0 0.0
    %1941 = vmatmul.mubr.f32.gmra.mrb[0].mxu0 %v1199
    %v1942 = vpop.f32.mrb[0].mxu0
    %v1943 = vadd.f32 0.0, %v1942
    %v1944 = vpop.f32.mrb[0].mxu0
    %1945 = vmatprep.mubr.f32.mxu0 0.0
    %1946 = vmatmul.mubr.f32.gmra.mrb[0].mxu0 %v1202
    %v1947 = vpop.f32.mrb[0].mxu0
    %v1948 = vadd.f32 0.0, %v1947
    %v1949 = vpop.f32.mrb[0].mxu0
    %1950 = vmatprep.mubr.f32.mxu0 0.0
    %1951 = vmatmul.mubr.f32.gmra.mrb[0].mxu0 %v1205
    %v1952 = vpop.f32.mrb[0].mxu0
    %v1953 = vadd.f32 0.0, %v1952
    %v1954 = vpop.f32.mrb[0].mxu0
    %1955 = vmatprep.mubr.f32.mxu0 0.0
    %1956 = vmatmul.mubr.f32.gmra.mrb[0].mxu0 %v1208
    %v1957 = vpop.f32.mrb[0].mxu0
    %v1958 = vadd.f32 0.0, %v1957
    %v1959 = vpop.f32.mrb[0].mxu0
    %1960 = vmatprep.mubr.f32.mxu0 0.0
    %1961 = vmatmul.mubr.f32.gmra.mrb[0].mxu0 %v1211
    %v1962 = vpop.f32.mrb[0].mxu0
    %v1963 = vadd.f32 0.0, %v1962
    %v1964 = vpop.f32.mrb[0].mxu0
    %1965 = vmatprep.mubr.f32.mxu0 0.0
    %1966 = vmatmul.mubr.f32.gmra.mrb[0].mxu0 %v1214
    %v1967 = vpop.f32.mrb[0].mxu0
    %v1968 = vadd.f32 0.0, %v1967
    %v1969 = vpop.f32.mrb[0].mxu0
    %1970 = vmatprep.mubr.f32.mxu0 0.0
    %1971 = vmatmul.mubr.f32.gmra.mrb[0].mxu0 %v1217
    %v1972 = vpop.f32.mrb[0].mxu0
    %v1973 = vadd.f32 0.0, %v1972
    %v1974 = vpop.f32.mrb[0].mxu0
    %1975 = vmatprep.mubr.f32.mxu0 0.0
    %1976 = vmatmul.mubr.f32.gmra.mrb[0].mxu0 %v1220
    %v1977 = vpop.f32.mrb[0].mxu0
    %v1978 = vadd.f32 0.0, %v1977
    %v1979 = vpop.f32.mrb[0].mxu0
    %1980 = vmatprep.mubr.f32.mxu0 0.0
    %1981 = vmatmul.mubr.f32.gmra.mrb[0].mxu0 %v1223
    %v1982 = vpop.f32.mrb[0].mxu0
    %v1983 = vadd.f32 0.0, %v1982
    %v1984 = vpop.f32.mrb[0].mxu0
    %1985 = vmatprep.mubr.f32.mxu0 0.0
    %1986 = vmatmul.mubr.f32.gmra.mrb[0].mxu0 %v1226
    %v1987 = vpop.f32.mrb[0].mxu0
    %v1988 = vadd.f32 0.0, %v1987
    %v1989 = vpop.f32.mrb[0].mxu0
    %1990 = vmatprep.mubr.f32.mxu0 0.0
    %1991 = vmatmul.mubr.f32.gmra.mrb[0].mxu0 %v1229
    %v1992 = vpop.f32.mrb[0].mxu0
    %v1993 = vadd.f32 0.0, %v1992
    %v1994 = vpop.f32.mrb[0].mxu0
    %1995 = vmatprep.mubr.f32.mxu0 0.0
    %1996 = vmatmul.mubr.f32.gmra.mrb[0].mxu0 %v1232
    %v1997 = vpop.f32.mrb[0].mxu0
    %v1998 = vadd.f32 0.0, %v1997
    %v1999 = vpop.f32.mrb[0].mxu0
    %2000 = vmatprep.mubr.f32.mxu0 0.0
    %2001 = vmatmul.mubr.f32.gmra.mrb[0].mxu0 %v1235
    %v2002 = vpop.f32.mrb[0].mxu0
    %v2003 = vadd.f32 0.0, %v2002
    %v2004 = vpop.f32.mrb[0].mxu0
    %2005 = vmatprep.mubr.f32.mxu0 0.0
    %2006 = vmatmul.mubr.f32.gmra.mrb[0].mxu0 %v1238
    %v2007 = vpop.f32.mrb[0].mxu0
    %v2008 = vadd.f32 0.0, %v2007
    %v2009 = vpop.f32.mrb[0].mxu0
    %2010 = vmatprep.mubr.f32.mxu0 0.0
    %2011 = vmatmul.mubr.f32.gmra.mrb[0].mxu0 %v1241
    %v2012 = vpop.f32.mrb[0].mxu0
    %v2013 = vadd.f32 0.0, %v2012
    %v2014 = vpop.f32.mrb[0].mxu0
    %2015 = vmatprep.mubr.f32.mxu0 0.0
    %2016 = vmatmul.mubr.f32.gmra.mrb[0].mxu0 %v1634
    %v2017 = vpop.f32.mrb[0].mxu0
    %v2018 = vadd.f32 0.0, %v2017
    %v2019 = vpop.f32.mrb[0].mxu0
    %2020 = vdwg.mxu0
    %v2021 = vadd.f32 %v1310, %v1703
    %v2022 = vadd.f32 %v1315, %v1708
    %v2023 = vadd.f32 %v1320, %v1713
    %v2024 = vadd.f32 %v1325, %v1718
    %v2025 = vadd.f32 %v1330, %v1723
    %v2026 = vadd.f32 %v1335, %v1728
    %v2027 = vadd.f32 %v1340, %v1733
    %v2028 = vadd.f32 %v1345, %v1738
    %v2029 = vadd.f32 %v1350, %v1743
    %v2030 = vadd.f32 %v1355, %v1748
    %v2031 = vadd.f32 %v1360, %v1753
    %v2032 = vadd.f32 %v1365, %v1758
    %v2033 = vadd.f32 %v1370, %v1763
    %v2034 = vadd.f32 %v1375, %v1768
    %v2035 = vadd.f32 %v1380, %v1773
    %v2036 = vadd.f32 %v1385, %v1778
    %v2037 = vadd.f32 %v1390, %v1783
    %v2038 = vadd.f32 %v1395, %v1788
    %v2039 = vadd.f32 %v1400, %v1793
    %v2040 = vadd.f32 %v1405, %v1798
    %v2041 = vadd.f32 %v1410, %v1803
    %v2042 = vadd.f32 %v1415, %v1808
    %v2043 = vadd.f32 %v1420, %v1813
    %v2044 = vadd.f32 %v1425, %v1818
    %v2045 = vadd.f32 %v1430, %v1823
    %v2046 = vadd.f32 %v1435, %v1828
    %v2047 = vadd.f32 %v1440, %v1833
    %v2048 = vadd.f32 %v1445, %v1838
    %v2049 = vadd.f32 %v1450, %v1843
    %v2050 = vadd.f32 %v1455, %v1848
    %v2051 = vadd.f32 %v1460, %v1853
    %v2052 = vadd.f32 %v1465, %v1858
    %v2053 = vadd.f32 %v1470, %v1863
    %v2054 = vadd.f32 %v1475, %v1868
    %v2055 = vadd.f32 %v1480, %v1873
    %v2056 = vadd.f32 %v1485, %v1878
    %v2057 = vadd.f32 %v1490, %v1883
    %v2058 = vadd.f32 %v1495, %v1888
    %v2059 = vadd.f32 %v1500, %v1893
    %v2060 = vadd.f32 %v1505, %v1898
    %v2061 = vadd.f32 %v1510, %v1903
    %v2062 = vadd.f32 %v1515, %v1908
    %v2063 = vadd.f32 %v1520, %v1913
    %v2064 = vadd.f32 %v1525, %v1918
    %v2065 = vadd.f32 %v1530, %v1923
    %v2066 = vadd.f32 %v1535, %v1928
    %v2067 = vadd.f32 %v1540, %v1933
    %v2068 = vadd.f32 %v1545, %v1938
    %v2069 = vadd.f32 %v1550, %v1943
    %v2070 = vadd.f32 %v1555, %v1948
    %v2071 = vadd.f32 %v1560, %v1953
    %v2072 = vadd.f32 %v1565, %v1958
    %v2073 = vadd.f32 %v1570, %v1963
    %v2074 = vadd.f32 %v1575, %v1968
    %v2075 = vadd.f32 %v1580, %v1973
    %v2076 = vadd.f32 %v1585, %v1978
    %v2077 = vadd.f32 %v1590, %v1983
    %v2078 = vadd.f32 %v1595, %v1988
    %v2079 = vadd.f32 %v1600, %v1993
    %v2080 = vadd.f32 %v1605, %v1998
    %v2081 = vadd.f32 %v1610, %v2003
    %v2082 = vadd.f32 %v1615, %v2008
    %v2083 = vadd.f32 %v1620, %v2013
    %v2084 = vadd.f32 %v1625, %v2018
    %v2085 = vld [vmem:[%s2] sm:$0x1]
    %v2087 = vlaneseq
    %v2088 = vshrl.u32 %v2087, 7
    %v2089 = vsub.s32 0, %v2088
    %v2090 = vrot.slane %v2085, %v2089
    %v2092 = vmul.f32 %v2021, %v2090
    %v2093 = vmul.f32 %v2022, %v2090
    %v2094 = vmul.f32 %v2023, %v2090
    %v2095 = vmul.f32 %v2024, %v2090
    %v2096 = vmul.f32 %v2025, %v2090
    %v2097 = vmul.f32 %v2026, %v2090
    %v2098 = vmul.f32 %v2027, %v2090
    %v2099 = vmul.f32 %v2028, %v2090
    %v2100 = vmul.f32 %v2029, %v2090
    %v2101 = vmul.f32 %v2030, %v2090
    %v2102 = vmul.f32 %v2031, %v2090
    %v2103 = vmul.f32 %v2032, %v2090
    %v2104 = vmul.f32 %v2033, %v2090
    %v2105 = vmul.f32 %v2034, %v2090
    %v2106 = vmul.f32 %v2035, %v2090
    %v2107 = vmul.f32 %v2036, %v2090
    %v2108 = vmul.f32 %v2037, %v2090
    %v2109 = vmul.f32 %v2038, %v2090
    %v2110 = vmul.f32 %v2039, %v2090
    %v2111 = vmul.f32 %v2040, %v2090
    %v2112 = vmul.f32 %v2041, %v2090
    %v2113 = vmul.f32 %v2042, %v2090
    %v2114 = vmul.f32 %v2043, %v2090
    %v2115 = vmul.f32 %v2044, %v2090
    %v2116 = vmul.f32 %v2045, %v2090
    %v2117 = vmul.f32 %v2046, %v2090
    %v2118 = vmul.f32 %v2047, %v2090
    %v2119 = vmul.f32 %v2048, %v2090
    %v2120 = vmul.f32 %v2049, %v2090
    %v2121 = vmul.f32 %v2050, %v2090
    %v2122 = vmul.f32 %v2051, %v2090
    %v2123 = vmul.f32 %v2052, %v2090
    %v2124 = vmul.f32 %v2053, %v2090
    %v2125 = vmul.f32 %v2054, %v2090
    %v2126 = vmul.f32 %v2055, %v2090
    %v2127 = vmul.f32 %v2056, %v2090
    %v2128 = vmul.f32 %v2057, %v2090
    %v2129 = vmul.f32 %v2058, %v2090
    %v2130 = vmul.f32 %v2059, %v2090
    %v2131 = vmul.f32 %v2060, %v2090
    %v2132 = vmul.f32 %v2061, %v2090
    %v2133 = vmul.f32 %v2062, %v2090
    %v2134 = vmul.f32 %v2063, %v2090
    %v2135 = vmul.f32 %v2064, %v2090
    %v2136 = vmul.f32 %v2065, %v2090
    %v2137 = vmul.f32 %v2066, %v2090
    %v2138 = vmul.f32 %v2067, %v2090
    %v2139 = vmul.f32 %v2068, %v2090
    %v2140 = vmul.f32 %v2069, %v2090
    %v2141 = vmul.f32 %v2070, %v2090
    %v2142 = vmul.f32 %v2071, %v2090
    %v2143 = vmul.f32 %v2072, %v2090
    %v2144 = vmul.f32 %v2073, %v2090
    %v2145 = vmul.f32 %v2074, %v2090
    %v2146 = vmul.f32 %v2075, %v2090
    %v2147 = vmul.f32 %v2076, %v2090
    %v2148 = vmul.f32 %v2077, %v2090
    %v2149 = vmul.f32 %v2078, %v2090
    %v2150 = vmul.f32 %v2079, %v2090
    %v2151 = vmul.f32 %v2080, %v2090
    %v2152 = vmul.f32 %v2081, %v2090
    %v2153 = vmul.f32 %v2082, %v2090
    %v2154 = vmul.f32 %v2083, %v2090
    %v2155 = vmul.f32 %v2084, %v2090
    %v2156 = vld [vmem:[%s3] sm:$0x1]
    %v2158 = vlaneseq
    %v2159 = vshrl.u32 %v2158, 7
    %v2160 = vsub.s32 0, %v2159
    %v2161 = vrot.slane %v2156, %v2160
    %v2163 = vadd.f32 %v2092, %v2161
    %v2164 = vadd.f32 %v2093, %v2161
    %v2165 = vadd.f32 %v2094, %v2161
    %v2166 = vadd.f32 %v2095, %v2161
    %v2167 = vadd.f32 %v2096, %v2161
    %v2168 = vadd.f32 %v2097, %v2161
    %v2169 = vadd.f32 %v2098, %v2161
    %v2170 = vadd.f32 %v2099, %v2161
    %v2171 = vadd.f32 %v2100, %v2161
    %v2172 = vadd.f32 %v2101, %v2161
    %v2173 = vadd.f32 %v2102, %v2161
    %v2174 = vadd.f32 %v2103, %v2161
    %v2175 = vadd.f32 %v2104, %v2161
    %v2176 = vadd.f32 %v2105, %v2161
    %v2177 = vadd.f32 %v2106, %v2161
    %v2178 = vadd.f32 %v2107, %v2161
    %v2179 = vadd.f32 %v2108, %v2161
    %v2180 = vadd.f32 %v2109, %v2161
    %v2181 = vadd.f32 %v2110, %v2161
    %v2182 = vadd.f32 %v2111, %v2161
    %v2183 = vadd.f32 %v2112, %v2161
    %v2184 = vadd.f32 %v2113, %v2161
    %v2185 = vadd.f32 %v2114, %v2161
    %v2186 = vadd.f32 %v2115, %v2161
    %v2187 = vadd.f32 %v2116, %v2161
    %v2188 = vadd.f32 %v2117, %v2161
    %v2189 = vadd.f32 %v2118, %v2161
    %v2190 = vadd.f32 %v2119, %v2161
    %v2191 = vadd.f32 %v2120, %v2161
    %v2192 = vadd.f32 %v2121, %v2161
    %v2193 = vadd.f32 %v2122, %v2161
    %v2194 = vadd.f32 %v2123, %v2161
    %v2195 = vadd.f32 %v2124, %v2161
    %v2196 = vadd.f32 %v2125, %v2161
    %v2197 = vadd.f32 %v2126, %v2161
    %v2198 = vadd.f32 %v2127, %v2161
    %v2199 = vadd.f32 %v2128, %v2161
    %v2200 = vadd.f32 %v2129, %v2161
    %v2201 = vadd.f32 %v2130, %v2161
    %v2202 = vadd.f32 %v2131, %v2161
    %v2203 = vadd.f32 %v2132, %v2161
    %v2204 = vadd.f32 %v2133, %v2161
    %v2205 = vadd.f32 %v2134, %v2161
    %v2206 = vadd.f32 %v2135, %v2161
    %v2207 = vadd.f32 %v2136, %v2161
    %v2208 = vadd.f32 %v2137, %v2161
    %v2209 = vadd.f32 %v2138, %v2161
    %v2210 = vadd.f32 %v2139, %v2161
    %v2211 = vadd.f32 %v2140, %v2161
    %v2212 = vadd.f32 %v2141, %v2161
    %v2213 = vadd.f32 %v2142, %v2161
    %v2214 = vadd.f32 %v2143, %v2161
    %v2215 = vadd.f32 %v2144, %v2161
    %v2216 = vadd.f32 %v2145, %v2161
    %v2217 = vadd.f32 %v2146, %v2161
    %v2218 = vadd.f32 %v2147, %v2161
    %v2219 = vadd.f32 %v2148, %v2161
    %v2220 = vadd.f32 %v2149, %v2161
    %v2221 = vadd.f32 %v2150, %v2161
    %v2222 = vadd.f32 %v2151, %v2161
    %v2223 = vadd.f32 %v2152, %v2161
    %v2224 = vadd.f32 %v2153, %v2161
    %v2225 = vadd.f32 %v2154, %v2161
    %v2226 = vadd.f32 %v2155, %v2161
    %v2227 = vmax.f32 %v2163, 0.0
    %v2228 = vmax.f32 %v2164, 0.0
    %v2229 = vmax.f32 %v2165, 0.0
    %v2230 = vmax.f32 %v2166, 0.0
    %v2231 = vmax.f32 %v2167, 0.0
    %v2232 = vmax.f32 %v2168, 0.0
    %v2233 = vmax.f32 %v2169, 0.0
    %v2234 = vmax.f32 %v2170, 0.0
    %v2235 = vmax.f32 %v2171, 0.0
    %v2236 = vmax.f32 %v2172, 0.0
    %v2237 = vmax.f32 %v2173, 0.0
    %v2238 = vmax.f32 %v2174, 0.0
    %v2239 = vmax.f32 %v2175, 0.0
    %v2240 = vmax.f32 %v2176, 0.0
    %v2241 = vmax.f32 %v2177, 0.0
    %v2242 = vmax.f32 %v2178, 0.0
    %v2243 = vmax.f32 %v2179, 0.0
    %v2244 = vmax.f32 %v2180, 0.0
    %v2245 = vmax.f32 %v2181, 0.0
    %v2246 = vmax.f32 %v2182, 0.0
    %v2247 = vmax.f32 %v2183, 0.0
    %v2248 = vmax.f32 %v2184, 0.0
    %v2249 = vmax.f32 %v2185, 0.0
    %v2250 = vmax.f32 %v2186, 0.0
    %v2251 = vmax.f32 %v2187, 0.0
    %v2252 = vmax.f32 %v2188, 0.0
    %v2253 = vmax.f32 %v2189, 0.0
    %v2254 = vmax.f32 %v2190, 0.0
    %v2255 = vmax.f32 %v2191, 0.0
    %v2256 = vmax.f32 %v2192, 0.0
    %v2257 = vmax.f32 %v2193, 0.0
    %v2258 = vmax.f32 %v2194, 0.0
    %v2259 = vmax.f32 %v2195, 0.0
    %v2260 = vmax.f32 %v2196, 0.0
    %v2261 = vmax.f32 %v2197, 0.0
    %v2262 = vmax.f32 %v2198, 0.0
    %v2263 = vmax.f32 %v2199, 0.0
    %v2264 = vmax.f32 %v2200, 0.0
    %v2265 = vmax.f32 %v2201, 0.0
    %v2266 = vmax.f32 %v2202, 0.0
    %v2267 = vmax.f32 %v2203, 0.0
    %v2268 = vmax.f32 %v2204, 0.0
    %v2269 = vmax.f32 %v2205, 0.0
    %v2270 = vmax.f32 %v2206, 0.0
    %v2271 = vmax.f32 %v2207, 0.0
    %v2272 = vmax.f32 %v2208, 0.0
    %v2273 = vmax.f32 %v2209, 0.0
    %v2274 = vmax.f32 %v2210, 0.0
    %v2275 = vmax.f32 %v2211, 0.0
    %v2276 = vmax.f32 %v2212, 0.0
    %v2277 = vmax.f32 %v2213, 0.0
    %v2278 = vmax.f32 %v2214, 0.0
    %v2279 = vmax.f32 %v2215, 0.0
    %v2280 = vmax.f32 %v2216, 0.0
    %v2281 = vmax.f32 %v2217, 0.0
    %v2282 = vmax.f32 %v2218, 0.0
    %v2283 = vmax.f32 %v2219, 0.0
    %v2284 = vmax.f32 %v2220, 0.0
    %v2285 = vmax.f32 %v2221, 0.0
    %v2286 = vmax.f32 %v2222, 0.0
    %v2287 = vmax.f32 %v2223, 0.0
    %v2288 = vmax.f32 %v2224, 0.0
    %v2289 = vmax.f32 %v2225, 0.0
    %v2290 = vmax.f32 %v2226, 0.0
    %2291 = vst [vmem:[#allocation3] sm:$0xff] 0.0
    %s2292 = scalar_lea.vmem [#allocation3], 520
    %2293 = vst [vmem:[%s2292] sm:$0xff] 0.0
    %s2294 = scalar_lea.vmem [#allocation3], 8
    %2295 = vst [vmem:[%s2294] sm:$0xff] %v2227
    %2296 = vst [vmem:[%s2294 + $0x8] sm:$0xff] %v2228
    %2297 = vst [vmem:[%s2294 + $0x10] sm:$0xff] %v2229
    %2298 = vst [vmem:[%s2294 + $0x18] sm:$0xff] %v2230
    %2299 = vst [vmem:[%s2294 + $0x20] sm:$0xff] %v2231
    %2300 = vst [vmem:[%s2294 + $0x28] sm:$0xff] %v2232
    %2301 = vst [vmem:[%s2294 + $0x30] sm:$0xff] %v2233
    %2302 = vst [vmem:[%s2294 + $0x38] sm:$0xff] %v2234
    %2303 = vst [vmem:[%s2294 + $0x40] sm:$0xff] %v2235
    %2304 = vst [vmem:[%s2294 + $0x48] sm:$0xff] %v2236
    %2305 = vst [vmem:[%s2294 + $0x50] sm:$0xff] %v2237
    %2306 = vst [vmem:[%s2294 + $0x58] sm:$0xff] %v2238
    %2307 = vst [vmem:[%s2294 + $0x60] sm:$0xff] %v2239
    %2308 = vst [vmem:[%s2294 + $0x68] sm:$0xff] %v2240
    %2309 = vst [vmem:[%s2294 + $0x70] sm:$0xff] %v2241
    %2310 = vst [vmem:[%s2294 + $0x78] sm:$0xff] %v2242
    %2311 = vst [vmem:[%s2294 + $0x80] sm:$0xff] %v2243
    %2312 = vst [vmem:[%s2294 + $0x88] sm:$0xff] %v2244
    %2313 = vst [vmem:[%s2294 + $0x90] sm:$0xff] %v2245
    %2314 = vst [vmem:[%s2294 + $0x98] sm:$0xff] %v2246
    %2315 = vst [vmem:[%s2294 + $0xa0] sm:$0xff] %v2247
    %2316 = vst [vmem:[%s2294 + $0xa8] sm:$0xff] %v2248
    %2317 = vst [vmem:[%s2294 + $0xb0] sm:$0xff] %v2249
    %2318 = vst [vmem:[%s2294 + $0xb8] sm:$0xff] %v2250
    %2319 = vst [vmem:[%s2294 + $0xc0] sm:$0xff] %v2251
    %2320 = vst [vmem:[%s2294 + $0xc8] sm:$0xff] %v2252
    %2321 = vst [vmem:[%s2294 + $0xd0] sm:$0xff] %v2253
    %2322 = vst [vmem:[%s2294 + $0xd8] sm:$0xff] %v2254
    %2323 = vst [vmem:[%s2294 + $0xe0] sm:$0xff] %v2255
    %2324 = vst [vmem:[%s2294 + $0xe8] sm:$0xff] %v2256
    %2325 = vst [vmem:[%s2294 + $0xf0] sm:$0xff] %v2257
    %2326 = vst [vmem:[%s2294 + $0xf8] sm:$0xff] %v2258
    %2327 = vst [vmem:[%s2294 + $0x100] sm:$0xff] %v2259
    %2328 = vst [vmem:[%s2294 + $0x108] sm:$0xff] %v2260
    %2329 = vst [vmem:[%s2294 + $0x110] sm:$0xff] %v2261
    %2330 = vst [vmem:[%s2294 + $0x118] sm:$0xff] %v2262
    %2331 = vst [vmem:[%s2294 + $0x120] sm:$0xff] %v2263
    %2332 = vst [vmem:[%s2294 + $0x128] sm:$0xff] %v2264
    %2333 = vst [vmem:[%s2294 + $0x130] sm:$0xff] %v2265
    %2334 = vst [vmem:[%s2294 + $0x138] sm:$0xff] %v2266
    %2335 = vst [vmem:[%s2294 + $0x140] sm:$0xff] %v2267
    %2336 = vst [vmem:[%s2294 + $0x148] sm:$0xff] %v2268
    %2337 = vst [vmem:[%s2294 + $0x150] sm:$0xff] %v2269
    %2338 = vst [vmem:[%s2294 + $0x158] sm:$0xff] %v2270
    %2339 = vst [vmem:[%s2294 + $0x160] sm:$0xff] %v2271
    %2340 = vst [vmem:[%s2294 + $0x168] sm:$0xff] %v2272
    %2341 = vst [vmem:[%s2294 + $0x170] sm:$0xff] %v2273
    %2342 = vst [vmem:[%s2294 + $0x178] sm:$0xff] %v2274
    %2343 = vst [vmem:[%s2294 + $0x180] sm:$0xff] %v2275
    %2344 = vst [vmem:[%s2294 + $0x188] sm:$0xff] %v2276
    %2345 = vst [vmem:[%s2294 + $0x190] sm:$0xff] %v2277
    %2346 = vst [vmem:[%s2294 + $0x198] sm:$0xff] %v2278
    %2347 = vst [vmem:[%s2294 + $0x1a0] sm:$0xff] %v2279
    %2348 = vst [vmem:[%s2294 + $0x1a8] sm:$0xff] %v2280
    %2349 = vst [vmem:[%s2294 + $0x1b0] sm:$0xff] %v2281
    %2350 = vst [vmem:[%s2294 + $0x1b8] sm:$0xff] %v2282
    %2351 = vst [vmem:[%s2294 + $0x1c0] sm:$0xff] %v2283
    %2352 = vst [vmem:[%s2294 + $0x1c8] sm:$0xff] %v2284
    %2353 = vst [vmem:[%s2294 + $0x1d0] sm:$0xff] %v2285
    %2354 = vst [vmem:[%s2294 + $0x1d8] sm:$0xff] %v2286
    %2355 = vst [vmem:[%s2294 + $0x1e0] sm:$0xff] %v2287
    %2356 = vst [vmem:[%s2294 + $0x1e8] sm:$0xff] %v2288
    %2357 = vst [vmem:[%s2294 + $0x1f0] sm:$0xff] %v2289
    %2358 = vst [vmem:[%s2294 + $0x1f8] sm:$0xff] %v2290
    %v2359 = vld [vmem:[#allocation3] sm:$0xff]
    %v2360 = vld [vmem:[#allocation3 + $0x8] sm:$0xff]
    %v2361 = vld [vmem:[#allocation3 + $0x10] sm:$0xff]
    %v2362 = vld [vmem:[#allocation3 + $0x18] sm:$0xff]
    %v2363 = vld [vmem:[#allocation3 + $0x20] sm:$0xff]
    %v2364 = vld [vmem:[#allocation3 + $0x28] sm:$0xff]
    %v2365 = vld [vmem:[#allocation3 + $0x30] sm:$0xff]
    %v2366 = vld [vmem:[#allocation3 + $0x38] sm:$0xff]
    %v2367 = vld [vmem:[#allocation3 + $0x40] sm:$0xff]
    %v2368 = vld [vmem:[#allocation3 + $0x48] sm:$0xff]
    %v2369 = vld [vmem:[#allocation3 + $0x50] sm:$0xff]
    %v2370 = vld [vmem:[#allocation3 + $0x58] sm:$0xff]
    %v2371 = vld [vmem:[#allocation3 + $0x60] sm:$0xff]
    %v2372 = vld [vmem:[#allocation3 + $0x68] sm:$0xff]
    %v2373 = vld [vmem:[#allocation3 + $0x70] sm:$0xff]
    %v2374 = vld [vmem:[#allocation3 + $0x78] sm:$0xff]
    %v2375 = vld [vmem:[#allocation3 + $0x80] sm:$0xff]
    %v2376 = vld [vmem:[#allocation3 + $0x88] sm:$0xff]
    %v2377 = vld [vmem:[#allocation3 + $0x90] sm:$0xff]
    %v2378 = vld [vmem:[#allocation3 + $0x98] sm:$0xff]
    %v2379 = vld [vmem:[#allocation3 + $0xa0] sm:$0xff]
    %v2380 = vld [vmem:[#allocation3 + $0xa8] sm:$0xff]
    %v2381 = vld [vmem:[#allocation3 + $0xb0] sm:$0xff]
    %v2382 = vld [vmem:[#allocation3 + $0xb8] sm:$0xff]
    %v2383 = vld [vmem:[#allocation3 + $0xc0] sm:$0xff]
    %v2384 = vld [vmem:[#allocation3 + $0xc8] sm:$0xff]
    %v2385 = vld [vmem:[#allocation3 + $0xd0] sm:$0xff]
    %v2386 = vld [vmem:[#allocation3 + $0xd8] sm:$0xff]
    %v2387 = vld [vmem:[#allocation3 + $0xe0] sm:$0xff]
    %v2388 = vld [vmem:[#allocation3 + $0xe8] sm:$0xff]
    %v2389 = vld [vmem:[#allocation3 + $0xf0] sm:$0xff]
    %v2390 = vld [vmem:[#allocation3 + $0xf8] sm:$0xff]
    %v2391 = vld [vmem:[#allocation3 + $0x100] sm:$0xff]
    %v2392 = vld [vmem:[#allocation3 + $0x108] sm:$0xff]
    %v2393 = vld [vmem:[#allocation3 + $0x110] sm:$0xff]
    %v2394 = vld [vmem:[#allocation3 + $0x118] sm:$0xff]
    %v2395 = vld [vmem:[#allocation3 + $0x120] sm:$0xff]
    %v2396 = vld [vmem:[#allocation3 + $0x128] sm:$0xff]
    %v2397 = vld [vmem:[#allocation3 + $0x130] sm:$0xff]
    %v2398 = vld [vmem:[#allocation3 + $0x138] sm:$0xff]
    %v2399 = vld [vmem:[#allocation3 + $0x140] sm:$0xff]
    %v2400 = vld [vmem:[#allocation3 + $0x148] sm:$0xff]
    %v2401 = vld [vmem:[#allocation3 + $0x150] sm:$0xff]
    %v2402 = vld [vmem:[#allocation3 + $0x158] sm:$0xff]
    %v2403 = vld [vmem:[#allocation3 + $0x160] sm:$0xff]
    %v2404 = vld [vmem:[#allocation3 + $0x168] sm:$0xff]
    %v2405 = vld [vmem:[#allocation3 + $0x170] sm:$0xff]
    %v2406 = vld [vmem:[#allocation3 + $0x178] sm:$0xff]
    %v2407 = vld [vmem:[#allocation3 + $0x180] sm:$0xff]
    %v2408 = vld [vmem:[#allocation3 + $0x188] sm:$0xff]
    %v2409 = vld [vmem:[#allocation3 + $0x190] sm:$0xff]
    %v2410 = vld [vmem:[#allocation3 + $0x198] sm:$0xff]
    %v2411 = vld [vmem:[#allocation3 + $0x1a0] sm:$0xff]
    %v2412 = vld [vmem:[#allocation3 + $0x1a8] sm:$0xff]
    %v2413 = vld [vmem:[#allocation3 + $0x1b0] sm:$0xff]
    %v2414 = vld [vmem:[#allocation3 + $0x1b8] sm:$0xff]
    %v2415 = vld [vmem:[#allocation3 + $0x1c0] sm:$0xff]
    %v2416 = vld [vmem:[#allocation3 + $0x1c8] sm:$0xff]
    %v2417 = vld [vmem:[#allocation3 + $0x1d0] sm:$0xff]
    %v2418 = vld [vmem:[#allocation3 + $0x1d8] sm:$0xff]
    %v2419 = vld [vmem:[#allocation3 + $0x1e0] sm:$0xff]
    %v2420 = vld [vmem:[#allocation3 + $0x1e8] sm:$0xff]
    %v2421 = vld [vmem:[#allocation3 + $0x1f0] sm:$0xff]
    %v2422 = vld [vmem:[#allocation3 + $0x1f8] sm:$0xff]
    %v2423 = vld [vmem:[#allocation3 + $0x200] sm:$0xff]
    %v2424 = vld [vmem:[%s4] sm:$0xff]
    %v2425 = vld [vmem:[%s4 + $0x8] sm:$0xff]
    %v2426 = vld [vmem:[%s4 + $0x10] sm:$0xff]
    %v2427 = vld [vmem:[%s4 + $0x18] sm:$0xff]
    %v2428 = vld [vmem:[%s4 + $0x20] sm:$0xff]
    %v2429 = vld [vmem:[%s4 + $0x28] sm:$0xff]
    %v2430 = vld [vmem:[%s4 + $0x30] sm:$0xff]
    %v2431 = vld [vmem:[%s4 + $0x38] sm:$0xff]
    %v2432 = vld [vmem:[%s4 + $0x40] sm:$0xff]
    %v2433 = vld [vmem:[%s4 + $0x48] sm:$0xff]
    %v2434 = vld [vmem:[%s4 + $0x50] sm:$0xff]
    %v2435 = vld [vmem:[%s4 + $0x58] sm:$0xff]
    %v2436 = vld [vmem:[%s4 + $0x60] sm:$0xff]
    %v2437 = vld [vmem:[%s4 + $0x68] sm:$0xff]
    %v2438 = vld [vmem:[%s4 + $0x70] sm:$0xff]
    %v2439 = vld [vmem:[%s4 + $0x78] sm:$0xff]
    %s2440 = scalar_lea.vmem %s4, 128
    %v2441 = vld [vmem:[%s2440] sm:$0xff]
    %v2442 = vld [vmem:[%s2440 + $0x8] sm:$0xff]
    %v2443 = vld [vmem:[%s2440 + $0x10] sm:$0xff]
    %v2444 = vld [vmem:[%s2440 + $0x18] sm:$0xff]
    %v2445 = vld [vmem:[%s2440 + $0x20] sm:$0xff]
    %v2446 = vld [vmem:[%s2440 + $0x28] sm:$0xff]
    %v2447 = vld [vmem:[%s2440 + $0x30] sm:$0xff]
    %v2448 = vld [vmem:[%s2440 + $0x38] sm:$0xff]
    %v2449 = vld [vmem:[%s2440 + $0x40] sm:$0xff]
    %v2450 = vld [vmem:[%s2440 + $0x48] sm:$0xff]
    %v2451 = vld [vmem:[%s2440 + $0x50] sm:$0xff]
    %v2452 = vld [vmem:[%s2440 + $0x58] sm:$0xff]
    %v2453 = vld [vmem:[%s2440 + $0x60] sm:$0xff]
    %v2454 = vld [vmem:[%s2440 + $0x68] sm:$0xff]
    %v2455 = vld [vmem:[%s2440 + $0x70] sm:$0xff]
    %v2456 = vld [vmem:[%s2440 + $0x78] sm:$0xff]
    %2457 = vmatprep.subr.mxu0 0.0
    %2458 = vmatpush1.msra.mxu0 %v2441
    %2459 = vmatprep.subr.mxu0 0.0
    %2460 = vmatpush1.msra.mxu0 %v2442
    %2461 = vmatprep.subr.mxu0 0.0
    %2462 = vmatpush1.msra.mxu0 %v2443
    %2463 = vmatprep.subr.mxu0 0.0
    %2464 = vmatpush1.msra.mxu0 %v2444
    %2465 = vmatprep.subr.mxu0 0.0
    %2466 = vmatpush1.msra.mxu0 %v2445
    %2467 = vmatprep.subr.mxu0 0.0
    %2468 = vmatpush1.msra.mxu0 %v2446
    %2469 = vmatprep.subr.mxu0 0.0
    %2470 = vmatpush1.msra.mxu0 %v2447
    %2471 = vmatprep.subr.mxu0 0.0
    %2472 = vmatpush1.msra.mxu0 %v2448
    %2473 = vmatprep.subr.mxu0 0.0
    %2474 = vmatpush1.msra.mxu0 %v2449
    %2475 = vmatprep.subr.mxu0 0.0
    %2476 = vmatpush1.msra.mxu0 %v2450
    %2477 = vmatprep.subr.mxu0 0.0
    %2478 = vmatpush1.msra.mxu0 %v2451
    %2479 = vmatprep.subr.mxu0 0.0
    %2480 = vmatpush1.msra.mxu0 %v2452
    %2481 = vmatprep.subr.mxu0 0.0
    %2482 = vmatpush1.msra.mxu0 %v2453
    %2483 = vmatprep.subr.mxu0 0.0
    %2484 = vmatpush1.msra.mxu0 %v2454
    %2485 = vmatprep.subr.mxu0 0.0
    %2486 = vmatpush1.msra.mxu0 %v2455
    %2487 = vmatprep.subr.mxu0 0.0
    %2488 = vmatpush1.msra.mxu0 %v2456
    %2489 = vmatprep.subr.mxu0 0.0
    %2490 = vmatpush1.msra.mxu0 0.0
    %2491 = vmatprep.subr.mxu0 0.0
    %2492 = vmatpush1.msra.mxu0 0.0
    %2493 = vmatprep.subr.mxu0 0.0
    %2494 = vmatpush1.msra.mxu0 0.0
    %2495 = vmatprep.subr.mxu0 0.0
    %2496 = vmatpush1.msra.mxu0 0.0
    %2497 = vmatprep.subr.mxu0 0.0
    %2498 = vmatpush1.msra.mxu0 0.0
    %2499 = vmatprep.subr.mxu0 0.0
    %2500 = vmatpush1.msra.mxu0 0.0
    %2501 = vmatprep.subr.mxu0 0.0
    %2502 = vmatpush1.msra.mxu0 0.0
    %2503 = vmatprep.subr.mxu0 0.0
    %2504 = vmatpush1.msra.mxu0 0.0
    %2505 = vmatprep.subr.mxu0 0.0
    %2506 = vmatpush1.msra.mxu0 0.0
    %2507 = vmatprep.subr.mxu0 0.0
    %2508 = vmatpush1.msra.mxu0 0.0
    %2509 = vmatprep.subr.mxu0 0.0
    %2510 = vmatpush1.msra.mxu0 0.0
    %2511 = vmatprep.subr.mxu0 0.0
    %2512 = vmatpush1.msra.mxu0 0.0
    %2513 = vmatprep.subr.mxu0 0.0
    %2514 = vmatpush1.msra.mxu0 0.0
    %2515 = vmatprep.subr.mxu0 0.0
    %2516 = vmatpush1.msra.mxu0 0.0
    %2517 = vmatprep.subr.mxu0 0.0
    %2518 = vmatpush1.msra.mxu0 0.0
    %2519 = vmatprep.subr.mxu0 0.0
    %2520 = vmatpush1.msra.mxu0 0.0
    %2521 = vmatprep.mubr.f32.mxu0 0.0
    %2522 = vmatmul.mubr.f32.gmra.mrb[0].mxu0 %v2360
    %v2523 = vpop.f32.mrb[0].mxu0
    %v2524 = vadd.f32 0.0, %v2523
    %v2525 = vpop.f32.mrb[0].mxu0
    %2526 = vmatprep.mubr.f32.mxu0 0.0
    %2527 = vmatmul.mubr.f32.gmra.mrb[0].mxu0 %v2362
    %v2528 = vpop.f32.mrb[0].mxu0
    %v2529 = vadd.f32 0.0, %v2528
    %v2530 = vpop.f32.mrb[0].mxu0
    %2531 = vmatprep.mubr.f32.mxu0 0.0
    %2532 = vmatmul.mubr.f32.gmra.mrb[0].mxu0 %v2364
    %v2533 = vpop.f32.mrb[0].mxu0
    %v2534 = vadd.f32 0.0, %v2533
    %v2535 = vpop.f32.mrb[0].mxu0
    %2536 = vmatprep.mubr.f32.mxu0 0.0
    %2537 = vmatmul.mubr.f32.gmra.mrb[0].mxu0 %v2366
    %v2538 = vpop.f32.mrb[0].mxu0
    %v2539 = vadd.f32 0.0, %v2538
    %v2540 = vpop.f32.mrb[0].mxu0
    %2541 = vmatprep.mubr.f32.mxu0 0.0
    %2542 = vmatmul.mubr.f32.gmra.mrb[0].mxu0 %v2368
    %v2543 = vpop.f32.mrb[0].mxu0
    %v2544 = vadd.f32 0.0, %v2543
    %v2545 = vpop.f32.mrb[0].mxu0
    %2546 = vmatprep.mubr.f32.mxu0 0.0
    %2547 = vmatmul.mubr.f32.gmra.mrb[0].mxu0 %v2370
    %v2548 = vpop.f32.mrb[0].mxu0
    %v2549 = vadd.f32 0.0, %v2548
    %v2550 = vpop.f32.mrb[0].mxu0
    %2551 = vmatprep.mubr.f32.mxu0 0.0
    %2552 = vmatmul.mubr.f32.gmra.mrb[0].mxu0 %v2372
    %v2553 = vpop.f32.mrb[0].mxu0
    %v2554 = vadd.f32 0.0, %v2553
    %v2555 = vpop.f32.mrb[0].mxu0
    %2556 = vmatprep.mubr.f32.mxu0 0.0
    %2557 = vmatmul.mubr.f32.gmra.mrb[0].mxu0 %v2374
    %v2558 = vpop.f32.mrb[0].mxu0
    %v2559 = vadd.f32 0.0, %v2558
    %v2560 = vpop.f32.mrb[0].mxu0
    %2561 = vmatprep.mubr.f32.mxu0 0.0
    %2562 = vmatmul.mubr.f32.gmra.mrb[0].mxu0 %v2376
    %v2563 = vpop.f32.mrb[0].mxu0
    %v2564 = vadd.f32 0.0, %v2563
    %v2565 = vpop.f32.mrb[0].mxu0
    %2566 = vmatprep.mubr.f32.mxu0 0.0
    %2567 = vmatmul.mubr.f32.gmra.mrb[0].mxu0 %v2378
    %v2568 = vpop.f32.mrb[0].mxu0
    %v2569 = vadd.f32 0.0, %v2568
    %v2570 = vpop.f32.mrb[0].mxu0
    %2571 = vmatprep.mubr.f32.mxu0 0.0
    %2572 = vmatmul.mubr.f32.gmra.mrb[0].mxu0 %v2380
    %v2573 = vpop.f32.mrb[0].mxu0
    %v2574 = vadd.f32 0.0, %v2573
    %v2575 = vpop.f32.mrb[0].mxu0
    %2576 = vmatprep.mubr.f32.mxu0 0.0
    %2577 = vmatmul.mubr.f32.gmra.mrb[0].mxu0 %v2382
    %v2578 = vpop.f32.mrb[0].mxu0
    %v2579 = vadd.f32 0.0, %v2578
    %v2580 = vpop.f32.mrb[0].mxu0
    %2581 = vmatprep.mubr.f32.mxu0 0.0
    %2582 = vmatmul.mubr.f32.gmra.mrb[0].mxu0 %v2384
    %v2583 = vpop.f32.mrb[0].mxu0
    %v2584 = vadd.f32 0.0, %v2583
    %v2585 = vpop.f32.mrb[0].mxu0
    %2586 = vmatprep.mubr.f32.mxu0 0.0
    %2587 = vmatmul.mubr.f32.gmra.mrb[0].mxu0 %v2386
    %v2588 = vpop.f32.mrb[0].mxu0
    %v2589 = vadd.f32 0.0, %v2588
    %v2590 = vpop.f32.mrb[0].mxu0
    %2591 = vmatprep.mubr.f32.mxu0 0.0
    %2592 = vmatmul.mubr.f32.gmra.mrb[0].mxu0 %v2388
    %v2593 = vpop.f32.mrb[0].mxu0
    %v2594 = vadd.f32 0.0, %v2593
    %v2595 = vpop.f32.mrb[0].mxu0
    %2596 = vmatprep.mubr.f32.mxu0 0.0
    %2597 = vmatmul.mubr.f32.gmra.mrb[0].mxu0 %v2390
    %v2598 = vpop.f32.mrb[0].mxu0
    %v2599 = vadd.f32 0.0, %v2598
    %v2600 = vpop.f32.mrb[0].mxu0
    %2601 = vmatprep.mubr.f32.mxu0 0.0
    %2602 = vmatmul.mubr.f32.gmra.mrb[0].mxu0 %v2392
    %v2603 = vpop.f32.mrb[0].mxu0
    %v2604 = vadd.f32 0.0, %v2603
    %v2605 = vpop.f32.mrb[0].mxu0
    %2606 = vmatprep.mubr.f32.mxu0 0.0
    %2607 = vmatmul.mubr.f32.gmra.mrb[0].mxu0 %v2394
    %v2608 = vpop.f32.mrb[0].mxu0
    %v2609 = vadd.f32 0.0, %v2608
    %v2610 = vpop.f32.mrb[0].mxu0
    %2611 = vmatprep.mubr.f32.mxu0 0.0
    %2612 = vmatmul.mubr.f32.gmra.mrb[0].mxu0 %v2396
    %v2613 = vpop.f32.mrb[0].mxu0
    %v2614 = vadd.f32 0.0, %v2613
    %v2615 = vpop.f32.mrb[0].mxu0
    %2616 = vmatprep.mubr.f32.mxu0 0.0
    %2617 = vmatmul.mubr.f32.gmra.mrb[0].mxu0 %v2398
    %v2618 = vpop.f32.mrb[0].mxu0
    %v2619 = vadd.f32 0.0, %v2618
    %v2620 = vpop.f32.mrb[0].mxu0
    %2621 = vmatprep.mubr.f32.mxu0 0.0
    %2622 = vmatmul.mubr.f32.gmra.mrb[0].mxu0 %v2400
    %v2623 = vpop.f32.mrb[0].mxu0
    %v2624 = vadd.f32 0.0, %v2623
    %v2625 = vpop.f32.mrb[0].mxu0
    %2626 = vmatprep.mubr.f32.mxu0 0.0
    %2627 = vmatmul.mubr.f32.gmra.mrb[0].mxu0 %v2402
    %v2628 = vpop.f32.mrb[0].mxu0
    %v2629 = vadd.f32 0.0, %v2628
    %v2630 = vpop.f32.mrb[0].mxu0
    %2631 = vmatprep.mubr.f32.mxu0 0.0
    %2632 = vmatmul.mubr.f32.gmra.mrb[0].mxu0 %v2404
    %v2633 = vpop.f32.mrb[0].mxu0
    %v2634 = vadd.f32 0.0, %v2633
    %v2635 = vpop.f32.mrb[0].mxu0
    %2636 = vmatprep.mubr.f32.mxu0 0.0
    %2637 = vmatmul.mubr.f32.gmra.mrb[0].mxu0 %v2406
    %v2638 = vpop.f32.mrb[0].mxu0
    %v2639 = vadd.f32 0.0, %v2638
    %v2640 = vpop.f32.mrb[0].mxu0
    %2641 = vmatprep.mubr.f32.mxu0 0.0
    %2642 = vmatmul.mubr.f32.gmra.mrb[0].mxu0 %v2408
    %v2643 = vpop.f32.mrb[0].mxu0
    %v2644 = vadd.f32 0.0, %v2643
    %v2645 = vpop.f32.mrb[0].mxu0
    %2646 = vmatprep.mubr.f32.mxu0 0.0
    %2647 = vmatmul.mubr.f32.gmra.mrb[0].mxu0 %v2410
    %v2648 = vpop.f32.mrb[0].mxu0
    %v2649 = vadd.f32 0.0, %v2648
    %v2650 = vpop.f32.mrb[0].mxu0
    %2651 = vmatprep.mubr.f32.mxu0 0.0
    %2652 = vmatmul.mubr.f32.gmra.mrb[0].mxu0 %v2412
    %v2653 = vpop.f32.mrb[0].mxu0
    %v2654 = vadd.f32 0.0, %v2653
    %v2655 = vpop.f32.mrb[0].mxu0
    %2656 = vmatprep.mubr.f32.mxu0 0.0
    %2657 = vmatmul.mubr.f32.gmra.mrb[0].mxu0 %v2414
    %v2658 = vpop.f32.mrb[0].mxu0
    %v2659 = vadd.f32 0.0, %v2658
    %v2660 = vpop.f32.mrb[0].mxu0
    %2661 = vmatprep.mubr.f32.mxu0 0.0
    %2662 = vmatmul.mubr.f32.gmra.mrb[0].mxu0 %v2416
    %v2663 = vpop.f32.mrb[0].mxu0
    %v2664 = vadd.f32 0.0, %v2663
    %v2665 = vpop.f32.mrb[0].mxu0
    %2666 = vmatprep.mubr.f32.mxu0 0.0
    %2667 = vmatmul.mubr.f32.gmra.mrb[0].mxu0 %v2418
    %v2668 = vpop.f32.mrb[0].mxu0
    %v2669 = vadd.f32 0.0, %v2668
    %v2670 = vpop.f32.mrb[0].mxu0
    %2671 = vmatprep.mubr.f32.mxu0 0.0
    %2672 = vmatmul.mubr.f32.gmra.mrb[0].mxu0 %v2420
    %v2673 = vpop.f32.mrb[0].mxu0
    %v2674 = vadd.f32 0.0, %v2673
    %v2675 = vpop.f32.mrb[0].mxu0
    %2676 = vmatprep.mubr.f32.mxu0 0.0
    %2677 = vmatmul.mubr.f32.gmra.mrb[0].mxu0 %v2422
    %v2678 = vpop.f32.mrb[0].mxu0
    %v2679 = vadd.f32 0.0, %v2678
    %v2680 = vpop.f32.mrb[0].mxu0
    %2681 = vdwg.mxu0
    %2682 = vmatprep.subr.mxu0 0.0
    %2683 = vmatpush1.msra.mxu0 %v2424
    %2684 = vmatprep.subr.mxu0 0.0
    %2685 = vmatpush1.msra.mxu0 %v2425
    %2686 = vmatprep.subr.mxu0 0.0
    %2687 = vmatpush1.msra.mxu0 %v2426
    %2688 = vmatprep.subr.mxu0 0.0
    %2689 = vmatpush1.msra.mxu0 %v2427
    %2690 = vmatprep.subr.mxu0 0.0
    %2691 = vmatpush1.msra.mxu0 %v2428
    %2692 = vmatprep.subr.mxu0 0.0
    %2693 = vmatpush1.msra.mxu0 %v2429
    %2694 = vmatprep.subr.mxu0 0.0
    %2695 = vmatpush1.msra.mxu0 %v2430
    %2696 = vmatprep.subr.mxu0 0.0
    %2697 = vmatpush1.msra.mxu0 %v2431
    %2698 = vmatprep.subr.mxu0 0.0
    %2699 = vmatpush1.msra.mxu0 %v2432
    %2700 = vmatprep.subr.mxu0 0.0
    %2701 = vmatpush1.msra.mxu0 %v2433
    %2702 = vmatprep.subr.mxu0 0.0
    %2703 = vmatpush1.msra.mxu0 %v2434
    %2704 = vmatprep.subr.mxu0 0.0
    %2705 = vmatpush1.msra.mxu0 %v2435
    %2706 = vmatprep.subr.mxu0 0.0
    %2707 = vmatpush1.msra.mxu0 %v2436
    %2708 = vmatprep.subr.mxu0 0.0
    %2709 = vmatpush1.msra.mxu0 %v2437
    %2710 = vmatprep.subr.mxu0 0.0
    %2711 = vmatpush1.msra.mxu0 %v2438
    %2712 = vmatprep.subr.mxu0 0.0
    %2713 = vmatpush1.msra.mxu0 %v2439
    %2714 = vmatprep.subr.mxu0 0.0
    %2715 = vmatpush1.msra.mxu0 0.0
    %2716 = vmatprep.subr.mxu0 0.0
    %2717 = vmatpush1.msra.mxu0 0.0
    %2718 = vmatprep.subr.mxu0 0.0
    %2719 = vmatpush1.msra.mxu0 0.0
    %2720 = vmatprep.subr.mxu0 0.0
    %2721 = vmatpush1.msra.mxu0 0.0
    %2722 = vmatprep.subr.mxu0 0.0
    %2723 = vmatpush1.msra.mxu0 0.0
    %2724 = vmatprep.subr.mxu0 0.0
    %2725 = vmatpush1.msra.mxu0 0.0
    %2726 = vmatprep.subr.mxu0 0.0
    %2727 = vmatpush1.msra.mxu0 0.0
    %2728 = vmatprep.subr.mxu0 0.0
    %2729 = vmatpush1.msra.mxu0 0.0
    %2730 = vmatprep.subr.mxu0 0.0
    %2731 = vmatpush1.msra.mxu0 0.0
    %2732 = vmatprep.subr.mxu0 0.0
    %2733 = vmatpush1.msra.mxu0 0.0
    %2734 = vmatprep.subr.mxu0 0.0
    %2735 = vmatpush1.msra.mxu0 0.0
    %2736 = vmatprep.subr.mxu0 0.0
    %2737 = vmatpush1.msra.mxu0 0.0
    %2738 = vmatprep.subr.mxu0 0.0
    %2739 = vmatpush1.msra.mxu0 0.0
    %2740 = vmatprep.subr.mxu0 0.0
    %2741 = vmatpush1.msra.mxu0 0.0
    %2742 = vmatprep.subr.mxu0 0.0
    %2743 = vmatpush1.msra.mxu0 0.0
    %2744 = vmatprep.subr.mxu0 0.0
    %2745 = vmatpush1.msra.mxu0 0.0
    %2746 = vmatprep.mubr.f32.mxu0 0.0
    %2747 = vmatmul.mubr.f32.gmra.mrb[0].mxu0 %v2359
    %v2748 = vpop.f32.mrb[0].mxu0
    %v2749 = vadd.f32 %v2524, %v2748
    %v2750 = vpop.f32.mrb[0].mxu0
    %2751 = vmatprep.mubr.f32.mxu0 0.0
    %2752 = vmatmul.mubr.f32.gmra.mrb[0].mxu0 %v2361
    %v2753 = vpop.f32.mrb[0].mxu0
    %v2754 = vadd.f32 %v2529, %v2753
    %v2755 = vpop.f32.mrb[0].mxu0
    %2756 = vmatprep.mubr.f32.mxu0 0.0
    %2757 = vmatmul.mubr.f32.gmra.mrb[0].mxu0 %v2363
    %v2758 = vpop.f32.mrb[0].mxu0
    %v2759 = vadd.f32 %v2534, %v2758
    %v2760 = vpop.f32.mrb[0].mxu0
    %2761 = vmatprep.mubr.f32.mxu0 0.0
    %2762 = vmatmul.mubr.f32.gmra.mrb[0].mxu0 %v2365
    %v2763 = vpop.f32.mrb[0].mxu0
    %v2764 = vadd.f32 %v2539, %v2763
    %v2765 = vpop.f32.mrb[0].mxu0
    %2766 = vmatprep.mubr.f32.mxu0 0.0
    %2767 = vmatmul.mubr.f32.gmra.mrb[0].mxu0 %v2367
    %v2768 = vpop.f32.mrb[0].mxu0
    %v2769 = vadd.f32 %v2544, %v2768
    %v2770 = vpop.f32.mrb[0].mxu0
    %2771 = vmatprep.mubr.f32.mxu0 0.0
    %2772 = vmatmul.mubr.f32.gmra.mrb[0].mxu0 %v2369
    %v2773 = vpop.f32.mrb[0].mxu0
    %v2774 = vadd.f32 %v2549, %v2773
    %v2775 = vpop.f32.mrb[0].mxu0
    %2776 = vmatprep.mubr.f32.mxu0 0.0
    %2777 = vmatmul.mubr.f32.gmra.mrb[0].mxu0 %v2371
    %v2778 = vpop.f32.mrb[0].mxu0
    %v2779 = vadd.f32 %v2554, %v2778
    %v2780 = vpop.f32.mrb[0].mxu0
    %2781 = vmatprep.mubr.f32.mxu0 0.0
    %2782 = vmatmul.mubr.f32.gmra.mrb[0].mxu0 %v2373
    %v2783 = vpop.f32.mrb[0].mxu0
    %v2784 = vadd.f32 %v2559, %v2783
    %v2785 = vpop.f32.mrb[0].mxu0
    %2786 = vmatprep.mubr.f32.mxu0 0.0
    %2787 = vmatmul.mubr.f32.gmra.mrb[0].mxu0 %v2375
    %v2788 = vpop.f32.mrb[0].mxu0
    %v2789 = vadd.f32 %v2564, %v2788
    %v2790 = vpop.f32.mrb[0].mxu0
    %2791 = vmatprep.mubr.f32.mxu0 0.0
    %2792 = vmatmul.mubr.f32.gmra.mrb[0].mxu0 %v2377
    %v2793 = vpop.f32.mrb[0].mxu0
    %v2794 = vadd.f32 %v2569, %v2793
    %v2795 = vpop.f32.mrb[0].mxu0
    %2796 = vmatprep.mubr.f32.mxu0 0.0
    %2797 = vmatmul.mubr.f32.gmra.mrb[0].mxu0 %v2379
    %v2798 = vpop.f32.mrb[0].mxu0
    %v2799 = vadd.f32 %v2574, %v2798
    %v2800 = vpop.f32.mrb[0].mxu0
    %2801 = vmatprep.mubr.f32.mxu0 0.0
    %2802 = vmatmul.mubr.f32.gmra.mrb[0].mxu0 %v2381
    %v2803 = vpop.f32.mrb[0].mxu0
    %v2804 = vadd.f32 %v2579, %v2803
    %v2805 = vpop.f32.mrb[0].mxu0
    %2806 = vmatprep.mubr.f32.mxu0 0.0
    %2807 = vmatmul.mubr.f32.gmra.mrb[0].mxu0 %v2383
    %v2808 = vpop.f32.mrb[0].mxu0
    %v2809 = vadd.f32 %v2584, %v2808
    %v2810 = vpop.f32.mrb[0].mxu0
    %2811 = vmatprep.mubr.f32.mxu0 0.0
    %2812 = vmatmul.mubr.f32.gmra.mrb[0].mxu0 %v2385
    %v2813 = vpop.f32.mrb[0].mxu0
    %v2814 = vadd.f32 %v2589, %v2813
    %v2815 = vpop.f32.mrb[0].mxu0
    %2816 = vmatprep.mubr.f32.mxu0 0.0
    %2817 = vmatmul.mubr.f32.gmra.mrb[0].mxu0 %v2387
    %v2818 = vpop.f32.mrb[0].mxu0
    %v2819 = vadd.f32 %v2594, %v2818
    %v2820 = vpop.f32.mrb[0].mxu0
    %2821 = vmatprep.mubr.f32.mxu0 0.0
    %2822 = vmatmul.mubr.f32.gmra.mrb[0].mxu0 %v2389
    %v2823 = vpop.f32.mrb[0].mxu0
    %v2824 = vadd.f32 %v2599, %v2823
    %v2825 = vpop.f32.mrb[0].mxu0
    %2826 = vmatprep.mubr.f32.mxu0 0.0
    %2827 = vmatmul.mubr.f32.gmra.mrb[0].mxu0 %v2391
    %v2828 = vpop.f32.mrb[0].mxu0
    %v2829 = vadd.f32 %v2604, %v2828
    %v2830 = vpop.f32.mrb[0].mxu0
    %2831 = vmatprep.mubr.f32.mxu0 0.0
    %2832 = vmatmul.mubr.f32.gmra.mrb[0].mxu0 %v2393
    %v2833 = vpop.f32.mrb[0].mxu0
    %v2834 = vadd.f32 %v2609, %v2833
    %v2835 = vpop.f32.mrb[0].mxu0
    %2836 = vmatprep.mubr.f32.mxu0 0.0
    %2837 = vmatmul.mubr.f32.gmra.mrb[0].mxu0 %v2395
    %v2838 = vpop.f32.mrb[0].mxu0
    %v2839 = vadd.f32 %v2614, %v2838
    %v2840 = vpop.f32.mrb[0].mxu0
    %2841 = vmatprep.mubr.f32.mxu0 0.0
    %2842 = vmatmul.mubr.f32.gmra.mrb[0].mxu0 %v2397
    %v2843 = vpop.f32.mrb[0].mxu0
    %v2844 = vadd.f32 %v2619, %v2843
    %v2845 = vpop.f32.mrb[0].mxu0
    %2846 = vmatprep.mubr.f32.mxu0 0.0
    %2847 = vmatmul.mubr.f32.gmra.mrb[0].mxu0 %v2399
    %v2848 = vpop.f32.mrb[0].mxu0
    %v2849 = vadd.f32 %v2624, %v2848
    %v2850 = vpop.f32.mrb[0].mxu0
    %2851 = vmatprep.mubr.f32.mxu0 0.0
    %2852 = vmatmul.mubr.f32.gmra.mrb[0].mxu0 %v2401
    %v2853 = vpop.f32.mrb[0].mxu0
    %v2854 = vadd.f32 %v2629, %v2853
    %v2855 = vpop.f32.mrb[0].mxu0
    %2856 = vmatprep.mubr.f32.mxu0 0.0
    %2857 = vmatmul.mubr.f32.gmra.mrb[0].mxu0 %v2403
    %v2858 = vpop.f32.mrb[0].mxu0
    %v2859 = vadd.f32 %v2634, %v2858
    %v2860 = vpop.f32.mrb[0].mxu0
    %2861 = vmatprep.mubr.f32.mxu0 0.0
    %2862 = vmatmul.mubr.f32.gmra.mrb[0].mxu0 %v2405
    %v2863 = vpop.f32.mrb[0].mxu0
    %v2864 = vadd.f32 %v2639, %v2863
    %v2865 = vpop.f32.mrb[0].mxu0
    %2866 = vmatprep.mubr.f32.mxu0 0.0
    %2867 = vmatmul.mubr.f32.gmra.mrb[0].mxu0 %v2407
    %v2868 = vpop.f32.mrb[0].mxu0
    %v2869 = vadd.f32 %v2644, %v2868
    %v2870 = vpop.f32.mrb[0].mxu0
    %2871 = vmatprep.mubr.f32.mxu0 0.0
    %2872 = vmatmul.mubr.f32.gmra.mrb[0].mxu0 %v2409
    %v2873 = vpop.f32.mrb[0].mxu0
    %v2874 = vadd.f32 %v2649, %v2873
    %v2875 = vpop.f32.mrb[0].mxu0
    %2876 = vmatprep.mubr.f32.mxu0 0.0
    %2877 = vmatmul.mubr.f32.gmra.mrb[0].mxu0 %v2411
    %v2878 = vpop.f32.mrb[0].mxu0
    %v2879 = vadd.f32 %v2654, %v2878
    %v2880 = vpop.f32.mrb[0].mxu0
    %2881 = vmatprep.mubr.f32.mxu0 0.0
    %2882 = vmatmul.mubr.f32.gmra.mrb[0].mxu0 %v2413
    %v2883 = vpop.f32.mrb[0].mxu0
    %v2884 = vadd.f32 %v2659, %v2883
    %v2885 = vpop.f32.mrb[0].mxu0
    %2886 = vmatprep.mubr.f32.mxu0 0.0
    %2887 = vmatmul.mubr.f32.gmra.mrb[0].mxu0 %v2415
    %v2888 = vpop.f32.mrb[0].mxu0
    %v2889 = vadd.f32 %v2664, %v2888
    %v2890 = vpop.f32.mrb[0].mxu0
    %2891 = vmatprep.mubr.f32.mxu0 0.0
    %2892 = vmatmul.mubr.f32.gmra.mrb[0].mxu0 %v2417
    %v2893 = vpop.f32.mrb[0].mxu0
    %v2894 = vadd.f32 %v2669, %v2893
    %v2895 = vpop.f32.mrb[0].mxu0
    %2896 = vmatprep.mubr.f32.mxu0 0.0
    %2897 = vmatmul.mubr.f32.gmra.mrb[0].mxu0 %v2419
    %v2898 = vpop.f32.mrb[0].mxu0
    %v2899 = vadd.f32 %v2674, %v2898
    %v2900 = vpop.f32.mrb[0].mxu0
    %2901 = vmatprep.mubr.f32.mxu0 0.0
    %2902 = vmatmul.mubr.f32.gmra.mrb[0].mxu0 %v2421
    %v2903 = vpop.f32.mrb[0].mxu0
    %v2904 = vadd.f32 %v2679, %v2903
    %v2905 = vpop.f32.mrb[0].mxu0
    %2906 = vdwg.mxu0
    %s2907 = scalar_lea.vmem %s4, 256
    %v2908 = vld [vmem:[%s2907] sm:$0xff]
    %v2909 = vld [vmem:[%s2907 + $0x8] sm:$0xff]
    %v2910 = vld [vmem:[%s2907 + $0x10] sm:$0xff]
    %v2911 = vld [vmem:[%s2907 + $0x18] sm:$0xff]
    %v2912 = vld [vmem:[%s2907 + $0x20] sm:$0xff]
    %v2913 = vld [vmem:[%s2907 + $0x28] sm:$0xff]
    %v2914 = vld [vmem:[%s2907 + $0x30] sm:$0xff]
    %v2915 = vld [vmem:[%s2907 + $0x38] sm:$0xff]
    %v2916 = vld [vmem:[%s2907 + $0x40] sm:$0xff]
    %v2917 = vld [vmem:[%s2907 + $0x48] sm:$0xff]
    %v2918 = vld [vmem:[%s2907 + $0x50] sm:$0xff]
    %v2919 = vld [vmem:[%s2907 + $0x58] sm:$0xff]
    %v2920 = vld [vmem:[%s2907 + $0x60] sm:$0xff]
    %v2921 = vld [vmem:[%s2907 + $0x68] sm:$0xff]
    %v2922 = vld [vmem:[%s2907 + $0x70] sm:$0xff]
    %v2923 = vld [vmem:[%s2907 + $0x78] sm:$0xff]
    %2924 = vmatprep.subr.mxu0 0.0
    %2925 = vmatpush1.msra.mxu0 %v2908
    %2926 = vmatprep.subr.mxu0 0.0
    %2927 = vmatpush1.msra.mxu0 %v2909
    %2928 = vmatprep.subr.mxu0 0.0
    %2929 = vmatpush1.msra.mxu0 %v2910
    %2930 = vmatprep.subr.mxu0 0.0
    %2931 = vmatpush1.msra.mxu0 %v2911
    %2932 = vmatprep.subr.mxu0 0.0
    %2933 = vmatpush1.msra.mxu0 %v2912
    %2934 = vmatprep.subr.mxu0 0.0
    %2935 = vmatpush1.msra.mxu0 %v2913
    %2936 = vmatprep.subr.mxu0 0.0
    %2937 = vmatpush1.msra.mxu0 %v2914
    %2938 = vmatprep.subr.mxu0 0.0
    %2939 = vmatpush1.msra.mxu0 %v2915
    %2940 = vmatprep.subr.mxu0 0.0
    %2941 = vmatpush1.msra.mxu0 %v2916
    %2942 = vmatprep.subr.mxu0 0.0
    %2943 = vmatpush1.msra.mxu0 %v2917
    %2944 = vmatprep.subr.mxu0 0.0
    %2945 = vmatpush1.msra.mxu0 %v2918
    %2946 = vmatprep.subr.mxu0 0.0
    %2947 = vmatpush1.msra.mxu0 %v2919
    %2948 = vmatprep.subr.mxu0 0.0
    %2949 = vmatpush1.msra.mxu0 %v2920
    %2950 = vmatprep.subr.mxu0 0.0
    %2951 = vmatpush1.msra.mxu0 %v2921
    %2952 = vmatprep.subr.mxu0 0.0
    %2953 = vmatpush1.msra.mxu0 %v2922
    %2954 = vmatprep.subr.mxu0 0.0
    %2955 = vmatpush1.msra.mxu0 %v2923
    %2956 = vmatprep.subr.mxu0 0.0
    %2957 = vmatpush1.msra.mxu0 0.0
    %2958 = vmatprep.subr.mxu0 0.0
    %2959 = vmatpush1.msra.mxu0 0.0
    %2960 = vmatprep.subr.mxu0 0.0
    %2961 = vmatpush1.msra.mxu0 0.0
    %2962 = vmatprep.subr.mxu0 0.0
    %2963 = vmatpush1.msra.mxu0 0.0
    %2964 = vmatprep.subr.mxu0 0.0
    %2965 = vmatpush1.msra.mxu0 0.0
    %2966 = vmatprep.subr.mxu0 0.0
    %2967 = vmatpush1.msra.mxu0 0.0
    %2968 = vmatprep.subr.mxu0 0.0
    %2969 = vmatpush1.msra.mxu0 0.0
    %2970 = vmatprep.subr.mxu0 0.0
    %2971 = vmatpush1.msra.mxu0 0.0
    %2972 = vmatprep.subr.mxu0 0.0
    %2973 = vmatpush1.msra.mxu0 0.0
    %2974 = vmatprep.subr.mxu0 0.0
    %2975 = vmatpush1.msra.mxu0 0.0
    %2976 = vmatprep.subr.mxu0 0.0
    %2977 = vmatpush1.msra.mxu0 0.0
    %2978 = vmatprep.subr.mxu0 0.0
    %2979 = vmatpush1.msra.mxu0 0.0
    %2980 = vmatprep.subr.mxu0 0.0
    %2981 = vmatpush1.msra.mxu0 0.0
    %2982 = vmatprep.subr.mxu0 0.0
    %2983 = vmatpush1.msra.mxu0 0.0
    %2984 = vmatprep.subr.mxu0 0.0
    %2985 = vmatpush1.msra.mxu0 0.0
    %2986 = vmatprep.subr.mxu0 0.0
    %2987 = vmatpush1.msra.mxu0 0.0
    %2988 = vmatprep.mubr.f32.mxu0 0.0
    %2989 = vmatmul.mubr.f32.gmra.mrb[0].mxu0 %v2361
    %v2990 = vpop.f32.mrb[0].mxu0
    %v2991 = vadd.f32 0.0, %v2990
    %v2992 = vpop.f32.mrb[0].mxu0
    %2993 = vmatprep.mubr.f32.mxu0 0.0
    %2994 = vmatmul.mubr.f32.gmra.mrb[0].mxu0 %v2363
    %v2995 = vpop.f32.mrb[0].mxu0
    %v2996 = vadd.f32 0.0, %v2995
    %v2997 = vpop.f32.mrb[0].mxu0
    %2998 = vmatprep.mubr.f32.mxu0 0.0
    %2999 = vmatmul.mubr.f32.gmra.mrb[0].mxu0 %v2365
    %v3000 = vpop.f32.mrb[0].mxu0
    %v3001 = vadd.f32 0.0, %v3000
    %v3002 = vpop.f32.mrb[0].mxu0
    %3003 = vmatprep.mubr.f32.mxu0 0.0
    %3004 = vmatmul.mubr.f32.gmra.mrb[0].mxu0 %v2367
    %v3005 = vpop.f32.mrb[0].mxu0
    %v3006 = vadd.f32 0.0, %v3005
    %v3007 = vpop.f32.mrb[0].mxu0
    %3008 = vmatprep.mubr.f32.mxu0 0.0
    %3009 = vmatmul.mubr.f32.gmra.mrb[0].mxu0 %v2369
    %v3010 = vpop.f32.mrb[0].mxu0
    %v3011 = vadd.f32 0.0, %v3010
    %v3012 = vpop.f32.mrb[0].mxu0
    %3013 = vmatprep.mubr.f32.mxu0 0.0
    %3014 = vmatmul.mubr.f32.gmra.mrb[0].mxu0 %v2371
    %v3015 = vpop.f32.mrb[0].mxu0
    %v3016 = vadd.f32 0.0, %v3015
    %v3017 = vpop.f32.mrb[0].mxu0
    %3018 = vmatprep.mubr.f32.mxu0 0.0
    %3019 = vmatmul.mubr.f32.gmra.mrb[0].mxu0 %v2373
    %v3020 = vpop.f32.mrb[0].mxu0
    %v3021 = vadd.f32 0.0, %v3020
    %v3022 = vpop.f32.mrb[0].mxu0
    %3023 = vmatprep.mubr.f32.mxu0 0.0
    %3024 = vmatmul.mubr.f32.gmra.mrb[0].mxu0 %v2375
    %v3025 = vpop.f32.mrb[0].mxu0
    %v3026 = vadd.f32 0.0, %v3025
    %v3027 = vpop.f32.mrb[0].mxu0
    %3028 = vmatprep.mubr.f32.mxu0 0.0
    %3029 = vmatmul.mubr.f32.gmra.mrb[0].mxu0 %v2377
    %v3030 = vpop.f32.mrb[0].mxu0
    %v3031 = vadd.f32 0.0, %v3030
    %v3032 = vpop.f32.mrb[0].mxu0
    %3033 = vmatprep.mubr.f32.mxu0 0.0
    %3034 = vmatmul.mubr.f32.gmra.mrb[0].mxu0 %v2379
    %v3035 = vpop.f32.mrb[0].mxu0
    %v3036 = vadd.f32 0.0, %v3035
    %v3037 = vpop.f32.mrb[0].mxu0
    %3038 = vmatprep.mubr.f32.mxu0 0.0
    %3039 = vmatmul.mubr.f32.gmra.mrb[0].mxu0 %v2381
    %v3040 = vpop.f32.mrb[0].mxu0
    %v3041 = vadd.f32 0.0, %v3040
    %v3042 = vpop.f32.mrb[0].mxu0
    %3043 = vmatprep.mubr.f32.mxu0 0.0
    %3044 = vmatmul.mubr.f32.gmra.mrb[0].mxu0 %v2383
    %v3045 = vpop.f32.mrb[0].mxu0
    %v3046 = vadd.f32 0.0, %v3045
    %v3047 = vpop.f32.mrb[0].mxu0
    %3048 = vmatprep.mubr.f32.mxu0 0.0
    %3049 = vmatmul.mubr.f32.gmra.mrb[0].mxu0 %v2385
    %v3050 = vpop.f32.mrb[0].mxu0
    %v3051 = vadd.f32 0.0, %v3050
    %v3052 = vpop.f32.mrb[0].mxu0
    %3053 = vmatprep.mubr.f32.mxu0 0.0
    %3054 = vmatmul.mubr.f32.gmra.mrb[0].mxu0 %v2387
    %v3055 = vpop.f32.mrb[0].mxu0
    %v3056 = vadd.f32 0.0, %v3055
    %v3057 = vpop.f32.mrb[0].mxu0
    %3058 = vmatprep.mubr.f32.mxu0 0.0
    %3059 = vmatmul.mubr.f32.gmra.mrb[0].mxu0 %v2389
    %v3060 = vpop.f32.mrb[0].mxu0
    %v3061 = vadd.f32 0.0, %v3060
    %v3062 = vpop.f32.mrb[0].mxu0
    %3063 = vmatprep.mubr.f32.mxu0 0.0
    %3064 = vmatmul.mubr.f32.gmra.mrb[0].mxu0 %v2391
    %v3065 = vpop.f32.mrb[0].mxu0
    %v3066 = vadd.f32 0.0, %v3065
    %v3067 = vpop.f32.mrb[0].mxu0
    %3068 = vmatprep.mubr.f32.mxu0 0.0
    %3069 = vmatmul.mubr.f32.gmra.mrb[0].mxu0 %v2393
    %v3070 = vpop.f32.mrb[0].mxu0
    %v3071 = vadd.f32 0.0, %v3070
    %v3072 = vpop.f32.mrb[0].mxu0
    %3073 = vmatprep.mubr.f32.mxu0 0.0
    %3074 = vmatmul.mubr.f32.gmra.mrb[0].mxu0 %v2395
    %v3075 = vpop.f32.mrb[0].mxu0
    %v3076 = vadd.f32 0.0, %v3075
    %v3077 = vpop.f32.mrb[0].mxu0
    %3078 = vmatprep.mubr.f32.mxu0 0.0
    %3079 = vmatmul.mubr.f32.gmra.mrb[0].mxu0 %v2397
    %v3080 = vpop.f32.mrb[0].mxu0
    %v3081 = vadd.f32 0.0, %v3080
    %v3082 = vpop.f32.mrb[0].mxu0
    %3083 = vmatprep.mubr.f32.mxu0 0.0
    %3084 = vmatmul.mubr.f32.gmra.mrb[0].mxu0 %v2399
    %v3085 = vpop.f32.mrb[0].mxu0
    %v3086 = vadd.f32 0.0, %v3085
    %v3087 = vpop.f32.mrb[0].mxu0
    %3088 = vmatprep.mubr.f32.mxu0 0.0
    %3089 = vmatmul.mubr.f32.gmra.mrb[0].mxu0 %v2401
    %v3090 = vpop.f32.mrb[0].mxu0
    %v3091 = vadd.f32 0.0, %v3090
    %v3092 = vpop.f32.mrb[0].mxu0
    %3093 = vmatprep.mubr.f32.mxu0 0.0
    %3094 = vmatmul.mubr.f32.gmra.mrb[0].mxu0 %v2403
    %v3095 = vpop.f32.mrb[0].mxu0
    %v3096 = vadd.f32 0.0, %v3095
    %v3097 = vpop.f32.mrb[0].mxu0
    %3098 = vmatprep.mubr.f32.mxu0 0.0
    %3099 = vmatmul.mubr.f32.gmra.mrb[0].mxu0 %v2405
    %v3100 = vpop.f32.mrb[0].mxu0
    %v3101 = vadd.f32 0.0, %v3100
    %v3102 = vpop.f32.mrb[0].mxu0
    %3103 = vmatprep.mubr.f32.mxu0 0.0
    %3104 = vmatmul.mubr.f32.gmra.mrb[0].mxu0 %v2407
    %v3105 = vpop.f32.mrb[0].mxu0
    %v3106 = vadd.f32 0.0, %v3105
    %v3107 = vpop.f32.mrb[0].mxu0
    %3108 = vmatprep.mubr.f32.mxu0 0.0
    %3109 = vmatmul.mubr.f32.gmra.mrb[0].mxu0 %v2409
    %v3110 = vpop.f32.mrb[0].mxu0
    %v3111 = vadd.f32 0.0, %v3110
    %v3112 = vpop.f32.mrb[0].mxu0
    %3113 = vmatprep.mubr.f32.mxu0 0.0
    %3114 = vmatmul.mubr.f32.gmra.mrb[0].mxu0 %v2411
    %v3115 = vpop.f32.mrb[0].mxu0
    %v3116 = vadd.f32 0.0, %v3115
    %v3117 = vpop.f32.mrb[0].mxu0
    %3118 = vmatprep.mubr.f32.mxu0 0.0
    %3119 = vmatmul.mubr.f32.gmra.mrb[0].mxu0 %v2413
    %v3120 = vpop.f32.mrb[0].mxu0
    %v3121 = vadd.f32 0.0, %v3120
    %v3122 = vpop.f32.mrb[0].mxu0
    %3123 = vmatprep.mubr.f32.mxu0 0.0
    %3124 = vmatmul.mubr.f32.gmra.mrb[0].mxu0 %v2415
    %v3125 = vpop.f32.mrb[0].mxu0
    %v3126 = vadd.f32 0.0, %v3125
    %v3127 = vpop.f32.mrb[0].mxu0
    %3128 = vmatprep.mubr.f32.mxu0 0.0
    %3129 = vmatmul.mubr.f32.gmra.mrb[0].mxu0 %v2417
    %v3130 = vpop.f32.mrb[0].mxu0
    %v3131 = vadd.f32 0.0, %v3130
    %v3132 = vpop.f32.mrb[0].mxu0
    %3133 = vmatprep.mubr.f32.mxu0 0.0
    %3134 = vmatmul.mubr.f32.gmra.mrb[0].mxu0 %v2419
    %v3135 = vpop.f32.mrb[0].mxu0
    %v3136 = vadd.f32 0.0, %v3135
    %v3137 = vpop.f32.mrb[0].mxu0
    %3138 = vmatprep.mubr.f32.mxu0 0.0
    %3139 = vmatmul.mubr.f32.gmra.mrb[0].mxu0 %v2421
    %v3140 = vpop.f32.mrb[0].mxu0
    %v3141 = vadd.f32 0.0, %v3140
    %v3142 = vpop.f32.mrb[0].mxu0
    %3143 = vmatprep.mubr.f32.mxu0 0.0
    %3144 = vmatmul.mubr.f32.gmra.mrb[0].mxu0 %v2423
    %v3145 = vpop.f32.mrb[0].mxu0
    %v3146 = vadd.f32 0.0, %v3145
    %v3147 = vpop.f32.mrb[0].mxu0
    %3148 = vdwg.mxu0
    %v3149 = vadd.f32 %v2749, %v2991
    %v3150 = vadd.f32 %v2754, %v2996
    %v3151 = vadd.f32 %v2759, %v3001
    %v3152 = vadd.f32 %v2764, %v3006
    %v3153 = vadd.f32 %v2769, %v3011
    %v3154 = vadd.f32 %v2774, %v3016
    %v3155 = vadd.f32 %v2779, %v3021
    %v3156 = vadd.f32 %v2784, %v3026
    %v3157 = vadd.f32 %v2789, %v3031
    %v3158 = vadd.f32 %v2794, %v3036
    %v3159 = vadd.f32 %v2799, %v3041
    %v3160 = vadd.f32 %v2804, %v3046
    %v3161 = vadd.f32 %v2809, %v3051
    %v3162 = vadd.f32 %v2814, %v3056
    %v3163 = vadd.f32 %v2819, %v3061
    %v3164 = vadd.f32 %v2824, %v3066
    %v3165 = vadd.f32 %v2829, %v3071
    %v3166 = vadd.f32 %v2834, %v3076
    %v3167 = vadd.f32 %v2839, %v3081
    %v3168 = vadd.f32 %v2844, %v3086
    %v3169 = vadd.f32 %v2849, %v3091
    %v3170 = vadd.f32 %v2854, %v3096
    %v3171 = vadd.f32 %v2859, %v3101
    %v3172 = vadd.f32 %v2864, %v3106
    %v3173 = vadd.f32 %v2869, %v3111
    %v3174 = vadd.f32 %v2874, %v3116
    %v3175 = vadd.f32 %v2879, %v3121
    %v3176 = vadd.f32 %v2884, %v3126
    %v3177 = vadd.f32 %v2889, %v3131
    %v3178 = vadd.f32 %v2894, %v3136
    %v3179 = vadd.f32 %v2899, %v3141
    %v3180 = vadd.f32 %v2904, %v3146
    %v3181 = vld [vmem:[%s5] sm:$0x1]
    %v3183 = vlaneseq
    %v3184 = vshrl.u32 %v3183, 7
    %v3185 = vsub.s32 0, %v3184
    %v3186 = vrot.slane %v3181, %v3185
    %v3188 = vmul.f32 %v3149, %v3186
    %v3189 = vmul.f32 %v3150, %v3186
    %v3190 = vmul.f32 %v3151, %v3186
    %v3191 = vmul.f32 %v3152, %v3186
    %v3192 = vmul.f32 %v3153, %v3186
    %v3193 = vmul.f32 %v3154, %v3186
    %v3194 = vmul.f32 %v3155, %v3186
    %v3195 = vmul.f32 %v3156, %v3186
    %v3196 = vmul.f32 %v3157, %v3186
    %v3197 = vmul.f32 %v3158, %v3186
    %v3198 = vmul.f32 %v3159, %v3186
    %v3199 = vmul.f32 %v3160, %v3186
    %v3200 = vmul.f32 %v3161, %v3186
    %v3201 = vmul.f32 %v3162, %v3186
    %v3202 = vmul.f32 %v3163, %v3186
    %v3203 = vmul.f32 %v3164, %v3186
    %v3204 = vmul.f32 %v3165, %v3186
    %v3205 = vmul.f32 %v3166, %v3186
    %v3206 = vmul.f32 %v3167, %v3186
    %v3207 = vmul.f32 %v3168, %v3186
    %v3208 = vmul.f32 %v3169, %v3186
    %v3209 = vmul.f32 %v3170, %v3186
    %v3210 = vmul.f32 %v3171, %v3186
    %v3211 = vmul.f32 %v3172, %v3186
    %v3212 = vmul.f32 %v3173, %v3186
    %v3213 = vmul.f32 %v3174, %v3186
    %v3214 = vmul.f32 %v3175, %v3186
    %v3215 = vmul.f32 %v3176, %v3186
    %v3216 = vmul.f32 %v3177, %v3186
    %v3217 = vmul.f32 %v3178, %v3186
    %v3218 = vmul.f32 %v3179, %v3186
    %v3219 = vmul.f32 %v3180, %v3186
    %v3220 = vld [vmem:[%s6] sm:$0x1]
    %v3222 = vlaneseq
    %v3223 = vshrl.u32 %v3222, 7
    %v3224 = vsub.s32 0, %v3223
    %v3225 = vrot.slane %v3220, %v3224
    %v3227 = vadd.f32 %v3188, %v3225
    %v3228 = vadd.f32 %v3189, %v3225
    %v3229 = vadd.f32 %v3190, %v3225
    %v3230 = vadd.f32 %v3191, %v3225
    %v3231 = vadd.f32 %v3192, %v3225
    %v3232 = vadd.f32 %v3193, %v3225
    %v3233 = vadd.f32 %v3194, %v3225
    %v3234 = vadd.f32 %v3195, %v3225
    %v3235 = vadd.f32 %v3196, %v3225
    %v3236 = vadd.f32 %v3197, %v3225
    %v3237 = vadd.f32 %v3198, %v3225
    %v3238 = vadd.f32 %v3199, %v3225
    %v3239 = vadd.f32 %v3200, %v3225
    %v3240 = vadd.f32 %v3201, %v3225
    %v3241 = vadd.f32 %v3202, %v3225
    %v3242 = vadd.f32 %v3203, %v3225
    %v3243 = vadd.f32 %v3204, %v3225
    %v3244 = vadd.f32 %v3205, %v3225
    %v3245 = vadd.f32 %v3206, %v3225
    %v3246 = vadd.f32 %v3207, %v3225
    %v3247 = vadd.f32 %v3208, %v3225
    %v3248 = vadd.f32 %v3209, %v3225
    %v3249 = vadd.f32 %v3210, %v3225
    %v3250 = vadd.f32 %v3211, %v3225
    %v3251 = vadd.f32 %v3212, %v3225
    %v3252 = vadd.f32 %v3213, %v3225
    %v3253 = vadd.f32 %v3214, %v3225
    %v3254 = vadd.f32 %v3215, %v3225
    %v3255 = vadd.f32 %v3216, %v3225
    %v3256 = vadd.f32 %v3217, %v3225
    %v3257 = vadd.f32 %v3218, %v3225
    %v3258 = vadd.f32 %v3219, %v3225
    %v3259 = vmax.f32 %v3227, 0.0
    %v3260 = vmax.f32 %v3228, 0.0
    %v3261 = vmax.f32 %v3229, 0.0
    %v3262 = vmax.f32 %v3230, 0.0
    %v3263 = vmax.f32 %v3231, 0.0
    %v3264 = vmax.f32 %v3232, 0.0
    %v3265 = vmax.f32 %v3233, 0.0
    %v3266 = vmax.f32 %v3234, 0.0
    %v3267 = vmax.f32 %v3235, 0.0
    %v3268 = vmax.f32 %v3236, 0.0
    %v3269 = vmax.f32 %v3237, 0.0
    %v3270 = vmax.f32 %v3238, 0.0
    %v3271 = vmax.f32 %v3239, 0.0
    %v3272 = vmax.f32 %v3240, 0.0
    %v3273 = vmax.f32 %v3241, 0.0
    %v3274 = vmax.f32 %v3242, 0.0
    %v3275 = vmax.f32 %v3243, 0.0
    %v3276 = vmax.f32 %v3244, 0.0
    %v3277 = vmax.f32 %v3245, 0.0
    %v3278 = vmax.f32 %v3246, 0.0
    %v3279 = vmax.f32 %v3247, 0.0
    %v3280 = vmax.f32 %v3248, 0.0
    %v3281 = vmax.f32 %v3249, 0.0
    %v3282 = vmax.f32 %v3250, 0.0
    %v3283 = vmax.f32 %v3251, 0.0
    %v3284 = vmax.f32 %v3252, 0.0
    %v3285 = vmax.f32 %v3253, 0.0
    %v3286 = vmax.f32 %v3254, 0.0
    %v3287 = vmax.f32 %v3255, 0.0
    %v3288 = vmax.f32 %v3256, 0.0
    %v3289 = vmax.f32 %v3257, 0.0
    %v3290 = vmax.f32 %v3258, 0.0
    %vm3291 = vcmask 523264
    %3292 = vst.msk [vmem:[#allocation4] sm:$0xff] %vm3291, 0.0
    %s3293 = scalar_lea.vmem [#allocation4], 264
    %3294 = vst.msk [vmem:[%s3293] sm:$0xff] %vm3291, 0.0
    %s3295 = scalar_lea.vmem [#allocation4], 8
    %3296 = vst.msk [vmem:[%s3295] sm:$0xff] %vm3291, %v3259
    %3297 = vst.msk [vmem:[%s3295 + $0x8] sm:$0xff] %vm3291, %v3260
    %3298 = vst.msk [vmem:[%s3295 + $0x10] sm:$0xff] %vm3291, %v3261
    %3299 = vst.msk [vmem:[%s3295 + $0x18] sm:$0xff] %vm3291, %v3262
    %3300 = vst.msk [vmem:[%s3295 + $0x20] sm:$0xff] %vm3291, %v3263
    %3301 = vst.msk [vmem:[%s3295 + $0x28] sm:$0xff] %vm3291, %v3264
    %3302 = vst.msk [vmem:[%s3295 + $0x30] sm:$0xff] %vm3291, %v3265
    %3303 = vst.msk [vmem:[%s3295 + $0x38] sm:$0xff] %vm3291, %v3266
    %3304 = vst.msk [vmem:[%s3295 + $0x40] sm:$0xff] %vm3291, %v3267
    %3305 = vst.msk [vmem:[%s3295 + $0x48] sm:$0xff] %vm3291, %v3268
    %3306 = vst.msk [vmem:[%s3295 + $0x50] sm:$0xff] %vm3291, %v3269
    %3307 = vst.msk [vmem:[%s3295 + $0x58] sm:$0xff] %vm3291, %v3270
    %3308 = vst.msk [vmem:[%s3295 + $0x60] sm:$0xff] %vm3291, %v3271
    %3309 = vst.msk [vmem:[%s3295 + $0x68] sm:$0xff] %vm3291, %v3272
    %3310 = vst.msk [vmem:[%s3295 + $0x70] sm:$0xff] %vm3291, %v3273
    %3311 = vst.msk [vmem:[%s3295 + $0x78] sm:$0xff] %vm3291, %v3274
    %3312 = vst.msk [vmem:[%s3295 + $0x80] sm:$0xff] %vm3291, %v3275
    %3313 = vst.msk [vmem:[%s3295 + $0x88] sm:$0xff] %vm3291, %v3276
    %3314 = vst.msk [vmem:[%s3295 + $0x90] sm:$0xff] %vm3291, %v3277
    %3315 = vst.msk [vmem:[%s3295 + $0x98] sm:$0xff] %vm3291, %v3278
    %3316 = vst.msk [vmem:[%s3295 + $0xa0] sm:$0xff] %vm3291, %v3279
    %3317 = vst.msk [vmem:[%s3295 + $0xa8] sm:$0xff] %vm3291, %v3280
    %3318 = vst.msk [vmem:[%s3295 + $0xb0] sm:$0xff] %vm3291, %v3281
    %3319 = vst.msk [vmem:[%s3295 + $0xb8] sm:$0xff] %vm3291, %v3282
    %3320 = vst.msk [vmem:[%s3295 + $0xc0] sm:$0xff] %vm3291, %v3283
    %3321 = vst.msk [vmem:[%s3295 + $0xc8] sm:$0xff] %vm3291, %v3284
    %3322 = vst.msk [vmem:[%s3295 + $0xd0] sm:$0xff] %vm3291, %v3285
    %3323 = vst.msk [vmem:[%s3295 + $0xd8] sm:$0xff] %vm3291, %v3286
    %3324 = vst.msk [vmem:[%s3295 + $0xe0] sm:$0xff] %vm3291, %v3287
    %3325 = vst.msk [vmem:[%s3295 + $0xe8] sm:$0xff] %vm3291, %v3288
    %3326 = vst.msk [vmem:[%s3295 + $0xf0] sm:$0xff] %vm3291, %v3289
    %3327 = vst.msk [vmem:[%s3295 + $0xf8] sm:$0xff] %vm3291, %v3290
    %v3328 = vld [vmem:[#allocation4] sm:$0xff]
    %v3329 = vld [vmem:[#allocation4 + $0x8] sm:$0xff]
    %v3330 = vld [vmem:[#allocation4 + $0x10] sm:$0xff]
    %v3331 = vld [vmem:[#allocation4 + $0x18] sm:$0xff]
    %v3332 = vld [vmem:[#allocation4 + $0x20] sm:$0xff]
    %v3333 = vld [vmem:[#allocation4 + $0x28] sm:$0xff]
    %v3334 = vld [vmem:[#allocation4 + $0x30] sm:$0xff]
    %v3335 = vld [vmem:[#allocation4 + $0x38] sm:$0xff]
    %v3336 = vld [vmem:[#allocation4 + $0x40] sm:$0xff]
    %v3337 = vld [vmem:[#allocation4 + $0x48] sm:$0xff]
    %v3338 = vld [vmem:[#allocation4 + $0x50] sm:$0xff]
    %v3339 = vld [vmem:[#allocation4 + $0x58] sm:$0xff]
    %v3340 = vld [vmem:[#allocation4 + $0x60] sm:$0xff]
    %v3341 = vld [vmem:[#allocation4 + $0x68] sm:$0xff]
    %v3342 = vld [vmem:[#allocation4 + $0x70] sm:$0xff]
    %v3343 = vld [vmem:[#allocation4 + $0x78] sm:$0xff]
    %v3344 = vld [vmem:[#allocation4 + $0x80] sm:$0xff]
    %v3345 = vld [vmem:[#allocation4 + $0x88] sm:$0xff]
    %v3346 = vld [vmem:[#allocation4 + $0x90] sm:$0xff]
    %v3347 = vld [vmem:[#allocation4 + $0x98] sm:$0xff]
    %v3348 = vld [vmem:[#allocation4 + $0xa0] sm:$0xff]
    %v3349 = vld [vmem:[#allocation4 + $0xa8] sm:$0xff]
    %v3350 = vld [vmem:[#allocation4 + $0xb0] sm:$0xff]
    %v3351 = vld [vmem:[#allocation4 + $0xb8] sm:$0xff]
    %v3352 = vld [vmem:[#allocation4 + $0xc0] sm:$0xff]
    %v3353 = vld [vmem:[#allocation4 + $0xc8] sm:$0xff]
    %v3354 = vld [vmem:[#allocation4 + $0xd0] sm:$0xff]
    %v3355 = vld [vmem:[#allocation4 + $0xd8] sm:$0xff]
    %v3356 = vld [vmem:[#allocation4 + $0xe0] sm:$0xff]
    %v3357 = vld [vmem:[#allocation4 + $0xe8] sm:$0xff]
    %v3358 = vld [vmem:[#allocation4 + $0xf0] sm:$0xff]
    %v3359 = vld [vmem:[#allocation4 + $0xf8] sm:$0xff]
    %v3360 = vld [vmem:[#allocation4 + $0x100] sm:$0xff]
    %v3361 = vld [vmem:[%s7] sm:$0xff]
    %v3362 = vld [vmem:[%s7 + $0x8] sm:$0xff]
    %v3363 = vld [vmem:[%s7 + $0x10] sm:$0xff]
    %v3364 = vld [vmem:[%s7 + $0x18] sm:$0xff]
    %v3365 = vld [vmem:[%s7 + $0x20] sm:$0xff]
    %v3366 = vld [vmem:[%s7 + $0x28] sm:$0xff]
    %v3367 = vld [vmem:[%s7 + $0x30] sm:$0xff]
    %v3368 = vld [vmem:[%s7 + $0x38] sm:$0xff]
    %s3369 = scalar_lea.vmem %s7, 64
    %v3370 = vld [vmem:[%s3369] sm:$0xff]
    %v3371 = vld [vmem:[%s3369 + $0x8] sm:$0xff]
    %v3372 = vld [vmem:[%s3369 + $0x10] sm:$0xff]
    %v3373 = vld [vmem:[%s3369 + $0x18] sm:$0xff]
    %v3374 = vld [vmem:[%s3369 + $0x20] sm:$0xff]
    %v3375 = vld [vmem:[%s3369 + $0x28] sm:$0xff]
    %v3376 = vld [vmem:[%s3369 + $0x30] sm:$0xff]
    %v3377 = vld [vmem:[%s3369 + $0x38] sm:$0xff]
    %v3379 = vsel %vm3291, %v3329, 0
    %v3382 = vsel %vm3291, %v3331, 0
    %v3385 = vsel %vm3291, %v3333, 0
    %v3388 = vsel %vm3291, %v3335, 0
    %v3391 = vsel %vm3291, %v3337, 0
    %v3394 = vsel %vm3291, %v3339, 0
    %v3397 = vsel %vm3291, %v3341, 0
    %v3400 = vsel %vm3291, %v3343, 0
    %v3403 = vsel %vm3291, %v3345, 0
    %v3406 = vsel %vm3291, %v3347, 0
    %v3409 = vsel %vm3291, %v3349, 0
    %v3412 = vsel %vm3291, %v3351, 0
    %v3415 = vsel %vm3291, %v3353, 0
    %v3418 = vsel %vm3291, %v3355, 0
    %v3421 = vsel %vm3291, %v3357, 0
    %v3424 = vsel %vm3291, %v3359, 0
    %3426 = vmatprep.subr.mxu0 0.0
    %3427 = vmatpush1.msra.mxu0 %v3370
    %3428 = vmatprep.subr.mxu0 0.0
    %3429 = vmatpush1.msra.mxu0 %v3371
    %3430 = vmatprep.subr.mxu0 0.0
    %3431 = vmatpush1.msra.mxu0 %v3372
    %3432 = vmatprep.subr.mxu0 0.0
    %3433 = vmatpush1.msra.mxu0 %v3373
    %3434 = vmatprep.subr.mxu0 0.0
    %3435 = vmatpush1.msra.mxu0 %v3374
    %3436 = vmatprep.subr.mxu0 0.0
    %3437 = vmatpush1.msra.mxu0 %v3375
    %3438 = vmatprep.subr.mxu0 0.0
    %3439 = vmatpush1.msra.mxu0 %v3376
    %3440 = vmatprep.subr.mxu0 0.0
    %3441 = vmatpush1.msra.mxu0 %v3377
    %3442 = vmatprep.subr.mxu0 0.0
    %3443 = vmatpush1.msra.mxu0 0.0
    %3444 = vmatprep.subr.mxu0 0.0
    %3445 = vmatpush1.msra.mxu0 0.0
    %3446 = vmatprep.subr.mxu0 0.0
    %3447 = vmatpush1.msra.mxu0 0.0
    %3448 = vmatprep.subr.mxu0 0.0
    %3449 = vmatpush1.msra.mxu0 0.0
    %3450 = vmatprep.subr.mxu0 0.0
    %3451 = vmatpush1.msra.mxu0 0.0
    %3452 = vmatprep.subr.mxu0 0.0
    %3453 = vmatpush1.msra.mxu0 0.0
    %3454 = vmatprep.subr.mxu0 0.0
    %3455 = vmatpush1.msra.mxu0 0.0
    %3456 = vmatprep.subr.mxu0 0.0
    %3457 = vmatpush1.msra.mxu0 0.0
    %3458 = vmatprep.subr.mxu0 0.0
    %3459 = vmatpush1.msra.mxu0 0.0
    %3460 = vmatprep.subr.mxu0 0.0
    %3461 = vmatpush1.msra.mxu0 0.0
    %3462 = vmatprep.subr.mxu0 0.0
    %3463 = vmatpush1.msra.mxu0 0.0
    %3464 = vmatprep.subr.mxu0 0.0
    %3465 = vmatpush1.msra.mxu0 0.0
    %3466 = vmatprep.subr.mxu0 0.0
    %3467 = vmatpush1.msra.mxu0 0.0
    %3468 = vmatprep.subr.mxu0 0.0
    %3469 = vmatpush1.msra.mxu0 0.0
    %3470 = vmatprep.subr.mxu0 0.0
    %3471 = vmatpush1.msra.mxu0 0.0
    %3472 = vmatprep.subr.mxu0 0.0
    %3473 = vmatpush1.msra.mxu0 0.0
    %3474 = vmatprep.subr.mxu0 0.0
    %3475 = vmatpush1.msra.mxu0 0.0
    %3476 = vmatprep.subr.mxu0 0.0
    %3477 = vmatpush1.msra.mxu0 0.0
    %3478 = vmatprep.subr.mxu0 0.0
    %3479 = vmatpush1.msra.mxu0 0.0
    %3480 = vmatprep.subr.mxu0 0.0
    %3481 = vmatpush1.msra.mxu0 0.0
    %3482 = vmatprep.subr.mxu0 0.0
    %3483 = vmatpush1.msra.mxu0 0.0
    %3484 = vmatprep.subr.mxu0 0.0
    %3485 = vmatpush1.msra.mxu0 0.0
    %3486 = vmatprep.subr.mxu0 0.0
    %3487 = vmatpush1.msra.mxu0 0.0
    %3488 = vmatprep.subr.mxu0 0.0
    %3489 = vmatpush1.msra.mxu0 0.0
    %3490 = vmatprep.mubr.f32.mxu0 0.0
    %3491 = vmatmul.mubr.f32.gmra.mrb[0].mxu0 %v3379
    %v3492 = vpop.f32.mrb[0].mxu0
    %v3493 = vadd.f32 0.0, %v3492
    %v3494 = vpop.f32.mrb[0].mxu0
    %3495 = vmatprep.mubr.f32.mxu0 0.0
    %3496 = vmatmul.mubr.f32.gmra.mrb[0].mxu0 %v3382
    %v3497 = vpop.f32.mrb[0].mxu0
    %v3498 = vadd.f32 0.0, %v3497
    %v3499 = vpop.f32.mrb[0].mxu0
    %3500 = vmatprep.mubr.f32.mxu0 0.0
    %3501 = vmatmul.mubr.f32.gmra.mrb[0].mxu0 %v3385
    %v3502 = vpop.f32.mrb[0].mxu0
    %v3503 = vadd.f32 0.0, %v3502
    %v3504 = vpop.f32.mrb[0].mxu0
    %3505 = vmatprep.mubr.f32.mxu0 0.0
    %3506 = vmatmul.mubr.f32.gmra.mrb[0].mxu0 %v3388
    %v3507 = vpop.f32.mrb[0].mxu0
    %v3508 = vadd.f32 0.0, %v3507
    %v3509 = vpop.f32.mrb[0].mxu0
    %3510 = vmatprep.mubr.f32.mxu0 0.0
    %3511 = vmatmul.mubr.f32.gmra.mrb[0].mxu0 %v3391
    %v3512 = vpop.f32.mrb[0].mxu0
    %v3513 = vadd.f32 0.0, %v3512
    %v3514 = vpop.f32.mrb[0].mxu0
    %3515 = vmatprep.mubr.f32.mxu0 0.0
    %3516 = vmatmul.mubr.f32.gmra.mrb[0].mxu0 %v3394
    %v3517 = vpop.f32.mrb[0].mxu0
    %v3518 = vadd.f32 0.0, %v3517
    %v3519 = vpop.f32.mrb[0].mxu0
    %3520 = vmatprep.mubr.f32.mxu0 0.0
    %3521 = vmatmul.mubr.f32.gmra.mrb[0].mxu0 %v3397
    %v3522 = vpop.f32.mrb[0].mxu0
    %v3523 = vadd.f32 0.0, %v3522
    %v3524 = vpop.f32.mrb[0].mxu0
    %3525 = vmatprep.mubr.f32.mxu0 0.0
    %3526 = vmatmul.mubr.f32.gmra.mrb[0].mxu0 %v3400
    %v3527 = vpop.f32.mrb[0].mxu0
    %v3528 = vadd.f32 0.0, %v3527
    %v3529 = vpop.f32.mrb[0].mxu0
    %3530 = vmatprep.mubr.f32.mxu0 0.0
    %3531 = vmatmul.mubr.f32.gmra.mrb[0].mxu0 %v3403
    %v3532 = vpop.f32.mrb[0].mxu0
    %v3533 = vadd.f32 0.0, %v3532
    %v3534 = vpop.f32.mrb[0].mxu0
    %3535 = vmatprep.mubr.f32.mxu0 0.0
    %3536 = vmatmul.mubr.f32.gmra.mrb[0].mxu0 %v3406
    %v3537 = vpop.f32.mrb[0].mxu0
    %v3538 = vadd.f32 0.0, %v3537
    %v3539 = vpop.f32.mrb[0].mxu0
    %3540 = vmatprep.mubr.f32.mxu0 0.0
    %3541 = vmatmul.mubr.f32.gmra.mrb[0].mxu0 %v3409
    %v3542 = vpop.f32.mrb[0].mxu0
    %v3543 = vadd.f32 0.0, %v3542
    %v3544 = vpop.f32.mrb[0].mxu0
    %3545 = vmatprep.mubr.f32.mxu0 0.0
    %3546 = vmatmul.mubr.f32.gmra.mrb[0].mxu0 %v3412
    %v3547 = vpop.f32.mrb[0].mxu0
    %v3548 = vadd.f32 0.0, %v3547
    %v3549 = vpop.f32.mrb[0].mxu0
    %3550 = vmatprep.mubr.f32.mxu0 0.0
    %3551 = vmatmul.mubr.f32.gmra.mrb[0].mxu0 %v3415
    %v3552 = vpop.f32.mrb[0].mxu0
    %v3553 = vadd.f32 0.0, %v3552
    %v3554 = vpop.f32.mrb[0].mxu0
    %3555 = vmatprep.mubr.f32.mxu0 0.0
    %3556 = vmatmul.mubr.f32.gmra.mrb[0].mxu0 %v3418
    %v3557 = vpop.f32.mrb[0].mxu0
    %v3558 = vadd.f32 0.0, %v3557
    %v3559 = vpop.f32.mrb[0].mxu0
    %3560 = vmatprep.mubr.f32.mxu0 0.0
    %3561 = vmatmul.mubr.f32.gmra.mrb[0].mxu0 %v3421
    %v3562 = vpop.f32.mrb[0].mxu0
    %v3563 = vadd.f32 0.0, %v3562
    %v3564 = vpop.f32.mrb[0].mxu0
    %3565 = vmatprep.mubr.f32.mxu0 0.0
    %3566 = vmatmul.mubr.f32.gmra.mrb[0].mxu0 %v3424
    %v3567 = vpop.f32.mrb[0].mxu0
    %v3568 = vadd.f32 0.0, %v3567
    %v3569 = vpop.f32.mrb[0].mxu0
    %3570 = vdwg.mxu0
    %v3572 = vsel %vm3291, %v3328, 0
    %v3575 = vsel %vm3291, %v3330, 0
    %v3578 = vsel %vm3291, %v3332, 0
    %v3581 = vsel %vm3291, %v3334, 0
    %v3584 = vsel %vm3291, %v3336, 0
    %v3587 = vsel %vm3291, %v3338, 0
    %v3590 = vsel %vm3291, %v3340, 0
    %v3593 = vsel %vm3291, %v3342, 0
    %v3596 = vsel %vm3291, %v3344, 0
    %v3599 = vsel %vm3291, %v3346, 0
    %v3602 = vsel %vm3291, %v3348, 0
    %v3605 = vsel %vm3291, %v3350, 0
    %v3608 = vsel %vm3291, %v3352, 0
    %v3611 = vsel %vm3291, %v3354, 0
    %v3614 = vsel %vm3291, %v3356, 0
    %v3617 = vsel %vm3291, %v3358, 0
    %3619 = vmatprep.subr.mxu0 0.0
    %3620 = vmatpush1.msra.mxu0 %v3361
    %3621 = vmatprep.subr.mxu0 0.0
    %3622 = vmatpush1.msra.mxu0 %v3362
    %3623 = vmatprep.subr.mxu0 0.0
    %3624 = vmatpush1.msra.mxu0 %v3363
    %3625 = vmatprep.subr.mxu0 0.0
    %3626 = vmatpush1.msra.mxu0 %v3364
    %3627 = vmatprep.subr.mxu0 0.0
    %3628 = vmatpush1.msra.mxu0 %v3365
    %3629 = vmatprep.subr.mxu0 0.0
    %3630 = vmatpush1.msra.mxu0 %v3366
    %3631 = vmatprep.subr.mxu0 0.0
    %3632 = vmatpush1.msra.mxu0 %v3367
    %3633 = vmatprep.subr.mxu0 0.0
    %3634 = vmatpush1.msra.mxu0 %v3368
    %3635 = vmatprep.subr.mxu0 0.0
    %3636 = vmatpush1.msra.mxu0 0.0
    %3637 = vmatprep.subr.mxu0 0.0
    %3638 = vmatpush1.msra.mxu0 0.0
    %3639 = vmatprep.subr.mxu0 0.0
    %3640 = vmatpush1.msra.mxu0 0.0
    %3641 = vmatprep.subr.mxu0 0.0
    %3642 = vmatpush1.msra.mxu0 0.0
    %3643 = vmatprep.subr.mxu0 0.0
    %3644 = vmatpush1.msra.mxu0 0.0
    %3645 = vmatprep.subr.mxu0 0.0
    %3646 = vmatpush1.msra.mxu0 0.0
    %3647 = vmatprep.subr.mxu0 0.0
    %3648 = vmatpush1.msra.mxu0 0.0
    %3649 = vmatprep.subr.mxu0 0.0
    %3650 = vmatpush1.msra.mxu0 0.0
    %3651 = vmatprep.subr.mxu0 0.0
    %3652 = vmatpush1.msra.mxu0 0.0
    %3653 = vmatprep.subr.mxu0 0.0
    %3654 = vmatpush1.msra.mxu0 0.0
    %3655 = vmatprep.subr.mxu0 0.0
    %3656 = vmatpush1.msra.mxu0 0.0
    %3657 = vmatprep.subr.mxu0 0.0
    %3658 = vmatpush1.msra.mxu0 0.0
    %3659 = vmatprep.subr.mxu0 0.0
    %3660 = vmatpush1.msra.mxu0 0.0
    %3661 = vmatprep.subr.mxu0 0.0
    %3662 = vmatpush1.msra.mxu0 0.0
    %3663 = vmatprep.subr.mxu0 0.0
    %3664 = vmatpush1.msra.mxu0 0.0
    %3665 = vmatprep.subr.mxu0 0.0
    %3666 = vmatpush1.msra.mxu0 0.0
    %3667 = vmatprep.subr.mxu0 0.0
    %3668 = vmatpush1.msra.mxu0 0.0
    %3669 = vmatprep.subr.mxu0 0.0
    %3670 = vmatpush1.msra.mxu0 0.0
    %3671 = vmatprep.subr.mxu0 0.0
    %3672 = vmatpush1.msra.mxu0 0.0
    %3673 = vmatprep.subr.mxu0 0.0
    %3674 = vmatpush1.msra.mxu0 0.0
    %3675 = vmatprep.subr.mxu0 0.0
    %3676 = vmatpush1.msra.mxu0 0.0
    %3677 = vmatprep.subr.mxu0 0.0
    %3678 = vmatpush1.msra.mxu0 0.0
    %3679 = vmatprep.subr.mxu0 0.0
    %3680 = vmatpush1.msra.mxu0 0.0
    %3681 = vmatprep.subr.mxu0 0.0
    %3682 = vmatpush1.msra.mxu0 0.0
    %3683 = vmatprep.mubr.f32.mxu0 0.0
    %3684 = vmatmul.mubr.f32.gmra.mrb[0].mxu0 %v3572
    %v3685 = vpop.f32.mrb[0].mxu0
    %v3686 = vadd.f32 %v3493, %v3685
    %v3687 = vpop.f32.mrb[0].mxu0
    %3688 = vmatprep.mubr.f32.mxu0 0.0
    %3689 = vmatmul.mubr.f32.gmra.mrb[0].mxu0 %v3575
    %v3690 = vpop.f32.mrb[0].mxu0
    %v3691 = vadd.f32 %v3498, %v3690
    %v3692 = vpop.f32.mrb[0].mxu0
    %3693 = vmatprep.mubr.f32.mxu0 0.0
    %3694 = vmatmul.mubr.f32.gmra.mrb[0].mxu0 %v3578
    %v3695 = vpop.f32.mrb[0].mxu0
    %v3696 = vadd.f32 %v3503, %v3695
    %v3697 = vpop.f32.mrb[0].mxu0
    %3698 = vmatprep.mubr.f32.mxu0 0.0
    %3699 = vmatmul.mubr.f32.gmra.mrb[0].mxu0 %v3581
    %v3700 = vpop.f32.mrb[0].mxu0
    %v3701 = vadd.f32 %v3508, %v3700
    %v3702 = vpop.f32.mrb[0].mxu0
    %3703 = vmatprep.mubr.f32.mxu0 0.0
    %3704 = vmatmul.mubr.f32.gmra.mrb[0].mxu0 %v3584
    %v3705 = vpop.f32.mrb[0].mxu0
    %v3706 = vadd.f32 %v3513, %v3705
    %v3707 = vpop.f32.mrb[0].mxu0
    %3708 = vmatprep.mubr.f32.mxu0 0.0
    %3709 = vmatmul.mubr.f32.gmra.mrb[0].mxu0 %v3587
    %v3710 = vpop.f32.mrb[0].mxu0
    %v3711 = vadd.f32 %v3518, %v3710
    %v3712 = vpop.f32.mrb[0].mxu0
    %3713 = vmatprep.mubr.f32.mxu0 0.0
    %3714 = vmatmul.mubr.f32.gmra.mrb[0].mxu0 %v3590
    %v3715 = vpop.f32.mrb[0].mxu0
    %v3716 = vadd.f32 %v3523, %v3715
    %v3717 = vpop.f32.mrb[0].mxu0
    %3718 = vmatprep.mubr.f32.mxu0 0.0
    %3719 = vmatmul.mubr.f32.gmra.mrb[0].mxu0 %v3593
    %v3720 = vpop.f32.mrb[0].mxu0
    %v3721 = vadd.f32 %v3528, %v3720
    %v3722 = vpop.f32.mrb[0].mxu0
    %3723 = vmatprep.mubr.f32.mxu0 0.0
    %3724 = vmatmul.mubr.f32.gmra.mrb[0].mxu0 %v3596
    %v3725 = vpop.f32.mrb[0].mxu0
    %v3726 = vadd.f32 %v3533, %v3725
    %v3727 = vpop.f32.mrb[0].mxu0
    %3728 = vmatprep.mubr.f32.mxu0 0.0
    %3729 = vmatmul.mubr.f32.gmra.mrb[0].mxu0 %v3599
    %v3730 = vpop.f32.mrb[0].mxu0
    %v3731 = vadd.f32 %v3538, %v3730
    %v3732 = vpop.f32.mrb[0].mxu0
    %3733 = vmatprep.mubr.f32.mxu0 0.0
    %3734 = vmatmul.mubr.f32.gmra.mrb[0].mxu0 %v3602
    %v3735 = vpop.f32.mrb[0].mxu0
    %v3736 = vadd.f32 %v3543, %v3735
    %v3737 = vpop.f32.mrb[0].mxu0
    %3738 = vmatprep.mubr.f32.mxu0 0.0
    %3739 = vmatmul.mubr.f32.gmra.mrb[0].mxu0 %v3605
    %v3740 = vpop.f32.mrb[0].mxu0
    %v3741 = vadd.f32 %v3548, %v3740
    %v3742 = vpop.f32.mrb[0].mxu0
    %3743 = vmatprep.mubr.f32.mxu0 0.0
    %3744 = vmatmul.mubr.f32.gmra.mrb[0].mxu0 %v3608
    %v3745 = vpop.f32.mrb[0].mxu0
    %v3746 = vadd.f32 %v3553, %v3745
    %v3747 = vpop.f32.mrb[0].mxu0
    %3748 = vmatprep.mubr.f32.mxu0 0.0
    %3749 = vmatmul.mubr.f32.gmra.mrb[0].mxu0 %v3611
    %v3750 = vpop.f32.mrb[0].mxu0
    %v3751 = vadd.f32 %v3558, %v3750
    %v3752 = vpop.f32.mrb[0].mxu0
    %3753 = vmatprep.mubr.f32.mxu0 0.0
    %3754 = vmatmul.mubr.f32.gmra.mrb[0].mxu0 %v3614
    %v3755 = vpop.f32.mrb[0].mxu0
    %v3756 = vadd.f32 %v3563, %v3755
    %v3757 = vpop.f32.mrb[0].mxu0
    %3758 = vmatprep.mubr.f32.mxu0 0.0
    %3759 = vmatmul.mubr.f32.gmra.mrb[0].mxu0 %v3617
    %v3760 = vpop.f32.mrb[0].mxu0
    %v3761 = vadd.f32 %v3568, %v3760
    %v3762 = vpop.f32.mrb[0].mxu0
    %3763 = vdwg.mxu0
    %s3764 = scalar_lea.vmem %s7, 128
    %v3765 = vld [vmem:[%s3764] sm:$0xff]
    %v3766 = vld [vmem:[%s3764 + $0x8] sm:$0xff]
    %v3767 = vld [vmem:[%s3764 + $0x10] sm:$0xff]
    %v3768 = vld [vmem:[%s3764 + $0x18] sm:$0xff]
    %v3769 = vld [vmem:[%s3764 + $0x20] sm:$0xff]
    %v3770 = vld [vmem:[%s3764 + $0x28] sm:$0xff]
    %v3771 = vld [vmem:[%s3764 + $0x30] sm:$0xff]
    %v3772 = vld [vmem:[%s3764 + $0x38] sm:$0xff]
    %v3774 = vsel %vm3291, %v3360, 0
    %3776 = vmatprep.subr.mxu0 0.0
    %3777 = vmatpush1.msra.mxu0 %v3765
    %3778 = vmatprep.subr.mxu0 0.0
    %3779 = vmatpush1.msra.mxu0 %v3766
    %3780 = vmatprep.subr.mxu0 0.0
    %3781 = vmatpush1.msra.mxu0 %v3767
    %3782 = vmatprep.subr.mxu0 0.0
    %3783 = vmatpush1.msra.mxu0 %v3768
    %3784 = vmatprep.subr.mxu0 0.0
    %3785 = vmatpush1.msra.mxu0 %v3769
    %3786 = vmatprep.subr.mxu0 0.0
    %3787 = vmatpush1.msra.mxu0 %v3770
    %3788 = vmatprep.subr.mxu0 0.0
    %3789 = vmatpush1.msra.mxu0 %v3771
    %3790 = vmatprep.subr.mxu0 0.0
    %3791 = vmatpush1.msra.mxu0 %v3772
    %3792 = vmatprep.subr.mxu0 0.0
    %3793 = vmatpush1.msra.mxu0 0.0
    %3794 = vmatprep.subr.mxu0 0.0
    %3795 = vmatpush1.msra.mxu0 0.0
    %3796 = vmatprep.subr.mxu0 0.0
    %3797 = vmatpush1.msra.mxu0 0.0
    %3798 = vmatprep.subr.mxu0 0.0
    %3799 = vmatpush1.msra.mxu0 0.0
    %3800 = vmatprep.subr.mxu0 0.0
    %3801 = vmatpush1.msra.mxu0 0.0
    %3802 = vmatprep.subr.mxu0 0.0
    %3803 = vmatpush1.msra.mxu0 0.0
    %3804 = vmatprep.subr.mxu0 0.0
    %3805 = vmatpush1.msra.mxu0 0.0
    %3806 = vmatprep.subr.mxu0 0.0
    %3807 = vmatpush1.msra.mxu0 0.0
    %3808 = vmatprep.subr.mxu0 0.0
    %3809 = vmatpush1.msra.mxu0 0.0
    %3810 = vmatprep.subr.mxu0 0.0
    %3811 = vmatpush1.msra.mxu0 0.0
    %3812 = vmatprep.subr.mxu0 0.0
    %3813 = vmatpush1.msra.mxu0 0.0
    %3814 = vmatprep.subr.mxu0 0.0
    %3815 = vmatpush1.msra.mxu0 0.0
    %3816 = vmatprep.subr.mxu0 0.0
    %3817 = vmatpush1.msra.mxu0 0.0
    %3818 = vmatprep.subr.mxu0 0.0
    %3819 = vmatpush1.msra.mxu0 0.0
    %3820 = vmatprep.subr.mxu0 0.0
    %3821 = vmatpush1.msra.mxu0 0.0
    %3822 = vmatprep.subr.mxu0 0.0
    %3823 = vmatpush1.msra.mxu0 0.0
    %3824 = vmatprep.subr.mxu0 0.0
    %3825 = vmatpush1.msra.mxu0 0.0
    %3826 = vmatprep.subr.mxu0 0.0
    %3827 = vmatpush1.msra.mxu0 0.0
    %3828 = vmatprep.subr.mxu0 0.0
    %3829 = vmatpush1.msra.mxu0 0.0
    %3830 = vmatprep.subr.mxu0 0.0
    %3831 = vmatpush1.msra.mxu0 0.0
    %3832 = vmatprep.subr.mxu0 0.0
    %3833 = vmatpush1.msra.mxu0 0.0
    %3834 = vmatprep.subr.mxu0 0.0
    %3835 = vmatpush1.msra.mxu0 0.0
    %3836 = vmatprep.subr.mxu0 0.0
    %3837 = vmatpush1.msra.mxu0 0.0
    %3838 = vmatprep.subr.mxu0 0.0
    %3839 = vmatpush1.msra.mxu0 0.0
    %3840 = vmatprep.mubr.f32.mxu0 0.0
    %3841 = vmatmul.mubr.f32.gmra.mrb[0].mxu0 %v3575
    %v3842 = vpop.f32.mrb[0].mxu0
    %v3843 = vadd.f32 0.0, %v3842
    %v3844 = vpop.f32.mrb[0].mxu0
    %3845 = vmatprep.mubr.f32.mxu0 0.0
    %3846 = vmatmul.mubr.f32.gmra.mrb[0].mxu0 %v3578
    %v3847 = vpop.f32.mrb[0].mxu0
    %v3848 = vadd.f32 0.0, %v3847
    %v3849 = vpop.f32.mrb[0].mxu0
    %3850 = vmatprep.mubr.f32.mxu0 0.0
    %3851 = vmatmul.mubr.f32.gmra.mrb[0].mxu0 %v3581
    %v3852 = vpop.f32.mrb[0].mxu0
    %v3853 = vadd.f32 0.0, %v3852
    %v3854 = vpop.f32.mrb[0].mxu0
    %3855 = vmatprep.mubr.f32.mxu0 0.0
    %3856 = vmatmul.mubr.f32.gmra.mrb[0].mxu0 %v3584
    %v3857 = vpop.f32.mrb[0].mxu0
    %v3858 = vadd.f32 0.0, %v3857
    %v3859 = vpop.f32.mrb[0].mxu0
    %3860 = vmatprep.mubr.f32.mxu0 0.0
    %3861 = vmatmul.mubr.f32.gmra.mrb[0].mxu0 %v3587
    %v3862 = vpop.f32.mrb[0].mxu0
    %v3863 = vadd.f32 0.0, %v3862
    %v3864 = vpop.f32.mrb[0].mxu0
    %3865 = vmatprep.mubr.f32.mxu0 0.0
    %3866 = vmatmul.mubr.f32.gmra.mrb[0].mxu0 %v3590
    %v3867 = vpop.f32.mrb[0].mxu0
    %v3868 = vadd.f32 0.0, %v3867
    %v3869 = vpop.f32.mrb[0].mxu0
    %3870 = vmatprep.mubr.f32.mxu0 0.0
    %3871 = vmatmul.mubr.f32.gmra.mrb[0].mxu0 %v3593
    %v3872 = vpop.f32.mrb[0].mxu0
    %v3873 = vadd.f32 0.0, %v3872
    %v3874 = vpop.f32.mrb[0].mxu0
    %3875 = vmatprep.mubr.f32.mxu0 0.0
    %3876 = vmatmul.mubr.f32.gmra.mrb[0].mxu0 %v3596
    %v3877 = vpop.f32.mrb[0].mxu0
    %v3878 = vadd.f32 0.0, %v3877
    %v3879 = vpop.f32.mrb[0].mxu0
    %3880 = vmatprep.mubr.f32.mxu0 0.0
    %3881 = vmatmul.mubr.f32.gmra.mrb[0].mxu0 %v3599
    %v3882 = vpop.f32.mrb[0].mxu0
    %v3883 = vadd.f32 0.0, %v3882
    %v3884 = vpop.f32.mrb[0].mxu0
    %3885 = vmatprep.mubr.f32.mxu0 0.0
    %3886 = vmatmul.mubr.f32.gmra.mrb[0].mxu0 %v3602
    %v3887 = vpop.f32.mrb[0].mxu0
    %v3888 = vadd.f32 0.0, %v3887
    %v3889 = vpop.f32.mrb[0].mxu0
    %3890 = vmatprep.mubr.f32.mxu0 0.0
    %3891 = vmatmul.mubr.f32.gmra.mrb[0].mxu0 %v3605
    %v3892 = vpop.f32.mrb[0].mxu0
    %v3893 = vadd.f32 0.0, %v3892
    %v3894 = vpop.f32.mrb[0].mxu0
    %3895 = vmatprep.mubr.f32.mxu0 0.0
    %3896 = vmatmul.mubr.f32.gmra.mrb[0].mxu0 %v3608
    %v3897 = vpop.f32.mrb[0].mxu0
    %v3898 = vadd.f32 0.0, %v3897
    %v3899 = vpop.f32.mrb[0].mxu0
    %3900 = vmatprep.mubr.f32.mxu0 0.0
    %3901 = vmatmul.mubr.f32.gmra.mrb[0].mxu0 %v3611
    %v3902 = vpop.f32.mrb[0].mxu0
    %v3903 = vadd.f32 0.0, %v3902
    %v3904 = vpop.f32.mrb[0].mxu0
    %3905 = vmatprep.mubr.f32.mxu0 0.0
    %3906 = vmatmul.mubr.f32.gmra.mrb[0].mxu0 %v3614
    %v3907 = vpop.f32.mrb[0].mxu0
    %v3908 = vadd.f32 0.0, %v3907
    %v3909 = vpop.f32.mrb[0].mxu0
    %3910 = vmatprep.mubr.f32.mxu0 0.0
    %3911 = vmatmul.mubr.f32.gmra.mrb[0].mxu0 %v3617
    %v3912 = vpop.f32.mrb[0].mxu0
    %v3913 = vadd.f32 0.0, %v3912
    %v3914 = vpop.f32.mrb[0].mxu0
    %3915 = vmatprep.mubr.f32.mxu0 0.0
    %3916 = vmatmul.mubr.f32.gmra.mrb[0].mxu0 %v3774
    %v3917 = vpop.f32.mrb[0].mxu0
    %v3918 = vadd.f32 0.0, %v3917
    %v3919 = vpop.f32.mrb[0].mxu0
    %3920 = vdwg.mxu0
    %v3921 = vadd.f32 %v3686, %v3843
    %v3922 = vadd.f32 %v3691, %v3848
    %v3923 = vadd.f32 %v3696, %v3853
    %v3924 = vadd.f32 %v3701, %v3858
    %v3925 = vadd.f32 %v3706, %v3863
    %v3926 = vadd.f32 %v3711, %v3868
    %v3927 = vadd.f32 %v3716, %v3873
    %v3928 = vadd.f32 %v3721, %v3878
    %v3929 = vadd.f32 %v3726, %v3883
    %v3930 = vadd.f32 %v3731, %v3888
    %v3931 = vadd.f32 %v3736, %v3893
    %v3932 = vadd.f32 %v3741, %v3898
    %v3933 = vadd.f32 %v3746, %v3903
    %v3934 = vadd.f32 %v3751, %v3908
    %v3935 = vadd.f32 %v3756, %v3913
    %v3936 = vadd.f32 %v3761, %v3918
    %v3937 = vld [vmem:[%s8] sm:$0x1]
    %v3939 = vlaneseq
    %v3940 = vshrl.u32 %v3939, 7
    %v3941 = vsub.s32 0, %v3940
    %v3942 = vrot.slane %v3937, %v3941
    %v3944 = vmul.f32 %v3921, %v3942
    %v3945 = vmul.f32 %v3922, %v3942
    %v3946 = vmul.f32 %v3923, %v3942
    %v3947 = vmul.f32 %v3924, %v3942
    %v3948 = vmul.f32 %v3925, %v3942
    %v3949 = vmul.f32 %v3926, %v3942
    %v3950 = vmul.f32 %v3927, %v3942
    %v3951 = vmul.f32 %v3928, %v3942
    %v3952 = vmul.f32 %v3929, %v3942
    %v3953 = vmul.f32 %v3930, %v3942
    %v3954 = vmul.f32 %v3931, %v3942
    %v3955 = vmul.f32 %v3932, %v3942
    %v3956 = vmul.f32 %v3933, %v3942
    %v3957 = vmul.f32 %v3934, %v3942
    %v3958 = vmul.f32 %v3935, %v3942
    %v3959 = vmul.f32 %v3936, %v3942
    %v3960 = vld [vmem:[%s9] sm:$0x1]
    %v3962 = vlaneseq
    %v3963 = vshrl.u32 %v3962, 7
    %v3964 = vsub.s32 0, %v3963
    %v3965 = vrot.slane %v3960, %v3964
    %v3967 = vadd.f32 %v3944, %v3965
    %v3968 = vadd.f32 %v3945, %v3965
    %v3969 = vadd.f32 %v3946, %v3965
    %v3970 = vadd.f32 %v3947, %v3965
    %v3971 = vadd.f32 %v3948, %v3965
    %v3972 = vadd.f32 %v3949, %v3965
    %v3973 = vadd.f32 %v3950, %v3965
    %v3974 = vadd.f32 %v3951, %v3965
    %v3975 = vadd.f32 %v3952, %v3965
    %v3976 = vadd.f32 %v3953, %v3965
    %v3977 = vadd.f32 %v3954, %v3965
    %v3978 = vadd.f32 %v3955, %v3965
    %v3979 = vadd.f32 %v3956, %v3965
    %v3980 = vadd.f32 %v3957, %v3965
    %v3981 = vadd.f32 %v3958, %v3965
    %v3982 = vadd.f32 %v3959, %v3965
    %v3983 = vmax.f32 %v3967, 0.0
    %v3984 = vmax.f32 %v3968, 0.0
    %v3985 = vmax.f32 %v3969, 0.0
    %v3986 = vmax.f32 %v3970, 0.0
    %v3987 = vmax.f32 %v3971, 0.0
    %v3988 = vmax.f32 %v3972, 0.0
    %v3989 = vmax.f32 %v3973, 0.0
    %v3990 = vmax.f32 %v3974, 0.0
    %v3991 = vmax.f32 %v3975, 0.0
    %v3992 = vmax.f32 %v3976, 0.0
    %v3993 = vmax.f32 %v3977, 0.0
    %v3994 = vmax.f32 %v3978, 0.0
    %v3995 = vmax.f32 %v3979, 0.0
    %v3996 = vmax.f32 %v3980, 0.0
    %v3997 = vmax.f32 %v3981, 0.0
    %v3998 = vmax.f32 %v3982, 0.0
    %3999 = vst.msk [vmem:[#allocation5] sm:$0xff] %vm3291, 0.0
    %s4000 = scalar_lea.vmem [#allocation5], 136
    %4001 = vst.msk [vmem:[%s4000] sm:$0xff] %vm3291, 0.0
    %s4002 = scalar_lea.vmem [#allocation5], 8
    %4003 = vst.msk [vmem:[%s4002] sm:$0xff] %vm3291, %v3983
    %4004 = vst.msk [vmem:[%s4002 + $0x8] sm:$0xff] %vm3291, %v3984
    %4005 = vst.msk [vmem:[%s4002 + $0x10] sm:$0xff] %vm3291, %v3985
    %4006 = vst.msk [vmem:[%s4002 + $0x18] sm:$0xff] %vm3291, %v3986
    %4007 = vst.msk [vmem:[%s4002 + $0x20] sm:$0xff] %vm3291, %v3987
    %4008 = vst.msk [vmem:[%s4002 + $0x28] sm:$0xff] %vm3291, %v3988
    %4009 = vst.msk [vmem:[%s4002 + $0x30] sm:$0xff] %vm3291, %v3989
    %4010 = vst.msk [vmem:[%s4002 + $0x38] sm:$0xff] %vm3291, %v3990
    %4011 = vst.msk [vmem:[%s4002 + $0x40] sm:$0xff] %vm3291, %v3991
    %4012 = vst.msk [vmem:[%s4002 + $0x48] sm:$0xff] %vm3291, %v3992
    %4013 = vst.msk [vmem:[%s4002 + $0x50] sm:$0xff] %vm3291, %v3993
    %4014 = vst.msk [vmem:[%s4002 + $0x58] sm:$0xff] %vm3291, %v3994
    %4015 = vst.msk [vmem:[%s4002 + $0x60] sm:$0xff] %vm3291, %v3995
    %4016 = vst.msk [vmem:[%s4002 + $0x68] sm:$0xff] %vm3291, %v3996
    %4017 = vst.msk [vmem:[%s4002 + $0x70] sm:$0xff] %vm3291, %v3997
    %4018 = vst.msk [vmem:[%s4002 + $0x78] sm:$0xff] %vm3291, %v3998
    %v4019 = vld [vmem:[#allocation5] sm:$0xff]
    %v4020 = vld [vmem:[#allocation5 + $0x8] sm:$0xff]
    %v4021 = vld [vmem:[#allocation5 + $0x10] sm:$0xff]
    %v4022 = vld [vmem:[#allocation5 + $0x18] sm:$0xff]
    %v4023 = vld [vmem:[#allocation5 + $0x20] sm:$0xff]
    %v4024 = vld [vmem:[#allocation5 + $0x28] sm:$0xff]
    %v4025 = vld [vmem:[#allocation5 + $0x30] sm:$0xff]
    %v4026 = vld [vmem:[#allocation5 + $0x38] sm:$0xff]
    %v4027 = vld [vmem:[#allocation5 + $0x40] sm:$0xff]
    %v4028 = vld [vmem:[#allocation5 + $0x48] sm:$0xff]
    %v4029 = vld [vmem:[#allocation5 + $0x50] sm:$0xff]
    %v4030 = vld [vmem:[#allocation5 + $0x58] sm:$0xff]
    %v4031 = vld [vmem:[#allocation5 + $0x60] sm:$0xff]
    %v4032 = vld [vmem:[#allocation5 + $0x68] sm:$0xff]
    %v4033 = vld [vmem:[#allocation5 + $0x70] sm:$0xff]
    %v4034 = vld [vmem:[#allocation5 + $0x78] sm:$0xff]
    %v4035 = vld [vmem:[#allocation5 + $0x80] sm:$0xff]
    %v4036 = vld [vmem:[%s10] sm:$0xff]
    %v4037 = vld [vmem:[%s10 + $0x8] sm:$0xff]
    %v4038 = vld [vmem:[%s10 + $0x10] sm:$0xff]
    %v4039 = vld [vmem:[%s10 + $0x18] sm:$0xff]
    %v4040 = vld [vmem:[%s10 + $0x20] sm:$0xff]
    %v4041 = vld [vmem:[%s10 + $0x28] sm:$0xff]
    %v4042 = vld [vmem:[%s10 + $0x30] sm:$0xff]
    %v4043 = vld [vmem:[%s10 + $0x38] sm:$0xff]
    %s4044 = scalar_lea.vmem %s10, 64
    %v4045 = vld [vmem:[%s4044] sm:$0xff]
    %v4046 = vld [vmem:[%s4044 + $0x8] sm:$0xff]
    %v4047 = vld [vmem:[%s4044 + $0x10] sm:$0xff]
    %v4048 = vld [vmem:[%s4044 + $0x18] sm:$0xff]
    %v4049 = vld [vmem:[%s4044 + $0x20] sm:$0xff]
    %v4050 = vld [vmem:[%s4044 + $0x28] sm:$0xff]
    %v4051 = vld [vmem:[%s4044 + $0x30] sm:$0xff]
    %v4052 = vld [vmem:[%s4044 + $0x38] sm:$0xff]
    %v4054 = vsel %vm3291, %v4020, 0
    %v4057 = vsel %vm3291, %v4022, 0
    %v4060 = vsel %vm3291, %v4024, 0
    %v4063 = vsel %vm3291, %v4026, 0
    %v4066 = vsel %vm3291, %v4028, 0
    %v4069 = vsel %vm3291, %v4030, 0
    %v4072 = vsel %vm3291, %v4032, 0
    %v4075 = vsel %vm3291, %v4034, 0
    %4077 = vmatprep.subr.mxu0 0.0
    %4078 = vmatpush1.msra.mxu0 %v4045
    %4079 = vmatprep.subr.mxu0 0.0
    %4080 = vmatpush1.msra.mxu0 %v4046
    %4081 = vmatprep.subr.mxu0 0.0
    %4082 = vmatpush1.msra.mxu0 %v4047
    %4083 = vmatprep.subr.mxu0 0.0
    %4084 = vmatpush1.msra.mxu0 %v4048
    %4085 = vmatprep.subr.mxu0 0.0
    %4086 = vmatpush1.msra.mxu0 %v4049
    %4087 = vmatprep.subr.mxu0 0.0
    %4088 = vmatpush1.msra.mxu0 %v4050
    %4089 = vmatprep.subr.mxu0 0.0
    %4090 = vmatpush1.msra.mxu0 %v4051
    %4091 = vmatprep.subr.mxu0 0.0
    %4092 = vmatpush1.msra.mxu0 %v4052
    %4093 = vmatprep.subr.mxu0 0.0
    %4094 = vmatpush1.msra.mxu0 0.0
    %4095 = vmatprep.subr.mxu0 0.0
    %4096 = vmatpush1.msra.mxu0 0.0
    %4097 = vmatprep.subr.mxu0 0.0
    %4098 = vmatpush1.msra.mxu0 0.0
    %4099 = vmatprep.subr.mxu0 0.0
    %4100 = vmatpush1.msra.mxu0 0.0
    %4101 = vmatprep.subr.mxu0 0.0
    %4102 = vmatpush1.msra.mxu0 0.0
    %4103 = vmatprep.subr.mxu0 0.0
    %4104 = vmatpush1.msra.mxu0 0.0
    %4105 = vmatprep.subr.mxu0 0.0
    %4106 = vmatpush1.msra.mxu0 0.0
    %4107 = vmatprep.subr.mxu0 0.0
    %4108 = vmatpush1.msra.mxu0 0.0
    %4109 = vmatprep.subr.mxu0 0.0
    %4110 = vmatpush1.msra.mxu0 0.0
    %4111 = vmatprep.subr.mxu0 0.0
    %4112 = vmatpush1.msra.mxu0 0.0
    %4113 = vmatprep.subr.mxu0 0.0
    %4114 = vmatpush1.msra.mxu0 0.0
    %4115 = vmatprep.subr.mxu0 0.0
    %4116 = vmatpush1.msra.mxu0 0.0
    %4117 = vmatprep.subr.mxu0 0.0
    %4118 = vmatpush1.msra.mxu0 0.0
    %4119 = vmatprep.subr.mxu0 0.0
    %4120 = vmatpush1.msra.mxu0 0.0
    %4121 = vmatprep.subr.mxu0 0.0
    %4122 = vmatpush1.msra.mxu0 0.0
    %4123 = vmatprep.subr.mxu0 0.0
    %4124 = vmatpush1.msra.mxu0 0.0
    %4125 = vmatprep.subr.mxu0 0.0
    %4126 = vmatpush1.msra.mxu0 0.0
    %4127 = vmatprep.subr.mxu0 0.0
    %4128 = vmatpush1.msra.mxu0 0.0
    %4129 = vmatprep.subr.mxu0 0.0
    %4130 = vmatpush1.msra.mxu0 0.0
    %4131 = vmatprep.subr.mxu0 0.0
    %4132 = vmatpush1.msra.mxu0 0.0
    %4133 = vmatprep.subr.mxu0 0.0
    %4134 = vmatpush1.msra.mxu0 0.0
    %4135 = vmatprep.subr.mxu0 0.0
    %4136 = vmatpush1.msra.mxu0 0.0
    %4137 = vmatprep.subr.mxu0 0.0
    %4138 = vmatpush1.msra.mxu0 0.0
    %4139 = vmatprep.subr.mxu0 0.0
    %4140 = vmatpush1.msra.mxu0 0.0
    %4141 = vmatprep.mubr.f32.mxu0 0.0
    %4142 = vmatmul.mubr.f32.gmra.mrb[0].mxu0 %v4054
    %v4143 = vpop.f32.mrb[0].mxu0
    %v4144 = vadd.f32 0.0, %v4143
    %v4145 = vpop.f32.mrb[0].mxu0
    %4146 = vmatprep.mubr.f32.mxu0 0.0
    %4147 = vmatmul.mubr.f32.gmra.mrb[0].mxu0 %v4057
    %v4148 = vpop.f32.mrb[0].mxu0
    %v4149 = vadd.f32 0.0, %v4148
    %v4150 = vpop.f32.mrb[0].mxu0
    %4151 = vmatprep.mubr.f32.mxu0 0.0
    %4152 = vmatmul.mubr.f32.gmra.mrb[0].mxu0 %v4060
    %v4153 = vpop.f32.mrb[0].mxu0
    %v4154 = vadd.f32 0.0, %v4153
    %v4155 = vpop.f32.mrb[0].mxu0
    %4156 = vmatprep.mubr.f32.mxu0 0.0
    %4157 = vmatmul.mubr.f32.gmra.mrb[0].mxu0 %v4063
    %v4158 = vpop.f32.mrb[0].mxu0
    %v4159 = vadd.f32 0.0, %v4158
    %v4160 = vpop.f32.mrb[0].mxu0
    %4161 = vmatprep.mubr.f32.mxu0 0.0
    %4162 = vmatmul.mubr.f32.gmra.mrb[0].mxu0 %v4066
    %v4163 = vpop.f32.mrb[0].mxu0
    %v4164 = vadd.f32 0.0, %v4163
    %v4165 = vpop.f32.mrb[0].mxu0
    %4166 = vmatprep.mubr.f32.mxu0 0.0
    %4167 = vmatmul.mubr.f32.gmra.mrb[0].mxu0 %v4069
    %v4168 = vpop.f32.mrb[0].mxu0
    %v4169 = vadd.f32 0.0, %v4168
    %v4170 = vpop.f32.mrb[0].mxu0
    %4171 = vmatprep.mubr.f32.mxu0 0.0
    %4172 = vmatmul.mubr.f32.gmra.mrb[0].mxu0 %v4072
    %v4173 = vpop.f32.mrb[0].mxu0
    %v4174 = vadd.f32 0.0, %v4173
    %v4175 = vpop.f32.mrb[0].mxu0
    %4176 = vmatprep.mubr.f32.mxu0 0.0
    %4177 = vmatmul.mubr.f32.gmra.mrb[0].mxu0 %v4075
    %v4178 = vpop.f32.mrb[0].mxu0
    %v4179 = vadd.f32 0.0, %v4178
    %v4180 = vpop.f32.mrb[0].mxu0
    %4181 = vdwg.mxu0
    %v4183 = vsel %vm3291, %v4019, 0
    %v4186 = vsel %vm3291, %v4021, 0
    %v4189 = vsel %vm3291, %v4023, 0
    %v4192 = vsel %vm3291, %v4025, 0
    %v4195 = vsel %vm3291, %v4027, 0
    %v4198 = vsel %vm3291, %v4029, 0
    %v4201 = vsel %vm3291, %v4031, 0
    %v4204 = vsel %vm3291, %v4033, 0
    %4206 = vmatprep.subr.mxu0 0.0
    %4207 = vmatpush1.msra.mxu0 %v4036
    %4208 = vmatprep.subr.mxu0 0.0
    %4209 = vmatpush1.msra.mxu0 %v4037
    %4210 = vmatprep.subr.mxu0 0.0
    %4211 = vmatpush1.msra.mxu0 %v4038
    %4212 = vmatprep.subr.mxu0 0.0
    %4213 = vmatpush1.msra.mxu0 %v4039
    %4214 = vmatprep.subr.mxu0 0.0
    %4215 = vmatpush1.msra.mxu0 %v4040
    %4216 = vmatprep.subr.mxu0 0.0
    %4217 = vmatpush1.msra.mxu0 %v4041
    %4218 = vmatprep.subr.mxu0 0.0
    %4219 = vmatpush1.msra.mxu0 %v4042
    %4220 = vmatprep.subr.mxu0 0.0
    %4221 = vmatpush1.msra.mxu0 %v4043
    %4222 = vmatprep.subr.mxu0 0.0
    %4223 = vmatpush1.msra.mxu0 0.0
    %4224 = vmatprep.subr.mxu0 0.0
    %4225 = vmatpush1.msra.mxu0 0.0
    %4226 = vmatprep.subr.mxu0 0.0
    %4227 = vmatpush1.msra.mxu0 0.0
    %4228 = vmatprep.subr.mxu0 0.0
    %4229 = vmatpush1.msra.mxu0 0.0
    %4230 = vmatprep.subr.mxu0 0.0
    %4231 = vmatpush1.msra.mxu0 0.0
    %4232 = vmatprep.subr.mxu0 0.0
    %4233 = vmatpush1.msra.mxu0 0.0
    %4234 = vmatprep.subr.mxu0 0.0
    %4235 = vmatpush1.msra.mxu0 0.0
    %4236 = vmatprep.subr.mxu0 0.0
    %4237 = vmatpush1.msra.mxu0 0.0
    %4238 = vmatprep.subr.mxu0 0.0
    %4239 = vmatpush1.msra.mxu0 0.0
    %4240 = vmatprep.subr.mxu0 0.0
    %4241 = vmatpush1.msra.mxu0 0.0
    %4242 = vmatprep.subr.mxu0 0.0
    %4243 = vmatpush1.msra.mxu0 0.0
    %4244 = vmatprep.subr.mxu0 0.0
    %4245 = vmatpush1.msra.mxu0 0.0
    %4246 = vmatprep.subr.mxu0 0.0
    %4247 = vmatpush1.msra.mxu0 0.0
    %4248 = vmatprep.subr.mxu0 0.0
    %4249 = vmatpush1.msra.mxu0 0.0
    %4250 = vmatprep.subr.mxu0 0.0
    %4251 = vmatpush1.msra.mxu0 0.0
    %4252 = vmatprep.subr.mxu0 0.0
    %4253 = vmatpush1.msra.mxu0 0.0
    %4254 = vmatprep.subr.mxu0 0.0
    %4255 = vmatpush1.msra.mxu0 0.0
    %4256 = vmatprep.subr.mxu0 0.0
    %4257 = vmatpush1.msra.mxu0 0.0
    %4258 = vmatprep.subr.mxu0 0.0
    %4259 = vmatpush1.msra.mxu0 0.0
    %4260 = vmatprep.subr.mxu0 0.0
    %4261 = vmatpush1.msra.mxu0 0.0
    %4262 = vmatprep.subr.mxu0 0.0
    %4263 = vmatpush1.msra.mxu0 0.0
    %4264 = vmatprep.subr.mxu0 0.0
    %4265 = vmatpush1.msra.mxu0 0.0
    %4266 = vmatprep.subr.mxu0 0.0
    %4267 = vmatpush1.msra.mxu0 0.0
    %4268 = vmatprep.subr.mxu0 0.0
    %4269 = vmatpush1.msra.mxu0 0.0
    %4270 = vmatprep.mubr.f32.mxu0 0.0
    %4271 = vmatmul.mubr.f32.gmra.mrb[0].mxu0 %v4183
    %v4272 = vpop.f32.mrb[0].mxu0
    %v4273 = vadd.f32 %v4144, %v4272
    %v4274 = vpop.f32.mrb[0].mxu0
    %4275 = vmatprep.mubr.f32.mxu0 0.0
    %4276 = vmatmul.mubr.f32.gmra.mrb[0].mxu0 %v4186
    %v4277 = vpop.f32.mrb[0].mxu0
    %v4278 = vadd.f32 %v4149, %v4277
    %v4279 = vpop.f32.mrb[0].mxu0
    %4280 = vmatprep.mubr.f32.mxu0 0.0
    %4281 = vmatmul.mubr.f32.gmra.mrb[0].mxu0 %v4189
    %v4282 = vpop.f32.mrb[0].mxu0
    %v4283 = vadd.f32 %v4154, %v4282
    %v4284 = vpop.f32.mrb[0].mxu0
    %4285 = vmatprep.mubr.f32.mxu0 0.0
    %4286 = vmatmul.mubr.f32.gmra.mrb[0].mxu0 %v4192
    %v4287 = vpop.f32.mrb[0].mxu0
    %v4288 = vadd.f32 %v4159, %v4287
    %v4289 = vpop.f32.mrb[0].mxu0
    %4290 = vmatprep.mubr.f32.mxu0 0.0
    %4291 = vmatmul.mubr.f32.gmra.mrb[0].mxu0 %v4195
    %v4292 = vpop.f32.mrb[0].mxu0
    %v4293 = vadd.f32 %v4164, %v4292
    %v4294 = vpop.f32.mrb[0].mxu0
    %4295 = vmatprep.mubr.f32.mxu0 0.0
    %4296 = vmatmul.mubr.f32.gmra.mrb[0].mxu0 %v4198
    %v4297 = vpop.f32.mrb[0].mxu0
    %v4298 = vadd.f32 %v4169, %v4297
    %v4299 = vpop.f32.mrb[0].mxu0
    %4300 = vmatprep.mubr.f32.mxu0 0.0
    %4301 = vmatmul.mubr.f32.gmra.mrb[0].mxu0 %v4201
    %v4302 = vpop.f32.mrb[0].mxu0
    %v4303 = vadd.f32 %v4174, %v4302
    %v4304 = vpop.f32.mrb[0].mxu0
    %4305 = vmatprep.mubr.f32.mxu0 0.0
    %4306 = vmatmul.mubr.f32.gmra.mrb[0].mxu0 %v4204
    %v4307 = vpop.f32.mrb[0].mxu0
    %v4308 = vadd.f32 %v4179, %v4307
    %v4309 = vpop.f32.mrb[0].mxu0
    %4310 = vdwg.mxu0
    %s4311 = scalar_lea.vmem %s10, 128
    %v4312 = vld [vmem:[%s4311] sm:$0xff]
    %v4313 = vld [vmem:[%s4311 + $0x8] sm:$0xff]
    %v4314 = vld [vmem:[%s4311 + $0x10] sm:$0xff]
    %v4315 = vld [vmem:[%s4311 + $0x18] sm:$0xff]
    %v4316 = vld [vmem:[%s4311 + $0x20] sm:$0xff]
    %v4317 = vld [vmem:[%s4311 + $0x28] sm:$0xff]
    %v4318 = vld [vmem:[%s4311 + $0x30] sm:$0xff]
    %v4319 = vld [vmem:[%s4311 + $0x38] sm:$0xff]
    %v4321 = vsel %vm3291, %v4035, 0
    %4323 = vmatprep.subr.mxu0 0.0
    %4324 = vmatpush1.msra.mxu0 %v4312
    %4325 = vmatprep.subr.mxu0 0.0
    %4326 = vmatpush1.msra.mxu0 %v4313
    %4327 = vmatprep.subr.mxu0 0.0
    %4328 = vmatpush1.msra.mxu0 %v4314
    %4329 = vmatprep.subr.mxu0 0.0
    %4330 = vmatpush1.msra.mxu0 %v4315
    %4331 = vmatprep.subr.mxu0 0.0
    %4332 = vmatpush1.msra.mxu0 %v4316
    %4333 = vmatprep.subr.mxu0 0.0
    %4334 = vmatpush1.msra.mxu0 %v4317
    %4335 = vmatprep.subr.mxu0 0.0
    %4336 = vmatpush1.msra.mxu0 %v4318
    %4337 = vmatprep.subr.mxu0 0.0
    %4338 = vmatpush1.msra.mxu0 %v4319
    %4339 = vmatprep.subr.mxu0 0.0
    %4340 = vmatpush1.msra.mxu0 0.0
    %4341 = vmatprep.subr.mxu0 0.0
    %4342 = vmatpush1.msra.mxu0 0.0
    %4343 = vmatprep.subr.mxu0 0.0
    %4344 = vmatpush1.msra.mxu0 0.0
    %4345 = vmatprep.subr.mxu0 0.0
    %4346 = vmatpush1.msra.mxu0 0.0
    %4347 = vmatprep.subr.mxu0 0.0
    %4348 = vmatpush1.msra.mxu0 0.0
    %4349 = vmatprep.subr.mxu0 0.0
    %4350 = vmatpush1.msra.mxu0 0.0
    %4351 = vmatprep.subr.mxu0 0.0
    %4352 = vmatpush1.msra.mxu0 0.0
    %4353 = vmatprep.subr.mxu0 0.0
    %4354 = vmatpush1.msra.mxu0 0.0
    %4355 = vmatprep.subr.mxu0 0.0
    %4356 = vmatpush1.msra.mxu0 0.0
    %4357 = vmatprep.subr.mxu0 0.0
    %4358 = vmatpush1.msra.mxu0 0.0
    %4359 = vmatprep.subr.mxu0 0.0
    %4360 = vmatpush1.msra.mxu0 0.0
    %4361 = vmatprep.subr.mxu0 0.0
    %4362 = vmatpush1.msra.mxu0 0.0
    %4363 = vmatprep.subr.mxu0 0.0
    %4364 = vmatpush1.msra.mxu0 0.0
    %4365 = vmatprep.subr.mxu0 0.0
    %4366 = vmatpush1.msra.mxu0 0.0
    %4367 = vmatprep.subr.mxu0 0.0
    %4368 = vmatpush1.msra.mxu0 0.0
    %4369 = vmatprep.subr.mxu0 0.0
    %4370 = vmatpush1.msra.mxu0 0.0
    %4371 = vmatprep.subr.mxu0 0.0
    %4372 = vmatpush1.msra.mxu0 0.0
    %4373 = vmatprep.subr.mxu0 0.0
    %4374 = vmatpush1.msra.mxu0 0.0
    %4375 = vmatprep.subr.mxu0 0.0
    %4376 = vmatpush1.msra.mxu0 0.0
    %4377 = vmatprep.subr.mxu0 0.0
    %4378 = vmatpush1.msra.mxu0 0.0
    %4379 = vmatprep.subr.mxu0 0.0
    %4380 = vmatpush1.msra.mxu0 0.0
    %4381 = vmatprep.subr.mxu0 0.0
    %4382 = vmatpush1.msra.mxu0 0.0
    %4383 = vmatprep.subr.mxu0 0.0
    %4384 = vmatpush1.msra.mxu0 0.0
    %4385 = vmatprep.subr.mxu0 0.0
    %4386 = vmatpush1.msra.mxu0 0.0
    %4387 = vmatprep.mubr.f32.mxu0 0.0
    %4388 = vmatmul.mubr.f32.gmra.mrb[0].mxu0 %v4186
    %v4389 = vpop.f32.mrb[0].mxu0
    %v4390 = vadd.f32 0.0, %v4389
    %v4391 = vpop.f32.mrb[0].mxu0
    %4392 = vmatprep.mubr.f32.mxu0 0.0
    %4393 = vmatmul.mubr.f32.gmra.mrb[0].mxu0 %v4189
    %v4394 = vpop.f32.mrb[0].mxu0
    %v4395 = vadd.f32 0.0, %v4394
    %v4396 = vpop.f32.mrb[0].mxu0
    %4397 = vmatprep.mubr.f32.mxu0 0.0
    %4398 = vmatmul.mubr.f32.gmra.mrb[0].mxu0 %v4192
    %v4399 = vpop.f32.mrb[0].mxu0
    %v4400 = vadd.f32 0.0, %v4399
    %v4401 = vpop.f32.mrb[0].mxu0
    %4402 = vmatprep.mubr.f32.mxu0 0.0
    %4403 = vmatmul.mubr.f32.gmra.mrb[0].mxu0 %v4195
    %v4404 = vpop.f32.mrb[0].mxu0
    %v4405 = vadd.f32 0.0, %v4404
    %v4406 = vpop.f32.mrb[0].mxu0
    %4407 = vmatprep.mubr.f32.mxu0 0.0
    %4408 = vmatmul.mubr.f32.gmra.mrb[0].mxu0 %v4198
    %v4409 = vpop.f32.mrb[0].mxu0
    %v4410 = vadd.f32 0.0, %v4409
    %v4411 = vpop.f32.mrb[0].mxu0
    %4412 = vmatprep.mubr.f32.mxu0 0.0
    %4413 = vmatmul.mubr.f32.gmra.mrb[0].mxu0 %v4201
    %v4414 = vpop.f32.mrb[0].mxu0
    %v4415 = vadd.f32 0.0, %v4414
    %v4416 = vpop.f32.mrb[0].mxu0
    %4417 = vmatprep.mubr.f32.mxu0 0.0
    %4418 = vmatmul.mubr.f32.gmra.mrb[0].mxu0 %v4204
    %v4419 = vpop.f32.mrb[0].mxu0
    %v4420 = vadd.f32 0.0, %v4419
    %v4421 = vpop.f32.mrb[0].mxu0
    %4422 = vmatprep.mubr.f32.mxu0 0.0
    %4423 = vmatmul.mubr.f32.gmra.mrb[0].mxu0 %v4321
    %v4424 = vpop.f32.mrb[0].mxu0
    %v4425 = vadd.f32 0.0, %v4424
    %v4426 = vpop.f32.mrb[0].mxu0
    %4427 = vdwg.mxu0
    %v4428 = vadd.f32 %v4273, %v4390
    %v4429 = vadd.f32 %v4278, %v4395
    %v4430 = vadd.f32 %v4283, %v4400
    %v4431 = vadd.f32 %v4288, %v4405
    %v4432 = vadd.f32 %v4293, %v4410
    %v4433 = vadd.f32 %v4298, %v4415
    %v4434 = vadd.f32 %v4303, %v4420
    %v4435 = vadd.f32 %v4308, %v4425
    %v4436 = vld [vmem:[%s11] sm:$0x1]
    %v4438 = vlaneseq
    %v4439 = vshrl.u32 %v4438, 7
    %v4440 = vsub.s32 0, %v4439
    %v4441 = vrot.slane %v4436, %v4440
    %v4443 = vmul.f32 %v4428, %v4441
    %v4444 = vmul.f32 %v4429, %v4441
    %v4445 = vmul.f32 %v4430, %v4441
    %v4446 = vmul.f32 %v4431, %v4441
    %v4447 = vmul.f32 %v4432, %v4441
    %v4448 = vmul.f32 %v4433, %v4441
    %v4449 = vmul.f32 %v4434, %v4441
    %v4450 = vmul.f32 %v4435, %v4441
    %v4451 = vld [vmem:[%s12] sm:$0x1]
    %v4453 = vlaneseq
    %v4454 = vshrl.u32 %v4453, 7
    %v4455 = vsub.s32 0, %v4454
    %v4456 = vrot.slane %v4451, %v4455
    %v4458 = vadd.f32 %v4443, %v4456
    %v4459 = vadd.f32 %v4444, %v4456
    %v4460 = vadd.f32 %v4445, %v4456
    %v4461 = vadd.f32 %v4446, %v4456
    %v4462 = vadd.f32 %v4447, %v4456
    %v4463 = vadd.f32 %v4448, %v4456
    %v4464 = vadd.f32 %v4449, %v4456
    %v4465 = vadd.f32 %v4450, %v4456
    %v4466 = vmax.f32 %v4458, 0.0
    %v4467 = vmax.f32 %v4459, 0.0
    %v4468 = vmax.f32 %v4460, 0.0
    %v4469 = vmax.f32 %v4461, 0.0
    %v4470 = vmax.f32 %v4462, 0.0
    %v4471 = vmax.f32 %v4463, 0.0
    %v4472 = vmax.f32 %v4464, 0.0
    %v4473 = vmax.f32 %v4465, 0.0
    %4474 = vst.msk [vmem:[#allocation6] sm:$0xff] %vm203, 0.0
    %s4475 = scalar_lea.vmem [#allocation6], 72
    %4476 = vst.msk [vmem:[%s4475] sm:$0xff] %vm203, 0.0
    %s4477 = scalar_lea.vmem [#allocation6], 8
    %4478 = vst.msk [vmem:[%s4477] sm:$0xff] %vm203, %v4466
    %4479 = vst.msk [vmem:[%s4477 + $0x8] sm:$0xff] %vm203, %v4467
    %4480 = vst.msk [vmem:[%s4477 + $0x10] sm:$0xff] %vm203, %v4468
    %4481 = vst.msk [vmem:[%s4477 + $0x18] sm:$0xff] %vm203, %v4469
    %4482 = vst.msk [vmem:[%s4477 + $0x20] sm:$0xff] %vm203, %v4470
    %4483 = vst.msk [vmem:[%s4477 + $0x28] sm:$0xff] %vm203, %v4471
    %4484 = vst.msk [vmem:[%s4477 + $0x30] sm:$0xff] %vm203, %v4472
    %4485 = vst.msk [vmem:[%s4477 + $0x38] sm:$0xff] %vm203, %v4473
    %v4486 = vld [vmem:[#allocation6] sm:$0xff]
    %v4487 = vld [vmem:[#allocation6 + $0x8] sm:$0xff]
    %v4488 = vld [vmem:[#allocation6 + $0x10] sm:$0xff]
    %v4489 = vld [vmem:[#allocation6 + $0x18] sm:$0xff]
    %v4490 = vld [vmem:[#allocation6 + $0x20] sm:$0xff]
    %v4491 = vld [vmem:[#allocation6 + $0x28] sm:$0xff]
    %v4492 = vld [vmem:[#allocation6 + $0x30] sm:$0xff]
    %v4493 = vld [vmem:[#allocation6 + $0x38] sm:$0xff]
    %v4494 = vld [vmem:[#allocation6 + $0x40] sm:$0xff]
    %v4495 = vld [vmem:[%s13] sm:$0xff]
    %v4496 = vld [vmem:[%s13 + $0x8] sm:$0xff]
    %v4497 = vld [vmem:[%s13 + $0x10] sm:$0xff]
    %v4498 = vld [vmem:[%s13 + $0x18] sm:$0xff]
    %s4499 = scalar_lea.vmem %s13, 32
    %v4500 = vld [vmem:[%s4499] sm:$0xff]
    %v4501 = vld [vmem:[%s4499 + $0x8] sm:$0xff]
    %v4502 = vld [vmem:[%s4499 + $0x10] sm:$0xff]
    %v4503 = vld [vmem:[%s4499 + $0x18] sm:$0xff]
    %v4505 = vsel %vm203, %v4487, 0
    %v4508 = vsel %vm203, %v4489, 0
    %v4511 = vsel %vm203, %v4491, 0
    %v4514 = vsel %vm203, %v4493, 0
    %4516 = vmatprep.subr.mxu0 0.0
    %4517 = vmatpush1.msra.mxu0 %v4500
    %4518 = vmatprep.subr.mxu0 0.0
    %4519 = vmatpush1.msra.mxu0 %v4501
    %4520 = vmatprep.subr.mxu0 0.0
    %4521 = vmatpush1.msra.mxu0 %v4502
    %4522 = vmatprep.subr.mxu0 0.0
    %4523 = vmatpush1.msra.mxu0 %v4503
    %4524 = vmatprep.subr.mxu0 0.0
    %4525 = vmatpush1.msra.mxu0 0.0
    %4526 = vmatprep.subr.mxu0 0.0
    %4527 = vmatpush1.msra.mxu0 0.0
    %4528 = vmatprep.subr.mxu0 0.0
    %4529 = vmatpush1.msra.mxu0 0.0
    %4530 = vmatprep.subr.mxu0 0.0
    %4531 = vmatpush1.msra.mxu0 0.0
    %4532 = vmatprep.subr.mxu0 0.0
    %4533 = vmatpush1.msra.mxu0 0.0
    %4534 = vmatprep.subr.mxu0 0.0
    %4535 = vmatpush1.msra.mxu0 0.0
    %4536 = vmatprep.subr.mxu0 0.0
    %4537 = vmatpush1.msra.mxu0 0.0
    %4538 = vmatprep.subr.mxu0 0.0
    %4539 = vmatpush1.msra.mxu0 0.0
    %4540 = vmatprep.subr.mxu0 0.0
    %4541 = vmatpush1.msra.mxu0 0.0
    %4542 = vmatprep.subr.mxu0 0.0
    %4543 = vmatpush1.msra.mxu0 0.0
    %4544 = vmatprep.subr.mxu0 0.0
    %4545 = vmatpush1.msra.mxu0 0.0
    %4546 = vmatprep.subr.mxu0 0.0
    %4547 = vmatpush1.msra.mxu0 0.0
    %4548 = vmatprep.subr.mxu0 0.0
    %4549 = vmatpush1.msra.mxu0 0.0
    %4550 = vmatprep.subr.mxu0 0.0
    %4551 = vmatpush1.msra.mxu0 0.0
    %4552 = vmatprep.subr.mxu0 0.0
    %4553 = vmatpush1.msra.mxu0 0.0
    %4554 = vmatprep.subr.mxu0 0.0
    %4555 = vmatpush1.msra.mxu0 0.0
    %4556 = vmatprep.subr.mxu0 0.0
    %4557 = vmatpush1.msra.mxu0 0.0
    %4558 = vmatprep.subr.mxu0 0.0
    %4559 = vmatpush1.msra.mxu0 0.0
    %4560 = vmatprep.subr.mxu0 0.0
    %4561 = vmatpush1.msra.mxu0 0.0
    %4562 = vmatprep.subr.mxu0 0.0
    %4563 = vmatpush1.msra.mxu0 0.0
    %4564 = vmatprep.subr.mxu0 0.0
    %4565 = vmatpush1.msra.mxu0 0.0
    %4566 = vmatprep.subr.mxu0 0.0
    %4567 = vmatpush1.msra.mxu0 0.0
    %4568 = vmatprep.subr.mxu0 0.0
    %4569 = vmatpush1.msra.mxu0 0.0
    %4570 = vmatprep.subr.mxu0 0.0
    %4571 = vmatpush1.msra.mxu0 0.0
    %4572 = vmatprep.subr.mxu0 0.0
    %4573 = vmatpush1.msra.mxu0 0.0
    %4574 = vmatprep.subr.mxu0 0.0
    %4575 = vmatpush1.msra.mxu0 0.0
    %4576 = vmatprep.subr.mxu0 0.0
    %4577 = vmatpush1.msra.mxu0 0.0
    %4578 = vmatprep.subr.mxu0 0.0
    %4579 = vmatpush1.msra.mxu0 0.0
    %4580 = vmatprep.mubr.f32.mxu0 0.0
    %4581 = vmatmul.mubr.f32.gmra.mrb[0].mxu0 %v4505
    %v4582 = vpop.f32.mrb[0].mxu0
    %v4583 = vadd.f32 0.0, %v4582
    %v4584 = vpop.f32.mrb[0].mxu0
    %4585 = vmatprep.mubr.f32.mxu0 0.0
    %4586 = vmatmul.mubr.f32.gmra.mrb[0].mxu0 %v4508
    %v4587 = vpop.f32.mrb[0].mxu0
    %v4588 = vadd.f32 0.0, %v4587
    %v4589 = vpop.f32.mrb[0].mxu0
    %4590 = vmatprep.mubr.f32.mxu0 0.0
    %4591 = vmatmul.mubr.f32.gmra.mrb[0].mxu0 %v4511
    %v4592 = vpop.f32.mrb[0].mxu0
    %v4593 = vadd.f32 0.0, %v4592
    %v4594 = vpop.f32.mrb[0].mxu0
    %4595 = vmatprep.mubr.f32.mxu0 0.0
    %4596 = vmatmul.mubr.f32.gmra.mrb[0].mxu0 %v4514
    %v4597 = vpop.f32.mrb[0].mxu0
    %v4598 = vadd.f32 0.0, %v4597
    %v4599 = vpop.f32.mrb[0].mxu0
    %4600 = vdwg.mxu0
    %v4602 = vsel %vm203, %v4486, 0
    %v4605 = vsel %vm203, %v4488, 0
    %v4608 = vsel %vm203, %v4490, 0
    %v4611 = vsel %vm203, %v4492, 0
    %4613 = vmatprep.subr.mxu0 0.0
    %4614 = vmatpush1.msra.mxu0 %v4495
    %4615 = vmatprep.subr.mxu0 0.0
    %4616 = vmatpush1.msra.mxu0 %v4496
    %4617 = vmatprep.subr.mxu0 0.0
    %4618 = vmatpush1.msra.mxu0 %v4497
    %4619 = vmatprep.subr.mxu0 0.0
    %4620 = vmatpush1.msra.mxu0 %v4498
    %4621 = vmatprep.subr.mxu0 0.0
    %4622 = vmatpush1.msra.mxu0 0.0
    %4623 = vmatprep.subr.mxu0 0.0
    %4624 = vmatpush1.msra.mxu0 0.0
    %4625 = vmatprep.subr.mxu0 0.0
    %4626 = vmatpush1.msra.mxu0 0.0
    %4627 = vmatprep.subr.mxu0 0.0
    %4628 = vmatpush1.msra.mxu0 0.0
    %4629 = vmatprep.subr.mxu0 0.0
    %4630 = vmatpush1.msra.mxu0 0.0
    %4631 = vmatprep.subr.mxu0 0.0
    %4632 = vmatpush1.msra.mxu0 0.0
    %4633 = vmatprep.subr.mxu0 0.0
    %4634 = vmatpush1.msra.mxu0 0.0
    %4635 = vmatprep.subr.mxu0 0.0
    %4636 = vmatpush1.msra.mxu0 0.0
    %4637 = vmatprep.subr.mxu0 0.0
    %4638 = vmatpush1.msra.mxu0 0.0
    %4639 = vmatprep.subr.mxu0 0.0
    %4640 = vmatpush1.msra.mxu0 0.0
    %4641 = vmatprep.subr.mxu0 0.0
    %4642 = vmatpush1.msra.mxu0 0.0
    %4643 = vmatprep.subr.mxu0 0.0
    %4644 = vmatpush1.msra.mxu0 0.0
    %4645 = vmatprep.subr.mxu0 0.0
    %4646 = vmatpush1.msra.mxu0 0.0
    %4647 = vmatprep.subr.mxu0 0.0
    %4648 = vmatpush1.msra.mxu0 0.0
    %4649 = vmatprep.subr.mxu0 0.0
    %4650 = vmatpush1.msra.mxu0 0.0
    %4651 = vmatprep.subr.mxu0 0.0
    %4652 = vmatpush1.msra.mxu0 0.0
    %4653 = vmatprep.subr.mxu0 0.0
    %4654 = vmatpush1.msra.mxu0 0.0
    %4655 = vmatprep.subr.mxu0 0.0
    %4656 = vmatpush1.msra.mxu0 0.0
    %4657 = vmatprep.subr.mxu0 0.0
    %4658 = vmatpush1.msra.mxu0 0.0
    %4659 = vmatprep.subr.mxu0 0.0
    %4660 = vmatpush1.msra.mxu0 0.0
    %4661 = vmatprep.subr.mxu0 0.0
    %4662 = vmatpush1.msra.mxu0 0.0
    %4663 = vmatprep.subr.mxu0 0.0
    %4664 = vmatpush1.msra.mxu0 0.0
    %4665 = vmatprep.subr.mxu0 0.0
    %4666 = vmatpush1.msra.mxu0 0.0
    %4667 = vmatprep.subr.mxu0 0.0
    %4668 = vmatpush1.msra.mxu0 0.0
    %4669 = vmatprep.subr.mxu0 0.0
    %4670 = vmatpush1.msra.mxu0 0.0
    %4671 = vmatprep.subr.mxu0 0.0
    %4672 = vmatpush1.msra.mxu0 0.0
    %4673 = vmatprep.subr.mxu0 0.0
    %4674 = vmatpush1.msra.mxu0 0.0
    %4675 = vmatprep.subr.mxu0 0.0
    %4676 = vmatpush1.msra.mxu0 0.0
    %4677 = vmatprep.mubr.f32.mxu0 0.0
    %4678 = vmatmul.mubr.f32.gmra.mrb[0].mxu0 %v4602
    %v4679 = vpop.f32.mrb[0].mxu0
    %v4680 = vadd.f32 %v4583, %v4679
    %v4681 = vpop.f32.mrb[0].mxu0
    %4682 = vmatprep.mubr.f32.mxu0 0.0
    %4683 = vmatmul.mubr.f32.gmra.mrb[0].mxu0 %v4605
    %v4684 = vpop.f32.mrb[0].mxu0
    %v4685 = vadd.f32 %v4588, %v4684
    %v4686 = vpop.f32.mrb[0].mxu0
    %4687 = vmatprep.mubr.f32.mxu0 0.0
    %4688 = vmatmul.mubr.f32.gmra.mrb[0].mxu0 %v4608
    %v4689 = vpop.f32.mrb[0].mxu0
    %v4690 = vadd.f32 %v4593, %v4689
    %v4691 = vpop.f32.mrb[0].mxu0
    %4692 = vmatprep.mubr.f32.mxu0 0.0
    %4693 = vmatmul.mubr.f32.gmra.mrb[0].mxu0 %v4611
    %v4694 = vpop.f32.mrb[0].mxu0
    %v4695 = vadd.f32 %v4598, %v4694
    %v4696 = vpop.f32.mrb[0].mxu0
    %4697 = vdwg.mxu0
    %s4698 = scalar_lea.vmem %s13, 64
    %v4699 = vld [vmem:[%s4698] sm:$0xff]
    %v4700 = vld [vmem:[%s4698 + $0x8] sm:$0xff]
    %v4701 = vld [vmem:[%s4698 + $0x10] sm:$0xff]
    %v4702 = vld [vmem:[%s4698 + $0x18] sm:$0xff]
    %v4704 = vsel %vm203, %v4494, 0
    %4706 = vmatprep.subr.mxu0 0.0
    %4707 = vmatpush1.msra.mxu0 %v4699
    %4708 = vmatprep.subr.mxu0 0.0
    %4709 = vmatpush1.msra.mxu0 %v4700
    %4710 = vmatprep.subr.mxu0 0.0
    %4711 = vmatpush1.msra.mxu0 %v4701
    %4712 = vmatprep.subr.mxu0 0.0
    %4713 = vmatpush1.msra.mxu0 %v4702
    %4714 = vmatprep.subr.mxu0 0.0
    %4715 = vmatpush1.msra.mxu0 0.0
    %4716 = vmatprep.subr.mxu0 0.0
    %4717 = vmatpush1.msra.mxu0 0.0
    %4718 = vmatprep.subr.mxu0 0.0
    %4719 = vmatpush1.msra.mxu0 0.0
    %4720 = vmatprep.subr.mxu0 0.0
    %4721 = vmatpush1.msra.mxu0 0.0
    %4722 = vmatprep.subr.mxu0 0.0
    %4723 = vmatpush1.msra.mxu0 0.0
    %4724 = vmatprep.subr.mxu0 0.0
    %4725 = vmatpush1.msra.mxu0 0.0
    %4726 = vmatprep.subr.mxu0 0.0
    %4727 = vmatpush1.msra.mxu0 0.0
    %4728 = vmatprep.subr.mxu0 0.0
    %4729 = vmatpush1.msra.mxu0 0.0
    %4730 = vmatprep.subr.mxu0 0.0
    %4731 = vmatpush1.msra.mxu0 0.0
    %4732 = vmatprep.subr.mxu0 0.0
    %4733 = vmatpush1.msra.mxu0 0.0
    %4734 = vmatprep.subr.mxu0 0.0
    %4735 = vmatpush1.msra.mxu0 0.0
    %4736 = vmatprep.subr.mxu0 0.0
    %4737 = vmatpush1.msra.mxu0 0.0
    %4738 = vmatprep.subr.mxu0 0.0
    %4739 = vmatpush1.msra.mxu0 0.0
    %4740 = vmatprep.subr.mxu0 0.0
    %4741 = vmatpush1.msra.mxu0 0.0
    %4742 = vmatprep.subr.mxu0 0.0
    %4743 = vmatpush1.msra.mxu0 0.0
    %4744 = vmatprep.subr.mxu0 0.0
    %4745 = vmatpush1.msra.mxu0 0.0
    %4746 = vmatprep.subr.mxu0 0.0
    %4747 = vmatpush1.msra.mxu0 0.0
    %4748 = vmatprep.subr.mxu0 0.0
    %4749 = vmatpush1.msra.mxu0 0.0
    %4750 = vmatprep.subr.mxu0 0.0
    %4751 = vmatpush1.msra.mxu0 0.0
    %4752 = vmatprep.subr.mxu0 0.0
    %4753 = vmatpush1.msra.mxu0 0.0
    %4754 = vmatprep.subr.mxu0 0.0
    %4755 = vmatpush1.msra.mxu0 0.0
    %4756 = vmatprep.subr.mxu0 0.0
    %4757 = vmatpush1.msra.mxu0 0.0
    %4758 = vmatprep.subr.mxu0 0.0
    %4759 = vmatpush1.msra.mxu0 0.0
    %4760 = vmatprep.subr.mxu0 0.0
    %4761 = vmatpush1.msra.mxu0 0.0
    %4762 = vmatprep.subr.mxu0 0.0
    %4763 = vmatpush1.msra.mxu0 0.0
    %4764 = vmatprep.subr.mxu0 0.0
    %4765 = vmatpush1.msra.mxu0 0.0
    %4766 = vmatprep.subr.mxu0 0.0
    %4767 = vmatpush1.msra.mxu0 0.0
    %4768 = vmatprep.subr.mxu0 0.0
    %4769 = vmatpush1.msra.mxu0 0.0
    %4770 = vmatprep.mubr.f32.mxu0 0.0
    %4771 = vmatmul.mubr.f32.gmra.mrb[0].mxu0 %v4605
    %v4772 = vpop.f32.mrb[0].mxu0
    %v4773 = vadd.f32 0.0, %v4772
    %v4774 = vpop.f32.mrb[0].mxu0
    %4775 = vmatprep.mubr.f32.mxu0 0.0
    %4776 = vmatmul.mubr.f32.gmra.mrb[0].mxu0 %v4608
    %v4777 = vpop.f32.mrb[0].mxu0
    %v4778 = vadd.f32 0.0, %v4777
    %v4779 = vpop.f32.mrb[0].mxu0
    %4780 = vmatprep.mubr.f32.mxu0 0.0
    %4781 = vmatmul.mubr.f32.gmra.mrb[0].mxu0 %v4611
    %v4782 = vpop.f32.mrb[0].mxu0
    %v4783 = vadd.f32 0.0, %v4782
    %v4784 = vpop.f32.mrb[0].mxu0
    %4785 = vmatprep.mubr.f32.mxu0 0.0
    %4786 = vmatmul.mubr.f32.gmra.mrb[0].mxu0 %v4704
    %v4787 = vpop.f32.mrb[0].mxu0
    %v4788 = vadd.f32 0.0, %v4787
    %v4789 = vpop.f32.mrb[0].mxu0
    %4790 = vdwg.mxu0
    %v4791 = vadd.f32 %v4680, %v4773
    %v4792 = vadd.f32 %v4685, %v4778
    %v4793 = vadd.f32 %v4690, %v4783
    %v4794 = vadd.f32 %v4695, %v4788
    %v4795 = vld [vmem:[%s14] sm:$0x1]
    %v4797 = vlaneseq
    %v4798 = vshrl.u32 %v4797, 7
    %v4799 = vsub.s32 0, %v4798
    %v4800 = vrot.slane %v4795, %v4799
    %v4802 = vmul.f32 %v4791, %v4800
    %v4803 = vmul.f32 %v4792, %v4800
    %v4804 = vmul.f32 %v4793, %v4800
    %v4805 = vmul.f32 %v4794, %v4800
    %v4806 = vld [vmem:[%s15] sm:$0x1]
    %v4808 = vlaneseq
    %v4809 = vshrl.u32 %v4808, 7
    %v4810 = vsub.s32 0, %v4809
    %v4811 = vrot.slane %v4806, %v4810
    %v4813 = vadd.f32 %v4802, %v4811
    %v4814 = vadd.f32 %v4803, %v4811
    %v4815 = vadd.f32 %v4804, %v4811
    %v4816 = vadd.f32 %v4805, %v4811
    %v4817 = vmax.f32 %v4813, 0.0
    %v4818 = vmax.f32 %v4814, 0.0
    %v4819 = vmax.f32 %v4815, 0.0
    %v4820 = vmax.f32 %v4816, 0.0
    %4821 = vst.msk [vmem:[#allocation7] sm:$0xff] %vm203, 0.0
    %s4822 = scalar_lea.vmem [#allocation7], 40
    %4823 = vst.msk [vmem:[%s4822] sm:$0xff] %vm203, 0.0
    %s4824 = scalar_lea.vmem [#allocation7], 8
    %4825 = vst.msk [vmem:[%s4824] sm:$0xff] %vm203, %v4817
    %4826 = vst.msk [vmem:[%s4824 + $0x8] sm:$0xff] %vm203, %v4818
    %4827 = vst.msk [vmem:[%s4824 + $0x10] sm:$0xff] %vm203, %v4819
    %4828 = vst.msk [vmem:[%s4824 + $0x18] sm:$0xff] %vm203, %v4820
    %v4829 = vld [vmem:[#allocation7] sm:$0xff]
    %v4830 = vld [vmem:[#allocation7 + $0x8] sm:$0xff]
    %v4831 = vld [vmem:[#allocation7 + $0x10] sm:$0xff]
    %v4832 = vld [vmem:[#allocation7 + $0x18] sm:$0xff]
    %v4833 = vld [vmem:[#allocation7 + $0x20] sm:$0xff]
    %v4834 = vld [vmem:[%s16] sm:$0xff]
    %v4835 = vld [vmem:[%s16 + $0x8] sm:$0xff]
    %v4836 = vld [vmem:[%s16 + $0x10] sm:$0xff]
    %v4837 = vld [vmem:[%s16 + $0x18] sm:$0xff]
    %s4838 = scalar_lea.vmem %s16, 32
    %v4839 = vld [vmem:[%s4838] sm:$0xff]
    %v4840 = vld [vmem:[%s4838 + $0x8] sm:$0xff]
    %v4841 = vld [vmem:[%s4838 + $0x10] sm:$0xff]
    %v4842 = vld [vmem:[%s4838 + $0x18] sm:$0xff]
    %v4844 = vsel %vm203, %v4830, 0
    %v4847 = vsel %vm203, %v4832, 0
    %4849 = vmatprep.subr.mxu0 0.0
    %4850 = vmatpush1.msra.mxu0 %v4839
    %4851 = vmatprep.subr.mxu0 0.0
    %4852 = vmatpush1.msra.mxu0 %v4840
    %4853 = vmatprep.subr.mxu0 0.0
    %4854 = vmatpush1.msra.mxu0 %v4841
    %4855 = vmatprep.subr.mxu0 0.0
    %4856 = vmatpush1.msra.mxu0 %v4842
    %4857 = vmatprep.subr.mxu0 0.0
    %4858 = vmatpush1.msra.mxu0 0.0
    %4859 = vmatprep.subr.mxu0 0.0
    %4860 = vmatpush1.msra.mxu0 0.0
    %4861 = vmatprep.subr.mxu0 0.0
    %4862 = vmatpush1.msra.mxu0 0.0
    %4863 = vmatprep.subr.mxu0 0.0
    %4864 = vmatpush1.msra.mxu0 0.0
    %4865 = vmatprep.subr.mxu0 0.0
    %4866 = vmatpush1.msra.mxu0 0.0
    %4867 = vmatprep.subr.mxu0 0.0
    %4868 = vmatpush1.msra.mxu0 0.0
    %4869 = vmatprep.subr.mxu0 0.0
    %4870 = vmatpush1.msra.mxu0 0.0
    %4871 = vmatprep.subr.mxu0 0.0
    %4872 = vmatpush1.msra.mxu0 0.0
    %4873 = vmatprep.subr.mxu0 0.0
    %4874 = vmatpush1.msra.mxu0 0.0
    %4875 = vmatprep.subr.mxu0 0.0
    %4876 = vmatpush1.msra.mxu0 0.0
    %4877 = vmatprep.subr.mxu0 0.0
    %4878 = vmatpush1.msra.mxu0 0.0
    %4879 = vmatprep.subr.mxu0 0.0
    %4880 = vmatpush1.msra.mxu0 0.0
    %4881 = vmatprep.subr.mxu0 0.0
    %4882 = vmatpush1.msra.mxu0 0.0
    %4883 = vmatprep.subr.mxu0 0.0
    %4884 = vmatpush1.msra.mxu0 0.0
    %4885 = vmatprep.subr.mxu0 0.0
    %4886 = vmatpush1.msra.mxu0 0.0
    %4887 = vmatprep.subr.mxu0 0.0
    %4888 = vmatpush1.msra.mxu0 0.0
    %4889 = vmatprep.subr.mxu0 0.0
    %4890 = vmatpush1.msra.mxu0 0.0
    %4891 = vmatprep.subr.mxu0 0.0
    %4892 = vmatpush1.msra.mxu0 0.0
    %4893 = vmatprep.subr.mxu0 0.0
    %4894 = vmatpush1.msra.mxu0 0.0
    %4895 = vmatprep.subr.mxu0 0.0
    %4896 = vmatpush1.msra.mxu0 0.0
    %4897 = vmatprep.subr.mxu0 0.0
    %4898 = vmatpush1.msra.mxu0 0.0
    %4899 = vmatprep.subr.mxu0 0.0
    %4900 = vmatpush1.msra.mxu0 0.0
    %4901 = vmatprep.subr.mxu0 0.0
    %4902 = vmatpush1.msra.mxu0 0.0
    %4903 = vmatprep.subr.mxu0 0.0
    %4904 = vmatpush1.msra.mxu0 0.0
    %4905 = vmatprep.subr.mxu0 0.0
    %4906 = vmatpush1.msra.mxu0 0.0
    %4907 = vmatprep.subr.mxu0 0.0
    %4908 = vmatpush1.msra.mxu0 0.0
    %4909 = vmatprep.subr.mxu0 0.0
    %4910 = vmatpush1.msra.mxu0 0.0
    %4911 = vmatprep.subr.mxu0 0.0
    %4912 = vmatpush1.msra.mxu0 0.0
    %4913 = vmatprep.mubr.f32.mxu0 0.0
    %4914 = vmatmul.mubr.f32.gmra.mrb[0].mxu0 %v4844
    %v4915 = vpop.f32.mrb[0].mxu0
    %v4916 = vadd.f32 0.0, %v4915
    %v4917 = vpop.f32.mrb[0].mxu0
    %4918 = vmatprep.mubr.f32.mxu0 0.0
    %4919 = vmatmul.mubr.f32.gmra.mrb[0].mxu0 %v4847
    %v4920 = vpop.f32.mrb[0].mxu0
    %v4921 = vadd.f32 0.0, %v4920
    %v4922 = vpop.f32.mrb[0].mxu0
    %4923 = vdwg.mxu0
    %v4925 = vsel %vm203, %v4829, 0
    %v4928 = vsel %vm203, %v4831, 0
    %4930 = vmatprep.subr.mxu0 0.0
    %4931 = vmatpush1.msra.mxu0 %v4834
    %4932 = vmatprep.subr.mxu0 0.0
    %4933 = vmatpush1.msra.mxu0 %v4835
    %4934 = vmatprep.subr.mxu0 0.0
    %4935 = vmatpush1.msra.mxu0 %v4836
    %4936 = vmatprep.subr.mxu0 0.0
    %4937 = vmatpush1.msra.mxu0 %v4837
    %4938 = vmatprep.subr.mxu0 0.0
    %4939 = vmatpush1.msra.mxu0 0.0
    %4940 = vmatprep.subr.mxu0 0.0
    %4941 = vmatpush1.msra.mxu0 0.0
    %4942 = vmatprep.subr.mxu0 0.0
    %4943 = vmatpush1.msra.mxu0 0.0
    %4944 = vmatprep.subr.mxu0 0.0
    %4945 = vmatpush1.msra.mxu0 0.0
    %4946 = vmatprep.subr.mxu0 0.0
    %4947 = vmatpush1.msra.mxu0 0.0
    %4948 = vmatprep.subr.mxu0 0.0
    %4949 = vmatpush1.msra.mxu0 0.0
    %4950 = vmatprep.subr.mxu0 0.0
    %4951 = vmatpush1.msra.mxu0 0.0
    %4952 = vmatprep.subr.mxu0 0.0
    %4953 = vmatpush1.msra.mxu0 0.0
    %4954 = vmatprep.subr.mxu0 0.0
    %4955 = vmatpush1.msra.mxu0 0.0
    %4956 = vmatprep.subr.mxu0 0.0
    %4957 = vmatpush1.msra.mxu0 0.0
    %4958 = vmatprep.subr.mxu0 0.0
    %4959 = vmatpush1.msra.mxu0 0.0
    %4960 = vmatprep.subr.mxu0 0.0
    %4961 = vmatpush1.msra.mxu0 0.0
    %4962 = vmatprep.subr.mxu0 0.0
    %4963 = vmatpush1.msra.mxu0 0.0
    %4964 = vmatprep.subr.mxu0 0.0
    %4965 = vmatpush1.msra.mxu0 0.0
    %4966 = vmatprep.subr.mxu0 0.0
    %4967 = vmatpush1.msra.mxu0 0.0
    %4968 = vmatprep.subr.mxu0 0.0
    %4969 = vmatpush1.msra.mxu0 0.0
    %4970 = vmatprep.subr.mxu0 0.0
    %4971 = vmatpush1.msra.mxu0 0.0
    %4972 = vmatprep.subr.mxu0 0.0
    %4973 = vmatpush1.msra.mxu0 0.0
    %4974 = vmatprep.subr.mxu0 0.0
    %4975 = vmatpush1.msra.mxu0 0.0
    %4976 = vmatprep.subr.mxu0 0.0
    %4977 = vmatpush1.msra.mxu0 0.0
    %4978 = vmatprep.subr.mxu0 0.0
    %4979 = vmatpush1.msra.mxu0 0.0
    %4980 = vmatprep.subr.mxu0 0.0
    %4981 = vmatpush1.msra.mxu0 0.0
    %4982 = vmatprep.subr.mxu0 0.0
    %4983 = vmatpush1.msra.mxu0 0.0
    %4984 = vmatprep.subr.mxu0 0.0
    %4985 = vmatpush1.msra.mxu0 0.0
    %4986 = vmatprep.subr.mxu0 0.0
    %4987 = vmatpush1.msra.mxu0 0.0
    %4988 = vmatprep.subr.mxu0 0.0
    %4989 = vmatpush1.msra.mxu0 0.0
    %4990 = vmatprep.subr.mxu0 0.0
    %4991 = vmatpush1.msra.mxu0 0.0
    %4992 = vmatprep.subr.mxu0 0.0
    %4993 = vmatpush1.msra.mxu0 0.0
    %4994 = vmatprep.mubr.f32.mxu0 0.0
    %4995 = vmatmul.mubr.f32.gmra.mrb[0].mxu0 %v4925
    %v4996 = vpop.f32.mrb[0].mxu0
    %v4997 = vadd.f32 %v4916, %v4996
    %v4998 = vpop.f32.mrb[0].mxu0
    %4999 = vmatprep.mubr.f32.mxu0 0.0
    %5000 = vmatmul.mubr.f32.gmra.mrb[0].mxu0 %v4928
    %v5001 = vpop.f32.mrb[0].mxu0
    %v5002 = vadd.f32 %v4921, %v5001
    %v5003 = vpop.f32.mrb[0].mxu0
    %5004 = vdwg.mxu0
    %s5005 = scalar_lea.vmem %s16, 64
    %v5006 = vld [vmem:[%s5005] sm:$0xff]
    %v5007 = vld [vmem:[%s5005 + $0x8] sm:$0xff]
    %v5008 = vld [vmem:[%s5005 + $0x10] sm:$0xff]
    %v5009 = vld [vmem:[%s5005 + $0x18] sm:$0xff]
    %v5011 = vsel %vm203, %v4833, 0
    %5013 = vmatprep.subr.mxu0 0.0
    %5014 = vmatpush1.msra.mxu0 %v5006
    %5015 = vmatprep.subr.mxu0 0.0
    %5016 = vmatpush1.msra.mxu0 %v5007
    %5017 = vmatprep.subr.mxu0 0.0
    %5018 = vmatpush1.msra.mxu0 %v5008
    %5019 = vmatprep.subr.mxu0 0.0
    %5020 = vmatpush1.msra.mxu0 %v5009
    %5021 = vmatprep.subr.mxu0 0.0
    %5022 = vmatpush1.msra.mxu0 0.0
    %5023 = vmatprep.subr.mxu0 0.0
    %5024 = vmatpush1.msra.mxu0 0.0
    %5025 = vmatprep.subr.mxu0 0.0
    %5026 = vmatpush1.msra.mxu0 0.0
    %5027 = vmatprep.subr.mxu0 0.0
    %5028 = vmatpush1.msra.mxu0 0.0
    %5029 = vmatprep.subr.mxu0 0.0
    %5030 = vmatpush1.msra.mxu0 0.0
    %5031 = vmatprep.subr.mxu0 0.0
    %5032 = vmatpush1.msra.mxu0 0.0
    %5033 = vmatprep.subr.mxu0 0.0
    %5034 = vmatpush1.msra.mxu0 0.0
    %5035 = vmatprep.subr.mxu0 0.0
    %5036 = vmatpush1.msra.mxu0 0.0
    %5037 = vmatprep.subr.mxu0 0.0
    %5038 = vmatpush1.msra.mxu0 0.0
    %5039 = vmatprep.subr.mxu0 0.0
    %5040 = vmatpush1.msra.mxu0 0.0
    %5041 = vmatprep.subr.mxu0 0.0
    %5042 = vmatpush1.msra.mxu0 0.0
    %5043 = vmatprep.subr.mxu0 0.0
    %5044 = vmatpush1.msra.mxu0 0.0
    %5045 = vmatprep.subr.mxu0 0.0
    %5046 = vmatpush1.msra.mxu0 0.0
    %5047 = vmatprep.subr.mxu0 0.0
    %5048 = vmatpush1.msra.mxu0 0.0
    %5049 = vmatprep.subr.mxu0 0.0
    %5050 = vmatpush1.msra.mxu0 0.0
    %5051 = vmatprep.subr.mxu0 0.0
    %5052 = vmatpush1.msra.mxu0 0.0
    %5053 = vmatprep.subr.mxu0 0.0
    %5054 = vmatpush1.msra.mxu0 0.0
    %5055 = vmatprep.subr.mxu0 0.0
    %5056 = vmatpush1.msra.mxu0 0.0
    %5057 = vmatprep.subr.mxu0 0.0
    %5058 = vmatpush1.msra.mxu0 0.0
    %5059 = vmatprep.subr.mxu0 0.0
    %5060 = vmatpush1.msra.mxu0 0.0
    %5061 = vmatprep.subr.mxu0 0.0
    %5062 = vmatpush1.msra.mxu0 0.0
    %5063 = vmatprep.subr.mxu0 0.0
    %5064 = vmatpush1.msra.mxu0 0.0
    %5065 = vmatprep.subr.mxu0 0.0
    %5066 = vmatpush1.msra.mxu0 0.0
    %5067 = vmatprep.subr.mxu0 0.0
    %5068 = vmatpush1.msra.mxu0 0.0
    %5069 = vmatprep.subr.mxu0 0.0
    %5070 = vmatpush1.msra.mxu0 0.0
    %5071 = vmatprep.subr.mxu0 0.0
    %5072 = vmatpush1.msra.mxu0 0.0
    %5073 = vmatprep.subr.mxu0 0.0
    %5074 = vmatpush1.msra.mxu0 0.0
    %5075 = vmatprep.subr.mxu0 0.0
    %5076 = vmatpush1.msra.mxu0 0.0
    %5077 = vmatprep.mubr.f32.mxu0 0.0
    %5078 = vmatmul.mubr.f32.gmra.mrb[0].mxu0 %v4928
    %v5079 = vpop.f32.mrb[0].mxu0
    %v5080 = vadd.f32 0.0, %v5079
    %v5081 = vpop.f32.mrb[0].mxu0
    %5082 = vmatprep.mubr.f32.mxu0 0.0
    %5083 = vmatmul.mubr.f32.gmra.mrb[0].mxu0 %v5011
    %v5084 = vpop.f32.mrb[0].mxu0
    %v5085 = vadd.f32 0.0, %v5084
    %v5086 = vpop.f32.mrb[0].mxu0
    %5087 = vdwg.mxu0
    %v5088 = vadd.f32 %v4997, %v5080
    %v5089 = vadd.f32 %v5002, %v5085
    %v5090 = vld [vmem:[%s17] sm:$0x1]
    %v5092 = vlaneseq
    %v5093 = vshrl.u32 %v5092, 7
    %v5094 = vsub.s32 0, %v5093
    %v5095 = vrot.slane %v5090, %v5094
    %v5097 = vmul.f32 %v5088, %v5095
    %v5098 = vmul.f32 %v5089, %v5095
    %v5099 = vld [vmem:[%s18] sm:$0x1]
    %v5101 = vlaneseq
    %v5102 = vshrl.u32 %v5101, 7
    %v5103 = vsub.s32 0, %v5102
    %v5104 = vrot.slane %v5099, %v5103
    %v5106 = vadd.f32 %v5097, %v5104
    %v5107 = vadd.f32 %v5098, %v5104
    %v5108 = vmax.f32 %v5106, 0.0
    %v5109 = vmax.f32 %v5107, 0.0
    %v5110 = vld [vmem:[%s19] sm:$0xff]
    %v5111 = vld [vmem:[%s19 + $0x8] sm:$0xff]
    %v5112 = vld [vmem:[%s19 + $0x10] sm:$0xff]
    %v5113 = vld [vmem:[%s19 + $0x18] sm:$0xff]
    %v5114 = vld [vmem:[%s21] sm:$0x1]
    %v5116 = vlaneseq
    %v5117 = vshrl.u32 %v5116, 7
    %v5118 = vsub.s32 0, %v5117
    %v5119 = vrot.slane %v5114, %v5118
    %v5122 = vsel %vm203, %v5108, 0
    %v5125 = vsel %vm203, %v5109, 0
    %5127 = vmatprep.subr.mxu0 0.0
    %5128 = vmatpush1.msra.mxu0 %v5110
    %5129 = vmatprep.subr.mxu0 0.0
    %5130 = vmatpush1.msra.mxu0 %v5111
    %5131 = vmatprep.subr.mxu0 0.0
    %5132 = vmatpush1.msra.mxu0 %v5112
    %5133 = vmatprep.subr.mxu0 0.0
    %5134 = vmatpush1.msra.mxu0 %v5113
    %5135 = vmatprep.subr.mxu0 0.0
    %5136 = vmatpush1.msra.mxu0 0.0
    %5137 = vmatprep.subr.mxu0 0.0
    %5138 = vmatpush1.msra.mxu0 0.0
    %5139 = vmatprep.subr.mxu0 0.0
    %5140 = vmatpush1.msra.mxu0 0.0
    %5141 = vmatprep.subr.mxu0 0.0
    %5142 = vmatpush1.msra.mxu0 0.0
    %5143 = vmatprep.subr.mxu0 0.0
    %5144 = vmatpush1.msra.mxu0 0.0
    %5145 = vmatprep.subr.mxu0 0.0
    %5146 = vmatpush1.msra.mxu0 0.0
    %5147 = vmatprep.subr.mxu0 0.0
    %5148 = vmatpush1.msra.mxu0 0.0
    %5149 = vmatprep.subr.mxu0 0.0
    %5150 = vmatpush1.msra.mxu0 0.0
    %5151 = vmatprep.subr.mxu0 0.0
    %5152 = vmatpush1.msra.mxu0 0.0
    %5153 = vmatprep.subr.mxu0 0.0
    %5154 = vmatpush1.msra.mxu0 0.0
    %5155 = vmatprep.subr.mxu0 0.0
    %5156 = vmatpush1.msra.mxu0 0.0
    %5157 = vmatprep.subr.mxu0 0.0
    %5158 = vmatpush1.msra.mxu0 0.0
    %5159 = vmatprep.subr.mxu0 0.0
    %5160 = vmatpush1.msra.mxu0 0.0
    %5161 = vmatprep.subr.mxu0 0.0
    %5162 = vmatpush1.msra.mxu0 0.0
    %5163 = vmatprep.subr.mxu0 0.0
    %5164 = vmatpush1.msra.mxu0 0.0
    %5165 = vmatprep.subr.mxu0 0.0
    %5166 = vmatpush1.msra.mxu0 0.0
    %5167 = vmatprep.subr.mxu0 0.0
    %5168 = vmatpush1.msra.mxu0 0.0
    %5169 = vmatprep.subr.mxu0 0.0
    %5170 = vmatpush1.msra.mxu0 0.0
    %5171 = vmatprep.subr.mxu0 0.0
    %5172 = vmatpush1.msra.mxu0 0.0
    %5173 = vmatprep.subr.mxu0 0.0
    %5174 = vmatpush1.msra.mxu0 0.0
    %5175 = vmatprep.subr.mxu0 0.0
    %5176 = vmatpush1.msra.mxu0 0.0
    %5177 = vmatprep.subr.mxu0 0.0
    %5178 = vmatpush1.msra.mxu0 0.0
    %5179 = vmatprep.subr.mxu0 0.0
    %5180 = vmatpush1.msra.mxu0 0.0
    %5181 = vmatprep.subr.mxu0 0.0
    %5182 = vmatpush1.msra.mxu0 0.0
    %5183 = vmatprep.subr.mxu0 0.0
    %5184 = vmatpush1.msra.mxu0 0.0
    %5185 = vmatprep.subr.mxu0 0.0
    %5186 = vmatpush1.msra.mxu0 0.0
    %5187 = vmatprep.subr.mxu0 0.0
    %5188 = vmatpush1.msra.mxu0 0.0
    %5189 = vmatprep.subr.mxu0 0.0
    %5190 = vmatpush1.msra.mxu0 0.0
    %5191 = vmatprep.mubr.f32.mxu0 0.0
    %5192 = vmatmul.mubr.f32.gmra.mrb[0].mxu0 %v5122
    %v5193 = vpop.f32.mrb[0].mxu0
    %v5194 = vadd.f32 %v5119, %v5193
    %v5195 = vpop.f32.mrb[0].mxu0
    %5196 = vmatprep.mubr.f32.mxu0 0.0
    %5197 = vmatmul.mubr.f32.gmra.mrb[0].mxu0 %v5125
    %v5198 = vpop.f32.mrb[0].mxu0
    %v5199 = vadd.f32 %v5119, %v5198
    %v5200 = vpop.f32.mrb[0].mxu0
    %5201 = vdwg.mxu0
    %v5202 = vld [vmem:[%s20] sm:$0xff]
    %v5203 = vld [vmem:[%s20 + $0x8] sm:$0xff]
    %v5204 = vld [vmem:[%s20 + $0x10] sm:$0xff]
    %v5205 = vld [vmem:[%s20 + $0x18] sm:$0xff]
    %v5206 = vld [vmem:[%s22] sm:$0x1]
    %v5208 = vlaneseq
    %v5209 = vshrl.u32 %v5208, 7
    %v5210 = vsub.s32 0, %v5209
    %v5211 = vrot.slane %v5206, %v5210
    %v5214 = vsel %vm203, 0.0, 0
    %5216 = vmatprep.subr.mxu0 0.0
    %5217 = vmatpush1.msra.mxu0 %v5202
    %5218 = vmatprep.subr.mxu0 0.0
    %5219 = vmatpush1.msra.mxu0 %v5203
    %5220 = vmatprep.subr.mxu0 0.0
    %5221 = vmatpush1.msra.mxu0 %v5204
    %5222 = vmatprep.subr.mxu0 0.0
    %5223 = vmatpush1.msra.mxu0 %v5205
    %5224 = vmatprep.subr.mxu0 0.0
    %5225 = vmatpush1.msra.mxu0 0.0
    %5226 = vmatprep.subr.mxu0 0.0
    %5227 = vmatpush1.msra.mxu0 0.0
    %5228 = vmatprep.subr.mxu0 0.0
    %5229 = vmatpush1.msra.mxu0 0.0
    %5230 = vmatprep.subr.mxu0 0.0
    %5231 = vmatpush1.msra.mxu0 0.0
    %5232 = vmatprep.subr.mxu0 0.0
    %5233 = vmatpush1.msra.mxu0 0.0
    %5234 = vmatprep.subr.mxu0 0.0
    %5235 = vmatpush1.msra.mxu0 0.0
    %5236 = vmatprep.subr.mxu0 0.0
    %5237 = vmatpush1.msra.mxu0 0.0
    %5238 = vmatprep.subr.mxu0 0.0
    %5239 = vmatpush1.msra.mxu0 0.0
    %5240 = vmatprep.subr.mxu0 0.0
    %5241 = vmatpush1.msra.mxu0 0.0
    %5242 = vmatprep.subr.mxu0 0.0
    %5243 = vmatpush1.msra.mxu0 0.0
    %5244 = vmatprep.subr.mxu0 0.0
    %5245 = vmatpush1.msra.mxu0 0.0
    %5246 = vmatprep.subr.mxu0 0.0
    %5247 = vmatpush1.msra.mxu0 0.0
    %5248 = vmatprep.subr.mxu0 0.0
    %5249 = vmatpush1.msra.mxu0 0.0
    %5250 = vmatprep.subr.mxu0 0.0
    %5251 = vmatpush1.msra.mxu0 0.0
    %5252 = vmatprep.subr.mxu0 0.0
    %5253 = vmatpush1.msra.mxu0 0.0
    %5254 = vmatprep.subr.mxu0 0.0
    %5255 = vmatpush1.msra.mxu0 0.0
    %5256 = vmatprep.subr.mxu0 0.0
    %5257 = vmatpush1.msra.mxu0 0.0
    %5258 = vmatprep.subr.mxu0 0.0
    %5259 = vmatpush1.msra.mxu0 0.0
    %5260 = vmatprep.subr.mxu0 0.0
    %5261 = vmatpush1.msra.mxu0 0.0
    %5262 = vmatprep.subr.mxu0 0.0
    %5263 = vmatpush1.msra.mxu0 0.0
    %5264 = vmatprep.subr.mxu0 0.0
    %5265 = vmatpush1.msra.mxu0 0.0
    %5266 = vmatprep.subr.mxu0 0.0
    %5267 = vmatpush1.msra.mxu0 0.0
    %5268 = vmatprep.subr.mxu0 0.0
    %5269 = vmatpush1.msra.mxu0 0.0
    %5270 = vmatprep.subr.mxu0 0.0
    %5271 = vmatpush1.msra.mxu0 0.0
    %5272 = vmatprep.subr.mxu0 0.0
    %5273 = vmatpush1.msra.mxu0 0.0
    %5274 = vmatprep.subr.mxu0 0.0
    %5275 = vmatpush1.msra.mxu0 0.0
    %5276 = vmatprep.subr.mxu0 0.0
    %5277 = vmatpush1.msra.mxu0 0.0
    %5278 = vmatprep.subr.mxu0 0.0
    %5279 = vmatpush1.msra.mxu0 0.0
    %5280 = vmatprep.mubr.f32.mxu0 0.0
    %5281 = vmatmul.mubr.f32.gmra.mrb[0].mxu0 %v5214
    %v5282 = vpop.f32.mrb[0].mxu0
    %v5283 = vadd.f32 %v5211, %v5282
    %v5284 = vpop.f32.mrb[0].mxu0
    %5285 = vdwg.mxu0
    %v5286 = vadd.f32 %v5194, %v5283
    %v5287 = vxor.u32 %v5286, 2147483648
    %v5288 = vmul.f32 %v5287, 1.442695
    %v5289 = vpow.pop %v5288
    %v5290 = vadd.f32 %v5289, 1.0
    %v5291 = vrcp.pop %v5290
    %v5292 = vmul.f32 1.0, %v5291
    %5294 = vrot.lane.b32.xlu0 %v5283, 64
    %v5295 = vpop.permute.xlu0 %5294
    %v5297 = vmul.f32 %v5292, %v5295
    %5299 = vrot.lane.b32.xlu0 %v5297, 64
    %v5300 = vpop.permute.xlu0 %5299
    %v5302 = vadd.f32 %v5194, %v5300
    %v5303 = vtanh.pop %v5302
    %v5304 = vsub.f32 1.0, %v5292
    %5306 = vrot.lane.b32.xlu0 %v5303, 96
    %v5307 = vpop.permute.xlu0 %5306
    %v5309 = vmul.f32 %v5304, %v5307
    %v5310 = vmul.f32 %v5292, 0.0
    %v5311 = vadd.f32 %v5309, %v5310
    %5313 = vrot.lane.b32.xlu0 %v5311, 96
    %v5314 = vpop.permute.xlu0 %5313
    %v5315 = vsel %vm203, %v5314, 0
    %5317 = vmatprep.subr.mxu0 0.0
    %5318 = vmatpush1.msra.mxu0 %v5202
    %5319 = vmatprep.subr.mxu0 0.0
    %5320 = vmatpush1.msra.mxu0 %v5203
    %5321 = vmatprep.subr.mxu0 0.0
    %5322 = vmatpush1.msra.mxu0 %v5204
    %5323 = vmatprep.subr.mxu0 0.0
    %5324 = vmatpush1.msra.mxu0 %v5205
    %5325 = vmatprep.subr.mxu0 0.0
    %5326 = vmatpush1.msra.mxu0 0.0
    %5327 = vmatprep.subr.mxu0 0.0
    %5328 = vmatpush1.msra.mxu0 0.0
    %5329 = vmatprep.subr.mxu0 0.0
    %5330 = vmatpush1.msra.mxu0 0.0
    %5331 = vmatprep.subr.mxu0 0.0
    %5332 = vmatpush1.msra.mxu0 0.0
    %5333 = vmatprep.subr.mxu0 0.0
    %5334 = vmatpush1.msra.mxu0 0.0
    %5335 = vmatprep.subr.mxu0 0.0
    %5336 = vmatpush1.msra.mxu0 0.0
    %5337 = vmatprep.subr.mxu0 0.0
    %5338 = vmatpush1.msra.mxu0 0.0
    %5339 = vmatprep.subr.mxu0 0.0
    %5340 = vmatpush1.msra.mxu0 0.0
    %5341 = vmatprep.subr.mxu0 0.0
    %5342 = vmatpush1.msra.mxu0 0.0
    %5343 = vmatprep.subr.mxu0 0.0
    %5344 = vmatpush1.msra.mxu0 0.0
    %5345 = vmatprep.subr.mxu0 0.0
    %5346 = vmatpush1.msra.mxu0 0.0
    %5347 = vmatprep.subr.mxu0 0.0
    %5348 = vmatpush1.msra.mxu0 0.0
    %5349 = vmatprep.subr.mxu0 0.0
    %5350 = vmatpush1.msra.mxu0 0.0
    %5351 = vmatprep.subr.mxu0 0.0
    %5352 = vmatpush1.msra.mxu0 0.0
    %5353 = vmatprep.subr.mxu0 0.0
    %5354 = vmatpush1.msra.mxu0 0.0
    %5355 = vmatprep.subr.mxu0 0.0
    %5356 = vmatpush1.msra.mxu0 0.0
    %5357 = vmatprep.subr.mxu0 0.0
    %5358 = vmatpush1.msra.mxu0 0.0
    %5359 = vmatprep.subr.mxu0 0.0
    %5360 = vmatpush1.msra.mxu0 0.0
    %5361 = vmatprep.subr.mxu0 0.0
    %5362 = vmatpush1.msra.mxu0 0.0
    %5363 = vmatprep.subr.mxu0 0.0
    %5364 = vmatpush1.msra.mxu0 0.0
    %5365 = vmatprep.subr.mxu0 0.0
    %5366 = vmatpush1.msra.mxu0 0.0
    %5367 = vmatprep.subr.mxu0 0.0
    %5368 = vmatpush1.msra.mxu0 0.0
    %5369 = vmatprep.subr.mxu0 0.0
    %5370 = vmatpush1.msra.mxu0 0.0
    %5371 = vmatprep.subr.mxu0 0.0
    %5372 = vmatpush1.msra.mxu0 0.0
    %5373 = vmatprep.subr.mxu0 0.0
    %5374 = vmatpush1.msra.mxu0 0.0
    %5375 = vmatprep.subr.mxu0 0.0
    %5376 = vmatpush1.msra.mxu0 0.0
    %5377 = vmatprep.subr.mxu0 0.0
    %5378 = vmatpush1.msra.mxu0 0.0
    %5379 = vmatprep.subr.mxu0 0.0
    %5380 = vmatpush1.msra.mxu0 0.0
    %5381 = vmatprep.mubr.f32.mxu0 0.0
    %5382 = vmatmul.mubr.f32.gmra.mrb[0].mxu0 %v5315
    %v5383 = vpop.f32.mrb[0].mxu0
    %v5384 = vadd.f32 %v5211, %v5383
    %v5385 = vpop.f32.mrb[0].mxu0
    %5386 = vdwg.mxu0
    %v5387 = vadd.f32 %v5199, %v5384
    %v5388 = vxor.u32 %v5387, 2147483648
    %v5389 = vmul.f32 %v5388, 1.442695
    %v5390 = vpow.pop %v5389
    %v5391 = vadd.f32 %v5390, 1.0
    %v5392 = vrcp.pop %v5391
    %v5393 = vmul.f32 1.0, %v5392
    %5395 = vrot.lane.b32.xlu0 %v5384, 64
    %v5396 = vpop.permute.xlu0 %5395
    %v5398 = vmul.f32 %v5393, %v5396
    %5400 = vrot.lane.b32.xlu0 %v5398, 64
    %v5401 = vpop.permute.xlu0 %5400
    %v5403 = vadd.f32 %v5199, %v5401
    %v5404 = vtanh.pop %v5403
    %v5405 = vsub.f32 1.0, %v5393
    %5407 = vrot.lane.b32.xlu0 %v5404, 96
    %v5408 = vpop.permute.xlu0 %5407
    %v5410 = vmul.f32 %v5405, %v5408
    %v5411 = vmul.f32 %v5393, %v5311
    %v5412 = vadd.f32 %v5410, %v5411
    %5414 = vrot.lane.b32.xlu0 %v5412, 96
    %v5415 = vpop.permute.xlu0 %5414
    %vm5417 = vcmask 254976
    %5418 = vst.msk [vmem:[#allocation8] sm:$0x3] %vm5417, %v5415
    // Predicated region
    $region94: #{_lambda_.1} parent=1 // pred_check
      _
    $region95: #{_lambda_.1} parent=1 // pred_check_branch
      %5420 = sbr.rel (0) target = $region97
    $region96: #{_lambda_.1} parent=1 // pred_region
      %s5422 = ssub.s32 32, 32
      %5423 = vsyncadd [#allocation9], %s5422
      %s5425 = sshll.u32 [#allocation8], 4
      %s5426 = int_to_ptr.vmem [resolvable:$true] %s5425
      %5428 = dma.vmem_to_hbm [thread:$0]  %s5426, 32, %s23, [#allocation9]
    $region97: #{_lambda_.1} parent=1 // pred_fallthru
      _
    // Predicated region
    $region98: #{_lambda_.1} parent=1 // pred_check
      _
    $region99: #{_lambda_.1} parent=1 // pred_check_branch
      %5430 = sbr.rel (0) target = $region101
    $region100: #{_lambda_.1} parent=1 // pred_region
      %5431 = dma.done [#allocation9], 32
    $region101: #{_lambda_.1} parent=1 // pred_fallthru
      _
    %5432 = vsyncpa [#allocation9], 1

</llo_original>
